<compile_context>
chip_gen: v7x
topology: tpu7x:2x2x1
jax: 0.10.0
libtpu: 0.0.40
codegen_flags: <defaults>
</compile_context>

<pallas_src>
import jax
import jax.numpy as jnp
from jax.experimental import pallas as pl
from jax.experimental.pallas import tpu as pltpu


def _make_kernel(Lq, D, H, L, P, Len_in, spatial_shapes):
    assert D % H == 0
    Dh = D // H
    HLP2 = H * L * P * 2

    # static level start offsets into the flattened src / value rows
    starts = []
    s = 0
    for (Hl, Wl) in spatial_shapes:
        starts.append(s)
        s += Hl * Wl
    assert s == Len_in

    scale = 1.0 / (Dh ** 0.5)
    eps = 1e-5

    def _mm(x, w):
        # bf16 operands, f32 accumulation, (M,K)x(K,N) contraction
        return jax.lax.dot_general(
            x.astype(jnp.bfloat16), w.astype(jnp.bfloat16),
            (((1,), (0,)), ((), ())),
            preferred_element_type=jnp.float32)

    def _mm_t(x, y):
        # (M,K) x (N,K) -> (M,N)   (contract last dims; no explicit transpose)
        return jax.lax.dot_general(
            x.astype(jnp.bfloat16), y.astype(jnp.bfloat16),
            (((1,), (1,)), ((), ())),
            preferred_element_type=jnp.float32)

    def _layernorm(x, w_ref, b_ref):
        mu = jnp.mean(x, axis=-1, keepdims=True)
        xc = x - mu
        var = jnp.mean(xc * xc, axis=-1, keepdims=True)
        return xc * jax.lax.rsqrt(var + eps) * w_ref[...] + b_ref[...]

    def kernel(tgt_ref, qpos_ref, refb_ref, src_ref, invn_ref, pixs_ref,
               sa_in_w, sa_in_b, sa_out_w, sa_out_b,
               n2_w, n2_b,
               off_w, off_b, aw_w, aw_b, val_w, val_b, co_w, co_b,
               n1_w, n1_b,
               l1_w, l1_b, l2_w, l2_b, n3_w, n3_b,
               out_ref, samp_ref):
        tgt = tgt_ref[0]                           # (Lq, D)      f32
        qpos = qpos_ref[0]                         # (Lq, D)      bf16
        ref_b = refb_ref[0]                        # (Lq, HLP2)   f32
        src = src_ref[0]                           # (Len_in, D)  bf16

        # ------------------------- self-attention (norm2) -------------------
        qk_in = tgt + qpos
        qk = _mm(qk_in, sa_in_w[:, :2 * D]) + sa_in_b[:, :2 * D]   # (Lq, 2D)
        q = qk[:, :D] * scale
        k = qk[:, D:]
        v = _mm(tgt, sa_in_w[:, 2 * D:]) + sa_in_b[:, 2 * D:]      # (Lq, D)

        # per-head 2-D dots on contiguous slices, head-concat fused into the
        # output projection (no stacking / concatenation)
        sa = jnp.zeros((Lq, D), jnp.float32)
        for h in range(H):
            sl = slice(h * Dh, (h + 1) * Dh)
            sc = _mm_t(q[:, sl], k[:, sl])                         # (Lq, Lq)
            sc = sc - jnp.max(sc, axis=-1, keepdims=True)
            e = jnp.exp(sc)
            p_attn = e / jnp.sum(e, axis=-1, keepdims=True)
            ctx = _mm(p_attn, v[:, sl])                            # (Lq, Dh)
            sa = sa + _mm(ctx, sa_out_w[sl, :])                    # (Lq, D)
        sa = sa + sa_out_b[...]
        x = _layernorm(tgt + sa, n2_w, n2_b)       # dropout2 == identity

        # -------------------- MSDeformAttn cross-attention (norm1) ----------
        query = x + qpos
        # value projection, kept in bf16 (f32 accumulation inside the dots)
        value = (_mm(src, val_w[...]) + val_b[...]).astype(jnp.bfloat16)

        offs = _mm(query, off_w[...]) + off_b[...]                 # (Lq, HLP2)
        aw = _mm(query, aw_w[...]) + aw_b[...]                     # (Lq, HLP)

        # sampling locations: exact f32 broadcast reference + normalized
        # offsets, single lane-dense store
        samp = ref_b + offs * invn_ref[...]
        samp_ref[0] = samp

        # grid_sample(align_corners=False, padding_mode='zeros') pixel coords
        pix = samp * pixs_ref[...] - 0.5
        base = jnp.floor(pix)
        frac = pix - base
        basei = base.astype(jnp.int32)

        # attention-weight softmax: one lane-dense exp (global row-max shift),
        # per-head sums are narrow but cheap
        e_aw = jnp.exp(aw - jnp.max(aw, axis=-1, keepdims=True))
        inv_den = [
            1.0 / jnp.maximum(
                jnp.sum(e_aw[:, h * L * P:(h + 1) * L * P],
                        axis=-1, keepdims=True), 1e-20)
            for h in range(H)]

        acc = [jnp.zeros((Lq, Dh), jnp.float32) for _ in range(H)]
        for l in range(L):                          # level-outer (stream-ready)
            Hl, Wl = spatial_shapes[l]
            npix = Hl * Wl
            lane_x = jax.lax.broadcasted_iota(jnp.int32, (Lq, Wl), 1)
            lane_y = jax.lax.broadcasted_iota(jnp.int32, (Lq, Hl), 1)
            v_l = value[starts[l]:starts[l] + npix, :]             # (npix, D)
            for h in range(H):
                wmat = jnp.zeros((Lq, Hl, Wl), jnp.float32)
                for p in range(P):
                    col = (h * L + l) * P + p
                    c0 = 2 * col
                    x0 = basei[:, c0:c0 + 1]
                    y0 = basei[:, c0 + 1:c0 + 2]
                    dx = frac[:, c0:c0 + 1]
                    dy = frac[:, c0 + 1:c0 + 2]
                    awc = e_aw[:, col:col + 1] * inv_den[h]        # (Lq, 1)
                    # separable 1-D bilinear weights; out-of-range corners
                    # contribute nothing because the iota never matches them
                    wx = (jnp.where(lane_x == x0, 1.0 - dx, 0.0)
                          + jnp.where(lane_x == x0 + 1, dx, 0.0))  # (Lq, Wl)
                    wy = (jnp.where(lane_y == y0, 1.0 - dy, 0.0)
                          + jnp.where(lane_y == y0 + 1, dy, 0.0))  # (Lq, Hl)
                    wy = wy * awc
                    wmat = wmat + wy[:, :, None] * wx[:, None, :]  # outer prod
                wflat = wmat.reshape(Lq, npix)      # row-major (y outer, x in)
                acc[h] = acc[h] + jax.lax.dot_general(
                    wflat.astype(jnp.bfloat16),
                    v_l[:, h * Dh:(h + 1) * Dh],
                    (((1,), (0,)), ((), ())),
                    preferred_element_type=jnp.float32)            # (Lq, Dh)

        # fused head-concat + output projection
        ca = jnp.zeros((Lq, D), jnp.float32)
        for h in range(H):
            ca = ca + _mm(acc[h], co_w[h * Dh:(h + 1) * Dh, :])
        ca = ca + co_b[...]
        x = _layernorm(x + ca, n1_w, n1_b)          # dropout1 == identity

        # ------------------------------- FFN (norm3) -------------------------
        h1 = jnp.maximum(_mm(x, l1_w[...]) + l1_b[...], 0.0)       # relu
        ff = _mm(h1, l2_w[...]) + l2_b[...]
        x = _layernorm(x + ff, n3_w, n3_b)          # dropout3/4 == identity

        out_ref[0] = x

    return kernel


def deformable_decoder_layer(params, tgt, query_pos, reference_points, src,
                             spatial_shapes, n_heads, n_points):
    N, Lq, D = tgt.shape
    L = len(spatial_shapes)
    H, P = n_heads, n_points
    Len_in = src.shape[1]
    HLP2 = H * L * P * 2

    kernel = _make_kernel(Lq, D, H, L, P, Len_in, spatial_shapes)

    # residual stream stays f32; the big / matmul-only operands go bf16
    tgt3 = tgt.astype(jnp.float32)
    qpos3 = query_pos.astype(jnp.bfloat16)
    src3 = src.astype(jnp.bfloat16)

    # exact f32 broadcast of per-level reference points to the
    # (head, level, point, xy) column layout -- layout plumbing only
    ref_b = jnp.broadcast_to(
        reference_points.reshape(N, Lq, 1, L, 1, 2).astype(jnp.float32),
        (N, Lq, H, L, P, 2)).reshape(N, Lq, HLP2)

    # per-column constants, passed as kernel inputs (kernels must not capture
    # non-scalar constants)
    inv_norm = []
    pix_scale = []
    for h in range(H):
        for l in range(L):
            Hl, Wl = spatial_shapes[l]
            for p in range(P):
                inv_norm += [1.0 / Wl, 1.0 / Hl]
                pix_scale += [float(Wl), float(Hl)]
    inv_norm = jnp.asarray(inv_norm, jnp.float32).reshape(1, HLP2)
    pix_scale = jnp.asarray(pix_scale, jnp.float32).reshape(1, HLP2)

    weight_names = ["sa_in_w", "sa_in_b", "sa_out_w", "sa_out_b",
                    "n2_w", "n2_b",
                    "off_w", "off_b", "aw_w", "aw_b",
                    "val_w", "val_b", "co_w", "co_b",
                    "n1_w", "n1_b",
                    "l1_w", "l1_b", "l2_w", "l2_b", "n3_w", "n3_b"]
    weights = [params[name] for name in weight_names]

    def batch_spec(rows, cols):
        return pl.BlockSpec((1, rows, cols), lambda n: (n, 0, 0))

    def full_spec(shape):
        return pl.BlockSpec(shape, lambda n: (0,) * len(shape))

    in_specs = [batch_spec(Lq, D), batch_spec(Lq, D),
                batch_spec(Lq, HLP2), batch_spec(Len_in, D),
                full_spec((1, HLP2)), full_spec((1, HLP2))]
    in_specs += [full_spec(tuple(w.shape)) for w in weights]

    out_specs = (batch_spec(Lq, D), batch_spec(Lq, HLP2))
    out_shape = (jax.ShapeDtypeStruct((N, Lq, D), jnp.float32),
                 jax.ShapeDtypeStruct((N, Lq, HLP2), jnp.float32))

    out3, samp3 = pl.pallas_call(
        kernel,
        grid=(N,),
        in_specs=in_specs,
        out_specs=out_specs,
        out_shape=out_shape,
        compiler_params=pltpu.CompilerParams(
            dimension_semantics=("parallel",),
            vmem_limit_bytes=48 * 1024 * 1024),
    )(tgt3, qpos3, ref_b, src3, inv_norm, pix_scale, *weights)

    sampled_points = samp3.reshape(N, Lq, H, L, P, 2)
    return out3, sampled_points


def init_params(key, d_model, d_ffn, n_levels, n_heads, n_points):
    D = d_model
    HLP = n_heads * n_levels * n_points
    ks = jax.random.split(key, 10)

    def w(k, din, dout, s=0.05):
        # pre-transposed (Din, Dout), bf16 operands for the MXU
        return (s * jax.random.normal(k, (din, dout))).astype(jnp.bfloat16)

    def b0(dout):
        return jnp.zeros((1, dout), jnp.float32)

    return dict(
        # self_attn (nn.MultiheadAttention): in_proj + out_proj
        sa_in_w=w(ks[0], D, 3 * D), sa_in_b=b0(3 * D),
        sa_out_w=w(ks[1], D, D), sa_out_b=b0(D),
        n2_w=jnp.ones((1, D), jnp.float32), n2_b=b0(D),
        # MSDeformAttn: sampling_offsets, attention_weights, value/output proj
        off_w=w(ks[2], D, HLP * 2, 0.02),
        off_b=(0.2 * jax.random.normal(ks[3], (1, HLP * 2))).astype(jnp.float32),
        aw_w=w(ks[4], D, HLP), aw_b=b0(HLP),
        val_w=w(ks[5], D, D), val_b=b0(D),
        co_w=w(ks[6], D, D), co_b=b0(D),
        n1_w=jnp.ones((1, D), jnp.float32), n1_b=b0(D),
        # FFN
        l1_w=w(ks[7], D, d_ffn), l1_b=b0(d_ffn),
        l2_w=w(ks[8], d_ffn, D), l2_b=b0(D),
        n3_w=jnp.ones((1, D), jnp.float32), n3_b=b0(D),
    )


if __name__ == "__main__":
    d_model, d_ffn = 32, 64
    n_levels, n_heads, n_points = 2, 4, 2
    N, Lq = 2, 8
    spatial_shapes = ((4, 4), (2, 2))          # static src_spatial_shapes
    Len_in = sum(h * w for h, w in spatial_shapes)

    key = jax.random.PRNGKey(0)
    kp, k1, k2, k3, k4 = jax.random.split(key, 5)
    params = init_params(kp, d_model, d_ffn, n_levels, n_heads, n_points)

    tgt = jax.random.normal(k1, (N, Lq, d_model), jnp.float32)
    query_pos = jax.random.normal(k2, (N, Lq, d_model), jnp.float32)
    reference_points = jax.nn.sigmoid(
        jax.random.normal(k3, (N, Lq, n_levels, 2), jnp.float32))
    src = jax.random.normal(k4, (N, Len_in, d_model), jnp.float32)

    out, sampled_points = deformable_decoder_layer(
        params, tgt, query_pos, reference_points, src,
        spatial_shapes, n_heads, n_points)
    jax.block_until_ready((out, sampled_points))

    assert out.shape == (N, Lq, d_model)
    assert sampled_points.shape == (N, Lq, n_heads, n_levels, n_points, 2)
    assert bool(jnp.isfinite(out).all())
    assert bool(jnp.isfinite(sampled_points).all())
    print("KERNEL_OK")
</pallas_src>

<mosaic_0001>
module attributes {stable_mosaic.version = 11 : i64} {
  func.func @kernel(%arg0: i32, %arg1: memref<1x8x32xf32, #tpu.memory_space<vmem>>, %arg2: memref<1x8x32xbf16, #tpu.memory_space<vmem>>, %arg3: memref<1x8x32xf32, #tpu.memory_space<vmem>>, %arg4: memref<1x20x32xbf16, #tpu.memory_space<vmem>>, %arg5: memref<1x32xf32, #tpu.memory_space<vmem>>, %arg6: memref<1x32xf32, #tpu.memory_space<vmem>>, %arg7: memref<32x96xbf16, #tpu.memory_space<vmem>>, %arg8: memref<1x96xf32, #tpu.memory_space<vmem>>, %arg9: memref<32x32xbf16, #tpu.memory_space<vmem>>, %arg10: memref<1x32xf32, #tpu.memory_space<vmem>>, %arg11: memref<1x32xf32, #tpu.memory_space<vmem>>, %arg12: memref<1x32xf32, #tpu.memory_space<vmem>>, %arg13: memref<32x32xbf16, #tpu.memory_space<vmem>>, %arg14: memref<1x32xf32, #tpu.memory_space<vmem>>, %arg15: memref<32x16xbf16, #tpu.memory_space<vmem>>, %arg16: memref<1x16xf32, #tpu.memory_space<vmem>>, %arg17: memref<32x32xbf16, #tpu.memory_space<vmem>>, %arg18: memref<1x32xf32, #tpu.memory_space<vmem>>, %arg19: memref<32x32xbf16, #tpu.memory_space<vmem>>, %arg20: memref<1x32xf32, #tpu.memory_space<vmem>>, %arg21: memref<1x32xf32, #tpu.memory_space<vmem>>, %arg22: memref<1x32xf32, #tpu.memory_space<vmem>>, %arg23: memref<32x64xbf16, #tpu.memory_space<vmem>>, %arg24: memref<1x64xf32, #tpu.memory_space<vmem>>, %arg25: memref<64x32xbf16, #tpu.memory_space<vmem>>, %arg26: memref<1x32xf32, #tpu.memory_space<vmem>>, %arg27: memref<1x32xf32, #tpu.memory_space<vmem>>, %arg28: memref<1x32xf32, #tpu.memory_space<vmem>>, %arg29: memref<1x8x32xf32, #tpu.memory_space<vmem>>, %arg30: memref<1x8x32xf32, #tpu.memory_space<vmem>>) attributes {dimension_semantics = [#tpu.dimension_semantics<parallel>], iteration_bounds = array<i64: 2>, scalar_prefetch = 0 : i64, scratch_operands = 0 : i64, tpu.core_type = #tpu.core_type<tc>, window_params = [{transform_indices = @transform_0, window_bounds = array<i64: 1, 8, 32>}, {transform_indices = @transform_1, window_bounds = array<i64: 1, 8, 32>}, {transform_indices = @transform_2, window_bounds = array<i64: 1, 8, 32>}, {transform_indices = @transform_3, window_bounds = array<i64: 1, 20, 32>}, {pipeline_mode = #tpu.pipeline_mode<synchronous>, transform_indices = @transform_4, window_bounds = array<i64: 1, 32>}, {pipeline_mode = #tpu.pipeline_mode<synchronous>, transform_indices = @transform_5, window_bounds = array<i64: 1, 32>}, {pipeline_mode = #tpu.pipeline_mode<synchronous>, transform_indices = @transform_6, window_bounds = array<i64: 32, 96>}, {pipeline_mode = #tpu.pipeline_mode<synchronous>, transform_indices = @transform_7, window_bounds = array<i64: 1, 96>}, {pipeline_mode = #tpu.pipeline_mode<synchronous>, transform_indices = @transform_8, window_bounds = array<i64: 32, 32>}, {pipeline_mode = #tpu.pipeline_mode<synchronous>, transform_indices = @transform_9, window_bounds = array<i64: 1, 32>}, {pipeline_mode = #tpu.pipeline_mode<synchronous>, transform_indices = @transform_10, window_bounds = array<i64: 1, 32>}, {pipeline_mode = #tpu.pipeline_mode<synchronous>, transform_indices = @transform_11, window_bounds = array<i64: 1, 32>}, {pipeline_mode = #tpu.pipeline_mode<synchronous>, transform_indices = @transform_12, window_bounds = array<i64: 32, 32>}, {pipeline_mode = #tpu.pipeline_mode<synchronous>, transform_indices = @transform_13, window_bounds = array<i64: 1, 32>}, {pipeline_mode = #tpu.pipeline_mode<synchronous>, transform_indices = @transform_14, window_bounds = array<i64: 32, 16>}, {pipeline_mode = #tpu.pipeline_mode<synchronous>, transform_indices = @transform_15, window_bounds = array<i64: 1, 16>}, {pipeline_mode = #tpu.pipeline_mode<synchronous>, transform_indices = @transform_16, window_bounds = array<i64: 32, 32>}, {pipeline_mode = #tpu.pipeline_mode<synchronous>, transform_indices = @transform_17, window_bounds = array<i64: 1, 32>}, {pipeline_mode = #tpu.pipeline_mode<synchronous>, transform_indices = @transform_18, window_bounds = array<i64: 32, 32>}, {pipeline_mode = #tpu.pipeline_mode<synchronous>, transform_indices = @transform_19, window_bounds = array<i64: 1, 32>}, {pipeline_mode = #tpu.pipeline_mode<synchronous>, transform_indices = @transform_20, window_bounds = array<i64: 1, 32>}, {pipeline_mode = #tpu.pipeline_mode<synchronous>, transform_indices = @transform_21, window_bounds = array<i64: 1, 32>}, {pipeline_mode = #tpu.pipeline_mode<synchronous>, transform_indices = @transform_22, window_bounds = array<i64: 32, 64>}, {pipeline_mode = #tpu.pipeline_mode<synchronous>, transform_indices = @transform_23, window_bounds = array<i64: 1, 64>}, {pipeline_mode = #tpu.pipeline_mode<synchronous>, transform_indices = @transform_24, window_bounds = array<i64: 64, 32>}, {pipeline_mode = #tpu.pipeline_mode<synchronous>, transform_indices = @transform_25, window_bounds = array<i64: 1, 32>}, {pipeline_mode = #tpu.pipeline_mode<synchronous>, transform_indices = @transform_26, window_bounds = array<i64: 1, 32>}, {pipeline_mode = #tpu.pipeline_mode<synchronous>, transform_indices = @transform_27, window_bounds = array<i64: 1, 32>}, {transform_indices = @transform_28, window_bounds = array<i64: 1, 8, 32>}, {transform_indices = @transform_29, window_bounds = array<i64: 1, 8, 32>}]} {
    %c0 = arith.constant 0 : index
    %c0_0 = arith.constant 0 : index
    %c0_1 = arith.constant 0 : index
    %0 = vector.load %arg1[%c0, %c0_0, %c0_1] : memref<1x8x32xf32, #tpu.memory_space<vmem>>, vector<1x8x32xf32>
    %1 = vector.shape_cast %0 : vector<1x8x32xf32> to vector<8x32xf32>
    %c0_2 = arith.constant 0 : index
    %c0_3 = arith.constant 0 : index
    %c0_4 = arith.constant 0 : index
    %2 = vector.load %arg2[%c0_2, %c0_3, %c0_4] : memref<1x8x32xbf16, #tpu.memory_space<vmem>>, vector<1x8x32xbf16>
    %3 = vector.shape_cast %2 : vector<1x8x32xbf16> to vector<8x32xbf16>
    %c0_5 = arith.constant 0 : index
    %c0_6 = arith.constant 0 : index
    %c0_7 = arith.constant 0 : index
    %4 = vector.load %arg3[%c0_5, %c0_6, %c0_7] : memref<1x8x32xf32, #tpu.memory_space<vmem>>, vector<1x8x32xf32>
    %5 = vector.shape_cast %4 : vector<1x8x32xf32> to vector<8x32xf32>
    %c0_8 = arith.constant 0 : index
    %c0_9 = arith.constant 0 : index
    %c0_10 = arith.constant 0 : index
    %6 = vector.load %arg4[%c0_8, %c0_9, %c0_10] : memref<1x20x32xbf16, #tpu.memory_space<vmem>>, vector<1x20x32xbf16>
    %7 = vector.shape_cast %6 : vector<1x20x32xbf16> to vector<20x32xbf16>
    %8 = arith.extf %3 : vector<8x32xbf16> to vector<8x32xf32>
    %9 = arith.addf %1, %8 : vector<8x32xf32>
    %c0_11 = arith.constant 0 : index
    %c0_12 = arith.constant 0 : index
    %10 = vector.load %arg7[%c0_11, %c0_12] : memref<32x96xbf16, #tpu.memory_space<vmem>>, vector<32x64xbf16>
    %11 = arith.truncf %9 : vector<8x32xf32> to vector<8x32xbf16>
    %cst = arith.constant dense<0.000000e+00> : vector<8x64xf32>
    %12 = tpu.matmul %11, %10, %cst {dimension_numbers = #tpu.dot_dimension_numbers<[1], [0], [0], [1], [0, 0, 1, 1], [], []>} : vector<8x32xbf16>, vector<32x64xbf16>, vector<8x64xf32> -> vector<8x64xf32>
    %c0_13 = arith.constant 0 : index
    %c0_14 = arith.constant 0 : index
    %13 = vector.load %arg8[%c0_13, %c0_14] : memref<1x96xf32, #tpu.memory_space<vmem>>, vector<1x64xf32>
    %14 = vector.broadcast %13 : vector<1x64xf32> to vector<8x64xf32>
    %15 = arith.addf %12, %14 : vector<8x64xf32>
    %16 = vector.extract_strided_slice %15 {offsets = [0, 0], sizes = [8, 32], strides = [1, 1]} : vector<8x64xf32> to vector<8x32xf32>
    %cst_15 = arith.constant 0.353553385 : f32
    %17 = vector.broadcast %cst_15 : f32 to vector<8x32xf32>
    %18 = arith.mulf %16, %17 : vector<8x32xf32>
    %19 = vector.extract_strided_slice %15 {offsets = [0, 32], sizes = [8, 32], strides = [1, 1]} : vector<8x64xf32> to vector<8x32xf32>
    %c0_16 = arith.constant 0 : index
    %c64 = arith.constant 64 : index
    %20 = vector.load %arg7[%c0_16, %c64] : memref<32x96xbf16, #tpu.memory_space<vmem>>, vector<32x32xbf16>
    %21 = arith.truncf %1 : vector<8x32xf32> to vector<8x32xbf16>
    %cst_17 = arith.constant dense<0.000000e+00> : vector<8x32xf32>
    %22 = tpu.matmul %21, %20, %cst_17 {dimension_numbers = #tpu.dot_dimension_numbers<[1], [0], [0], [1], [0, 0, 1, 1], [], []>} : vector<8x32xbf16>, vector<32x32xbf16>, vector<8x32xf32> -> vector<8x32xf32>
    %c0_18 = arith.constant 0 : index
    %c64_19 = arith.constant 64 : index
    %23 = vector.load %arg8[%c0_18, %c64_19] : memref<1x96xf32, #tpu.memory_space<vmem>>, vector<1x32xf32>
    %24 = vector.broadcast %23 : vector<1x32xf32> to vector<8x32xf32>
    %25 = arith.addf %22, %24 : vector<8x32xf32>
    %cst_20 = arith.constant 0.000000e+00 : f32
    %26 = vector.broadcast %cst_20 : f32 to vector<8x32xf32>
    %27 = vector.extract_strided_slice %18 {offsets = [0, 0], sizes = [8, 8], strides = [1, 1]} : vector<8x32xf32> to vector<8x8xf32>
    %28 = vector.extract_strided_slice %19 {offsets = [0, 0], sizes = [8, 8], strides = [1, 1]} : vector<8x32xf32> to vector<8x8xf32>
    %29 = arith.truncf %27 : vector<8x8xf32> to vector<8x8xbf16>
    %30 = arith.truncf %28 : vector<8x8xf32> to vector<8x8xbf16>
    %cst_21 = arith.constant dense<0.000000e+00> : vector<8x8xf32>
    %31 = tpu.matmul %29, %30, %cst_21 {dimension_numbers = #tpu.dot_dimension_numbers<[1], [1], [0], [0], [0, 0, 1, 0], [], []>} : vector<8x8xbf16>, vector<8x8xbf16>, vector<8x8xf32> -> vector<8x8xf32>
    %cst_22 = arith.constant dense<0xFF800000> : vector<8xf32>
    %32 = vector.multi_reduction <maximumf>, %31, %cst_22 [1] : vector<8x8xf32> to vector<8xf32>
    %33 = vector.shape_cast %32 : vector<8xf32> to vector<8x1xf32>
    %34 = vector.broadcast %33 : vector<8x1xf32> to vector<8x8xf32>
    %35 = arith.subf %31, %34 : vector<8x8xf32>
    %36 = math.exp %35 : vector<8x8xf32>
    %cst_23 = arith.constant dense<0.000000e+00> : vector<8xf32>
    %37 = vector.multi_reduction <add>, %36, %cst_23 [1] : vector<8x8xf32> to vector<8xf32>
    %38 = vector.shape_cast %37 : vector<8xf32> to vector<8x1xf32>
    %39 = vector.broadcast %38 : vector<8x1xf32> to vector<8x8xf32>
    %40 = arith.divf %36, %39 : vector<8x8xf32>
    %41 = vector.extract_strided_slice %25 {offsets = [0, 0], sizes = [8, 8], strides = [1, 1]} : vector<8x32xf32> to vector<8x8xf32>
    %42 = arith.truncf %40 : vector<8x8xf32> to vector<8x8xbf16>
    %43 = arith.truncf %41 : vector<8x8xf32> to vector<8x8xbf16>
    %cst_24 = arith.constant dense<0.000000e+00> : vector<8x8xf32>
    %44 = tpu.matmul %42, %43, %cst_24 {dimension_numbers = #tpu.dot_dimension_numbers<[1], [0], [0], [1], [0, 0, 1, 1], [], []>} : vector<8x8xbf16>, vector<8x8xbf16>, vector<8x8xf32> -> vector<8x8xf32>
    %c0_25 = arith.constant 0 : index
    %c0_26 = arith.constant 0 : index
    %45 = vector.load %arg9[%c0_25, %c0_26] : memref<32x32xbf16, #tpu.memory_space<vmem>>, vector<8x32xbf16>
    %46 = arith.truncf %44 : vector<8x8xf32> to vector<8x8xbf16>
    %cst_27 = arith.constant dense<0.000000e+00> : vector<8x32xf32>
    %47 = tpu.matmul %46, %45, %cst_27 {dimension_numbers = #tpu.dot_dimension_numbers<[1], [0], [0], [1], [0, 0, 1, 1], [], []>} : vector<8x8xbf16>, vector<8x32xbf16>, vector<8x32xf32> -> vector<8x32xf32>
    %48 = arith.addf %26, %47 : vector<8x32xf32>
    %49 = vector.extract_strided_slice %18 {offsets = [0, 8], sizes = [8, 8], strides = [1, 1]} : vector<8x32xf32> to vector<8x8xf32>
    %50 = vector.extract_strided_slice %19 {offsets = [0, 8], sizes = [8, 8], strides = [1, 1]} : vector<8x32xf32> to vector<8x8xf32>
    %51 = arith.truncf %49 : vector<8x8xf32> to vector<8x8xbf16>
    %52 = arith.truncf %50 : vector<8x8xf32> to vector<8x8xbf16>
    %cst_28 = arith.constant dense<0.000000e+00> : vector<8x8xf32>
    %53 = tpu.matmul %51, %52, %cst_28 {dimension_numbers = #tpu.dot_dimension_numbers<[1], [1], [0], [0], [0, 0, 1, 0], [], []>} : vector<8x8xbf16>, vector<8x8xbf16>, vector<8x8xf32> -> vector<8x8xf32>
    %cst_29 = arith.constant dense<0xFF800000> : vector<8xf32>
    %54 = vector.multi_reduction <maximumf>, %53, %cst_29 [1] : vector<8x8xf32> to vector<8xf32>
    %55 = vector.shape_cast %54 : vector<8xf32> to vector<8x1xf32>
    %56 = vector.broadcast %55 : vector<8x1xf32> to vector<8x8xf32>
    %57 = arith.subf %53, %56 : vector<8x8xf32>
    %58 = math.exp %57 : vector<8x8xf32>
    %cst_30 = arith.constant dense<0.000000e+00> : vector<8xf32>
    %59 = vector.multi_reduction <add>, %58, %cst_30 [1] : vector<8x8xf32> to vector<8xf32>
    %60 = vector.shape_cast %59 : vector<8xf32> to vector<8x1xf32>
    %61 = vector.broadcast %60 : vector<8x1xf32> to vector<8x8xf32>
    %62 = arith.divf %58, %61 : vector<8x8xf32>
    %63 = vector.extract_strided_slice %25 {offsets = [0, 8], sizes = [8, 8], strides = [1, 1]} : vector<8x32xf32> to vector<8x8xf32>
    %64 = arith.truncf %62 : vector<8x8xf32> to vector<8x8xbf16>
    %65 = arith.truncf %63 : vector<8x8xf32> to vector<8x8xbf16>
    %cst_31 = arith.constant dense<0.000000e+00> : vector<8x8xf32>
    %66 = tpu.matmul %64, %65, %cst_31 {dimension_numbers = #tpu.dot_dimension_numbers<[1], [0], [0], [1], [0, 0, 1, 1], [], []>} : vector<8x8xbf16>, vector<8x8xbf16>, vector<8x8xf32> -> vector<8x8xf32>
    %c8 = arith.constant 8 : index
    %c0_32 = arith.constant 0 : index
    %67 = vector.load %arg9[%c8, %c0_32] : memref<32x32xbf16, #tpu.memory_space<vmem>>, vector<8x32xbf16>
    %68 = arith.truncf %66 : vector<8x8xf32> to vector<8x8xbf16>
    %cst_33 = arith.constant dense<0.000000e+00> : vector<8x32xf32>
    %69 = tpu.matmul %68, %67, %cst_33 {dimension_numbers = #tpu.dot_dimension_numbers<[1], [0], [0], [1], [0, 0, 1, 1], [], []>} : vector<8x8xbf16>, vector<8x32xbf16>, vector<8x32xf32> -> vector<8x32xf32>
    %70 = arith.addf %48, %69 : vector<8x32xf32>
    %71 = vector.extract_strided_slice %18 {offsets = [0, 16], sizes = [8, 8], strides = [1, 1]} : vector<8x32xf32> to vector<8x8xf32>
    %72 = vector.extract_strided_slice %19 {offsets = [0, 16], sizes = [8, 8], strides = [1, 1]} : vector<8x32xf32> to vector<8x8xf32>
    %73 = arith.truncf %71 : vector<8x8xf32> to vector<8x8xbf16>
    %74 = arith.truncf %72 : vector<8x8xf32> to vector<8x8xbf16>
    %cst_34 = arith.constant dense<0.000000e+00> : vector<8x8xf32>
    %75 = tpu.matmul %73, %74, %cst_34 {dimension_numbers = #tpu.dot_dimension_numbers<[1], [1], [0], [0], [0, 0, 1, 0], [], []>} : vector<8x8xbf16>, vector<8x8xbf16>, vector<8x8xf32> -> vector<8x8xf32>
    %cst_35 = arith.constant dense<0xFF800000> : vector<8xf32>
    %76 = vector.multi_reduction <maximumf>, %75, %cst_35 [1] : vector<8x8xf32> to vector<8xf32>
    %77 = vector.shape_cast %76 : vector<8xf32> to vector<8x1xf32>
    %78 = vector.broadcast %77 : vector<8x1xf32> to vector<8x8xf32>
    %79 = arith.subf %75, %78 : vector<8x8xf32>
    %80 = math.exp %79 : vector<8x8xf32>
    %cst_36 = arith.constant dense<0.000000e+00> : vector<8xf32>
    %81 = vector.multi_reduction <add>, %80, %cst_36 [1] : vector<8x8xf32> to vector<8xf32>
    %82 = vector.shape_cast %81 : vector<8xf32> to vector<8x1xf32>
    %83 = vector.broadcast %82 : vector<8x1xf32> to vector<8x8xf32>
    %84 = arith.divf %80, %83 : vector<8x8xf32>
    %85 = vector.extract_strided_slice %25 {offsets = [0, 16], sizes = [8, 8], strides = [1, 1]} : vector<8x32xf32> to vector<8x8xf32>
    %86 = arith.truncf %84 : vector<8x8xf32> to vector<8x8xbf16>
    %87 = arith.truncf %85 : vector<8x8xf32> to vector<8x8xbf16>
    %cst_37 = arith.constant dense<0.000000e+00> : vector<8x8xf32>
    %88 = tpu.matmul %86, %87, %cst_37 {dimension_numbers = #tpu.dot_dimension_numbers<[1], [0], [0], [1], [0, 0, 1, 1], [], []>} : vector<8x8xbf16>, vector<8x8xbf16>, vector<8x8xf32> -> vector<8x8xf32>
    %c16 = arith.constant 16 : index
    %c0_38 = arith.constant 0 : index
    %89 = vector.load %arg9[%c16, %c0_38] : memref<32x32xbf16, #tpu.memory_space<vmem>>, vector<8x32xbf16>
    %90 = arith.truncf %88 : vector<8x8xf32> to vector<8x8xbf16>
    %cst_39 = arith.constant dense<0.000000e+00> : vector<8x32xf32>
    %91 = tpu.matmul %90, %89, %cst_39 {dimension_numbers = #tpu.dot_dimension_numbers<[1], [0], [0], [1], [0, 0, 1, 1], [], []>} : vector<8x8xbf16>, vector<8x32xbf16>, vector<8x32xf32> -> vector<8x32xf32>
    %92 = arith.addf %70, %91 : vector<8x32xf32>
    %93 = vector.extract_strided_slice %18 {offsets = [0, 24], sizes = [8, 8], strides = [1, 1]} : vector<8x32xf32> to vector<8x8xf32>
    %94 = vector.extract_strided_slice %19 {offsets = [0, 24], sizes = [8, 8], strides = [1, 1]} : vector<8x32xf32> to vector<8x8xf32>
    %95 = arith.truncf %93 : vector<8x8xf32> to vector<8x8xbf16>
    %96 = arith.truncf %94 : vector<8x8xf32> to vector<8x8xbf16>
    %cst_40 = arith.constant dense<0.000000e+00> : vector<8x8xf32>
    %97 = tpu.matmul %95, %96, %cst_40 {dimension_numbers = #tpu.dot_dimension_numbers<[1], [1], [0], [0], [0, 0, 1, 0], [], []>} : vector<8x8xbf16>, vector<8x8xbf16>, vector<8x8xf32> -> vector<8x8xf32>
    %cst_41 = arith.constant dense<0xFF800000> : vector<8xf32>
    %98 = vector.multi_reduction <maximumf>, %97, %cst_41 [1] : vector<8x8xf32> to vector<8xf32>
    %99 = vector.shape_cast %98 : vector<8xf32> to vector<8x1xf32>
    %100 = vector.broadcast %99 : vector<8x1xf32> to vector<8x8xf32>
    %101 = arith.subf %97, %100 : vector<8x8xf32>
    %102 = math.exp %101 : vector<8x8xf32>
    %cst_42 = arith.constant dense<0.000000e+00> : vector<8xf32>
    %103 = vector.multi_reduction <add>, %102, %cst_42 [1] : vector<8x8xf32> to vector<8xf32>
    %104 = vector.shape_cast %103 : vector<8xf32> to vector<8x1xf32>
    %105 = vector.broadcast %104 : vector<8x1xf32> to vector<8x8xf32>
    %106 = arith.divf %102, %105 : vector<8x8xf32>
    %107 = vector.extract_strided_slice %25 {offsets = [0, 24], sizes = [8, 8], strides = [1, 1]} : vector<8x32xf32> to vector<8x8xf32>
    %108 = arith.truncf %106 : vector<8x8xf32> to vector<8x8xbf16>
    %109 = arith.truncf %107 : vector<8x8xf32> to vector<8x8xbf16>
    %cst_43 = arith.constant dense<0.000000e+00> : vector<8x8xf32>
    %110 = tpu.matmul %108, %109, %cst_43 {dimension_numbers = #tpu.dot_dimension_numbers<[1], [0], [0], [1], [0, 0, 1, 1], [], []>} : vector<8x8xbf16>, vector<8x8xbf16>, vector<8x8xf32> -> vector<8x8xf32>
    %c24 = arith.constant 24 : index
    %c0_44 = arith.constant 0 : index
    %111 = vector.load %arg9[%c24, %c0_44] : memref<32x32xbf16, #tpu.memory_space<vmem>>, vector<8x32xbf16>
    %112 = arith.truncf %110 : vector<8x8xf32> to vector<8x8xbf16>
    %cst_45 = arith.constant dense<0.000000e+00> : vector<8x32xf32>
    %113 = tpu.matmul %112, %111, %cst_45 {dimension_numbers = #tpu.dot_dimension_numbers<[1], [0], [0], [1], [0, 0, 1, 1], [], []>} : vector<8x8xbf16>, vector<8x32xbf16>, vector<8x32xf32> -> vector<8x32xf32>
    %114 = arith.addf %92, %113 : vector<8x32xf32>
    %c0_46 = arith.constant 0 : index
    %c0_47 = arith.constant 0 : index
    %115 = vector.load %arg10[%c0_46, %c0_47] : memref<1x32xf32, #tpu.memory_space<vmem>>, vector<1x32xf32>
    %116 = vector.broadcast %115 : vector<1x32xf32> to vector<8x32xf32>
    %117 = arith.addf %114, %116 : vector<8x32xf32>
    %118 = arith.addf %1, %117 : vector<8x32xf32>
    %cst_48 = arith.constant dense<0.000000e+00> : vector<8xf32>
    %119 = vector.multi_reduction <add>, %118, %cst_48 [1] : vector<8x32xf32> to vector<8xf32>
    %120 = vector.shape_cast %119 : vector<8xf32> to vector<8x1xf32>
    %cst_49 = arith.constant 3.200000e+01 : f32
    %121 = vector.broadcast %cst_49 : f32 to vector<8x1xf32>
    %122 = arith.divf %120, %121 : vector<8x1xf32>
    %123 = vector.broadcast %122 : vector<8x1xf32> to vector<8x32xf32>
    %124 = arith.subf %118, %123 : vector<8x32xf32>
    %125 = arith.mulf %124, %124 : vector<8x32xf32>
    %cst_50 = arith.constant dense<0.000000e+00> : vector<8xf32>
    %126 = vector.multi_reduction <add>, %125, %cst_50 [1] : vector<8x32xf32> to vector<8xf32>
    %127 = vector.shape_cast %126 : vector<8xf32> to vector<8x1xf32>
    %cst_51 = arith.constant 3.200000e+01 : f32
    %128 = vector.broadcast %cst_51 : f32 to vector<8x1xf32>
    %129 = arith.divf %127, %128 : vector<8x1xf32>
    %cst_52 = arith.constant 9.99999974E-6 : f32
    %130 = vector.broadcast %cst_52 : f32 to vector<8x1xf32>
    %131 = arith.addf %129, %130 : vector<8x1xf32>
    %132 = math.rsqrt %131 : vector<8x1xf32>
    %133 = vector.broadcast %132 : vector<8x1xf32> to vector<8x32xf32>
    %134 = arith.mulf %124, %133 : vector<8x32xf32>
    %c0_53 = arith.constant 0 : index
    %c0_54 = arith.constant 0 : index
    %135 = vector.load %arg11[%c0_53, %c0_54] : memref<1x32xf32, #tpu.memory_space<vmem>>, vector<1x32xf32>
    %136 = vector.broadcast %135 : vector<1x32xf32> to vector<8x32xf32>
    %137 = arith.mulf %134, %136 : vector<8x32xf32>
    %c0_55 = arith.constant 0 : index
    %c0_56 = arith.constant 0 : index
    %138 = vector.load %arg12[%c0_55, %c0_56] : memref<1x32xf32, #tpu.memory_space<vmem>>, vector<1x32xf32>
    %139 = vector.broadcast %138 : vector<1x32xf32> to vector<8x32xf32>
    %140 = arith.addf %137, %139 : vector<8x32xf32>
    %141 = arith.extf %3 : vector<8x32xbf16> to vector<8x32xf32>
    %142 = arith.addf %140, %141 : vector<8x32xf32>
    %c0_57 = arith.constant 0 : index
    %c0_58 = arith.constant 0 : index
    %143 = vector.load %arg17[%c0_57, %c0_58] : memref<32x32xbf16, #tpu.memory_space<vmem>>, vector<32x32xbf16>
    %cst_59 = arith.constant dense<0.000000e+00> : vector<20x32xf32>
    %144 = tpu.matmul %7, %143, %cst_59 {dimension_numbers = #tpu.dot_dimension_numbers<[1], [0], [0], [1], [0, 0, 1, 1], [], []>} : vector<20x32xbf16>, vector<32x32xbf16>, vector<20x32xf32> -> vector<20x32xf32>
    %c0_60 = arith.constant 0 : index
    %c0_61 = arith.constant 0 : index
    %145 = vector.load %arg18[%c0_60, %c0_61] : memref<1x32xf32, #tpu.memory_space<vmem>>, vector<1x32xf32>
    %146 = vector.broadcast %145 : vector<1x32xf32> to vector<20x32xf32>
    %147 = arith.addf %144, %146 : vector<20x32xf32>
    %148 = arith.truncf %147 : vector<20x32xf32> to vector<20x32xbf16>
    %c0_62 = arith.constant 0 : index
    %c0_63 = arith.constant 0 : index
    %149 = vector.load %arg13[%c0_62, %c0_63] : memref<32x32xbf16, #tpu.memory_space<vmem>>, vector<32x32xbf16>
    %150 = arith.truncf %142 : vector<8x32xf32> to vector<8x32xbf16>
    %cst_64 = arith.constant dense<0.000000e+00> : vector<8x32xf32>
    %151 = tpu.matmul %150, %149, %cst_64 {dimension_numbers = #tpu.dot_dimension_numbers<[1], [0], [0], [1], [0, 0, 1, 1], [], []>} : vector<8x32xbf16>, vector<32x32xbf16>, vector<8x32xf32> -> vector<8x32xf32>
    %c0_65 = arith.constant 0 : index
    %c0_66 = arith.constant 0 : index
    %152 = vector.load %arg14[%c0_65, %c0_66] : memref<1x32xf32, #tpu.memory_space<vmem>>, vector<1x32xf32>
    %153 = vector.broadcast %152 : vector<1x32xf32> to vector<8x32xf32>
    %154 = arith.addf %151, %153 : vector<8x32xf32>
    %c0_67 = arith.constant 0 : index
    %c0_68 = arith.constant 0 : index
    %155 = vector.load %arg15[%c0_67, %c0_68] : memref<32x16xbf16, #tpu.memory_space<vmem>>, vector<32x16xbf16>
    %156 = arith.truncf %142 : vector<8x32xf32> to vector<8x32xbf16>
    %cst_69 = arith.constant dense<0.000000e+00> : vector<8x16xf32>
    %157 = tpu.matmul %156, %155, %cst_69 {dimension_numbers = #tpu.dot_dimension_numbers<[1], [0], [0], [1], [0, 0, 1, 1], [], []>} : vector<8x32xbf16>, vector<32x16xbf16>, vector<8x16xf32> -> vector<8x16xf32>
    %c0_70 = arith.constant 0 : index
    %c0_71 = arith.constant 0 : index
    %158 = vector.load %arg16[%c0_70, %c0_71] : memref<1x16xf32, #tpu.memory_space<vmem>>, vector<1x16xf32>
    %159 = vector.broadcast %158 : vector<1x16xf32> to vector<8x16xf32>
    %160 = arith.addf %157, %159 : vector<8x16xf32>
    %c0_72 = arith.constant 0 : index
    %c0_73 = arith.constant 0 : index
    %161 = vector.load %arg5[%c0_72, %c0_73] : memref<1x32xf32, #tpu.memory_space<vmem>>, vector<1x32xf32>
    %162 = vector.broadcast %161 : vector<1x32xf32> to vector<8x32xf32>
    %163 = arith.mulf %154, %162 : vector<8x32xf32>
    %164 = arith.addf %5, %163 : vector<8x32xf32>
    %c0_74 = arith.constant 0 : index
    %c0_75 = arith.constant 0 : index
    %c0_76 = arith.constant 0 : index
    %165 = vector.load %arg30[%c0_74, %c0_75, %c0_76] : memref<1x8x32xf32, #tpu.memory_space<vmem>>, vector<1x8x32xf32>
    %166 = vector.shape_cast %165 : vector<1x8x32xf32> to vector<8x32xf32>
    %167 = vector.shape_cast %164 : vector<8x32xf32> to vector<1x8x32xf32>
    tpu.vector_store %arg30[%c0_74, %c0_75, %c0_76], %167 {strides = array<i32>} : memref<1x8x32xf32, #tpu.memory_space<vmem>>, vector<1x8x32xf32>,
    %c0_77 = arith.constant 0 : index
    %c0_78 = arith.constant 0 : index
    %168 = vector.load %arg6[%c0_77, %c0_78] : memref<1x32xf32, #tpu.memory_space<vmem>>, vector<1x32xf32>
    %169 = vector.broadcast %168 : vector<1x32xf32> to vector<8x32xf32>
    %170 = arith.mulf %164, %169 : vector<8x32xf32>
    %cst_79 = arith.constant 5.000000e-01 : f32
    %171 = vector.broadcast %cst_79 : f32 to vector<8x32xf32>
    %172 = arith.subf %170, %171 : vector<8x32xf32>
    %173 = math.floor %172 : vector<8x32xf32>
    %174 = arith.subf %172, %173 : vector<8x32xf32>
    %175 = arith.fptosi %173 : vector<8x32xf32> to vector<8x32xi32>
    %cst_80 = arith.constant dense<0xFF800000> : vector<8xf32>
    %176 = vector.multi_reduction <maximumf>, %160, %cst_80 [1] : vector<8x16xf32> to vector<8xf32>
    %177 = vector.shape_cast %176 : vector<8xf32> to vector<8x1xf32>
    %178 = vector.broadcast %177 : vector<8x1xf32> to vector<8x16xf32>
    %179 = arith.subf %160, %178 : vector<8x16xf32>
    %180 = math.exp %179 : vector<8x16xf32>
    %181 = vector.extract_strided_slice %180 {offsets = [0, 0], sizes = [8, 4], strides = [1, 1]} : vector<8x16xf32> to vector<8x4xf32>
    %cst_81 = arith.constant dense<0.000000e+00> : vector<8xf32>
    %182 = vector.multi_reduction <add>, %181, %cst_81 [1] : vector<8x4xf32> to vector<8xf32>
    %183 = vector.shape_cast %182 : vector<8xf32> to vector<8x1xf32>
    %cst_82 = arith.constant 9.99999968E-21 : f32
    %184 = vector.broadcast %cst_82 : f32 to vector<8x1xf32>
    %185 = arith.maximumf %183, %184 : vector<8x1xf32>
    %cst_83 = arith.constant 1.000000e+00 : f32
    %186 = vector.broadcast %cst_83 : f32 to vector<8x1xf32>
    %187 = arith.divf %186, %185 : vector<8x1xf32>
    %188 = vector.extract_strided_slice %180 {offsets = [0, 4], sizes = [8, 4], strides = [1, 1]} : vector<8x16xf32> to vector<8x4xf32>
    %cst_84 = arith.constant dense<0.000000e+00> : vector<8xf32>
    %189 = vector.multi_reduction <add>, %188, %cst_84 [1] : vector<8x4xf32> to vector<8xf32>
    %190 = vector.shape_cast %189 : vector<8xf32> to vector<8x1xf32>
    %cst_85 = arith.constant 9.99999968E-21 : f32
    %191 = vector.broadcast %cst_85 : f32 to vector<8x1xf32>
    %192 = arith.maximumf %190, %191 : vector<8x1xf32>
    %cst_86 = arith.constant 1.000000e+00 : f32
    %193 = vector.broadcast %cst_86 : f32 to vector<8x1xf32>
    %194 = arith.divf %193, %192 : vector<8x1xf32>
    %195 = vector.extract_strided_slice %180 {offsets = [0, 8], sizes = [8, 4], strides = [1, 1]} : vector<8x16xf32> to vector<8x4xf32>
    %cst_87 = arith.constant dense<0.000000e+00> : vector<8xf32>
    %196 = vector.multi_reduction <add>, %195, %cst_87 [1] : vector<8x4xf32> to vector<8xf32>
    %197 = vector.shape_cast %196 : vector<8xf32> to vector<8x1xf32>
    %cst_88 = arith.constant 9.99999968E-21 : f32
    %198 = vector.broadcast %cst_88 : f32 to vector<8x1xf32>
    %199 = arith.maximumf %197, %198 : vector<8x1xf32>
    %cst_89 = arith.constant 1.000000e+00 : f32
    %200 = vector.broadcast %cst_89 : f32 to vector<8x1xf32>
    %201 = arith.divf %200, %199 : vector<8x1xf32>
    %202 = vector.extract_strided_slice %180 {offsets = [0, 12], sizes = [8, 4], strides = [1, 1]} : vector<8x16xf32> to vector<8x4xf32>
    %cst_90 = arith.constant dense<0.000000e+00> : vector<8xf32>
    %203 = vector.multi_reduction <add>, %202, %cst_90 [1] : vector<8x4xf32> to vector<8xf32>
    %204 = vector.shape_cast %203 : vector<8xf32> to vector<8x1xf32>
    %cst_91 = arith.constant 9.99999968E-21 : f32
    %205 = vector.broadcast %cst_91 : f32 to vector<8x1xf32>
    %206 = arith.maximumf %204, %205 : vector<8x1xf32>
    %cst_92 = arith.constant 1.000000e+00 : f32
    %207 = vector.broadcast %cst_92 : f32 to vector<8x1xf32>
    %208 = arith.divf %207, %206 : vector<8x1xf32>
    %cst_93 = arith.constant 0.000000e+00 : f32
    %209 = vector.broadcast %cst_93 : f32 to vector<8x8xf32>
    %cst_94 = arith.constant 0.000000e+00 : f32
    %210 = vector.broadcast %cst_94 : f32 to vector<8x8xf32>
    %cst_95 = arith.constant 0.000000e+00 : f32
    %211 = vector.broadcast %cst_95 : f32 to vector<8x8xf32>
    %cst_96 = arith.constant 0.000000e+00 : f32
    %212 = vector.broadcast %cst_96 : f32 to vector<8x8xf32>
    %213 = tpu.iota {dimensions = array<i32: 1>} : vector<8x4xi32>
    %214 = tpu.iota {dimensions = array<i32: 1>} : vector<8x4xi32>
    %215 = vector.extract_strided_slice %148 {offsets = [0, 0], sizes = [16, 32], strides = [1, 1]} : vector<20x32xbf16> to vector<16x32xbf16>
    %cst_97 = arith.constant 0.000000e+00 : f32
    %216 = vector.broadcast %cst_97 : f32 to vector<8x4x4xf32>
    %217 = vector.extract_strided_slice %175 {offsets = [0, 0], sizes = [8, 1], strides = [1, 1]} : vector<8x32xi32> to vector<8x1xi32>
    %218 = vector.extract_strided_slice %175 {offsets = [0, 1], sizes = [8, 1], strides = [1, 1]} : vector<8x32xi32> to vector<8x1xi32>
    %219 = vector.extract_strided_slice %174 {offsets = [0, 0], sizes = [8, 1], strides = [1, 1]} : vector<8x32xf32> to vector<8x1xf32>
    %220 = vector.extract_strided_slice %174 {offsets = [0, 1], sizes = [8, 1], strides = [1, 1]} : vector<8x32xf32> to vector<8x1xf32>
    %221 = vector.extract_strided_slice %180 {offsets = [0, 0], sizes = [8, 1], strides = [1, 1]} : vector<8x16xf32> to vector<8x1xf32>
    %222 = arith.mulf %221, %187 : vector<8x1xf32>
    %223 = vector.broadcast %217 : vector<8x1xi32> to vector<8x4xi32>
    %224 = arith.cmpi eq, %213, %223 : vector<8x4xi32>
    %cst_98 = arith.constant 1.000000e+00 : f32
    %225 = vector.broadcast %cst_98 : f32 to vector<8x1xf32>
    %226 = arith.subf %225, %219 : vector<8x1xf32>
    %cst_99 = arith.constant 0.000000e+00 : f32
    %227 = vector.shape_cast %226 : vector<8x1xf32> to vector<8x1xf32>
    %228 = vector.broadcast %227 : vector<8x1xf32> to vector<8x4xf32>
    %229 = vector.broadcast %cst_99 : f32 to vector<8x4xf32>
    %230 = arith.select %224, %228, %229 : vector<8x4xi1>, vector<8x4xf32>
    %c1_i32 = arith.constant 1 : i32
    %231 = vector.broadcast %c1_i32 : i32 to vector<8x1xi32>
    %232 = arith.addi %217, %231 : vector<8x1xi32>
    %233 = vector.broadcast %232 : vector<8x1xi32> to vector<8x4xi32>
    %234 = arith.cmpi eq, %213, %233 : vector<8x4xi32>
    %cst_100 = arith.constant 0.000000e+00 : f32
    %235 = vector.shape_cast %219 : vector<8x1xf32> to vector<8x1xf32>
    %236 = vector.broadcast %235 : vector<8x1xf32> to vector<8x4xf32>
    %237 = vector.broadcast %cst_100 : f32 to vector<8x4xf32>
    %238 = arith.select %234, %236, %237 : vector<8x4xi1>, vector<8x4xf32>
    %239 = arith.addf %230, %238 : vector<8x4xf32>
    %240 = vector.broadcast %218 : vector<8x1xi32> to vector<8x4xi32>
    %241 = arith.cmpi eq, %214, %240 : vector<8x4xi32>
    %cst_101 = arith.constant 1.000000e+00 : f32
    %242 = vector.broadcast %cst_101 : f32 to vector<8x1xf32>
    %243 = arith.subf %242, %220 : vector<8x1xf32>
    %cst_102 = arith.constant 0.000000e+00 : f32
    %244 = vector.shape_cast %243 : vector<8x1xf32> to vector<8x1xf32>
    %245 = vector.broadcast %244 : vector<8x1xf32> to vector<8x4xf32>
    %246 = vector.broadcast %cst_102 : f32 to vector<8x4xf32>
    %247 = arith.select %241, %245, %246 : vector<8x4xi1>, vector<8x4xf32>
    %c1_i32_103 = arith.constant 1 : i32
    %248 = vector.broadcast %c1_i32_103 : i32 to vector<8x1xi32>
    %249 = arith.addi %218, %248 : vector<8x1xi32>
    %250 = vector.broadcast %249 : vector<8x1xi32> to vector<8x4xi32>
    %251 = arith.cmpi eq, %214, %250 : vector<8x4xi32>
    %cst_104 = arith.constant 0.000000e+00 : f32
    %252 = vector.shape_cast %220 : vector<8x1xf32> to vector<8x1xf32>
    %253 = vector.broadcast %252 : vector<8x1xf32> to vector<8x4xf32>
    %254 = vector.broadcast %cst_104 : f32 to vector<8x4xf32>
    %255 = arith.select %251, %253, %254 : vector<8x4xi1>, vector<8x4xf32>
    %256 = arith.addf %247, %255 : vector<8x4xf32>
    %257 = vector.broadcast %222 : vector<8x1xf32> to vector<8x4xf32>
    %258 = arith.mulf %256, %257 : vector<8x4xf32>
    %259 = vector.shape_cast %258 : vector<8x4xf32> to vector<8x4x1xf32>
    %260 = vector.shape_cast %239 : vector<8x4xf32> to vector<8x1x4xf32>
    %261 = vector.broadcast %259 : vector<8x4x1xf32> to vector<8x4x4xf32>
    %262 = vector.broadcast %260 : vector<8x1x4xf32> to vector<8x4x4xf32>
    %263 = arith.mulf %261, %262 : vector<8x4x4xf32>
    %264 = arith.addf %216, %263 : vector<8x4x4xf32>
    %265 = vector.extract_strided_slice %175 {offsets = [0, 2], sizes = [8, 1], strides = [1, 1]} : vector<8x32xi32> to vector<8x1xi32>
    %266 = vector.extract_strided_slice %175 {offsets = [0, 3], sizes = [8, 1], strides = [1, 1]} : vector<8x32xi32> to vector<8x1xi32>
    %267 = vector.extract_strided_slice %174 {offsets = [0, 2], sizes = [8, 1], strides = [1, 1]} : vector<8x32xf32> to vector<8x1xf32>
    %268 = vector.extract_strided_slice %174 {offsets = [0, 3], sizes = [8, 1], strides = [1, 1]} : vector<8x32xf32> to vector<8x1xf32>
    %269 = vector.extract_strided_slice %180 {offsets = [0, 1], sizes = [8, 1], strides = [1, 1]} : vector<8x16xf32> to vector<8x1xf32>
    %270 = arith.mulf %269, %187 : vector<8x1xf32>
    %271 = vector.broadcast %265 : vector<8x1xi32> to vector<8x4xi32>
    %272 = arith.cmpi eq, %213, %271 : vector<8x4xi32>
    %cst_105 = arith.constant 1.000000e+00 : f32
    %273 = vector.broadcast %cst_105 : f32 to vector<8x1xf32>
    %274 = arith.subf %273, %267 : vector<8x1xf32>
    %cst_106 = arith.constant 0.000000e+00 : f32
    %275 = vector.shape_cast %274 : vector<8x1xf32> to vector<8x1xf32>
    %276 = vector.broadcast %275 : vector<8x1xf32> to vector<8x4xf32>
    %277 = vector.broadcast %cst_106 : f32 to vector<8x4xf32>
    %278 = arith.select %272, %276, %277 : vector<8x4xi1>, vector<8x4xf32>
    %c1_i32_107 = arith.constant 1 : i32
    %279 = vector.broadcast %c1_i32_107 : i32 to vector<8x1xi32>
    %280 = arith.addi %265, %279 : vector<8x1xi32>
    %281 = vector.broadcast %280 : vector<8x1xi32> to vector<8x4xi32>
    %282 = arith.cmpi eq, %213, %281 : vector<8x4xi32>
    %cst_108 = arith.constant 0.000000e+00 : f32
    %283 = vector.shape_cast %267 : vector<8x1xf32> to vector<8x1xf32>
    %284 = vector.broadcast %283 : vector<8x1xf32> to vector<8x4xf32>
    %285 = vector.broadcast %cst_108 : f32 to vector<8x4xf32>
    %286 = arith.select %282, %284, %285 : vector<8x4xi1>, vector<8x4xf32>
    %287 = arith.addf %278, %286 : vector<8x4xf32>
    %288 = vector.broadcast %266 : vector<8x1xi32> to vector<8x4xi32>
    %289 = arith.cmpi eq, %214, %288 : vector<8x4xi32>
    %cst_109 = arith.constant 1.000000e+00 : f32
    %290 = vector.broadcast %cst_109 : f32 to vector<8x1xf32>
    %291 = arith.subf %290, %268 : vector<8x1xf32>
    %cst_110 = arith.constant 0.000000e+00 : f32
    %292 = vector.shape_cast %291 : vector<8x1xf32> to vector<8x1xf32>
    %293 = vector.broadcast %292 : vector<8x1xf32> to vector<8x4xf32>
    %294 = vector.broadcast %cst_110 : f32 to vector<8x4xf32>
    %295 = arith.select %289, %293, %294 : vector<8x4xi1>, vector<8x4xf32>
    %c1_i32_111 = arith.constant 1 : i32
    %296 = vector.broadcast %c1_i32_111 : i32 to vector<8x1xi32>
    %297 = arith.addi %266, %296 : vector<8x1xi32>
    %298 = vector.broadcast %297 : vector<8x1xi32> to vector<8x4xi32>
    %299 = arith.cmpi eq, %214, %298 : vector<8x4xi32>
    %cst_112 = arith.constant 0.000000e+00 : f32
    %300 = vector.shape_cast %268 : vector<8x1xf32> to vector<8x1xf32>
    %301 = vector.broadcast %300 : vector<8x1xf32> to vector<8x4xf32>
    %302 = vector.broadcast %cst_112 : f32 to vector<8x4xf32>
    %303 = arith.select %299, %301, %302 : vector<8x4xi1>, vector<8x4xf32>
    %304 = arith.addf %295, %303 : vector<8x4xf32>
    %305 = vector.broadcast %270 : vector<8x1xf32> to vector<8x4xf32>
    %306 = arith.mulf %304, %305 : vector<8x4xf32>
    %307 = vector.shape_cast %306 : vector<8x4xf32> to vector<8x4x1xf32>
    %308 = vector.shape_cast %287 : vector<8x4xf32> to vector<8x1x4xf32>
    %309 = vector.broadcast %307 : vector<8x4x1xf32> to vector<8x4x4xf32>
    %310 = vector.broadcast %308 : vector<8x1x4xf32> to vector<8x4x4xf32>
    %311 = arith.mulf %309, %310 : vector<8x4x4xf32>
    %312 = arith.addf %264, %311 : vector<8x4x4xf32>
    %313 = vector.shape_cast %312 : vector<8x4x4xf32> to vector<8x16xf32>
    %314 = arith.truncf %313 : vector<8x16xf32> to vector<8x16xbf16>
    %315 = vector.extract_strided_slice %215 {offsets = [0, 0], sizes = [16, 8], strides = [1, 1]} : vector<16x32xbf16> to vector<16x8xbf16>
    %cst_113 = arith.constant dense<0.000000e+00> : vector<8x8xf32>
    %316 = tpu.matmul %314, %315, %cst_113 {dimension_numbers = #tpu.dot_dimension_numbers<[1], [0], [0], [1], [0, 0, 1, 1], [], []>} : vector<8x16xbf16>, vector<16x8xbf16>, vector<8x8xf32> -> vector<8x8xf32>
    %317 = arith.addf %209, %316 : vector<8x8xf32>
    %cst_114 = arith.constant 0.000000e+00 : f32
    %318 = vector.broadcast %cst_114 : f32 to vector<8x4x4xf32>
    %319 = vector.extract_strided_slice %175 {offsets = [0, 8], sizes = [8, 1], strides = [1, 1]} : vector<8x32xi32> to vector<8x1xi32>
    %320 = vector.extract_strided_slice %175 {offsets = [0, 9], sizes = [8, 1], strides = [1, 1]} : vector<8x32xi32> to vector<8x1xi32>
    %321 = vector.extract_strided_slice %174 {offsets = [0, 8], sizes = [8, 1], strides = [1, 1]} : vector<8x32xf32> to vector<8x1xf32>
    %322 = vector.extract_strided_slice %174 {offsets = [0, 9], sizes = [8, 1], strides = [1, 1]} : vector<8x32xf32> to vector<8x1xf32>
    %323 = vector.extract_strided_slice %180 {offsets = [0, 4], sizes = [8, 1], strides = [1, 1]} : vector<8x16xf32> to vector<8x1xf32>
    %324 = arith.mulf %323, %194 : vector<8x1xf32>
    %325 = vector.broadcast %319 : vector<8x1xi32> to vector<8x4xi32>
    %326 = arith.cmpi eq, %213, %325 : vector<8x4xi32>
    %cst_115 = arith.constant 1.000000e+00 : f32
    %327 = vector.broadcast %cst_115 : f32 to vector<8x1xf32>
    %328 = arith.subf %327, %321 : vector<8x1xf32>
    %cst_116 = arith.constant 0.000000e+00 : f32
    %329 = vector.shape_cast %328 : vector<8x1xf32> to vector<8x1xf32>
    %330 = vector.broadcast %329 : vector<8x1xf32> to vector<8x4xf32>
    %331 = vector.broadcast %cst_116 : f32 to vector<8x4xf32>
    %332 = arith.select %326, %330, %331 : vector<8x4xi1>, vector<8x4xf32>
    %c1_i32_117 = arith.constant 1 : i32
    %333 = vector.broadcast %c1_i32_117 : i32 to vector<8x1xi32>
    %334 = arith.addi %319, %333 : vector<8x1xi32>
    %335 = vector.broadcast %334 : vector<8x1xi32> to vector<8x4xi32>
    %336 = arith.cmpi eq, %213, %335 : vector<8x4xi32>
    %cst_118 = arith.constant 0.000000e+00 : f32
    %337 = vector.shape_cast %321 : vector<8x1xf32> to vector<8x1xf32>
    %338 = vector.broadcast %337 : vector<8x1xf32> to vector<8x4xf32>
    %339 = vector.broadcast %cst_118 : f32 to vector<8x4xf32>
    %340 = arith.select %336, %338, %339 : vector<8x4xi1>, vector<8x4xf32>
    %341 = arith.addf %332, %340 : vector<8x4xf32>
    %342 = vector.broadcast %320 : vector<8x1xi32> to vector<8x4xi32>
    %343 = arith.cmpi eq, %214, %342 : vector<8x4xi32>
    %cst_119 = arith.constant 1.000000e+00 : f32
    %344 = vector.broadcast %cst_119 : f32 to vector<8x1xf32>
    %345 = arith.subf %344, %322 : vector<8x1xf32>
    %cst_120 = arith.constant 0.000000e+00 : f32
    %346 = vector.shape_cast %345 : vector<8x1xf32> to vector<8x1xf32>
    %347 = vector.broadcast %346 : vector<8x1xf32> to vector<8x4xf32>
    %348 = vector.broadcast %cst_120 : f32 to vector<8x4xf32>
    %349 = arith.select %343, %347, %348 : vector<8x4xi1>, vector<8x4xf32>
    %c1_i32_121 = arith.constant 1 : i32
    %350 = vector.broadcast %c1_i32_121 : i32 to vector<8x1xi32>
    %351 = arith.addi %320, %350 : vector<8x1xi32>
    %352 = vector.broadcast %351 : vector<8x1xi32> to vector<8x4xi32>
    %353 = arith.cmpi eq, %214, %352 : vector<8x4xi32>
    %cst_122 = arith.constant 0.000000e+00 : f32
    %354 = vector.shape_cast %322 : vector<8x1xf32> to vector<8x1xf32>
    %355 = vector.broadcast %354 : vector<8x1xf32> to vector<8x4xf32>
    %356 = vector.broadcast %cst_122 : f32 to vector<8x4xf32>
    %357 = arith.select %353, %355, %356 : vector<8x4xi1>, vector<8x4xf32>
    %358 = arith.addf %349, %357 : vector<8x4xf32>
    %359 = vector.broadcast %324 : vector<8x1xf32> to vector<8x4xf32>
    %360 = arith.mulf %358, %359 : vector<8x4xf32>
    %361 = vector.shape_cast %360 : vector<8x4xf32> to vector<8x4x1xf32>
    %362 = vector.shape_cast %341 : vector<8x4xf32> to vector<8x1x4xf32>
    %363 = vector.broadcast %361 : vector<8x4x1xf32> to vector<8x4x4xf32>
    %364 = vector.broadcast %362 : vector<8x1x4xf32> to vector<8x4x4xf32>
    %365 = arith.mulf %363, %364 : vector<8x4x4xf32>
    %366 = arith.addf %318, %365 : vector<8x4x4xf32>
    %367 = vector.extract_strided_slice %175 {offsets = [0, 10], sizes = [8, 1], strides = [1, 1]} : vector<8x32xi32> to vector<8x1xi32>
    %368 = vector.extract_strided_slice %175 {offsets = [0, 11], sizes = [8, 1], strides = [1, 1]} : vector<8x32xi32> to vector<8x1xi32>
    %369 = vector.extract_strided_slice %174 {offsets = [0, 10], sizes = [8, 1], strides = [1, 1]} : vector<8x32xf32> to vector<8x1xf32>
    %370 = vector.extract_strided_slice %174 {offsets = [0, 11], sizes = [8, 1], strides = [1, 1]} : vector<8x32xf32> to vector<8x1xf32>
    %371 = vector.extract_strided_slice %180 {offsets = [0, 5], sizes = [8, 1], strides = [1, 1]} : vector<8x16xf32> to vector<8x1xf32>
    %372 = arith.mulf %371, %194 : vector<8x1xf32>
    %373 = vector.broadcast %367 : vector<8x1xi32> to vector<8x4xi32>
    %374 = arith.cmpi eq, %213, %373 : vector<8x4xi32>
    %cst_123 = arith.constant 1.000000e+00 : f32
    %375 = vector.broadcast %cst_123 : f32 to vector<8x1xf32>
    %376 = arith.subf %375, %369 : vector<8x1xf32>
    %cst_124 = arith.constant 0.000000e+00 : f32
    %377 = vector.shape_cast %376 : vector<8x1xf32> to vector<8x1xf32>
    %378 = vector.broadcast %377 : vector<8x1xf32> to vector<8x4xf32>
    %379 = vector.broadcast %cst_124 : f32 to vector<8x4xf32>
    %380 = arith.select %374, %378, %379 : vector<8x4xi1>, vector<8x4xf32>
    %c1_i32_125 = arith.constant 1 : i32
    %381 = vector.broadcast %c1_i32_125 : i32 to vector<8x1xi32>
    %382 = arith.addi %367, %381 : vector<8x1xi32>
    %383 = vector.broadcast %382 : vector<8x1xi32> to vector<8x4xi32>
    %384 = arith.cmpi eq, %213, %383 : vector<8x4xi32>
    %cst_126 = arith.constant 0.000000e+00 : f32
    %385 = vector.shape_cast %369 : vector<8x1xf32> to vector<8x1xf32>
    %386 = vector.broadcast %385 : vector<8x1xf32> to vector<8x4xf32>
    %387 = vector.broadcast %cst_126 : f32 to vector<8x4xf32>
    %388 = arith.select %384, %386, %387 : vector<8x4xi1>, vector<8x4xf32>
    %389 = arith.addf %380, %388 : vector<8x4xf32>
    %390 = vector.broadcast %368 : vector<8x1xi32> to vector<8x4xi32>
    %391 = arith.cmpi eq, %214, %390 : vector<8x4xi32>
    %cst_127 = arith.constant 1.000000e+00 : f32
    %392 = vector.broadcast %cst_127 : f32 to vector<8x1xf32>
    %393 = arith.subf %392, %370 : vector<8x1xf32>
    %cst_128 = arith.constant 0.000000e+00 : f32
    %394 = vector.shape_cast %393 : vector<8x1xf32> to vector<8x1xf32>
    %395 = vector.broadcast %394 : vector<8x1xf32> to vector<8x4xf32>
    %396 = vector.broadcast %cst_128 : f32 to vector<8x4xf32>
    %397 = arith.select %391, %395, %396 : vector<8x4xi1>, vector<8x4xf32>
    %c1_i32_129 = arith.constant 1 : i32
    %398 = vector.broadcast %c1_i32_129 : i32 to vector<8x1xi32>
    %399 = arith.addi %368, %398 : vector<8x1xi32>
    %400 = vector.broadcast %399 : vector<8x1xi32> to vector<8x4xi32>
    %401 = arith.cmpi eq, %214, %400 : vector<8x4xi32>
    %cst_130 = arith.constant 0.000000e+00 : f32
    %402 = vector.shape_cast %370 : vector<8x1xf32> to vector<8x1xf32>
    %403 = vector.broadcast %402 : vector<8x1xf32> to vector<8x4xf32>
    %404 = vector.broadcast %cst_130 : f32 to vector<8x4xf32>
    %405 = arith.select %401, %403, %404 : vector<8x4xi1>, vector<8x4xf32>
    %406 = arith.addf %397, %405 : vector<8x4xf32>
    %407 = vector.broadcast %372 : vector<8x1xf32> to vector<8x4xf32>
    %408 = arith.mulf %406, %407 : vector<8x4xf32>
    %409 = vector.shape_cast %408 : vector<8x4xf32> to vector<8x4x1xf32>
    %410 = vector.shape_cast %389 : vector<8x4xf32> to vector<8x1x4xf32>
    %411 = vector.broadcast %409 : vector<8x4x1xf32> to vector<8x4x4xf32>
    %412 = vector.broadcast %410 : vector<8x1x4xf32> to vector<8x4x4xf32>
    %413 = arith.mulf %411, %412 : vector<8x4x4xf32>
    %414 = arith.addf %366, %413 : vector<8x4x4xf32>
    %415 = vector.shape_cast %414 : vector<8x4x4xf32> to vector<8x16xf32>
    %416 = arith.truncf %415 : vector<8x16xf32> to vector<8x16xbf16>
    %417 = vector.extract_strided_slice %215 {offsets = [0, 8], sizes = [16, 8], strides = [1, 1]} : vector<16x32xbf16> to vector<16x8xbf16>
    %cst_131 = arith.constant dense<0.000000e+00> : vector<8x8xf32>
    %418 = tpu.matmul %416, %417, %cst_131 {dimension_numbers = #tpu.dot_dimension_numbers<[1], [0], [0], [1], [0, 0, 1, 1], [], []>} : vector<8x16xbf16>, vector<16x8xbf16>, vector<8x8xf32> -> vector<8x8xf32>
    %419 = arith.addf %210, %418 : vector<8x8xf32>
    %cst_132 = arith.constant 0.000000e+00 : f32
    %420 = vector.broadcast %cst_132 : f32 to vector<8x4x4xf32>
    %421 = vector.extract_strided_slice %175 {offsets = [0, 16], sizes = [8, 1], strides = [1, 1]} : vector<8x32xi32> to vector<8x1xi32>
    %422 = vector.extract_strided_slice %175 {offsets = [0, 17], sizes = [8, 1], strides = [1, 1]} : vector<8x32xi32> to vector<8x1xi32>
    %423 = vector.extract_strided_slice %174 {offsets = [0, 16], sizes = [8, 1], strides = [1, 1]} : vector<8x32xf32> to vector<8x1xf32>
    %424 = vector.extract_strided_slice %174 {offsets = [0, 17], sizes = [8, 1], strides = [1, 1]} : vector<8x32xf32> to vector<8x1xf32>
    %425 = vector.extract_strided_slice %180 {offsets = [0, 8], sizes = [8, 1], strides = [1, 1]} : vector<8x16xf32> to vector<8x1xf32>
    %426 = arith.mulf %425, %201 : vector<8x1xf32>
    %427 = vector.broadcast %421 : vector<8x1xi32> to vector<8x4xi32>
    %428 = arith.cmpi eq, %213, %427 : vector<8x4xi32>
    %cst_133 = arith.constant 1.000000e+00 : f32
    %429 = vector.broadcast %cst_133 : f32 to vector<8x1xf32>
    %430 = arith.subf %429, %423 : vector<8x1xf32>
    %cst_134 = arith.constant 0.000000e+00 : f32
    %431 = vector.shape_cast %430 : vector<8x1xf32> to vector<8x1xf32>
    %432 = vector.broadcast %431 : vector<8x1xf32> to vector<8x4xf32>
    %433 = vector.broadcast %cst_134 : f32 to vector<8x4xf32>
    %434 = arith.select %428, %432, %433 : vector<8x4xi1>, vector<8x4xf32>
    %c1_i32_135 = arith.constant 1 : i32
    %435 = vector.broadcast %c1_i32_135 : i32 to vector<8x1xi32>
    %436 = arith.addi %421, %435 : vector<8x1xi32>
    %437 = vector.broadcast %436 : vector<8x1xi32> to vector<8x4xi32>
    %438 = arith.cmpi eq, %213, %437 : vector<8x4xi32>
    %cst_136 = arith.constant 0.000000e+00 : f32
    %439 = vector.shape_cast %423 : vector<8x1xf32> to vector<8x1xf32>
    %440 = vector.broadcast %439 : vector<8x1xf32> to vector<8x4xf32>
    %441 = vector.broadcast %cst_136 : f32 to vector<8x4xf32>
    %442 = arith.select %438, %440, %441 : vector<8x4xi1>, vector<8x4xf32>
    %443 = arith.addf %434, %442 : vector<8x4xf32>
    %444 = vector.broadcast %422 : vector<8x1xi32> to vector<8x4xi32>
    %445 = arith.cmpi eq, %214, %444 : vector<8x4xi32>
    %cst_137 = arith.constant 1.000000e+00 : f32
    %446 = vector.broadcast %cst_137 : f32 to vector<8x1xf32>
    %447 = arith.subf %446, %424 : vector<8x1xf32>
    %cst_138 = arith.constant 0.000000e+00 : f32
    %448 = vector.shape_cast %447 : vector<8x1xf32> to vector<8x1xf32>
    %449 = vector.broadcast %448 : vector<8x1xf32> to vector<8x4xf32>
    %450 = vector.broadcast %cst_138 : f32 to vector<8x4xf32>
    %451 = arith.select %445, %449, %450 : vector<8x4xi1>, vector<8x4xf32>
    %c1_i32_139 = arith.constant 1 : i32
    %452 = vector.broadcast %c1_i32_139 : i32 to vector<8x1xi32>
    %453 = arith.addi %422, %452 : vector<8x1xi32>
    %454 = vector.broadcast %453 : vector<8x1xi32> to vector<8x4xi32>
    %455 = arith.cmpi eq, %214, %454 : vector<8x4xi32>
    %cst_140 = arith.constant 0.000000e+00 : f32
    %456 = vector.shape_cast %424 : vector<8x1xf32> to vector<8x1xf32>
    %457 = vector.broadcast %456 : vector<8x1xf32> to vector<8x4xf32>
    %458 = vector.broadcast %cst_140 : f32 to vector<8x4xf32>
    %459 = arith.select %455, %457, %458 : vector<8x4xi1>, vector<8x4xf32>
    %460 = arith.addf %451, %459 : vector<8x4xf32>
    %461 = vector.broadcast %426 : vector<8x1xf32> to vector<8x4xf32>
    %462 = arith.mulf %460, %461 : vector<8x4xf32>
    %463 = vector.shape_cast %462 : vector<8x4xf32> to vector<8x4x1xf32>
    %464 = vector.shape_cast %443 : vector<8x4xf32> to vector<8x1x4xf32>
    %465 = vector.broadcast %463 : vector<8x4x1xf32> to vector<8x4x4xf32>
    %466 = vector.broadcast %464 : vector<8x1x4xf32> to vector<8x4x4xf32>
    %467 = arith.mulf %465, %466 : vector<8x4x4xf32>
    %468 = arith.addf %420, %467 : vector<8x4x4xf32>
    %469 = vector.extract_strided_slice %175 {offsets = [0, 18], sizes = [8, 1], strides = [1, 1]} : vector<8x32xi32> to vector<8x1xi32>
    %470 = vector.extract_strided_slice %175 {offsets = [0, 19], sizes = [8, 1], strides = [1, 1]} : vector<8x32xi32> to vector<8x1xi32>
    %471 = vector.extract_strided_slice %174 {offsets = [0, 18], sizes = [8, 1], strides = [1, 1]} : vector<8x32xf32> to vector<8x1xf32>
    %472 = vector.extract_strided_slice %174 {offsets = [0, 19], sizes = [8, 1], strides = [1, 1]} : vector<8x32xf32> to vector<8x1xf32>
    %473 = vector.extract_strided_slice %180 {offsets = [0, 9], sizes = [8, 1], strides = [1, 1]} : vector<8x16xf32> to vector<8x1xf32>
    %474 = arith.mulf %473, %201 : vector<8x1xf32>
    %475 = vector.broadcast %469 : vector<8x1xi32> to vector<8x4xi32>
    %476 = arith.cmpi eq, %213, %475 : vector<8x4xi32>
    %cst_141 = arith.constant 1.000000e+00 : f32
    %477 = vector.broadcast %cst_141 : f32 to vector<8x1xf32>
    %478 = arith.subf %477, %471 : vector<8x1xf32>
    %cst_142 = arith.constant 0.000000e+00 : f32
    %479 = vector.shape_cast %478 : vector<8x1xf32> to vector<8x1xf32>
    %480 = vector.broadcast %479 : vector<8x1xf32> to vector<8x4xf32>
    %481 = vector.broadcast %cst_142 : f32 to vector<8x4xf32>
    %482 = arith.select %476, %480, %481 : vector<8x4xi1>, vector<8x4xf32>
    %c1_i32_143 = arith.constant 1 : i32
    %483 = vector.broadcast %c1_i32_143 : i32 to vector<8x1xi32>
    %484 = arith.addi %469, %483 : vector<8x1xi32>
    %485 = vector.broadcast %484 : vector<8x1xi32> to vector<8x4xi32>
    %486 = arith.cmpi eq, %213, %485 : vector<8x4xi32>
    %cst_144 = arith.constant 0.000000e+00 : f32
    %487 = vector.shape_cast %471 : vector<8x1xf32> to vector<8x1xf32>
    %488 = vector.broadcast %487 : vector<8x1xf32> to vector<8x4xf32>
    %489 = vector.broadcast %cst_144 : f32 to vector<8x4xf32>
    %490 = arith.select %486, %488, %489 : vector<8x4xi1>, vector<8x4xf32>
    %491 = arith.addf %482, %490 : vector<8x4xf32>
    %492 = vector.broadcast %470 : vector<8x1xi32> to vector<8x4xi32>
    %493 = arith.cmpi eq, %214, %492 : vector<8x4xi32>
    %cst_145 = arith.constant 1.000000e+00 : f32
    %494 = vector.broadcast %cst_145 : f32 to vector<8x1xf32>
    %495 = arith.subf %494, %472 : vector<8x1xf32>
    %cst_146 = arith.constant 0.000000e+00 : f32
    %496 = vector.shape_cast %495 : vector<8x1xf32> to vector<8x1xf32>
    %497 = vector.broadcast %496 : vector<8x1xf32> to vector<8x4xf32>
    %498 = vector.broadcast %cst_146 : f32 to vector<8x4xf32>
    %499 = arith.select %493, %497, %498 : vector<8x4xi1>, vector<8x4xf32>
    %c1_i32_147 = arith.constant 1 : i32
    %500 = vector.broadcast %c1_i32_147 : i32 to vector<8x1xi32>
    %501 = arith.addi %470, %500 : vector<8x1xi32>
    %502 = vector.broadcast %501 : vector<8x1xi32> to vector<8x4xi32>
    %503 = arith.cmpi eq, %214, %502 : vector<8x4xi32>
    %cst_148 = arith.constant 0.000000e+00 : f32
    %504 = vector.shape_cast %472 : vector<8x1xf32> to vector<8x1xf32>
    %505 = vector.broadcast %504 : vector<8x1xf32> to vector<8x4xf32>
    %506 = vector.broadcast %cst_148 : f32 to vector<8x4xf32>
    %507 = arith.select %503, %505, %506 : vector<8x4xi1>, vector<8x4xf32>
    %508 = arith.addf %499, %507 : vector<8x4xf32>
    %509 = vector.broadcast %474 : vector<8x1xf32> to vector<8x4xf32>
    %510 = arith.mulf %508, %509 : vector<8x4xf32>
    %511 = vector.shape_cast %510 : vector<8x4xf32> to vector<8x4x1xf32>
    %512 = vector.shape_cast %491 : vector<8x4xf32> to vector<8x1x4xf32>
    %513 = vector.broadcast %511 : vector<8x4x1xf32> to vector<8x4x4xf32>
    %514 = vector.broadcast %512 : vector<8x1x4xf32> to vector<8x4x4xf32>
    %515 = arith.mulf %513, %514 : vector<8x4x4xf32>
    %516 = arith.addf %468, %515 : vector<8x4x4xf32>
    %517 = vector.shape_cast %516 : vector<8x4x4xf32> to vector<8x16xf32>
    %518 = arith.truncf %517 : vector<8x16xf32> to vector<8x16xbf16>
    %519 = vector.extract_strided_slice %215 {offsets = [0, 16], sizes = [16, 8], strides = [1, 1]} : vector<16x32xbf16> to vector<16x8xbf16>
    %cst_149 = arith.constant dense<0.000000e+00> : vector<8x8xf32>
    %520 = tpu.matmul %518, %519, %cst_149 {dimension_numbers = #tpu.dot_dimension_numbers<[1], [0], [0], [1], [0, 0, 1, 1], [], []>} : vector<8x16xbf16>, vector<16x8xbf16>, vector<8x8xf32> -> vector<8x8xf32>
    %521 = arith.addf %211, %520 : vector<8x8xf32>
    %cst_150 = arith.constant 0.000000e+00 : f32
    %522 = vector.broadcast %cst_150 : f32 to vector<8x4x4xf32>
    %523 = vector.extract_strided_slice %175 {offsets = [0, 24], sizes = [8, 1], strides = [1, 1]} : vector<8x32xi32> to vector<8x1xi32>
    %524 = vector.extract_strided_slice %175 {offsets = [0, 25], sizes = [8, 1], strides = [1, 1]} : vector<8x32xi32> to vector<8x1xi32>
    %525 = vector.extract_strided_slice %174 {offsets = [0, 24], sizes = [8, 1], strides = [1, 1]} : vector<8x32xf32> to vector<8x1xf32>
    %526 = vector.extract_strided_slice %174 {offsets = [0, 25], sizes = [8, 1], strides = [1, 1]} : vector<8x32xf32> to vector<8x1xf32>
    %527 = vector.extract_strided_slice %180 {offsets = [0, 12], sizes = [8, 1], strides = [1, 1]} : vector<8x16xf32> to vector<8x1xf32>
    %528 = arith.mulf %527, %208 : vector<8x1xf32>
    %529 = vector.broadcast %523 : vector<8x1xi32> to vector<8x4xi32>
    %530 = arith.cmpi eq, %213, %529 : vector<8x4xi32>
    %cst_151 = arith.constant 1.000000e+00 : f32
    %531 = vector.broadcast %cst_151 : f32 to vector<8x1xf32>
    %532 = arith.subf %531, %525 : vector<8x1xf32>
    %cst_152 = arith.constant 0.000000e+00 : f32
    %533 = vector.shape_cast %532 : vector<8x1xf32> to vector<8x1xf32>
    %534 = vector.broadcast %533 : vector<8x1xf32> to vector<8x4xf32>
    %535 = vector.broadcast %cst_152 : f32 to vector<8x4xf32>
    %536 = arith.select %530, %534, %535 : vector<8x4xi1>, vector<8x4xf32>
    %c1_i32_153 = arith.constant 1 : i32
    %537 = vector.broadcast %c1_i32_153 : i32 to vector<8x1xi32>
    %538 = arith.addi %523, %537 : vector<8x1xi32>
    %539 = vector.broadcast %538 : vector<8x1xi32> to vector<8x4xi32>
    %540 = arith.cmpi eq, %213, %539 : vector<8x4xi32>
    %cst_154 = arith.constant 0.000000e+00 : f32
    %541 = vector.shape_cast %525 : vector<8x1xf32> to vector<8x1xf32>
    %542 = vector.broadcast %541 : vector<8x1xf32> to vector<8x4xf32>
    %543 = vector.broadcast %cst_154 : f32 to vector<8x4xf32>
    %544 = arith.select %540, %542, %543 : vector<8x4xi1>, vector<8x4xf32>
    %545 = arith.addf %536, %544 : vector<8x4xf32>
    %546 = vector.broadcast %524 : vector<8x1xi32> to vector<8x4xi32>
    %547 = arith.cmpi eq, %214, %546 : vector<8x4xi32>
    %cst_155 = arith.constant 1.000000e+00 : f32
    %548 = vector.broadcast %cst_155 : f32 to vector<8x1xf32>
    %549 = arith.subf %548, %526 : vector<8x1xf32>
    %cst_156 = arith.constant 0.000000e+00 : f32
    %550 = vector.shape_cast %549 : vector<8x1xf32> to vector<8x1xf32>
    %551 = vector.broadcast %550 : vector<8x1xf32> to vector<8x4xf32>
    %552 = vector.broadcast %cst_156 : f32 to vector<8x4xf32>
    %553 = arith.select %547, %551, %552 : vector<8x4xi1>, vector<8x4xf32>
    %c1_i32_157 = arith.constant 1 : i32
    %554 = vector.broadcast %c1_i32_157 : i32 to vector<8x1xi32>
    %555 = arith.addi %524, %554 : vector<8x1xi32>
    %556 = vector.broadcast %555 : vector<8x1xi32> to vector<8x4xi32>
    %557 = arith.cmpi eq, %214, %556 : vector<8x4xi32>
    %cst_158 = arith.constant 0.000000e+00 : f32
    %558 = vector.shape_cast %526 : vector<8x1xf32> to vector<8x1xf32>
    %559 = vector.broadcast %558 : vector<8x1xf32> to vector<8x4xf32>
    %560 = vector.broadcast %cst_158 : f32 to vector<8x4xf32>
    %561 = arith.select %557, %559, %560 : vector<8x4xi1>, vector<8x4xf32>
    %562 = arith.addf %553, %561 : vector<8x4xf32>
    %563 = vector.broadcast %528 : vector<8x1xf32> to vector<8x4xf32>
    %564 = arith.mulf %562, %563 : vector<8x4xf32>
    %565 = vector.shape_cast %564 : vector<8x4xf32> to vector<8x4x1xf32>
    %566 = vector.shape_cast %545 : vector<8x4xf32> to vector<8x1x4xf32>
    %567 = vector.broadcast %565 : vector<8x4x1xf32> to vector<8x4x4xf32>
    %568 = vector.broadcast %566 : vector<8x1x4xf32> to vector<8x4x4xf32>
    %569 = arith.mulf %567, %568 : vector<8x4x4xf32>
    %570 = arith.addf %522, %569 : vector<8x4x4xf32>
    %571 = vector.extract_strided_slice %175 {offsets = [0, 26], sizes = [8, 1], strides = [1, 1]} : vector<8x32xi32> to vector<8x1xi32>
    %572 = vector.extract_strided_slice %175 {offsets = [0, 27], sizes = [8, 1], strides = [1, 1]} : vector<8x32xi32> to vector<8x1xi32>
    %573 = vector.extract_strided_slice %174 {offsets = [0, 26], sizes = [8, 1], strides = [1, 1]} : vector<8x32xf32> to vector<8x1xf32>
    %574 = vector.extract_strided_slice %174 {offsets = [0, 27], sizes = [8, 1], strides = [1, 1]} : vector<8x32xf32> to vector<8x1xf32>
    %575 = vector.extract_strided_slice %180 {offsets = [0, 13], sizes = [8, 1], strides = [1, 1]} : vector<8x16xf32> to vector<8x1xf32>
    %576 = arith.mulf %575, %208 : vector<8x1xf32>
    %577 = vector.broadcast %571 : vector<8x1xi32> to vector<8x4xi32>
    %578 = arith.cmpi eq, %213, %577 : vector<8x4xi32>
    %cst_159 = arith.constant 1.000000e+00 : f32
    %579 = vector.broadcast %cst_159 : f32 to vector<8x1xf32>
    %580 = arith.subf %579, %573 : vector<8x1xf32>
    %cst_160 = arith.constant 0.000000e+00 : f32
    %581 = vector.shape_cast %580 : vector<8x1xf32> to vector<8x1xf32>
    %582 = vector.broadcast %581 : vector<8x1xf32> to vector<8x4xf32>
    %583 = vector.broadcast %cst_160 : f32 to vector<8x4xf32>
    %584 = arith.select %578, %582, %583 : vector<8x4xi1>, vector<8x4xf32>
    %c1_i32_161 = arith.constant 1 : i32
    %585 = vector.broadcast %c1_i32_161 : i32 to vector<8x1xi32>
    %586 = arith.addi %571, %585 : vector<8x1xi32>
    %587 = vector.broadcast %586 : vector<8x1xi32> to vector<8x4xi32>
    %588 = arith.cmpi eq, %213, %587 : vector<8x4xi32>
    %cst_162 = arith.constant 0.000000e+00 : f32
    %589 = vector.shape_cast %573 : vector<8x1xf32> to vector<8x1xf32>
    %590 = vector.broadcast %589 : vector<8x1xf32> to vector<8x4xf32>
    %591 = vector.broadcast %cst_162 : f32 to vector<8x4xf32>
    %592 = arith.select %588, %590, %591 : vector<8x4xi1>, vector<8x4xf32>
    %593 = arith.addf %584, %592 : vector<8x4xf32>
    %594 = vector.broadcast %572 : vector<8x1xi32> to vector<8x4xi32>
    %595 = arith.cmpi eq, %214, %594 : vector<8x4xi32>
    %cst_163 = arith.constant 1.000000e+00 : f32
    %596 = vector.broadcast %cst_163 : f32 to vector<8x1xf32>
    %597 = arith.subf %596, %574 : vector<8x1xf32>
    %cst_164 = arith.constant 0.000000e+00 : f32
    %598 = vector.shape_cast %597 : vector<8x1xf32> to vector<8x1xf32>
    %599 = vector.broadcast %598 : vector<8x1xf32> to vector<8x4xf32>
    %600 = vector.broadcast %cst_164 : f32 to vector<8x4xf32>
    %601 = arith.select %595, %599, %600 : vector<8x4xi1>, vector<8x4xf32>
    %c1_i32_165 = arith.constant 1 : i32
    %602 = vector.broadcast %c1_i32_165 : i32 to vector<8x1xi32>
    %603 = arith.addi %572, %602 : vector<8x1xi32>
    %604 = vector.broadcast %603 : vector<8x1xi32> to vector<8x4xi32>
    %605 = arith.cmpi eq, %214, %604 : vector<8x4xi32>
    %cst_166 = arith.constant 0.000000e+00 : f32
    %606 = vector.shape_cast %574 : vector<8x1xf32> to vector<8x1xf32>
    %607 = vector.broadcast %606 : vector<8x1xf32> to vector<8x4xf32>
    %608 = vector.broadcast %cst_166 : f32 to vector<8x4xf32>
    %609 = arith.select %605, %607, %608 : vector<8x4xi1>, vector<8x4xf32>
    %610 = arith.addf %601, %609 : vector<8x4xf32>
    %611 = vector.broadcast %576 : vector<8x1xf32> to vector<8x4xf32>
    %612 = arith.mulf %610, %611 : vector<8x4xf32>
    %613 = vector.shape_cast %612 : vector<8x4xf32> to vector<8x4x1xf32>
    %614 = vector.shape_cast %593 : vector<8x4xf32> to vector<8x1x4xf32>
    %615 = vector.broadcast %613 : vector<8x4x1xf32> to vector<8x4x4xf32>
    %616 = vector.broadcast %614 : vector<8x1x4xf32> to vector<8x4x4xf32>
    %617 = arith.mulf %615, %616 : vector<8x4x4xf32>
    %618 = arith.addf %570, %617 : vector<8x4x4xf32>
    %619 = vector.shape_cast %618 : vector<8x4x4xf32> to vector<8x16xf32>
    %620 = arith.truncf %619 : vector<8x16xf32> to vector<8x16xbf16>
    %621 = vector.extract_strided_slice %215 {offsets = [0, 24], sizes = [16, 8], strides = [1, 1]} : vector<16x32xbf16> to vector<16x8xbf16>
    %cst_167 = arith.constant dense<0.000000e+00> : vector<8x8xf32>
    %622 = tpu.matmul %620, %621, %cst_167 {dimension_numbers = #tpu.dot_dimension_numbers<[1], [0], [0], [1], [0, 0, 1, 1], [], []>} : vector<8x16xbf16>, vector<16x8xbf16>, vector<8x8xf32> -> vector<8x8xf32>
    %623 = arith.addf %212, %622 : vector<8x8xf32>
    %624 = tpu.iota {dimensions = array<i32: 1>} : vector<8x2xi32>
    %625 = tpu.iota {dimensions = array<i32: 1>} : vector<8x2xi32>
    %626 = vector.extract_strided_slice %148 {offsets = [16, 0], sizes = [4, 32], strides = [1, 1]} : vector<20x32xbf16> to vector<4x32xbf16>
    %cst_168 = arith.constant 0.000000e+00 : f32
    %627 = vector.broadcast %cst_168 : f32 to vector<8x2x2xf32>
    %628 = vector.extract_strided_slice %175 {offsets = [0, 4], sizes = [8, 1], strides = [1, 1]} : vector<8x32xi32> to vector<8x1xi32>
    %629 = vector.extract_strided_slice %175 {offsets = [0, 5], sizes = [8, 1], strides = [1, 1]} : vector<8x32xi32> to vector<8x1xi32>
    %630 = vector.extract_strided_slice %174 {offsets = [0, 4], sizes = [8, 1], strides = [1, 1]} : vector<8x32xf32> to vector<8x1xf32>
    %631 = vector.extract_strided_slice %174 {offsets = [0, 5], sizes = [8, 1], strides = [1, 1]} : vector<8x32xf32> to vector<8x1xf32>
    %632 = vector.extract_strided_slice %180 {offsets = [0, 2], sizes = [8, 1], strides = [1, 1]} : vector<8x16xf32> to vector<8x1xf32>
    %633 = arith.mulf %632, %187 : vector<8x1xf32>
    %634 = vector.broadcast %628 : vector<8x1xi32> to vector<8x2xi32>
    %635 = arith.cmpi eq, %624, %634 : vector<8x2xi32>
    %cst_169 = arith.constant 1.000000e+00 : f32
    %636 = vector.broadcast %cst_169 : f32 to vector<8x1xf32>
    %637 = arith.subf %636, %630 : vector<8x1xf32>
    %cst_170 = arith.constant 0.000000e+00 : f32
    %638 = vector.shape_cast %637 : vector<8x1xf32> to vector<8x1xf32>
    %639 = vector.broadcast %638 : vector<8x1xf32> to vector<8x2xf32>
    %640 = vector.broadcast %cst_170 : f32 to vector<8x2xf32>
    %641 = arith.select %635, %639, %640 : vector<8x2xi1>, vector<8x2xf32>
    %c1_i32_171 = arith.constant 1 : i32
    %642 = vector.broadcast %c1_i32_171 : i32 to vector<8x1xi32>
    %643 = arith.addi %628, %642 : vector<8x1xi32>
    %644 = vector.broadcast %643 : vector<8x1xi32> to vector<8x2xi32>
    %645 = arith.cmpi eq, %624, %644 : vector<8x2xi32>
    %cst_172 = arith.constant 0.000000e+00 : f32
    %646 = vector.shape_cast %630 : vector<8x1xf32> to vector<8x1xf32>
    %647 = vector.broadcast %646 : vector<8x1xf32> to vector<8x2xf32>
    %648 = vector.broadcast %cst_172 : f32 to vector<8x2xf32>
    %649 = arith.select %645, %647, %648 : vector<8x2xi1>, vector<8x2xf32>
    %650 = arith.addf %641, %649 : vector<8x2xf32>
    %651 = vector.broadcast %629 : vector<8x1xi32> to vector<8x2xi32>
    %652 = arith.cmpi eq, %625, %651 : vector<8x2xi32>
    %cst_173 = arith.constant 1.000000e+00 : f32
    %653 = vector.broadcast %cst_173 : f32 to vector<8x1xf32>
    %654 = arith.subf %653, %631 : vector<8x1xf32>
    %cst_174 = arith.constant 0.000000e+00 : f32
    %655 = vector.shape_cast %654 : vector<8x1xf32> to vector<8x1xf32>
    %656 = vector.broadcast %655 : vector<8x1xf32> to vector<8x2xf32>
    %657 = vector.broadcast %cst_174 : f32 to vector<8x2xf32>
    %658 = arith.select %652, %656, %657 : vector<8x2xi1>, vector<8x2xf32>
    %c1_i32_175 = arith.constant 1 : i32
    %659 = vector.broadcast %c1_i32_175 : i32 to vector<8x1xi32>
    %660 = arith.addi %629, %659 : vector<8x1xi32>
    %661 = vector.broadcast %660 : vector<8x1xi32> to vector<8x2xi32>
    %662 = arith.cmpi eq, %625, %661 : vector<8x2xi32>
    %cst_176 = arith.constant 0.000000e+00 : f32
    %663 = vector.shape_cast %631 : vector<8x1xf32> to vector<8x1xf32>
    %664 = vector.broadcast %663 : vector<8x1xf32> to vector<8x2xf32>
    %665 = vector.broadcast %cst_176 : f32 to vector<8x2xf32>
    %666 = arith.select %662, %664, %665 : vector<8x2xi1>, vector<8x2xf32>
    %667 = arith.addf %658, %666 : vector<8x2xf32>
    %668 = vector.broadcast %633 : vector<8x1xf32> to vector<8x2xf32>
    %669 = arith.mulf %667, %668 : vector<8x2xf32>
    %670 = vector.shape_cast %669 : vector<8x2xf32> to vector<8x2x1xf32>
    %671 = vector.shape_cast %650 : vector<8x2xf32> to vector<8x1x2xf32>
    %672 = vector.broadcast %670 : vector<8x2x1xf32> to vector<8x2x2xf32>
    %673 = vector.broadcast %671 : vector<8x1x2xf32> to vector<8x2x2xf32>
    %674 = arith.mulf %672, %673 : vector<8x2x2xf32>
    %675 = arith.addf %627, %674 : vector<8x2x2xf32>
    %676 = vector.extract_strided_slice %175 {offsets = [0, 6], sizes = [8, 1], strides = [1, 1]} : vector<8x32xi32> to vector<8x1xi32>
    %677 = vector.extract_strided_slice %175 {offsets = [0, 7], sizes = [8, 1], strides = [1, 1]} : vector<8x32xi32> to vector<8x1xi32>
    %678 = vector.extract_strided_slice %174 {offsets = [0, 6], sizes = [8, 1], strides = [1, 1]} : vector<8x32xf32> to vector<8x1xf32>
    %679 = vector.extract_strided_slice %174 {offsets = [0, 7], sizes = [8, 1], strides = [1, 1]} : vector<8x32xf32> to vector<8x1xf32>
    %680 = vector.extract_strided_slice %180 {offsets = [0, 3], sizes = [8, 1], strides = [1, 1]} : vector<8x16xf32> to vector<8x1xf32>
    %681 = arith.mulf %680, %187 : vector<8x1xf32>
    %682 = vector.broadcast %676 : vector<8x1xi32> to vector<8x2xi32>
    %683 = arith.cmpi eq, %624, %682 : vector<8x2xi32>
    %cst_177 = arith.constant 1.000000e+00 : f32
    %684 = vector.broadcast %cst_177 : f32 to vector<8x1xf32>
    %685 = arith.subf %684, %678 : vector<8x1xf32>
    %cst_178 = arith.constant 0.000000e+00 : f32
    %686 = vector.shape_cast %685 : vector<8x1xf32> to vector<8x1xf32>
    %687 = vector.broadcast %686 : vector<8x1xf32> to vector<8x2xf32>
    %688 = vector.broadcast %cst_178 : f32 to vector<8x2xf32>
    %689 = arith.select %683, %687, %688 : vector<8x2xi1>, vector<8x2xf32>
    %c1_i32_179 = arith.constant 1 : i32
    %690 = vector.broadcast %c1_i32_179 : i32 to vector<8x1xi32>
    %691 = arith.addi %676, %690 : vector<8x1xi32>
    %692 = vector.broadcast %691 : vector<8x1xi32> to vector<8x2xi32>
    %693 = arith.cmpi eq, %624, %692 : vector<8x2xi32>
    %cst_180 = arith.constant 0.000000e+00 : f32
    %694 = vector.shape_cast %678 : vector<8x1xf32> to vector<8x1xf32>
    %695 = vector.broadcast %694 : vector<8x1xf32> to vector<8x2xf32>
    %696 = vector.broadcast %cst_180 : f32 to vector<8x2xf32>
    %697 = arith.select %693, %695, %696 : vector<8x2xi1>, vector<8x2xf32>
    %698 = arith.addf %689, %697 : vector<8x2xf32>
    %699 = vector.broadcast %677 : vector<8x1xi32> to vector<8x2xi32>
    %700 = arith.cmpi eq, %625, %699 : vector<8x2xi32>
    %cst_181 = arith.constant 1.000000e+00 : f32
    %701 = vector.broadcast %cst_181 : f32 to vector<8x1xf32>
    %702 = arith.subf %701, %679 : vector<8x1xf32>
    %cst_182 = arith.constant 0.000000e+00 : f32
    %703 = vector.shape_cast %702 : vector<8x1xf32> to vector<8x1xf32>
    %704 = vector.broadcast %703 : vector<8x1xf32> to vector<8x2xf32>
    %705 = vector.broadcast %cst_182 : f32 to vector<8x2xf32>
    %706 = arith.select %700, %704, %705 : vector<8x2xi1>, vector<8x2xf32>
    %c1_i32_183 = arith.constant 1 : i32
    %707 = vector.broadcast %c1_i32_183 : i32 to vector<8x1xi32>
    %708 = arith.addi %677, %707 : vector<8x1xi32>
    %709 = vector.broadcast %708 : vector<8x1xi32> to vector<8x2xi32>
    %710 = arith.cmpi eq, %625, %709 : vector<8x2xi32>
    %cst_184 = arith.constant 0.000000e+00 : f32
    %711 = vector.shape_cast %679 : vector<8x1xf32> to vector<8x1xf32>
    %712 = vector.broadcast %711 : vector<8x1xf32> to vector<8x2xf32>
    %713 = vector.broadcast %cst_184 : f32 to vector<8x2xf32>
    %714 = arith.select %710, %712, %713 : vector<8x2xi1>, vector<8x2xf32>
    %715 = arith.addf %706, %714 : vector<8x2xf32>
    %716 = vector.broadcast %681 : vector<8x1xf32> to vector<8x2xf32>
    %717 = arith.mulf %715, %716 : vector<8x2xf32>
    %718 = vector.shape_cast %717 : vector<8x2xf32> to vector<8x2x1xf32>
    %719 = vector.shape_cast %698 : vector<8x2xf32> to vector<8x1x2xf32>
    %720 = vector.broadcast %718 : vector<8x2x1xf32> to vector<8x2x2xf32>
    %721 = vector.broadcast %719 : vector<8x1x2xf32> to vector<8x2x2xf32>
    %722 = arith.mulf %720, %721 : vector<8x2x2xf32>
    %723 = arith.addf %675, %722 : vector<8x2x2xf32>
    %724 = vector.shape_cast %723 : vector<8x2x2xf32> to vector<8x4xf32>
    %725 = arith.truncf %724 : vector<8x4xf32> to vector<8x4xbf16>
    %726 = vector.extract_strided_slice %626 {offsets = [0, 0], sizes = [4, 8], strides = [1, 1]} : vector<4x32xbf16> to vector<4x8xbf16>
    %cst_185 = arith.constant dense<0.000000e+00> : vector<8x8xf32>
    %727 = tpu.matmul %725, %726, %cst_185 {dimension_numbers = #tpu.dot_dimension_numbers<[1], [0], [0], [1], [0, 0, 1, 1], [], []>} : vector<8x4xbf16>, vector<4x8xbf16>, vector<8x8xf32> -> vector<8x8xf32>
    %728 = arith.addf %317, %727 : vector<8x8xf32>
    %cst_186 = arith.constant 0.000000e+00 : f32
    %729 = vector.broadcast %cst_186 : f32 to vector<8x2x2xf32>
    %730 = vector.extract_strided_slice %175 {offsets = [0, 12], sizes = [8, 1], strides = [1, 1]} : vector<8x32xi32> to vector<8x1xi32>
    %731 = vector.extract_strided_slice %175 {offsets = [0, 13], sizes = [8, 1], strides = [1, 1]} : vector<8x32xi32> to vector<8x1xi32>
    %732 = vector.extract_strided_slice %174 {offsets = [0, 12], sizes = [8, 1], strides = [1, 1]} : vector<8x32xf32> to vector<8x1xf32>
    %733 = vector.extract_strided_slice %174 {offsets = [0, 13], sizes = [8, 1], strides = [1, 1]} : vector<8x32xf32> to vector<8x1xf32>
    %734 = vector.extract_strided_slice %180 {offsets = [0, 6], sizes = [8, 1], strides = [1, 1]} : vector<8x16xf32> to vector<8x1xf32>
    %735 = arith.mulf %734, %194 : vector<8x1xf32>
    %736 = vector.broadcast %730 : vector<8x1xi32> to vector<8x2xi32>
    %737 = arith.cmpi eq, %624, %736 : vector<8x2xi32>
    %cst_187 = arith.constant 1.000000e+00 : f32
    %738 = vector.broadcast %cst_187 : f32 to vector<8x1xf32>
    %739 = arith.subf %738, %732 : vector<8x1xf32>
    %cst_188 = arith.constant 0.000000e+00 : f32
    %740 = vector.shape_cast %739 : vector<8x1xf32> to vector<8x1xf32>
    %741 = vector.broadcast %740 : vector<8x1xf32> to vector<8x2xf32>
    %742 = vector.broadcast %cst_188 : f32 to vector<8x2xf32>
    %743 = arith.select %737, %741, %742 : vector<8x2xi1>, vector<8x2xf32>
    %c1_i32_189 = arith.constant 1 : i32
    %744 = vector.broadcast %c1_i32_189 : i32 to vector<8x1xi32>
    %745 = arith.addi %730, %744 : vector<8x1xi32>
    %746 = vector.broadcast %745 : vector<8x1xi32> to vector<8x2xi32>
    %747 = arith.cmpi eq, %624, %746 : vector<8x2xi32>
    %cst_190 = arith.constant 0.000000e+00 : f32
    %748 = vector.shape_cast %732 : vector<8x1xf32> to vector<8x1xf32>
    %749 = vector.broadcast %748 : vector<8x1xf32> to vector<8x2xf32>
    %750 = vector.broadcast %cst_190 : f32 to vector<8x2xf32>
    %751 = arith.select %747, %749, %750 : vector<8x2xi1>, vector<8x2xf32>
    %752 = arith.addf %743, %751 : vector<8x2xf32>
    %753 = vector.broadcast %731 : vector<8x1xi32> to vector<8x2xi32>
    %754 = arith.cmpi eq, %625, %753 : vector<8x2xi32>
    %cst_191 = arith.constant 1.000000e+00 : f32
    %755 = vector.broadcast %cst_191 : f32 to vector<8x1xf32>
    %756 = arith.subf %755, %733 : vector<8x1xf32>
    %cst_192 = arith.constant 0.000000e+00 : f32
    %757 = vector.shape_cast %756 : vector<8x1xf32> to vector<8x1xf32>
    %758 = vector.broadcast %757 : vector<8x1xf32> to vector<8x2xf32>
    %759 = vector.broadcast %cst_192 : f32 to vector<8x2xf32>
    %760 = arith.select %754, %758, %759 : vector<8x2xi1>, vector<8x2xf32>
    %c1_i32_193 = arith.constant 1 : i32
    %761 = vector.broadcast %c1_i32_193 : i32 to vector<8x1xi32>
    %762 = arith.addi %731, %761 : vector<8x1xi32>
    %763 = vector.broadcast %762 : vector<8x1xi32> to vector<8x2xi32>
    %764 = arith.cmpi eq, %625, %763 : vector<8x2xi32>
    %cst_194 = arith.constant 0.000000e+00 : f32
    %765 = vector.shape_cast %733 : vector<8x1xf32> to vector<8x1xf32>
    %766 = vector.broadcast %765 : vector<8x1xf32> to vector<8x2xf32>
    %767 = vector.broadcast %cst_194 : f32 to vector<8x2xf32>
    %768 = arith.select %764, %766, %767 : vector<8x2xi1>, vector<8x2xf32>
    %769 = arith.addf %760, %768 : vector<8x2xf32>
    %770 = vector.broadcast %735 : vector<8x1xf32> to vector<8x2xf32>
    %771 = arith.mulf %769, %770 : vector<8x2xf32>
    %772 = vector.shape_cast %771 : vector<8x2xf32> to vector<8x2x1xf32>
    %773 = vector.shape_cast %752 : vector<8x2xf32> to vector<8x1x2xf32>
    %774 = vector.broadcast %772 : vector<8x2x1xf32> to vector<8x2x2xf32>
    %775 = vector.broadcast %773 : vector<8x1x2xf32> to vector<8x2x2xf32>
    %776 = arith.mulf %774, %775 : vector<8x2x2xf32>
    %777 = arith.addf %729, %776 : vector<8x2x2xf32>
    %778 = vector.extract_strided_slice %175 {offsets = [0, 14], sizes = [8, 1], strides = [1, 1]} : vector<8x32xi32> to vector<8x1xi32>
    %779 = vector.extract_strided_slice %175 {offsets = [0, 15], sizes = [8, 1], strides = [1, 1]} : vector<8x32xi32> to vector<8x1xi32>
    %780 = vector.extract_strided_slice %174 {offsets = [0, 14], sizes = [8, 1], strides = [1, 1]} : vector<8x32xf32> to vector<8x1xf32>
    %781 = vector.extract_strided_slice %174 {offsets = [0, 15], sizes = [8, 1], strides = [1, 1]} : vector<8x32xf32> to vector<8x1xf32>
    %782 = vector.extract_strided_slice %180 {offsets = [0, 7], sizes = [8, 1], strides = [1, 1]} : vector<8x16xf32> to vector<8x1xf32>
    %783 = arith.mulf %782, %194 : vector<8x1xf32>
    %784 = vector.broadcast %778 : vector<8x1xi32> to vector<8x2xi32>
    %785 = arith.cmpi eq, %624, %784 : vector<8x2xi32>
    %cst_195 = arith.constant 1.000000e+00 : f32
    %786 = vector.broadcast %cst_195 : f32 to vector<8x1xf32>
    %787 = arith.subf %786, %780 : vector<8x1xf32>
    %cst_196 = arith.constant 0.000000e+00 : f32
    %788 = vector.shape_cast %787 : vector<8x1xf32> to vector<8x1xf32>
    %789 = vector.broadcast %788 : vector<8x1xf32> to vector<8x2xf32>
    %790 = vector.broadcast %cst_196 : f32 to vector<8x2xf32>
    %791 = arith.select %785, %789, %790 : vector<8x2xi1>, vector<8x2xf32>
    %c1_i32_197 = arith.constant 1 : i32
    %792 = vector.broadcast %c1_i32_197 : i32 to vector<8x1xi32>
    %793 = arith.addi %778, %792 : vector<8x1xi32>
    %794 = vector.broadcast %793 : vector<8x1xi32> to vector<8x2xi32>
    %795 = arith.cmpi eq, %624, %794 : vector<8x2xi32>
    %cst_198 = arith.constant 0.000000e+00 : f32
    %796 = vector.shape_cast %780 : vector<8x1xf32> to vector<8x1xf32>
    %797 = vector.broadcast %796 : vector<8x1xf32> to vector<8x2xf32>
    %798 = vector.broadcast %cst_198 : f32 to vector<8x2xf32>
    %799 = arith.select %795, %797, %798 : vector<8x2xi1>, vector<8x2xf32>
    %800 = arith.addf %791, %799 : vector<8x2xf32>
    %801 = vector.broadcast %779 : vector<8x1xi32> to vector<8x2xi32>
    %802 = arith.cmpi eq, %625, %801 : vector<8x2xi32>
    %cst_199 = arith.constant 1.000000e+00 : f32
    %803 = vector.broadcast %cst_199 : f32 to vector<8x1xf32>
    %804 = arith.subf %803, %781 : vector<8x1xf32>
    %cst_200 = arith.constant 0.000000e+00 : f32
    %805 = vector.shape_cast %804 : vector<8x1xf32> to vector<8x1xf32>
    %806 = vector.broadcast %805 : vector<8x1xf32> to vector<8x2xf32>
    %807 = vector.broadcast %cst_200 : f32 to vector<8x2xf32>
    %808 = arith.select %802, %806, %807 : vector<8x2xi1>, vector<8x2xf32>
    %c1_i32_201 = arith.constant 1 : i32
    %809 = vector.broadcast %c1_i32_201 : i32 to vector<8x1xi32>
    %810 = arith.addi %779, %809 : vector<8x1xi32>
    %811 = vector.broadcast %810 : vector<8x1xi32> to vector<8x2xi32>
    %812 = arith.cmpi eq, %625, %811 : vector<8x2xi32>
    %cst_202 = arith.constant 0.000000e+00 : f32
    %813 = vector.shape_cast %781 : vector<8x1xf32> to vector<8x1xf32>
    %814 = vector.broadcast %813 : vector<8x1xf32> to vector<8x2xf32>
    %815 = vector.broadcast %cst_202 : f32 to vector<8x2xf32>
    %816 = arith.select %812, %814, %815 : vector<8x2xi1>, vector<8x2xf32>
    %817 = arith.addf %808, %816 : vector<8x2xf32>
    %818 = vector.broadcast %783 : vector<8x1xf32> to vector<8x2xf32>
    %819 = arith.mulf %817, %818 : vector<8x2xf32>
    %820 = vector.shape_cast %819 : vector<8x2xf32> to vector<8x2x1xf32>
    %821 = vector.shape_cast %800 : vector<8x2xf32> to vector<8x1x2xf32>
    %822 = vector.broadcast %820 : vector<8x2x1xf32> to vector<8x2x2xf32>
    %823 = vector.broadcast %821 : vector<8x1x2xf32> to vector<8x2x2xf32>
    %824 = arith.mulf %822, %823 : vector<8x2x2xf32>
    %825 = arith.addf %777, %824 : vector<8x2x2xf32>
    %826 = vector.shape_cast %825 : vector<8x2x2xf32> to vector<8x4xf32>
    %827 = arith.truncf %826 : vector<8x4xf32> to vector<8x4xbf16>
    %828 = vector.extract_strided_slice %626 {offsets = [0, 8], sizes = [4, 8], strides = [1, 1]} : vector<4x32xbf16> to vector<4x8xbf16>
    %cst_203 = arith.constant dense<0.000000e+00> : vector<8x8xf32>
    %829 = tpu.matmul %827, %828, %cst_203 {dimension_numbers = #tpu.dot_dimension_numbers<[1], [0], [0], [1], [0, 0, 1, 1], [], []>} : vector<8x4xbf16>, vector<4x8xbf16>, vector<8x8xf32> -> vector<8x8xf32>
    %830 = arith.addf %419, %829 : vector<8x8xf32>
    %cst_204 = arith.constant 0.000000e+00 : f32
    %831 = vector.broadcast %cst_204 : f32 to vector<8x2x2xf32>
    %832 = vector.extract_strided_slice %175 {offsets = [0, 20], sizes = [8, 1], strides = [1, 1]} : vector<8x32xi32> to vector<8x1xi32>
    %833 = vector.extract_strided_slice %175 {offsets = [0, 21], sizes = [8, 1], strides = [1, 1]} : vector<8x32xi32> to vector<8x1xi32>
    %834 = vector.extract_strided_slice %174 {offsets = [0, 20], sizes = [8, 1], strides = [1, 1]} : vector<8x32xf32> to vector<8x1xf32>
    %835 = vector.extract_strided_slice %174 {offsets = [0, 21], sizes = [8, 1], strides = [1, 1]} : vector<8x32xf32> to vector<8x1xf32>
    %836 = vector.extract_strided_slice %180 {offsets = [0, 10], sizes = [8, 1], strides = [1, 1]} : vector<8x16xf32> to vector<8x1xf32>
    %837 = arith.mulf %836, %201 : vector<8x1xf32>
    %838 = vector.broadcast %832 : vector<8x1xi32> to vector<8x2xi32>
    %839 = arith.cmpi eq, %624, %838 : vector<8x2xi32>
    %cst_205 = arith.constant 1.000000e+00 : f32
    %840 = vector.broadcast %cst_205 : f32 to vector<8x1xf32>
    %841 = arith.subf %840, %834 : vector<8x1xf32>
    %cst_206 = arith.constant 0.000000e+00 : f32
    %842 = vector.shape_cast %841 : vector<8x1xf32> to vector<8x1xf32>
    %843 = vector.broadcast %842 : vector<8x1xf32> to vector<8x2xf32>
    %844 = vector.broadcast %cst_206 : f32 to vector<8x2xf32>
    %845 = arith.select %839, %843, %844 : vector<8x2xi1>, vector<8x2xf32>
    %c1_i32_207 = arith.constant 1 : i32
    %846 = vector.broadcast %c1_i32_207 : i32 to vector<8x1xi32>
    %847 = arith.addi %832, %846 : vector<8x1xi32>
    %848 = vector.broadcast %847 : vector<8x1xi32> to vector<8x2xi32>
    %849 = arith.cmpi eq, %624, %848 : vector<8x2xi32>
    %cst_208 = arith.constant 0.000000e+00 : f32
    %850 = vector.shape_cast %834 : vector<8x1xf32> to vector<8x1xf32>
    %851 = vector.broadcast %850 : vector<8x1xf32> to vector<8x2xf32>
    %852 = vector.broadcast %cst_208 : f32 to vector<8x2xf32>
    %853 = arith.select %849, %851, %852 : vector<8x2xi1>, vector<8x2xf32>
    %854 = arith.addf %845, %853 : vector<8x2xf32>
    %855 = vector.broadcast %833 : vector<8x1xi32> to vector<8x2xi32>
    %856 = arith.cmpi eq, %625, %855 : vector<8x2xi32>
    %cst_209 = arith.constant 1.000000e+00 : f32
    %857 = vector.broadcast %cst_209 : f32 to vector<8x1xf32>
    %858 = arith.subf %857, %835 : vector<8x1xf32>
    %cst_210 = arith.constant 0.000000e+00 : f32
    %859 = vector.shape_cast %858 : vector<8x1xf32> to vector<8x1xf32>
    %860 = vector.broadcast %859 : vector<8x1xf32> to vector<8x2xf32>
    %861 = vector.broadcast %cst_210 : f32 to vector<8x2xf32>
    %862 = arith.select %856, %860, %861 : vector<8x2xi1>, vector<8x2xf32>
    %c1_i32_211 = arith.constant 1 : i32
    %863 = vector.broadcast %c1_i32_211 : i32 to vector<8x1xi32>
    %864 = arith.addi %833, %863 : vector<8x1xi32>
    %865 = vector.broadcast %864 : vector<8x1xi32> to vector<8x2xi32>
    %866 = arith.cmpi eq, %625, %865 : vector<8x2xi32>
    %cst_212 = arith.constant 0.000000e+00 : f32
    %867 = vector.shape_cast %835 : vector<8x1xf32> to vector<8x1xf32>
    %868 = vector.broadcast %867 : vector<8x1xf32> to vector<8x2xf32>
    %869 = vector.broadcast %cst_212 : f32 to vector<8x2xf32>
    %870 = arith.select %866, %868, %869 : vector<8x2xi1>, vector<8x2xf32>
    %871 = arith.addf %862, %870 : vector<8x2xf32>
    %872 = vector.broadcast %837 : vector<8x1xf32> to vector<8x2xf32>
    %873 = arith.mulf %871, %872 : vector<8x2xf32>
    %874 = vector.shape_cast %873 : vector<8x2xf32> to vector<8x2x1xf32>
    %875 = vector.shape_cast %854 : vector<8x2xf32> to vector<8x1x2xf32>
    %876 = vector.broadcast %874 : vector<8x2x1xf32> to vector<8x2x2xf32>
    %877 = vector.broadcast %875 : vector<8x1x2xf32> to vector<8x2x2xf32>
    %878 = arith.mulf %876, %877 : vector<8x2x2xf32>
    %879 = arith.addf %831, %878 : vector<8x2x2xf32>
    %880 = vector.extract_strided_slice %175 {offsets = [0, 22], sizes = [8, 1], strides = [1, 1]} : vector<8x32xi32> to vector<8x1xi32>
    %881 = vector.extract_strided_slice %175 {offsets = [0, 23], sizes = [8, 1], strides = [1, 1]} : vector<8x32xi32> to vector<8x1xi32>
    %882 = vector.extract_strided_slice %174 {offsets = [0, 22], sizes = [8, 1], strides = [1, 1]} : vector<8x32xf32> to vector<8x1xf32>
    %883 = vector.extract_strided_slice %174 {offsets = [0, 23], sizes = [8, 1], strides = [1, 1]} : vector<8x32xf32> to vector<8x1xf32>
    %884 = vector.extract_strided_slice %180 {offsets = [0, 11], sizes = [8, 1], strides = [1, 1]} : vector<8x16xf32> to vector<8x1xf32>
    %885 = arith.mulf %884, %201 : vector<8x1xf32>
    %886 = vector.broadcast %880 : vector<8x1xi32> to vector<8x2xi32>
    %887 = arith.cmpi eq, %624, %886 : vector<8x2xi32>
    %cst_213 = arith.constant 1.000000e+00 : f32
    %888 = vector.broadcast %cst_213 : f32 to vector<8x1xf32>
    %889 = arith.subf %888, %882 : vector<8x1xf32>
    %cst_214 = arith.constant 0.000000e+00 : f32
    %890 = vector.shape_cast %889 : vector<8x1xf32> to vector<8x1xf32>
    %891 = vector.broadcast %890 : vector<8x1xf32> to vector<8x2xf32>
    %892 = vector.broadcast %cst_214 : f32 to vector<8x2xf32>
    %893 = arith.select %887, %891, %892 : vector<8x2xi1>, vector<8x2xf32>
    %c1_i32_215 = arith.constant 1 : i32
    %894 = vector.broadcast %c1_i32_215 : i32 to vector<8x1xi32>
    %895 = arith.addi %880, %894 : vector<8x1xi32>
    %896 = vector.broadcast %895 : vector<8x1xi32> to vector<8x2xi32>
    %897 = arith.cmpi eq, %624, %896 : vector<8x2xi32>
    %cst_216 = arith.constant 0.000000e+00 : f32
    %898 = vector.shape_cast %882 : vector<8x1xf32> to vector<8x1xf32>
    %899 = vector.broadcast %898 : vector<8x1xf32> to vector<8x2xf32>
    %900 = vector.broadcast %cst_216 : f32 to vector<8x2xf32>
    %901 = arith.select %897, %899, %900 : vector<8x2xi1>, vector<8x2xf32>
    %902 = arith.addf %893, %901 : vector<8x2xf32>
    %903 = vector.broadcast %881 : vector<8x1xi32> to vector<8x2xi32>
    %904 = arith.cmpi eq, %625, %903 : vector<8x2xi32>
    %cst_217 = arith.constant 1.000000e+00 : f32
    %905 = vector.broadcast %cst_217 : f32 to vector<8x1xf32>
    %906 = arith.subf %905, %883 : vector<8x1xf32>
    %cst_218 = arith.constant 0.000000e+00 : f32
    %907 = vector.shape_cast %906 : vector<8x1xf32> to vector<8x1xf32>
    %908 = vector.broadcast %907 : vector<8x1xf32> to vector<8x2xf32>
    %909 = vector.broadcast %cst_218 : f32 to vector<8x2xf32>
    %910 = arith.select %904, %908, %909 : vector<8x2xi1>, vector<8x2xf32>
    %c1_i32_219 = arith.constant 1 : i32
    %911 = vector.broadcast %c1_i32_219 : i32 to vector<8x1xi32>
    %912 = arith.addi %881, %911 : vector<8x1xi32>
    %913 = vector.broadcast %912 : vector<8x1xi32> to vector<8x2xi32>
    %914 = arith.cmpi eq, %625, %913 : vector<8x2xi32>
    %cst_220 = arith.constant 0.000000e+00 : f32
    %915 = vector.shape_cast %883 : vector<8x1xf32> to vector<8x1xf32>
    %916 = vector.broadcast %915 : vector<8x1xf32> to vector<8x2xf32>
    %917 = vector.broadcast %cst_220 : f32 to vector<8x2xf32>
    %918 = arith.select %914, %916, %917 : vector<8x2xi1>, vector<8x2xf32>
    %919 = arith.addf %910, %918 : vector<8x2xf32>
    %920 = vector.broadcast %885 : vector<8x1xf32> to vector<8x2xf32>
    %921 = arith.mulf %919, %920 : vector<8x2xf32>
    %922 = vector.shape_cast %921 : vector<8x2xf32> to vector<8x2x1xf32>
    %923 = vector.shape_cast %902 : vector<8x2xf32> to vector<8x1x2xf32>
    %924 = vector.broadcast %922 : vector<8x2x1xf32> to vector<8x2x2xf32>
    %925 = vector.broadcast %923 : vector<8x1x2xf32> to vector<8x2x2xf32>
    %926 = arith.mulf %924, %925 : vector<8x2x2xf32>
    %927 = arith.addf %879, %926 : vector<8x2x2xf32>
    %928 = vector.shape_cast %927 : vector<8x2x2xf32> to vector<8x4xf32>
    %929 = arith.truncf %928 : vector<8x4xf32> to vector<8x4xbf16>
    %930 = vector.extract_strided_slice %626 {offsets = [0, 16], sizes = [4, 8], strides = [1, 1]} : vector<4x32xbf16> to vector<4x8xbf16>
    %cst_221 = arith.constant dense<0.000000e+00> : vector<8x8xf32>
    %931 = tpu.matmul %929, %930, %cst_221 {dimension_numbers = #tpu.dot_dimension_numbers<[1], [0], [0], [1], [0, 0, 1, 1], [], []>} : vector<8x4xbf16>, vector<4x8xbf16>, vector<8x8xf32> -> vector<8x8xf32>
    %932 = arith.addf %521, %931 : vector<8x8xf32>
    %cst_222 = arith.constant 0.000000e+00 : f32
    %933 = vector.broadcast %cst_222 : f32 to vector<8x2x2xf32>
    %934 = vector.extract_strided_slice %175 {offsets = [0, 28], sizes = [8, 1], strides = [1, 1]} : vector<8x32xi32> to vector<8x1xi32>
    %935 = vector.extract_strided_slice %175 {offsets = [0, 29], sizes = [8, 1], strides = [1, 1]} : vector<8x32xi32> to vector<8x1xi32>
    %936 = vector.extract_strided_slice %174 {offsets = [0, 28], sizes = [8, 1], strides = [1, 1]} : vector<8x32xf32> to vector<8x1xf32>
    %937 = vector.extract_strided_slice %174 {offsets = [0, 29], sizes = [8, 1], strides = [1, 1]} : vector<8x32xf32> to vector<8x1xf32>
    %938 = vector.extract_strided_slice %180 {offsets = [0, 14], sizes = [8, 1], strides = [1, 1]} : vector<8x16xf32> to vector<8x1xf32>
    %939 = arith.mulf %938, %208 : vector<8x1xf32>
    %940 = vector.broadcast %934 : vector<8x1xi32> to vector<8x2xi32>
    %941 = arith.cmpi eq, %624, %940 : vector<8x2xi32>
    %cst_223 = arith.constant 1.000000e+00 : f32
    %942 = vector.broadcast %cst_223 : f32 to vector<8x1xf32>
    %943 = arith.subf %942, %936 : vector<8x1xf32>
    %cst_224 = arith.constant 0.000000e+00 : f32
    %944 = vector.shape_cast %943 : vector<8x1xf32> to vector<8x1xf32>
    %945 = vector.broadcast %944 : vector<8x1xf32> to vector<8x2xf32>
    %946 = vector.broadcast %cst_224 : f32 to vector<8x2xf32>
    %947 = arith.select %941, %945, %946 : vector<8x2xi1>, vector<8x2xf32>
    %c1_i32_225 = arith.constant 1 : i32
    %948 = vector.broadcast %c1_i32_225 : i32 to vector<8x1xi32>
    %949 = arith.addi %934, %948 : vector<8x1xi32>
    %950 = vector.broadcast %949 : vector<8x1xi32> to vector<8x2xi32>
    %951 = arith.cmpi eq, %624, %950 : vector<8x2xi32>
    %cst_226 = arith.constant 0.000000e+00 : f32
    %952 = vector.shape_cast %936 : vector<8x1xf32> to vector<8x1xf32>
    %953 = vector.broadcast %952 : vector<8x1xf32> to vector<8x2xf32>
    %954 = vector.broadcast %cst_226 : f32 to vector<8x2xf32>
    %955 = arith.select %951, %953, %954 : vector<8x2xi1>, vector<8x2xf32>
    %956 = arith.addf %947, %955 : vector<8x2xf32>
    %957 = vector.broadcast %935 : vector<8x1xi32> to vector<8x2xi32>
    %958 = arith.cmpi eq, %625, %957 : vector<8x2xi32>
    %cst_227 = arith.constant 1.000000e+00 : f32
    %959 = vector.broadcast %cst_227 : f32 to vector<8x1xf32>
    %960 = arith.subf %959, %937 : vector<8x1xf32>
    %cst_228 = arith.constant 0.000000e+00 : f32
    %961 = vector.shape_cast %960 : vector<8x1xf32> to vector<8x1xf32>
    %962 = vector.broadcast %961 : vector<8x1xf32> to vector<8x2xf32>
    %963 = vector.broadcast %cst_228 : f32 to vector<8x2xf32>
    %964 = arith.select %958, %962, %963 : vector<8x2xi1>, vector<8x2xf32>
    %c1_i32_229 = arith.constant 1 : i32
    %965 = vector.broadcast %c1_i32_229 : i32 to vector<8x1xi32>
    %966 = arith.addi %935, %965 : vector<8x1xi32>
    %967 = vector.broadcast %966 : vector<8x1xi32> to vector<8x2xi32>
    %968 = arith.cmpi eq, %625, %967 : vector<8x2xi32>
    %cst_230 = arith.constant 0.000000e+00 : f32
    %969 = vector.shape_cast %937 : vector<8x1xf32> to vector<8x1xf32>
    %970 = vector.broadcast %969 : vector<8x1xf32> to vector<8x2xf32>
    %971 = vector.broadcast %cst_230 : f32 to vector<8x2xf32>
    %972 = arith.select %968, %970, %971 : vector<8x2xi1>, vector<8x2xf32>
    %973 = arith.addf %964, %972 : vector<8x2xf32>
    %974 = vector.broadcast %939 : vector<8x1xf32> to vector<8x2xf32>
    %975 = arith.mulf %973, %974 : vector<8x2xf32>
    %976 = vector.shape_cast %975 : vector<8x2xf32> to vector<8x2x1xf32>
    %977 = vector.shape_cast %956 : vector<8x2xf32> to vector<8x1x2xf32>
    %978 = vector.broadcast %976 : vector<8x2x1xf32> to vector<8x2x2xf32>
    %979 = vector.broadcast %977 : vector<8x1x2xf32> to vector<8x2x2xf32>
    %980 = arith.mulf %978, %979 : vector<8x2x2xf32>
    %981 = arith.addf %933, %980 : vector<8x2x2xf32>
    %982 = vector.extract_strided_slice %175 {offsets = [0, 30], sizes = [8, 1], strides = [1, 1]} : vector<8x32xi32> to vector<8x1xi32>
    %983 = vector.extract_strided_slice %175 {offsets = [0, 31], sizes = [8, 1], strides = [1, 1]} : vector<8x32xi32> to vector<8x1xi32>
    %984 = vector.extract_strided_slice %174 {offsets = [0, 30], sizes = [8, 1], strides = [1, 1]} : vector<8x32xf32> to vector<8x1xf32>
    %985 = vector.extract_strided_slice %174 {offsets = [0, 31], sizes = [8, 1], strides = [1, 1]} : vector<8x32xf32> to vector<8x1xf32>
    %986 = vector.extract_strided_slice %180 {offsets = [0, 15], sizes = [8, 1], strides = [1, 1]} : vector<8x16xf32> to vector<8x1xf32>
    %987 = arith.mulf %986, %208 : vector<8x1xf32>
    %988 = vector.broadcast %982 : vector<8x1xi32> to vector<8x2xi32>
    %989 = arith.cmpi eq, %624, %988 : vector<8x2xi32>
    %cst_231 = arith.constant 1.000000e+00 : f32
    %990 = vector.broadcast %cst_231 : f32 to vector<8x1xf32>
    %991 = arith.subf %990, %984 : vector<8x1xf32>
    %cst_232 = arith.constant 0.000000e+00 : f32
    %992 = vector.shape_cast %991 : vector<8x1xf32> to vector<8x1xf32>
    %993 = vector.broadcast %992 : vector<8x1xf32> to vector<8x2xf32>
    %994 = vector.broadcast %cst_232 : f32 to vector<8x2xf32>
    %995 = arith.select %989, %993, %994 : vector<8x2xi1>, vector<8x2xf32>
    %c1_i32_233 = arith.constant 1 : i32
    %996 = vector.broadcast %c1_i32_233 : i32 to vector<8x1xi32>
    %997 = arith.addi %982, %996 : vector<8x1xi32>
    %998 = vector.broadcast %997 : vector<8x1xi32> to vector<8x2xi32>
    %999 = arith.cmpi eq, %624, %998 : vector<8x2xi32>
    %cst_234 = arith.constant 0.000000e+00 : f32
    %1000 = vector.shape_cast %984 : vector<8x1xf32> to vector<8x1xf32>
    %1001 = vector.broadcast %1000 : vector<8x1xf32> to vector<8x2xf32>
    %1002 = vector.broadcast %cst_234 : f32 to vector<8x2xf32>
    %1003 = arith.select %999, %1001, %1002 : vector<8x2xi1>, vector<8x2xf32>
    %1004 = arith.addf %995, %1003 : vector<8x2xf32>
    %1005 = vector.broadcast %983 : vector<8x1xi32> to vector<8x2xi32>
    %1006 = arith.cmpi eq, %625, %1005 : vector<8x2xi32>
    %cst_235 = arith.constant 1.000000e+00 : f32
    %1007 = vector.broadcast %cst_235 : f32 to vector<8x1xf32>
    %1008 = arith.subf %1007, %985 : vector<8x1xf32>
    %cst_236 = arith.constant 0.000000e+00 : f32
    %1009 = vector.shape_cast %1008 : vector<8x1xf32> to vector<8x1xf32>
    %1010 = vector.broadcast %1009 : vector<8x1xf32> to vector<8x2xf32>
    %1011 = vector.broadcast %cst_236 : f32 to vector<8x2xf32>
    %1012 = arith.select %1006, %1010, %1011 : vector<8x2xi1>, vector<8x2xf32>
    %c1_i32_237 = arith.constant 1 : i32
    %1013 = vector.broadcast %c1_i32_237 : i32 to vector<8x1xi32>
    %1014 = arith.addi %983, %1013 : vector<8x1xi32>
    %1015 = vector.broadcast %1014 : vector<8x1xi32> to vector<8x2xi32>
    %1016 = arith.cmpi eq, %625, %1015 : vector<8x2xi32>
    %cst_238 = arith.constant 0.000000e+00 : f32
    %1017 = vector.shape_cast %985 : vector<8x1xf32> to vector<8x1xf32>
    %1018 = vector.broadcast %1017 : vector<8x1xf32> to vector<8x2xf32>
    %1019 = vector.broadcast %cst_238 : f32 to vector<8x2xf32>
    %1020 = arith.select %1016, %1018, %1019 : vector<8x2xi1>, vector<8x2xf32>
    %1021 = arith.addf %1012, %1020 : vector<8x2xf32>
    %1022 = vector.broadcast %987 : vector<8x1xf32> to vector<8x2xf32>
    %1023 = arith.mulf %1021, %1022 : vector<8x2xf32>
    %1024 = vector.shape_cast %1023 : vector<8x2xf32> to vector<8x2x1xf32>
    %1025 = vector.shape_cast %1004 : vector<8x2xf32> to vector<8x1x2xf32>
    %1026 = vector.broadcast %1024 : vector<8x2x1xf32> to vector<8x2x2xf32>
    %1027 = vector.broadcast %1025 : vector<8x1x2xf32> to vector<8x2x2xf32>
    %1028 = arith.mulf %1026, %1027 : vector<8x2x2xf32>
    %1029 = arith.addf %981, %1028 : vector<8x2x2xf32>
    %1030 = vector.shape_cast %1029 : vector<8x2x2xf32> to vector<8x4xf32>
    %1031 = arith.truncf %1030 : vector<8x4xf32> to vector<8x4xbf16>
    %1032 = vector.extract_strided_slice %626 {offsets = [0, 24], sizes = [4, 8], strides = [1, 1]} : vector<4x32xbf16> to vector<4x8xbf16>
    %cst_239 = arith.constant dense<0.000000e+00> : vector<8x8xf32>
    %1033 = tpu.matmul %1031, %1032, %cst_239 {dimension_numbers = #tpu.dot_dimension_numbers<[1], [0], [0], [1], [0, 0, 1, 1], [], []>} : vector<8x4xbf16>, vector<4x8xbf16>, vector<8x8xf32> -> vector<8x8xf32>
    %1034 = arith.addf %623, %1033 : vector<8x8xf32>
    %cst_240 = arith.constant 0.000000e+00 : f32
    %1035 = vector.broadcast %cst_240 : f32 to vector<8x32xf32>
    %c0_241 = arith.constant 0 : index
    %c0_242 = arith.constant 0 : index
    %1036 = vector.load %arg19[%c0_241, %c0_242] : memref<32x32xbf16, #tpu.memory_space<vmem>>, vector<8x32xbf16>
    %1037 = arith.truncf %728 : vector<8x8xf32> to vector<8x8xbf16>
    %cst_243 = arith.constant dense<0.000000e+00> : vector<8x32xf32>
    %1038 = tpu.matmul %1037, %1036, %cst_243 {dimension_numbers = #tpu.dot_dimension_numbers<[1], [0], [0], [1], [0, 0, 1, 1], [], []>} : vector<8x8xbf16>, vector<8x32xbf16>, vector<8x32xf32> -> vector<8x32xf32>
    %1039 = arith.addf %1035, %1038 : vector<8x32xf32>
    %c8_244 = arith.constant 8 : index
    %c0_245 = arith.constant 0 : index
    %1040 = vector.load %arg19[%c8_244, %c0_245] : memref<32x32xbf16, #tpu.memory_space<vmem>>, vector<8x32xbf16>
    %1041 = arith.truncf %830 : vector<8x8xf32> to vector<8x8xbf16>
    %cst_246 = arith.constant dense<0.000000e+00> : vector<8x32xf32>
    %1042 = tpu.matmul %1041, %1040, %cst_246 {dimension_numbers = #tpu.dot_dimension_numbers<[1], [0], [0], [1], [0, 0, 1, 1], [], []>} : vector<8x8xbf16>, vector<8x32xbf16>, vector<8x32xf32> -> vector<8x32xf32>
    %1043 = arith.addf %1039, %1042 : vector<8x32xf32>
    %c16_247 = arith.constant 16 : index
    %c0_248 = arith.constant 0 : index
    %1044 = vector.load %arg19[%c16_247, %c0_248] : memref<32x32xbf16, #tpu.memory_space<vmem>>, vector<8x32xbf16>
    %1045 = arith.truncf %932 : vector<8x8xf32> to vector<8x8xbf16>
    %cst_249 = arith.constant dense<0.000000e+00> : vector<8x32xf32>
    %1046 = tpu.matmul %1045, %1044, %cst_249 {dimension_numbers = #tpu.dot_dimension_numbers<[1], [0], [0], [1], [0, 0, 1, 1], [], []>} : vector<8x8xbf16>, vector<8x32xbf16>, vector<8x32xf32> -> vector<8x32xf32>
    %1047 = arith.addf %1043, %1046 : vector<8x32xf32>
    %c24_250 = arith.constant 24 : index
    %c0_251 = arith.constant 0 : index
    %1048 = vector.load %arg19[%c24_250, %c0_251] : memref<32x32xbf16, #tpu.memory_space<vmem>>, vector<8x32xbf16>
    %1049 = arith.truncf %1034 : vector<8x8xf32> to vector<8x8xbf16>
    %cst_252 = arith.constant dense<0.000000e+00> : vector<8x32xf32>
    %1050 = tpu.matmul %1049, %1048, %cst_252 {dimension_numbers = #tpu.dot_dimension_numbers<[1], [0], [0], [1], [0, 0, 1, 1], [], []>} : vector<8x8xbf16>, vector<8x32xbf16>, vector<8x32xf32> -> vector<8x32xf32>
    %1051 = arith.addf %1047, %1050 : vector<8x32xf32>
    %c0_253 = arith.constant 0 : index
    %c0_254 = arith.constant 0 : index
    %1052 = vector.load %arg20[%c0_253, %c0_254] : memref<1x32xf32, #tpu.memory_space<vmem>>, vector<1x32xf32>
    %1053 = vector.broadcast %1052 : vector<1x32xf32> to vector<8x32xf32>
    %1054 = arith.addf %1051, %1053 : vector<8x32xf32>
    %1055 = arith.addf %140, %1054 : vector<8x32xf32>
    %cst_255 = arith.constant dense<0.000000e+00> : vector<8xf32>
    %1056 = vector.multi_reduction <add>, %1055, %cst_255 [1] : vector<8x32xf32> to vector<8xf32>
    %1057 = vector.shape_cast %1056 : vector<8xf32> to vector<8x1xf32>
    %cst_256 = arith.constant 3.200000e+01 : f32
    %1058 = vector.broadcast %cst_256 : f32 to vector<8x1xf32>
    %1059 = arith.divf %1057, %1058 : vector<8x1xf32>
    %1060 = vector.broadcast %1059 : vector<8x1xf32> to vector<8x32xf32>
    %1061 = arith.subf %1055, %1060 : vector<8x32xf32>
    %1062 = arith.mulf %1061, %1061 : vector<8x32xf32>
    %cst_257 = arith.constant dense<0.000000e+00> : vector<8xf32>
    %1063 = vector.multi_reduction <add>, %1062, %cst_257 [1] : vector<8x32xf32> to vector<8xf32>
    %1064 = vector.shape_cast %1063 : vector<8xf32> to vector<8x1xf32>
    %cst_258 = arith.constant 3.200000e+01 : f32
    %1065 = vector.broadcast %cst_258 : f32 to vector<8x1xf32>
    %1066 = arith.divf %1064, %1065 : vector<8x1xf32>
    %cst_259 = arith.constant 9.99999974E-6 : f32
    %1067 = vector.broadcast %cst_259 : f32 to vector<8x1xf32>
    %1068 = arith.addf %1066, %1067 : vector<8x1xf32>
    %1069 = math.rsqrt %1068 : vector<8x1xf32>
    %1070 = vector.broadcast %1069 : vector<8x1xf32> to vector<8x32xf32>
    %1071 = arith.mulf %1061, %1070 : vector<8x32xf32>
    %c0_260 = arith.constant 0 : index
    %c0_261 = arith.constant 0 : index
    %1072 = vector.load %arg21[%c0_260, %c0_261] : memref<1x32xf32, #tpu.memory_space<vmem>>, vector<1x32xf32>
    %1073 = vector.broadcast %1072 : vector<1x32xf32> to vector<8x32xf32>
    %1074 = arith.mulf %1071, %1073 : vector<8x32xf32>
    %c0_262 = arith.constant 0 : index
    %c0_263 = arith.constant 0 : index
    %1075 = vector.load %arg22[%c0_262, %c0_263] : memref<1x32xf32, #tpu.memory_space<vmem>>, vector<1x32xf32>
    %1076 = vector.broadcast %1075 : vector<1x32xf32> to vector<8x32xf32>
    %1077 = arith.addf %1074, %1076 : vector<8x32xf32>
    %c0_264 = arith.constant 0 : index
    %c0_265 = arith.constant 0 : index
    %1078 = vector.load %arg23[%c0_264, %c0_265] : memref<32x64xbf16, #tpu.memory_space<vmem>>, vector<32x64xbf16>
    %1079 = arith.truncf %1077 : vector<8x32xf32> to vector<8x32xbf16>
    %cst_266 = arith.constant dense<0.000000e+00> : vector<8x64xf32>
    %1080 = tpu.matmul %1079, %1078, %cst_266 {dimension_numbers = #tpu.dot_dimension_numbers<[1], [0], [0], [1], [0, 0, 1, 1], [], []>} : vector<8x32xbf16>, vector<32x64xbf16>, vector<8x64xf32> -> vector<8x64xf32>
    %c0_267 = arith.constant 0 : index
    %c0_268 = arith.constant 0 : index
    %1081 = vector.load %arg24[%c0_267, %c0_268] : memref<1x64xf32, #tpu.memory_space<vmem>>, vector<1x64xf32>
    %1082 = vector.broadcast %1081 : vector<1x64xf32> to vector<8x64xf32>
    %1083 = arith.addf %1080, %1082 : vector<8x64xf32>
    %cst_269 = arith.constant 0.000000e+00 : f32
    %1084 = vector.broadcast %cst_269 : f32 to vector<8x64xf32>
    %1085 = arith.maximumf %1083, %1084 : vector<8x64xf32>
    %c0_270 = arith.constant 0 : index
    %c0_271 = arith.constant 0 : index
    %1086 = vector.load %arg25[%c0_270, %c0_271] : memref<64x32xbf16, #tpu.memory_space<vmem>>, vector<64x32xbf16>
    %1087 = arith.truncf %1085 : vector<8x64xf32> to vector<8x64xbf16>
    %cst_272 = arith.constant dense<0.000000e+00> : vector<8x32xf32>
    %1088 = tpu.matmul %1087, %1086, %cst_272 {dimension_numbers = #tpu.dot_dimension_numbers<[1], [0], [0], [1], [0, 0, 1, 1], [], []>} : vector<8x64xbf16>, vector<64x32xbf16>, vector<8x32xf32> -> vector<8x32xf32>
    %c0_273 = arith.constant 0 : index
    %c0_274 = arith.constant 0 : index
    %1089 = vector.load %arg26[%c0_273, %c0_274] : memref<1x32xf32, #tpu.memory_space<vmem>>, vector<1x32xf32>
    %1090 = vector.broadcast %1089 : vector<1x32xf32> to vector<8x32xf32>
    %1091 = arith.addf %1088, %1090 : vector<8x32xf32>
    %1092 = arith.addf %1077, %1091 : vector<8x32xf32>
    %cst_275 = arith.constant dense<0.000000e+00> : vector<8xf32>
    %1093 = vector.multi_reduction <add>, %1092, %cst_275 [1] : vector<8x32xf32> to vector<8xf32>
    %1094 = vector.shape_cast %1093 : vector<8xf32> to vector<8x1xf32>
    %cst_276 = arith.constant 3.200000e+01 : f32
    %1095 = vector.broadcast %cst_276 : f32 to vector<8x1xf32>
    %1096 = arith.divf %1094, %1095 : vector<8x1xf32>
    %1097 = vector.broadcast %1096 : vector<8x1xf32> to vector<8x32xf32>
    %1098 = arith.subf %1092, %1097 : vector<8x32xf32>
    %1099 = arith.mulf %1098, %1098 : vector<8x32xf32>
    %cst_277 = arith.constant dense<0.000000e+00> : vector<8xf32>
    %1100 = vector.multi_reduction <add>, %1099, %cst_277 [1] : vector<8x32xf32> to vector<8xf32>
    %1101 = vector.shape_cast %1100 : vector<8xf32> to vector<8x1xf32>
    %cst_278 = arith.constant 3.200000e+01 : f32
    %1102 = vector.broadcast %cst_278 : f32 to vector<8x1xf32>
    %1103 = arith.divf %1101, %1102 : vector<8x1xf32>
    %cst_279 = arith.constant 9.99999974E-6 : f32
    %1104 = vector.broadcast %cst_279 : f32 to vector<8x1xf32>
    %1105 = arith.addf %1103, %1104 : vector<8x1xf32>
    %1106 = math.rsqrt %1105 : vector<8x1xf32>
    %1107 = vector.broadcast %1106 : vector<8x1xf32> to vector<8x32xf32>
    %1108 = arith.mulf %1098, %1107 : vector<8x32xf32>
    %c0_280 = arith.constant 0 : index
    %c0_281 = arith.constant 0 : index
    %1109 = vector.load %arg27[%c0_280, %c0_281] : memref<1x32xf32, #tpu.memory_space<vmem>>, vector<1x32xf32>
    %1110 = vector.broadcast %1109 : vector<1x32xf32> to vector<8x32xf32>
    %1111 = arith.mulf %1108, %1110 : vector<8x32xf32>
    %c0_282 = arith.constant 0 : index
    %c0_283 = arith.constant 0 : index
    %1112 = vector.load %arg28[%c0_282, %c0_283] : memref<1x32xf32, #tpu.memory_space<vmem>>, vector<1x32xf32>
    %1113 = vector.broadcast %1112 : vector<1x32xf32> to vector<8x32xf32>
    %1114 = arith.addf %1111, %1113 : vector<8x32xf32>
    %c0_284 = arith.constant 0 : index
    %c0_285 = arith.constant 0 : index
    %c0_286 = arith.constant 0 : index
    %1115 = vector.load %arg29[%c0_284, %c0_285, %c0_286] : memref<1x8x32xf32, #tpu.memory_space<vmem>>, vector<1x8x32xf32>
    %1116 = vector.shape_cast %1115 : vector<1x8x32xf32> to vector<8x32xf32>
    %1117 = vector.shape_cast %1114 : vector<8x32xf32> to vector<1x8x32xf32>
    tpu.vector_store %arg29[%c0_284, %c0_285, %c0_286], %1117 {strides = array<i32>} : memref<1x8x32xf32, #tpu.memory_space<vmem>>, vector<1x8x32xf32>,
    return
  }
  func.func @transform_0(%arg0: i32) -> (i32, i32, i32) {
    %c0_i32 = arith.constant 0 : i32
    %c0_i32_0 = arith.constant 0 : i32
    %c0_i32_1 = arith.constant 0 : i32
    return %arg0, %c0_i32, %c0_i32_0 : i32, i32, i32
  }
  func.func @transform_1(%arg0: i32) -> (i32, i32, i32) {
    %c0_i32 = arith.constant 0 : i32
    %c0_i32_0 = arith.constant 0 : i32
    %c0_i32_1 = arith.constant 0 : i32
    return %arg0, %c0_i32, %c0_i32_0 : i32, i32, i32
  }
  func.func @transform_2(%arg0: i32) -> (i32, i32, i32) {
    %c0_i32 = arith.constant 0 : i32
    %c0_i32_0 = arith.constant 0 : i32
    %c0_i32_1 = arith.constant 0 : i32
    return %arg0, %c0_i32, %c0_i32_0 : i32, i32, i32
  }
  func.func @transform_3(%arg0: i32) -> (i32, i32, i32) {
    %c0_i32 = arith.constant 0 : i32
    %c0_i32_0 = arith.constant 0 : i32
    %c0_i32_1 = arith.constant 0 : i32
    return %arg0, %c0_i32, %c0_i32_0 : i32, i32, i32
  }
  func.func @transform_4(%arg0: i32) -> (i32, i32) {
    %c0_i32 = arith.constant 0 : i32
    %c0_i32_0 = arith.constant 0 : i32
    %c0_i32_1 = arith.constant 0 : i32
    return %c0_i32, %c0_i32_0 : i32, i32
  }
  func.func @transform_5(%arg0: i32) -> (i32, i32) {
    %c0_i32 = arith.constant 0 : i32
    %c0_i32_0 = arith.constant 0 : i32
    %c0_i32_1 = arith.constant 0 : i32
    return %c0_i32, %c0_i32_0 : i32, i32
  }
  func.func @transform_6(%arg0: i32) -> (i32, i32) {
    %c0_i32 = arith.constant 0 : i32
    %c0_i32_0 = arith.constant 0 : i32
    %c0_i32_1 = arith.constant 0 : i32
    return %c0_i32, %c0_i32_0 : i32, i32
  }
  func.func @transform_7(%arg0: i32) -> (i32, i32) {
    %c0_i32 = arith.constant 0 : i32
    %c0_i32_0 = arith.constant 0 : i32
    %c0_i32_1 = arith.constant 0 : i32
    return %c0_i32, %c0_i32_0 : i32, i32
  }
  func.func @transform_8(%arg0: i32) -> (i32, i32) {
    %c0_i32 = arith.constant 0 : i32
    %c0_i32_0 = arith.constant 0 : i32
    %c0_i32_1 = arith.constant 0 : i32
    return %c0_i32, %c0_i32_0 : i32, i32
  }
  func.func @transform_9(%arg0: i32) -> (i32, i32) {
    %c0_i32 = arith.constant 0 : i32
    %c0_i32_0 = arith.constant 0 : i32
    %c0_i32_1 = arith.constant 0 : i32
    return %c0_i32, %c0_i32_0 : i32, i32
  }
  func.func @transform_10(%arg0: i32) -> (i32, i32) {
    %c0_i32 = arith.constant 0 : i32
    %c0_i32_0 = arith.constant 0 : i32
    %c0_i32_1 = arith.constant 0 : i32
    return %c0_i32, %c0_i32_0 : i32, i32
  }
  func.func @transform_11(%arg0: i32) -> (i32, i32) {
    %c0_i32 = arith.constant 0 : i32
    %c0_i32_0 = arith.constant 0 : i32
    %c0_i32_1 = arith.constant 0 : i32
    return %c0_i32, %c0_i32_0 : i32, i32
  }
  func.func @transform_12(%arg0: i32) -> (i32, i32) {
    %c0_i32 = arith.constant 0 : i32
    %c0_i32_0 = arith.constant 0 : i32
    %c0_i32_1 = arith.constant 0 : i32
    return %c0_i32, %c0_i32_0 : i32, i32
  }
  func.func @transform_13(%arg0: i32) -> (i32, i32) {
    %c0_i32 = arith.constant 0 : i32
    %c0_i32_0 = arith.constant 0 : i32
    %c0_i32_1 = arith.constant 0 : i32
    return %c0_i32, %c0_i32_0 : i32, i32
  }
  func.func @transform_14(%arg0: i32) -> (i32, i32) {
    %c0_i32 = arith.constant 0 : i32
    %c0_i32_0 = arith.constant 0 : i32
    %c0_i32_1 = arith.constant 0 : i32
    return %c0_i32, %c0_i32_0 : i32, i32
  }
  func.func @transform_15(%arg0: i32) -> (i32, i32) {
    %c0_i32 = arith.constant 0 : i32
    %c0_i32_0 = arith.constant 0 : i32
    %c0_i32_1 = arith.constant 0 : i32
    return %c0_i32, %c0_i32_0 : i32, i32
  }
  func.func @transform_16(%arg0: i32) -> (i32, i32) {
    %c0_i32 = arith.constant 0 : i32
    %c0_i32_0 = arith.constant 0 : i32
    %c0_i32_1 = arith.constant 0 : i32
    return %c0_i32, %c0_i32_0 : i32, i32
  }
  func.func @transform_17(%arg0: i32) -> (i32, i32) {
    %c0_i32 = arith.constant 0 : i32
    %c0_i32_0 = arith.constant 0 : i32
    %c0_i32_1 = arith.constant 0 : i32
    return %c0_i32, %c0_i32_0 : i32, i32
  }
  func.func @transform_18(%arg0: i32) -> (i32, i32) {
    %c0_i32 = arith.constant 0 : i32
    %c0_i32_0 = arith.constant 0 : i32
    %c0_i32_1 = arith.constant 0 : i32
    return %c0_i32, %c0_i32_0 : i32, i32
  }
  func.func @transform_19(%arg0: i32) -> (i32, i32) {
    %c0_i32 = arith.constant 0 : i32
    %c0_i32_0 = arith.constant 0 : i32
    %c0_i32_1 = arith.constant 0 : i32
    return %c0_i32, %c0_i32_0 : i32, i32
  }
  func.func @transform_20(%arg0: i32) -> (i32, i32) {
    %c0_i32 = arith.constant 0 : i32
    %c0_i32_0 = arith.constant 0 : i32
    %c0_i32_1 = arith.constant 0 : i32
    return %c0_i32, %c0_i32_0 : i32, i32
  }
  func.func @transform_21(%arg0: i32) -> (i32, i32) {
    %c0_i32 = arith.constant 0 : i32
    %c0_i32_0 = arith.constant 0 : i32
    %c0_i32_1 = arith.constant 0 : i32
    return %c0_i32, %c0_i32_0 : i32, i32
  }
  func.func @transform_22(%arg0: i32) -> (i32, i32) {
    %c0_i32 = arith.constant 0 : i32
    %c0_i32_0 = arith.constant 0 : i32
    %c0_i32_1 = arith.constant 0 : i32
    return %c0_i32, %c0_i32_0 : i32, i32
  }
  func.func @transform_23(%arg0: i32) -> (i32, i32) {
    %c0_i32 = arith.constant 0 : i32
    %c0_i32_0 = arith.constant 0 : i32
    %c0_i32_1 = arith.constant 0 : i32
    return %c0_i32, %c0_i32_0 : i32, i32
  }
  func.func @transform_24(%arg0: i32) -> (i32, i32) {
    %c0_i32 = arith.constant 0 : i32
    %c0_i32_0 = arith.constant 0 : i32
    %c0_i32_1 = arith.constant 0 : i32
    return %c0_i32, %c0_i32_0 : i32, i32
  }
  func.func @transform_25(%arg0: i32) -> (i32, i32) {
    %c0_i32 = arith.constant 0 : i32
    %c0_i32_0 = arith.constant 0 : i32
    %c0_i32_1 = arith.constant 0 : i32
    return %c0_i32, %c0_i32_0 : i32, i32
  }
  func.func @transform_26(%arg0: i32) -> (i32, i32) {
    %c0_i32 = arith.constant 0 : i32
    %c0_i32_0 = arith.constant 0 : i32
    %c0_i32_1 = arith.constant 0 : i32
    return %c0_i32, %c0_i32_0 : i32, i32
  }
  func.func @transform_27(%arg0: i32) -> (i32, i32) {
    %c0_i32 = arith.constant 0 : i32
    %c0_i32_0 = arith.constant 0 : i32
    %c0_i32_1 = arith.constant 0 : i32
    return %c0_i32, %c0_i32_0 : i32, i32
  }
  func.func @transform_28(%arg0: i32) -> (i32, i32, i32) {
    %c0_i32 = arith.constant 0 : i32
    %c0_i32_0 = arith.constant 0 : i32
    %c0_i32_1 = arith.constant 0 : i32
    return %arg0, %c0_i32, %c0_i32_0 : i32, i32, i32
  }
  func.func @transform_29(%arg0: i32) -> (i32, i32, i32) {
    %c0_i32 = arith.constant 0 : i32
    %c0_i32_0 = arith.constant 0 : i32
    %c0_i32_1 = arith.constant 0 : i32
    return %arg0, %c0_i32, %c0_i32_0 : i32, i32, i32
  }
}

</mosaic_0001>

<llo_original>
// kernel: tpu_custom_call.1
$region0: #{tpu_custom_call.1}
  #allocation0 [shape = 'u32[]', space=smem, size = 0x4, offset = 0x4, fixed_abs, tag = 'smem constant byte address 0x4 - core index']
  #allocation1 [shape = 'u32[144,128]{1,0:T(1,128)}', space=vmem, size = 0x12000, scoped, tag = 'internal scratch']
  %s0 = inlined_call_operand.smem [shape: u32[30], index: -1, kind: input, shape index: {}]
  %s1 = sld [smem:[%s0]]
  %s2 = scalar_lea.smem %s0, 1
  %s3 = sld [smem:[%s2]]
  %s4 = scalar_lea.smem %s0, 2
  %s5 = sld [smem:[%s4]]
  %s6 = scalar_lea.smem %s0, 3
  %s7 = sld [smem:[%s6]]
  %s8 = scalar_lea.smem %s0, 4
  %s9 = sld [smem:[%s8]]
  %s10 = scalar_lea.smem %s0, 5
  %s11 = sld [smem:[%s10]]
  %s12 = scalar_lea.smem %s0, 6
  %s13 = sld [smem:[%s12]]
  %s14 = scalar_lea.smem %s0, 7
  %s15 = sld [smem:[%s14]]
  %s16 = scalar_lea.smem %s0, 8
  %s17 = sld [smem:[%s16]]
  %s18 = scalar_lea.smem %s0, 9
  %s19 = sld [smem:[%s18]]
  %s20 = scalar_lea.smem %s0, 10
  %s21 = sld [smem:[%s20]]
  %s22 = scalar_lea.smem %s0, 11
  %s23 = sld [smem:[%s22]]
  %s24 = scalar_lea.smem %s0, 12
  %s25 = sld [smem:[%s24]]
  %s26 = scalar_lea.smem %s0, 13
  %s27 = sld [smem:[%s26]]
  %s28 = scalar_lea.smem %s0, 14
  %s29 = sld [smem:[%s28]]
  %s30 = scalar_lea.smem %s0, 15
  %s31 = sld [smem:[%s30]]
  %s32 = scalar_lea.smem %s0, 16
  %s33 = sld [smem:[%s32]]
  %s34 = scalar_lea.smem %s0, 17
  %s35 = sld [smem:[%s34]]
  %s36 = scalar_lea.smem %s0, 18
  %s37 = sld [smem:[%s36]]
  %s38 = scalar_lea.smem %s0, 19
  %s39 = sld [smem:[%s38]]
  %s40 = scalar_lea.smem %s0, 20
  %s41 = sld [smem:[%s40]]
  %s42 = scalar_lea.smem %s0, 21
  %s43 = sld [smem:[%s42]]
  %s44 = scalar_lea.smem %s0, 22
  %s45 = sld [smem:[%s44]]
  %s46 = scalar_lea.smem %s0, 23
  %s47 = sld [smem:[%s46]]
  %s48 = scalar_lea.smem %s0, 24
  %s49 = sld [smem:[%s48]]
  %s50 = scalar_lea.smem %s0, 25
  %s51 = sld [smem:[%s50]]
  %s52 = scalar_lea.smem %s0, 26
  %s53 = sld [smem:[%s52]]
  %s54 = scalar_lea.smem %s0, 27
  %s55 = sld [smem:[%s54]]
  %s56 = scalar_lea.smem %s0, 28
  %s57 = sld [smem:[%s56]]
  %s58 = scalar_lea.smem %s0, 29
  %s59 = sld [smem:[%s58]]
  %60 = xla_tuple %s57, %s59
  %s61 = sld [smem:[#allocation0]]
  $region181: #{tpu_custom_call.1} parent=0
    _
  %s63 = ssub.s32 1, %s61
  %s64 = scalar_select 0, %s63, %s61
  $region1: #{tpu_custom_call.1} parent=0
    #allocation2 [shape = 'u8[4096]{0}', space=vmem, size = 0x1000, scoped, tag = 'input window, operand 1']
    #allocation3 [shape = 's32[2]{0}', space=sflag, size = 0x8, scoped, tag = 'scoped memory for tpu_custom_call.1']
    #allocation4 [shape = 's32[2]{0}', space=sflag, size = 0x8, scoped, tag = 'scoped memory for tpu_custom_call.1']
    #allocation5 [shape = 'u8[512]{0}', space=vmem, size = 0x400, scoped, tag = 'input window, operand 5, single buffered']
    #allocation6 [shape = 's32[1]{0}', space=sflag, size = 0x4, scoped, tag = 'scoped memory for tpu_custom_call.1']
    #allocation7 [shape = 'u8[512]{0}', space=vmem, size = 0x400, scoped, tag = 'input window, operand 7, single buffered']
    #allocation8 [shape = 'u8[512]{0}', space=vmem, size = 0x400, scoped, tag = 'input window, operand 9, single buffered']
    #allocation9 [shape = 's32[1]{0}', space=sflag, size = 0x4, scoped, tag = 'scoped memory for tpu_custom_call.1']
    #allocation10 [shape = 'u8[512]{0}', space=vmem, size = 0x400, scoped, tag = 'input window, operand 10, single buffered']
    #allocation11 [shape = 'u8[512]{0}', space=vmem, size = 0x400, scoped, tag = 'input window, operand 11, single buffered']
    #allocation12 [shape = 's32[1]{0}', space=sflag, size = 0x4, scoped, tag = 'scoped memory for tpu_custom_call.1']
    #allocation13 [shape = 'u8[512]{0}', space=vmem, size = 0x400, scoped, tag = 'input window, operand 13, single buffered']
    #allocation14 [shape = 'u8[8192]{0}', space=vmem, size = 0x2000, scoped, tag = 'output window, operand 0']
    #allocation15 [shape = 'u8[8192]{0}', space=vmem, size = 0x2000, scoped, tag = 'output window, operand 1']
    #allocation16 [shape = 's32[2]{0}', space=sflag, size = 0x8, scoped, tag = 'scoped memory for tpu_custom_call.1']
    %65 = vsyncpa [#allocation3], 0
    %s66 = scalar_lea.sflag [#allocation3], 1
    %67 = vsyncpa %s66, 0
    %68 = vsyncpa [#allocation6], 0
    %69 = vsyncpa [#allocation9], 0
    %70 = vsyncpa [#allocation12], 0
    %71 = vsyncpa [#allocation4], 0
    %s72 = scalar_lea.sflag [#allocation4], 1
    %73 = vsyncpa %s72, 0
    %74 = vsyncpa [#allocation16], 0
    %s75 = scalar_lea.sflag [#allocation16], 1
    %76 = vsyncpa %s75, 0
    loop: start=0, step=1, limit=4
    $region2: #{tpu_custom_call.1} parent=1 // loop_pre_header
      _
    $region3: #{tpu_custom_call.1} parent=1 // loop_header
      %s78 = sphi 0, %s82
      %p79 = scmp.ge.s32.totalorder %s78, 4
      %s88 = sphi 0, %s90
      %s91 = sphi 0, %s88
      %s92 = sphi 0, %s91
      %s108 = sphi 0, %s92
      %s114 = sphi 0, %s116
      %s117 = sphi 0, %s114
      %s118 = sphi 0, %s117
      %s134 = sphi 0, %s118
      %s140 = sphi 0, %s142
      %s143 = sphi 0, %s140
      %s144 = sphi 0, %s143
      %s160 = sphi 0, %s144
      %s166 = sphi 0, %s168
      %s169 = sphi 0, %s166
      %s170 = sphi 0, %s169
      %s186 = sphi 0, %s170
      %s190 = sphi 0, %s190
      %s192 = sphi 0, %s190
      %s193 = sphi 0, %s192
      %s207 = sphi 0, %s193
      %s211 = sphi 0, %s211
      %s213 = sphi 0, %s211
      %s214 = sphi 0, %s213
      %s228 = sphi 0, %s214
      %s232 = sphi 0, %s232
      %s234 = sphi 0, %s232
      %s235 = sphi 0, %s234
      %s249 = sphi 0, %s235
      %s253 = sphi 0, %s253
      %s255 = sphi 0, %s253
      %s256 = sphi 0, %s255
      %s270 = sphi 0, %s256
      %s274 = sphi 0, %s274
      %s276 = sphi 0, %s274
      %s277 = sphi 0, %s276
      %s291 = sphi 0, %s277
      %s295 = sphi 0, %s295
      %s297 = sphi 0, %s295
      %s298 = sphi 0, %s297
      %s312 = sphi 0, %s298
      %s316 = sphi 0, %s316
      %s318 = sphi 0, %s316
      %s319 = sphi 0, %s318
      %s333 = sphi 0, %s319
      %s337 = sphi 0, %s337
      %s339 = sphi 0, %s337
      %s340 = sphi 0, %s339
      %s354 = sphi 0, %s340
      %s358 = sphi 0, %s358
      %s360 = sphi 0, %s358
      %s361 = sphi 0, %s360
      %s375 = sphi 0, %s361
      %s379 = sphi 0, %s379
      %s381 = sphi 0, %s379
      %s382 = sphi 0, %s381
      %s396 = sphi 0, %s382
      %s400 = sphi 0, %s400
      %s402 = sphi 0, %s400
      %s403 = sphi 0, %s402
      %s417 = sphi 0, %s403
      %s421 = sphi 0, %s421
      %s423 = sphi 0, %s421
      %s424 = sphi 0, %s423
      %s438 = sphi 0, %s424
      %s442 = sphi 0, %s442
      %s444 = sphi 0, %s442
      %s445 = sphi 0, %s444
      %s459 = sphi 0, %s445
      %s463 = sphi 0, %s463
      %s465 = sphi 0, %s463
      %s466 = sphi 0, %s465
      %s480 = sphi 0, %s466
      %s484 = sphi 0, %s484
      %s486 = sphi 0, %s484
      %s487 = sphi 0, %s486
      %s501 = sphi 0, %s487
      %s505 = sphi 0, %s505
      %s507 = sphi 0, %s505
      %s508 = sphi 0, %s507
      %s522 = sphi 0, %s508
      %s526 = sphi 0, %s526
      %s528 = sphi 0, %s526
      %s529 = sphi 0, %s528
      %s543 = sphi 0, %s529
      %s547 = sphi 0, %s547
      %s549 = sphi 0, %s547
      %s550 = sphi 0, %s549
      %s564 = sphi 0, %s550
      %s568 = sphi 0, %s568
      %s570 = sphi 0, %s568
      %s571 = sphi 0, %s570
      %s585 = sphi 0, %s571
      %s589 = sphi 0, %s589
      %s591 = sphi 0, %s589
      %s592 = sphi 0, %s591
      %s606 = sphi 0, %s592
      %s610 = sphi 0, %s610
      %s612 = sphi 0, %s610
      %s613 = sphi 0, %s612
      %s627 = sphi 0, %s613
      %s631 = sphi 0, %s631
      %s633 = sphi 0, %s631
      %s634 = sphi 0, %s633
      %s648 = sphi 0, %s634
      %s652 = sphi 0, %s652
      %s654 = sphi 0, %s652
      %s655 = sphi 0, %s654
      %s669 = sphi 0, %s655
      %s673 = sphi 0, %s673
      %s675 = sphi 0, %s673
      %s676 = sphi 0, %s675
      %s690 = sphi 0, %s676
      %s696 = sphi 0, %s698
      %s699 = sphi 0, %s696
      %s700 = sphi 0, %s699
      %s716 = sphi 0, %s700
      %s722 = sphi 0, %s724
      %s725 = sphi 0, %s722
      %s726 = sphi 0, %s725
      %s742 = sphi 0, %s726
    $region4: #{tpu_custom_call.1} parent=1 // loop_header_branch
      %81 = sbr.rel (%p79) target = $region8
    $region5: #{tpu_custom_call.1} parent=1 // loop_body
      %s83 = ssub.s32 %s78, 1
      %s84 = ssub.s32 %s78, 2
      %s85 = sadd.s32 %s78, 1
      %s86 = ssub.s32 %s78, %s85
      %p87 = scmp.eq.s32.totalorder %s86, 0
      %s89 = sadd.s32 %s88, 1
      %s90 = scalar_select %p87, %s88, %s89
      %p93 = pneg %p87
      %p94 = scmp.eq.s32.totalorder %s78, 1
      %p95 = por %p93, %p94
      %p96 = scmp.ne.s32.totalorder %s88, %s91
      %p97 = scmp.eq.s32.totalorder %s78, 0
      %p98 = por %p96, %p97
      %p99 = scmp.ne.s32.totalorder %s88, %s91
      %p100 = scmp.eq.s32.totalorder %s83, 1
      %p101 = por %p99, %p100
      %p102 = scmp.ne.s32.totalorder %s91, %s92
      %p103 = scmp.eq.s32.totalorder %s83, 0
      %p104 = por %p102, %p103
      %p105 = scmp.ne.s32.totalorder %s91, %s92
      %p106 = scmp.eq.s32.totalorder %s84, 1
      %p107 = por %p105, %p106
      %p109 = scmp.ne.s32.totalorder %s92, %s108
      %p110 = scmp.eq.s32.totalorder %s84, 0
      %p111 = por %p109, %p110
      %s112 = ssub.s32 %s78, %s85
      %p113 = scmp.eq.s32.totalorder %s112, 0
      %s115 = sadd.s32 %s114, 1
      %s116 = scalar_select %p113, %s114, %s115
      %p119 = pneg %p113
      %p120 = scmp.eq.s32.totalorder %s78, 1
      %p121 = por %p119, %p120
      %p122 = scmp.ne.s32.totalorder %s114, %s117
      %p123 = scmp.eq.s32.totalorder %s78, 0
      %p124 = por %p122, %p123
      %p125 = scmp.ne.s32.totalorder %s114, %s117
      %p126 = scmp.eq.s32.totalorder %s83, 1
      %p127 = por %p125, %p126
      %p128 = scmp.ne.s32.totalorder %s117, %s118
      %p129 = scmp.eq.s32.totalorder %s83, 0
      %p130 = por %p128, %p129
      %p131 = scmp.ne.s32.totalorder %s117, %s118
      %p132 = scmp.eq.s32.totalorder %s84, 1
      %p133 = por %p131, %p132
      %p135 = scmp.ne.s32.totalorder %s118, %s134
      %p136 = scmp.eq.s32.totalorder %s84, 0
      %p137 = por %p135, %p136
      %s138 = ssub.s32 %s78, %s85
      %p139 = scmp.eq.s32.totalorder %s138, 0
      %s141 = sadd.s32 %s140, 1
      %s142 = scalar_select %p139, %s140, %s141
      %p145 = pneg %p139
      %p146 = scmp.eq.s32.totalorder %s78, 1
      %p147 = por %p145, %p146
      %p148 = scmp.ne.s32.totalorder %s140, %s143
      %p149 = scmp.eq.s32.totalorder %s78, 0
      %p150 = por %p148, %p149
      %p151 = scmp.ne.s32.totalorder %s140, %s143
      %p152 = scmp.eq.s32.totalorder %s83, 1
      %p153 = por %p151, %p152
      %p154 = scmp.ne.s32.totalorder %s143, %s144
      %p155 = scmp.eq.s32.totalorder %s83, 0
      %p156 = por %p154, %p155
      %p157 = scmp.ne.s32.totalorder %s143, %s144
      %p158 = scmp.eq.s32.totalorder %s84, 1
      %p159 = por %p157, %p158
      %p161 = scmp.ne.s32.totalorder %s144, %s160
      %p162 = scmp.eq.s32.totalorder %s84, 0
      %p163 = por %p161, %p162
      %s164 = ssub.s32 %s78, %s85
      %p165 = scmp.eq.s32.totalorder %s164, 0
      %s167 = sadd.s32 %s166, 1
      %s168 = scalar_select %p165, %s166, %s167
      %p171 = pneg %p165
      %p172 = scmp.eq.s32.totalorder %s78, 1
      %p173 = por %p171, %p172
      %p174 = scmp.ne.s32.totalorder %s166, %s169
      %p175 = scmp.eq.s32.totalorder %s78, 0
      %p176 = por %p174, %p175
      %p177 = scmp.ne.s32.totalorder %s166, %s169
      %p178 = scmp.eq.s32.totalorder %s83, 1
      %p179 = por %p177, %p178
      %p180 = scmp.ne.s32.totalorder %s169, %s170
      %p181 = scmp.eq.s32.totalorder %s83, 0
      %p182 = por %p180, %p181
      %p183 = scmp.ne.s32.totalorder %s169, %s170
      %p184 = scmp.eq.s32.totalorder %s84, 1
      %p185 = por %p183, %p184
      %p187 = scmp.ne.s32.totalorder %s170, %s186
      %p188 = scmp.eq.s32.totalorder %s84, 0
      %p189 = por %p187, %p188
      %s191 = sadd.s32 %s190, 1
      %p194 = scmp.eq.s32.totalorder %s78, 1
      %p195 = scmp.ne.s32.totalorder %s190, %s192
      %p196 = scmp.eq.s32.totalorder %s78, 0
      %p197 = por %p195, %p196
      %p198 = scmp.ne.s32.totalorder %s190, %s192
      %p199 = scmp.eq.s32.totalorder %s83, 1
      %p200 = por %p198, %p199
      %p201 = scmp.ne.s32.totalorder %s192, %s193
      %p202 = scmp.eq.s32.totalorder %s83, 0
      %p203 = por %p201, %p202
      %p204 = scmp.ne.s32.totalorder %s192, %s193
      %p205 = scmp.eq.s32.totalorder %s84, 1
      %p206 = por %p204, %p205
      %p208 = scmp.ne.s32.totalorder %s193, %s207
      %p209 = scmp.eq.s32.totalorder %s84, 0
      %p210 = por %p208, %p209
      %s212 = sadd.s32 %s211, 1
      %p215 = scmp.eq.s32.totalorder %s78, 1
      %p216 = scmp.ne.s32.totalorder %s211, %s213
      %p217 = scmp.eq.s32.totalorder %s78, 0
      %p218 = por %p216, %p217
      %p219 = scmp.ne.s32.totalorder %s211, %s213
      %p220 = scmp.eq.s32.totalorder %s83, 1
      %p221 = por %p219, %p220
      %p222 = scmp.ne.s32.totalorder %s213, %s214
      %p223 = scmp.eq.s32.totalorder %s83, 0
      %p224 = por %p222, %p223
      %p225 = scmp.ne.s32.totalorder %s213, %s214
      %p226 = scmp.eq.s32.totalorder %s84, 1
      %p227 = por %p225, %p226
      %p229 = scmp.ne.s32.totalorder %s214, %s228
      %p230 = scmp.eq.s32.totalorder %s84, 0
      %p231 = por %p229, %p230
      %s233 = sadd.s32 %s232, 1
      %p236 = scmp.eq.s32.totalorder %s78, 1
      %p237 = scmp.ne.s32.totalorder %s232, %s234
      %p238 = scmp.eq.s32.totalorder %s78, 0
      %p239 = por %p237, %p238
      %p240 = scmp.ne.s32.totalorder %s232, %s234
      %p241 = scmp.eq.s32.totalorder %s83, 1
      %p242 = por %p240, %p241
      %p243 = scmp.ne.s32.totalorder %s234, %s235
      %p244 = scmp.eq.s32.totalorder %s83, 0
      %p245 = por %p243, %p244
      %p246 = scmp.ne.s32.totalorder %s234, %s235
      %p247 = scmp.eq.s32.totalorder %s84, 1
      %p248 = por %p246, %p247
      %p250 = scmp.ne.s32.totalorder %s235, %s249
      %p251 = scmp.eq.s32.totalorder %s84, 0
      %p252 = por %p250, %p251
      %s254 = sadd.s32 %s253, 1
      %p257 = scmp.eq.s32.totalorder %s78, 1
      %p258 = scmp.ne.s32.totalorder %s253, %s255
      %p259 = scmp.eq.s32.totalorder %s78, 0
      %p260 = por %p258, %p259
      %p261 = scmp.ne.s32.totalorder %s253, %s255
      %p262 = scmp.eq.s32.totalorder %s83, 1
      %p263 = por %p261, %p262
      %p264 = scmp.ne.s32.totalorder %s255, %s256
      %p265 = scmp.eq.s32.totalorder %s83, 0
      %p266 = por %p264, %p265
      %p267 = scmp.ne.s32.totalorder %s255, %s256
      %p268 = scmp.eq.s32.totalorder %s84, 1
      %p269 = por %p267, %p268
      %p271 = scmp.ne.s32.totalorder %s256, %s270
      %p272 = scmp.eq.s32.totalorder %s84, 0
      %p273 = por %p271, %p272
      %s275 = sadd.s32 %s274, 1
      %p278 = scmp.eq.s32.totalorder %s78, 1
      %p279 = scmp.ne.s32.totalorder %s274, %s276
      %p280 = scmp.eq.s32.totalorder %s78, 0
      %p281 = por %p279, %p280
      %p282 = scmp.ne.s32.totalorder %s274, %s276
      %p283 = scmp.eq.s32.totalorder %s83, 1
      %p284 = por %p282, %p283
      %p285 = scmp.ne.s32.totalorder %s276, %s277
      %p286 = scmp.eq.s32.totalorder %s83, 0
      %p287 = por %p285, %p286
      %p288 = scmp.ne.s32.totalorder %s276, %s277
      %p289 = scmp.eq.s32.totalorder %s84, 1
      %p290 = por %p288, %p289
      %p292 = scmp.ne.s32.totalorder %s277, %s291
      %p293 = scmp.eq.s32.totalorder %s84, 0
      %p294 = por %p292, %p293
      %s296 = sadd.s32 %s295, 1
      %p299 = scmp.eq.s32.totalorder %s78, 1
      %p300 = scmp.ne.s32.totalorder %s295, %s297
      %p301 = scmp.eq.s32.totalorder %s78, 0
      %p302 = por %p300, %p301
      %p303 = scmp.ne.s32.totalorder %s295, %s297
      %p304 = scmp.eq.s32.totalorder %s83, 1
      %p305 = por %p303, %p304
      %p306 = scmp.ne.s32.totalorder %s297, %s298
      %p307 = scmp.eq.s32.totalorder %s83, 0
      %p308 = por %p306, %p307
      %p309 = scmp.ne.s32.totalorder %s297, %s298
      %p310 = scmp.eq.s32.totalorder %s84, 1
      %p311 = por %p309, %p310
      %p313 = scmp.ne.s32.totalorder %s298, %s312
      %p314 = scmp.eq.s32.totalorder %s84, 0
      %p315 = por %p313, %p314
      %s317 = sadd.s32 %s316, 1
      %p320 = scmp.eq.s32.totalorder %s78, 1
      %p321 = scmp.ne.s32.totalorder %s316, %s318
      %p322 = scmp.eq.s32.totalorder %s78, 0
      %p323 = por %p321, %p322
      %p324 = scmp.ne.s32.totalorder %s316, %s318
      %p325 = scmp.eq.s32.totalorder %s83, 1
      %p326 = por %p324, %p325
      %p327 = scmp.ne.s32.totalorder %s318, %s319
      %p328 = scmp.eq.s32.totalorder %s83, 0
      %p329 = por %p327, %p328
      %p330 = scmp.ne.s32.totalorder %s318, %s319
      %p331 = scmp.eq.s32.totalorder %s84, 1
      %p332 = por %p330, %p331
      %p334 = scmp.ne.s32.totalorder %s319, %s333
      %p335 = scmp.eq.s32.totalorder %s84, 0
      %p336 = por %p334, %p335
      %s338 = sadd.s32 %s337, 1
      %p341 = scmp.eq.s32.totalorder %s78, 1
      %p342 = scmp.ne.s32.totalorder %s337, %s339
      %p343 = scmp.eq.s32.totalorder %s78, 0
      %p344 = por %p342, %p343
      %p345 = scmp.ne.s32.totalorder %s337, %s339
      %p346 = scmp.eq.s32.totalorder %s83, 1
      %p347 = por %p345, %p346
      %p348 = scmp.ne.s32.totalorder %s339, %s340
      %p349 = scmp.eq.s32.totalorder %s83, 0
      %p350 = por %p348, %p349
      %p351 = scmp.ne.s32.totalorder %s339, %s340
      %p352 = scmp.eq.s32.totalorder %s84, 1
      %p353 = por %p351, %p352
      %p355 = scmp.ne.s32.totalorder %s340, %s354
      %p356 = scmp.eq.s32.totalorder %s84, 0
      %p357 = por %p355, %p356
      %s359 = sadd.s32 %s358, 1
      %p362 = scmp.eq.s32.totalorder %s78, 1
      %p363 = scmp.ne.s32.totalorder %s358, %s360
      %p364 = scmp.eq.s32.totalorder %s78, 0
      %p365 = por %p363, %p364
      %p366 = scmp.ne.s32.totalorder %s358, %s360
      %p367 = scmp.eq.s32.totalorder %s83, 1
      %p368 = por %p366, %p367
      %p369 = scmp.ne.s32.totalorder %s360, %s361
      %p370 = scmp.eq.s32.totalorder %s83, 0
      %p371 = por %p369, %p370
      %p372 = scmp.ne.s32.totalorder %s360, %s361
      %p373 = scmp.eq.s32.totalorder %s84, 1
      %p374 = por %p372, %p373
      %p376 = scmp.ne.s32.totalorder %s361, %s375
      %p377 = scmp.eq.s32.totalorder %s84, 0
      %p378 = por %p376, %p377
      %s380 = sadd.s32 %s379, 1
      %p383 = scmp.eq.s32.totalorder %s78, 1
      %p384 = scmp.ne.s32.totalorder %s379, %s381
      %p385 = scmp.eq.s32.totalorder %s78, 0
      %p386 = por %p384, %p385
      %p387 = scmp.ne.s32.totalorder %s379, %s381
      %p388 = scmp.eq.s32.totalorder %s83, 1
      %p389 = por %p387, %p388
      %p390 = scmp.ne.s32.totalorder %s381, %s382
      %p391 = scmp.eq.s32.totalorder %s83, 0
      %p392 = por %p390, %p391
      %p393 = scmp.ne.s32.totalorder %s381, %s382
      %p394 = scmp.eq.s32.totalorder %s84, 1
      %p395 = por %p393, %p394
      %p397 = scmp.ne.s32.totalorder %s382, %s396
      %p398 = scmp.eq.s32.totalorder %s84, 0
      %p399 = por %p397, %p398
      %s401 = sadd.s32 %s400, 1
      %p404 = scmp.eq.s32.totalorder %s78, 1
      %p405 = scmp.ne.s32.totalorder %s400, %s402
      %p406 = scmp.eq.s32.totalorder %s78, 0
      %p407 = por %p405, %p406
      %p408 = scmp.ne.s32.totalorder %s400, %s402
      %p409 = scmp.eq.s32.totalorder %s83, 1
      %p410 = por %p408, %p409
      %p411 = scmp.ne.s32.totalorder %s402, %s403
      %p412 = scmp.eq.s32.totalorder %s83, 0
      %p413 = por %p411, %p412
      %p414 = scmp.ne.s32.totalorder %s402, %s403
      %p415 = scmp.eq.s32.totalorder %s84, 1
      %p416 = por %p414, %p415
      %p418 = scmp.ne.s32.totalorder %s403, %s417
      %p419 = scmp.eq.s32.totalorder %s84, 0
      %p420 = por %p418, %p419
      %s422 = sadd.s32 %s421, 1
      %p425 = scmp.eq.s32.totalorder %s78, 1
      %p426 = scmp.ne.s32.totalorder %s421, %s423
      %p427 = scmp.eq.s32.totalorder %s78, 0
      %p428 = por %p426, %p427
      %p429 = scmp.ne.s32.totalorder %s421, %s423
      %p430 = scmp.eq.s32.totalorder %s83, 1
      %p431 = por %p429, %p430
      %p432 = scmp.ne.s32.totalorder %s423, %s424
      %p433 = scmp.eq.s32.totalorder %s83, 0
      %p434 = por %p432, %p433
      %p435 = scmp.ne.s32.totalorder %s423, %s424
      %p436 = scmp.eq.s32.totalorder %s84, 1
      %p437 = por %p435, %p436
      %p439 = scmp.ne.s32.totalorder %s424, %s438
      %p440 = scmp.eq.s32.totalorder %s84, 0
      %p441 = por %p439, %p440
      %s443 = sadd.s32 %s442, 1
      %p446 = scmp.eq.s32.totalorder %s78, 1
      %p447 = scmp.ne.s32.totalorder %s442, %s444
      %p448 = scmp.eq.s32.totalorder %s78, 0
      %p449 = por %p447, %p448
      %p450 = scmp.ne.s32.totalorder %s442, %s444
      %p451 = scmp.eq.s32.totalorder %s83, 1
      %p452 = por %p450, %p451
      %p453 = scmp.ne.s32.totalorder %s444, %s445
      %p454 = scmp.eq.s32.totalorder %s83, 0
      %p455 = por %p453, %p454
      %p456 = scmp.ne.s32.totalorder %s444, %s445
      %p457 = scmp.eq.s32.totalorder %s84, 1
      %p458 = por %p456, %p457
      %p460 = scmp.ne.s32.totalorder %s445, %s459
      %p461 = scmp.eq.s32.totalorder %s84, 0
      %p462 = por %p460, %p461
      %s464 = sadd.s32 %s463, 1
      %p467 = scmp.eq.s32.totalorder %s78, 1
      %p468 = scmp.ne.s32.totalorder %s463, %s465
      %p469 = scmp.eq.s32.totalorder %s78, 0
      %p470 = por %p468, %p469
      %p471 = scmp.ne.s32.totalorder %s463, %s465
      %p472 = scmp.eq.s32.totalorder %s83, 1
      %p473 = por %p471, %p472
      %p474 = scmp.ne.s32.totalorder %s465, %s466
      %p475 = scmp.eq.s32.totalorder %s83, 0
      %p476 = por %p474, %p475
      %p477 = scmp.ne.s32.totalorder %s465, %s466
      %p478 = scmp.eq.s32.totalorder %s84, 1
      %p479 = por %p477, %p478
      %p481 = scmp.ne.s32.totalorder %s466, %s480
      %p482 = scmp.eq.s32.totalorder %s84, 0
      %p483 = por %p481, %p482
      %s485 = sadd.s32 %s484, 1
      %p488 = scmp.eq.s32.totalorder %s78, 1
      %p489 = scmp.ne.s32.totalorder %s484, %s486
      %p490 = scmp.eq.s32.totalorder %s78, 0
      %p491 = por %p489, %p490
      %p492 = scmp.ne.s32.totalorder %s484, %s486
      %p493 = scmp.eq.s32.totalorder %s83, 1
      %p494 = por %p492, %p493
      %p495 = scmp.ne.s32.totalorder %s486, %s487
      %p496 = scmp.eq.s32.totalorder %s83, 0
      %p497 = por %p495, %p496
      %p498 = scmp.ne.s32.totalorder %s486, %s487
      %p499 = scmp.eq.s32.totalorder %s84, 1
      %p500 = por %p498, %p499
      %p502 = scmp.ne.s32.totalorder %s487, %s501
      %p503 = scmp.eq.s32.totalorder %s84, 0
      %p504 = por %p502, %p503
      %s506 = sadd.s32 %s505, 1
      %p509 = scmp.eq.s32.totalorder %s78, 1
      %p510 = scmp.ne.s32.totalorder %s505, %s507
      %p511 = scmp.eq.s32.totalorder %s78, 0
      %p512 = por %p510, %p511
      %p513 = scmp.ne.s32.totalorder %s505, %s507
      %p514 = scmp.eq.s32.totalorder %s83, 1
      %p515 = por %p513, %p514
      %p516 = scmp.ne.s32.totalorder %s507, %s508
      %p517 = scmp.eq.s32.totalorder %s83, 0
      %p518 = por %p516, %p517
      %p519 = scmp.ne.s32.totalorder %s507, %s508
      %p520 = scmp.eq.s32.totalorder %s84, 1
      %p521 = por %p519, %p520
      %p523 = scmp.ne.s32.totalorder %s508, %s522
      %p524 = scmp.eq.s32.totalorder %s84, 0
      %p525 = por %p523, %p524
      %s527 = sadd.s32 %s526, 1
      %p530 = scmp.eq.s32.totalorder %s78, 1
      %p531 = scmp.ne.s32.totalorder %s526, %s528
      %p532 = scmp.eq.s32.totalorder %s78, 0
      %p533 = por %p531, %p532
      %p534 = scmp.ne.s32.totalorder %s526, %s528
      %p535 = scmp.eq.s32.totalorder %s83, 1
      %p536 = por %p534, %p535
      %p537 = scmp.ne.s32.totalorder %s528, %s529
      %p538 = scmp.eq.s32.totalorder %s83, 0
      %p539 = por %p537, %p538
      %p540 = scmp.ne.s32.totalorder %s528, %s529
      %p541 = scmp.eq.s32.totalorder %s84, 1
      %p542 = por %p540, %p541
      %p544 = scmp.ne.s32.totalorder %s529, %s543
      %p545 = scmp.eq.s32.totalorder %s84, 0
      %p546 = por %p544, %p545
      %s548 = sadd.s32 %s547, 1
      %p551 = scmp.eq.s32.totalorder %s78, 1
      %p552 = scmp.ne.s32.totalorder %s547, %s549
      %p553 = scmp.eq.s32.totalorder %s78, 0
      %p554 = por %p552, %p553
      %p555 = scmp.ne.s32.totalorder %s547, %s549
      %p556 = scmp.eq.s32.totalorder %s83, 1
      %p557 = por %p555, %p556
      %p558 = scmp.ne.s32.totalorder %s549, %s550
      %p559 = scmp.eq.s32.totalorder %s83, 0
      %p560 = por %p558, %p559
      %p561 = scmp.ne.s32.totalorder %s549, %s550
      %p562 = scmp.eq.s32.totalorder %s84, 1
      %p563 = por %p561, %p562
      %p565 = scmp.ne.s32.totalorder %s550, %s564
      %p566 = scmp.eq.s32.totalorder %s84, 0
      %p567 = por %p565, %p566
      %s569 = sadd.s32 %s568, 1
      %p572 = scmp.eq.s32.totalorder %s78, 1
      %p573 = scmp.ne.s32.totalorder %s568, %s570
      %p574 = scmp.eq.s32.totalorder %s78, 0
      %p575 = por %p573, %p574
      %p576 = scmp.ne.s32.totalorder %s568, %s570
      %p577 = scmp.eq.s32.totalorder %s83, 1
      %p578 = por %p576, %p577
      %p579 = scmp.ne.s32.totalorder %s570, %s571
      %p580 = scmp.eq.s32.totalorder %s83, 0
      %p581 = por %p579, %p580
      %p582 = scmp.ne.s32.totalorder %s570, %s571
      %p583 = scmp.eq.s32.totalorder %s84, 1
      %p584 = por %p582, %p583
      %p586 = scmp.ne.s32.totalorder %s571, %s585
      %p587 = scmp.eq.s32.totalorder %s84, 0
      %p588 = por %p586, %p587
      %s590 = sadd.s32 %s589, 1
      %p593 = scmp.eq.s32.totalorder %s78, 1
      %p594 = scmp.ne.s32.totalorder %s589, %s591
      %p595 = scmp.eq.s32.totalorder %s78, 0
      %p596 = por %p594, %p595
      %p597 = scmp.ne.s32.totalorder %s589, %s591
      %p598 = scmp.eq.s32.totalorder %s83, 1
      %p599 = por %p597, %p598
      %p600 = scmp.ne.s32.totalorder %s591, %s592
      %p601 = scmp.eq.s32.totalorder %s83, 0
      %p602 = por %p600, %p601
      %p603 = scmp.ne.s32.totalorder %s591, %s592
      %p604 = scmp.eq.s32.totalorder %s84, 1
      %p605 = por %p603, %p604
      %p607 = scmp.ne.s32.totalorder %s592, %s606
      %p608 = scmp.eq.s32.totalorder %s84, 0
      %p609 = por %p607, %p608
      %s611 = sadd.s32 %s610, 1
      %p614 = scmp.eq.s32.totalorder %s78, 1
      %p615 = scmp.ne.s32.totalorder %s610, %s612
      %p616 = scmp.eq.s32.totalorder %s78, 0
      %p617 = por %p615, %p616
      %p618 = scmp.ne.s32.totalorder %s610, %s612
      %p619 = scmp.eq.s32.totalorder %s83, 1
      %p620 = por %p618, %p619
      %p621 = scmp.ne.s32.totalorder %s612, %s613
      %p622 = scmp.eq.s32.totalorder %s83, 0
      %p623 = por %p621, %p622
      %p624 = scmp.ne.s32.totalorder %s612, %s613
      %p625 = scmp.eq.s32.totalorder %s84, 1
      %p626 = por %p624, %p625
      %p628 = scmp.ne.s32.totalorder %s613, %s627
      %p629 = scmp.eq.s32.totalorder %s84, 0
      %p630 = por %p628, %p629
      %s632 = sadd.s32 %s631, 1
      %p635 = scmp.eq.s32.totalorder %s78, 1
      %p636 = scmp.ne.s32.totalorder %s631, %s633
      %p637 = scmp.eq.s32.totalorder %s78, 0
      %p638 = por %p636, %p637
      %p639 = scmp.ne.s32.totalorder %s631, %s633
      %p640 = scmp.eq.s32.totalorder %s83, 1
      %p641 = por %p639, %p640
      %p642 = scmp.ne.s32.totalorder %s633, %s634
      %p643 = scmp.eq.s32.totalorder %s83, 0
      %p644 = por %p642, %p643
      %p645 = scmp.ne.s32.totalorder %s633, %s634
      %p646 = scmp.eq.s32.totalorder %s84, 1
      %p647 = por %p645, %p646
      %p649 = scmp.ne.s32.totalorder %s634, %s648
      %p650 = scmp.eq.s32.totalorder %s84, 0
      %p651 = por %p649, %p650
      %s653 = sadd.s32 %s652, 1
      %p656 = scmp.eq.s32.totalorder %s78, 1
      %p657 = scmp.ne.s32.totalorder %s652, %s654
      %p658 = scmp.eq.s32.totalorder %s78, 0
      %p659 = por %p657, %p658
      %p660 = scmp.ne.s32.totalorder %s652, %s654
      %p661 = scmp.eq.s32.totalorder %s83, 1
      %p662 = por %p660, %p661
      %p663 = scmp.ne.s32.totalorder %s654, %s655
      %p664 = scmp.eq.s32.totalorder %s83, 0
      %p665 = por %p663, %p664
      %p666 = scmp.ne.s32.totalorder %s654, %s655
      %p667 = scmp.eq.s32.totalorder %s84, 1
      %p668 = por %p666, %p667
      %p670 = scmp.ne.s32.totalorder %s655, %s669
      %p671 = scmp.eq.s32.totalorder %s84, 0
      %p672 = por %p670, %p671
      %s674 = sadd.s32 %s673, 1
      %p677 = scmp.eq.s32.totalorder %s78, 1
      %p678 = scmp.ne.s32.totalorder %s673, %s675
      %p679 = scmp.eq.s32.totalorder %s78, 0
      %p680 = por %p678, %p679
      %p681 = scmp.ne.s32.totalorder %s673, %s675
      %p682 = scmp.eq.s32.totalorder %s83, 1
      %p683 = por %p681, %p682
      %p684 = scmp.ne.s32.totalorder %s675, %s676
      %p685 = scmp.eq.s32.totalorder %s83, 0
      %p686 = por %p684, %p685
      %p687 = scmp.ne.s32.totalorder %s675, %s676
      %p688 = scmp.eq.s32.totalorder %s84, 1
      %p689 = por %p687, %p688
      %p691 = scmp.ne.s32.totalorder %s676, %s690
      %p692 = scmp.eq.s32.totalorder %s84, 0
      %p693 = por %p691, %p692
      %s694 = ssub.s32 %s78, %s85
      %p695 = scmp.eq.s32.totalorder %s694, 0
      %s697 = sadd.s32 %s696, 1
      %s698 = scalar_select %p695, %s696, %s697
      %p701 = pneg %p695
      %p702 = scmp.eq.s32.totalorder %s78, 1
      %p703 = por %p701, %p702
      %p704 = scmp.ne.s32.totalorder %s696, %s699
      %p705 = scmp.eq.s32.totalorder %s78, 0
      %p706 = por %p704, %p705
      %p707 = scmp.ne.s32.totalorder %s696, %s699
      %p708 = scmp.eq.s32.totalorder %s83, 1
      %p709 = por %p707, %p708
      %p710 = scmp.ne.s32.totalorder %s699, %s700
      %p711 = scmp.eq.s32.totalorder %s83, 0
      %p712 = por %p710, %p711
      %p713 = scmp.ne.s32.totalorder %s699, %s700
      %p714 = scmp.eq.s32.totalorder %s84, 1
      %p715 = por %p713, %p714
      %p717 = scmp.ne.s32.totalorder %s700, %s716
      %p718 = scmp.eq.s32.totalorder %s84, 0
      %p719 = por %p717, %p718
      %s720 = ssub.s32 %s78, %s85
      %p721 = scmp.eq.s32.totalorder %s720, 0
      %s723 = sadd.s32 %s722, 1
      %s724 = scalar_select %p721, %s722, %s723
      %p727 = pneg %p721
      %p728 = scmp.eq.s32.totalorder %s78, 1
      %p729 = por %p727, %p728
      %p730 = scmp.ne.s32.totalorder %s722, %s725
      %p731 = scmp.eq.s32.totalorder %s78, 0
      %p732 = por %p730, %p731
      %p733 = scmp.ne.s32.totalorder %s722, %s725
      %p734 = scmp.eq.s32.totalorder %s83, 1
      %p735 = por %p733, %p734
      %p736 = scmp.ne.s32.totalorder %s725, %s726
      %p737 = scmp.eq.s32.totalorder %s83, 0
      %p738 = por %p736, %p737
      %p739 = scmp.ne.s32.totalorder %s725, %s726
      %p740 = scmp.eq.s32.totalorder %s84, 1
      %p741 = por %p739, %p740
      %p743 = scmp.ne.s32.totalorder %s726, %s742
      %p744 = scmp.eq.s32.totalorder %s84, 0
      %p745 = por %p743, %p744
      %p746 = scmp.le.s32.totalorder 1, %s78
      %p747 = scmp.lt.s32.totalorder %s78, 3
      %p748 = pnand %p746, %p747
      %p749 = pneg %p748
      // Predicated region
      $region9: #{tpu_custom_call.1} parent=5 // pred_check
        _
      $region10: #{tpu_custom_call.1} parent=5 // pred_check_branch
        %751 = sbr.rel (%p748) target = $region12
      $region11: #{tpu_custom_call.1} parent=5 // pred_region
        %s752 = ssub.s32 %s78, 1
        // Predicated region
        $region13: #{tpu_custom_call.1} parent=11 // pred_check
          %p753 = pneg %p203
        $region14: #{tpu_custom_call.1} parent=11 // pred_check_branch
          %755 = sbr.rel (%p753) target = $region16
        $region15: #{tpu_custom_call.1} parent=11 // pred_region
          _
        $region16: #{tpu_custom_call.1} parent=11 // pred_fallthru
          _
        // Predicated region
        $region17: #{tpu_custom_call.1} parent=11 // pred_check
          %p756 = pneg %p224
        $region18: #{tpu_custom_call.1} parent=11 // pred_check_branch
          %758 = sbr.rel (%p756) target = $region20
        $region19: #{tpu_custom_call.1} parent=11 // pred_region
          %s760 = ssub.s32 16, 16
          %761 = vsyncadd [#allocation6], %s760
          %s763 = sshll.u32 [#allocation5], 4
          %s764 = int_to_ptr.vmem [resolvable:$true] %s763
          %766 = dma.hbm_to_vmem [thread:$0]  %s11, 16, %s764, [#allocation6]
        $region20: #{tpu_custom_call.1} parent=11 // pred_fallthru
          _
        // Predicated region
        $region21: #{tpu_custom_call.1} parent=11 // pred_check
          %p767 = pneg %p245
        $region22: #{tpu_custom_call.1} parent=11 // pred_check_branch
          %769 = sbr.rel (%p767) target = $region24
        $region23: #{tpu_custom_call.1} parent=11 // pred_region
          _
        $region24: #{tpu_custom_call.1} parent=11 // pred_fallthru
          _
        // Predicated region
        $region25: #{tpu_custom_call.1} parent=11 // pred_check
          %p770 = pneg %p266
        $region26: #{tpu_custom_call.1} parent=11 // pred_check_branch
          %772 = sbr.rel (%p770) target = $region28
        $region27: #{tpu_custom_call.1} parent=11 // pred_region
          %s774 = ssub.s32 16, 16
          %775 = vsyncadd [#allocation6], %s774
          %s777 = sshll.u32 [#allocation7], 4
          %s778 = int_to_ptr.vmem [resolvable:$true] %s777
          %780 = dma.hbm_to_vmem [thread:$0]  %s15, 16, %s778, [#allocation6]
        $region28: #{tpu_custom_call.1} parent=11 // pred_fallthru
          _
        // Predicated region
        $region29: #{tpu_custom_call.1} parent=11 // pred_check
          %p781 = pneg %p287
        $region30: #{tpu_custom_call.1} parent=11 // pred_check_branch
          %783 = sbr.rel (%p781) target = $region32
        $region31: #{tpu_custom_call.1} parent=11 // pred_region
          _
        $region32: #{tpu_custom_call.1} parent=11 // pred_fallthru
          _
        // Predicated region
        $region33: #{tpu_custom_call.1} parent=11 // pred_check
          %p784 = pneg %p308
        $region34: #{tpu_custom_call.1} parent=11 // pred_check_branch
          %786 = sbr.rel (%p784) target = $region36
        $region35: #{tpu_custom_call.1} parent=11 // pred_region
          %s788 = ssub.s32 16, 16
          %789 = vsyncadd [#allocation9], %s788
          %s791 = sshll.u32 [#allocation8], 4
          %s792 = int_to_ptr.vmem [resolvable:$true] %s791
          %794 = dma.hbm_to_vmem [thread:$0]  %s19, 16, %s792, [#allocation9]
        $region36: #{tpu_custom_call.1} parent=11 // pred_fallthru
          _
        // Predicated region
        $region37: #{tpu_custom_call.1} parent=11 // pred_check
          %p795 = pneg %p329
        $region38: #{tpu_custom_call.1} parent=11 // pred_check_branch
          %797 = sbr.rel (%p795) target = $region40
        $region39: #{tpu_custom_call.1} parent=11 // pred_region
          %s799 = ssub.s32 16, 16
          %800 = vsyncadd [#allocation9], %s799
          %s802 = sshll.u32 [#allocation10], 4
          %s803 = int_to_ptr.vmem [resolvable:$true] %s802
          %805 = dma.hbm_to_vmem [thread:$0]  %s21, 16, %s803, [#allocation9]
        $region40: #{tpu_custom_call.1} parent=11 // pred_fallthru
          _
        // Predicated region
        $region41: #{tpu_custom_call.1} parent=11 // pred_check
          %p806 = pneg %p350
        $region42: #{tpu_custom_call.1} parent=11 // pred_check_branch
          %808 = sbr.rel (%p806) target = $region44
        $region43: #{tpu_custom_call.1} parent=11 // pred_region
          %s810 = ssub.s32 16, 16
          %811 = vsyncadd [#allocation12], %s810
          %s813 = sshll.u32 [#allocation11], 4
          %s814 = int_to_ptr.vmem [resolvable:$true] %s813
          %816 = dma.hbm_to_vmem [thread:$0]  %s23, 16, %s814, [#allocation12]
        $region44: #{tpu_custom_call.1} parent=11 // pred_fallthru
          _
        // Predicated region
        $region45: #{tpu_custom_call.1} parent=11 // pred_check
          %p817 = pneg %p371
        $region46: #{tpu_custom_call.1} parent=11 // pred_check_branch
          %819 = sbr.rel (%p817) target = $region48
        $region47: #{tpu_custom_call.1} parent=11 // pred_region
          _
        $region48: #{tpu_custom_call.1} parent=11 // pred_fallthru
          _
        // Predicated region
        $region49: #{tpu_custom_call.1} parent=11 // pred_check
          %p820 = pneg %p392
        $region50: #{tpu_custom_call.1} parent=11 // pred_check_branch
          %822 = sbr.rel (%p820) target = $region52
        $region51: #{tpu_custom_call.1} parent=11 // pred_region
          %s824 = ssub.s32 16, 16
          %825 = vsyncadd [#allocation12], %s824
          %s827 = sshll.u32 [#allocation13], 4
          %s828 = int_to_ptr.vmem [resolvable:$true] %s827
          %830 = dma.hbm_to_vmem [thread:$0]  %s27, 16, %s828, [#allocation12]
        $region52: #{tpu_custom_call.1} parent=11 // pred_fallthru
          _
        // Predicated region
        $region53: #{tpu_custom_call.1} parent=11 // pred_check
          %p831 = pneg %p413
        $region54: #{tpu_custom_call.1} parent=11 // pred_check_branch
          %833 = sbr.rel (%p831) target = $region56
        $region55: #{tpu_custom_call.1} parent=11 // pred_region
          _
        $region56: #{tpu_custom_call.1} parent=11 // pred_fallthru
          _
        // Predicated region
        $region57: #{tpu_custom_call.1} parent=11 // pred_check
          %p834 = pneg %p434
        $region58: #{tpu_custom_call.1} parent=11 // pred_check_branch
          %836 = sbr.rel (%p834) target = $region60
        $region59: #{tpu_custom_call.1} parent=11 // pred_region
          _
        $region60: #{tpu_custom_call.1} parent=11 // pred_fallthru
          _
        // Predicated region
        $region61: #{tpu_custom_call.1} parent=11 // pred_check
          %p837 = pneg %p455
        $region62: #{tpu_custom_call.1} parent=11 // pred_check_branch
          %839 = sbr.rel (%p837) target = $region64
        $region63: #{tpu_custom_call.1} parent=11 // pred_region
          _
        $region64: #{tpu_custom_call.1} parent=11 // pred_fallthru
          _
        // Predicated region
        $region65: #{tpu_custom_call.1} parent=11 // pred_check
          %p840 = pneg %p476
        $region66: #{tpu_custom_call.1} parent=11 // pred_check_branch
          %842 = sbr.rel (%p840) target = $region68
        $region67: #{tpu_custom_call.1} parent=11 // pred_region
          _
        $region68: #{tpu_custom_call.1} parent=11 // pred_fallthru
          _
        // Predicated region
        $region69: #{tpu_custom_call.1} parent=11 // pred_check
          %p843 = pneg %p497
        $region70: #{tpu_custom_call.1} parent=11 // pred_check_branch
          %845 = sbr.rel (%p843) target = $region72
        $region71: #{tpu_custom_call.1} parent=11 // pred_region
          _
        $region72: #{tpu_custom_call.1} parent=11 // pred_fallthru
          _
        // Predicated region
        $region73: #{tpu_custom_call.1} parent=11 // pred_check
          %p846 = pneg %p518
        $region74: #{tpu_custom_call.1} parent=11 // pred_check_branch
          %848 = sbr.rel (%p846) target = $region76
        $region75: #{tpu_custom_call.1} parent=11 // pred_region
          _
        $region76: #{tpu_custom_call.1} parent=11 // pred_fallthru
          _
        // Predicated region
        $region77: #{tpu_custom_call.1} parent=11 // pred_check
          %p849 = pneg %p539
        $region78: #{tpu_custom_call.1} parent=11 // pred_check_branch
          %851 = sbr.rel (%p849) target = $region80
        $region79: #{tpu_custom_call.1} parent=11 // pred_region
          _
        $region80: #{tpu_custom_call.1} parent=11 // pred_fallthru
          _
        // Predicated region
        $region81: #{tpu_custom_call.1} parent=11 // pred_check
          %p852 = pneg %p560
        $region82: #{tpu_custom_call.1} parent=11 // pred_check_branch
          %854 = sbr.rel (%p852) target = $region84
        $region83: #{tpu_custom_call.1} parent=11 // pred_region
          _
        $region84: #{tpu_custom_call.1} parent=11 // pred_fallthru
          _
        // Predicated region
        $region85: #{tpu_custom_call.1} parent=11 // pred_check
          %p855 = pneg %p581
        $region86: #{tpu_custom_call.1} parent=11 // pred_check_branch
          %857 = sbr.rel (%p855) target = $region88
        $region87: #{tpu_custom_call.1} parent=11 // pred_region
          _
        $region88: #{tpu_custom_call.1} parent=11 // pred_fallthru
          _
        // Predicated region
        $region89: #{tpu_custom_call.1} parent=11 // pred_check
          %p858 = pneg %p602
        $region90: #{tpu_custom_call.1} parent=11 // pred_check_branch
          %860 = sbr.rel (%p858) target = $region92
        $region91: #{tpu_custom_call.1} parent=11 // pred_region
          _
        $region92: #{tpu_custom_call.1} parent=11 // pred_fallthru
          _
        // Predicated region
        $region93: #{tpu_custom_call.1} parent=11 // pred_check
          %p861 = pneg %p623
        $region94: #{tpu_custom_call.1} parent=11 // pred_check_branch
          %863 = sbr.rel (%p861) target = $region96
        $region95: #{tpu_custom_call.1} parent=11 // pred_region
          _
        $region96: #{tpu_custom_call.1} parent=11 // pred_fallthru
          _
        // Predicated region
        $region97: #{tpu_custom_call.1} parent=11 // pred_check
          %p864 = pneg %p644
        $region98: #{tpu_custom_call.1} parent=11 // pred_check_branch
          %866 = sbr.rel (%p864) target = $region100
        $region99: #{tpu_custom_call.1} parent=11 // pred_region
          _
        $region100: #{tpu_custom_call.1} parent=11 // pred_fallthru
          _
        // Predicated region
        $region101: #{tpu_custom_call.1} parent=11 // pred_check
          %p867 = pneg %p665
        $region102: #{tpu_custom_call.1} parent=11 // pred_check_branch
          %869 = sbr.rel (%p867) target = $region104
        $region103: #{tpu_custom_call.1} parent=11 // pred_region
          _
        $region104: #{tpu_custom_call.1} parent=11 // pred_fallthru
          _
        // Predicated region
        $region105: #{tpu_custom_call.1} parent=11 // pred_check
          %p870 = pneg %p686
        $region106: #{tpu_custom_call.1} parent=11 // pred_check_branch
          %872 = sbr.rel (%p870) target = $region108
        $region107: #{tpu_custom_call.1} parent=11 // pred_region
          _
        $region108: #{tpu_custom_call.1} parent=11 // pred_fallthru
          _
      $region12: #{tpu_custom_call.1} parent=5 // pred_fallthru
        _
      %p873 = scmp.lt.s32.totalorder %s78, 2
      // Predicated region
      $region109: #{tpu_custom_call.1} parent=5 // pred_check
        %p874 = pneg %p873
      $region110: #{tpu_custom_call.1} parent=5 // pred_check_branch
        %876 = sbr.rel (%p874) target = $region112
      $region111: #{tpu_custom_call.1} parent=5 // pred_region
        // Predicated region
        $region113: #{tpu_custom_call.1} parent=111 // pred_check
          %p877 = pneg %p98
        $region114: #{tpu_custom_call.1} parent=111 // pred_check_branch
          %879 = sbr.rel (%p877) target = $region116
        $region115: #{tpu_custom_call.1} parent=111 // pred_region
          %p880 = scmp.lt.s32.totalorder %s78, 1
          %s881 = scalar_select %p880, %s78, 1
          %s882 = smul.addr %s881, 8
          %s883 = scalar_lea.vmem %s1, %s882
        $region116: #{tpu_custom_call.1} parent=111 // pred_fallthru
          _
        // Predicated region
        $region117: #{tpu_custom_call.1} parent=111 // pred_check
          %p884 = pneg %p124
        $region118: #{tpu_custom_call.1} parent=111 // pred_check_branch
          %886 = sbr.rel (%p884) target = $region120
        $region119: #{tpu_custom_call.1} parent=111 // pred_region
          %s887 = sand.u32 %s114, 1
          %s888 = scalar_lea.sflag [#allocation3], %s887
          %s889 = sand.u32 %s114, 1
          %s890 = smul.addr %s889, 4
          %s891 = scalar_lea.vmem [#allocation2], %s890
          %s893 = ssub.s32 64, 64
          %894 = vsyncadd %s888, %s893
          %s895 = smul.addr %s78, 64
          %s896 = scalar_lea.hbm %s3, %s895
          %s898 = sshll.u32 %s891, 4
          %s899 = int_to_ptr.vmem [resolvable:$true] %s898
          %901 = dma.hbm_to_vmem [thread:$0]  %s896, 64, %s899, %s888
        $region120: #{tpu_custom_call.1} parent=111 // pred_fallthru
          _
        // Predicated region
        $region121: #{tpu_custom_call.1} parent=111 // pred_check
          %p902 = pneg %p150
        $region122: #{tpu_custom_call.1} parent=111 // pred_check_branch
          %904 = sbr.rel (%p902) target = $region124
        $region123: #{tpu_custom_call.1} parent=111 // pred_region
          %p905 = scmp.lt.s32.totalorder %s78, 1
          %s906 = scalar_select %p905, %s78, 1
          %s907 = smul.addr %s906, 8
          %s908 = scalar_lea.vmem %s5, %s907
        $region124: #{tpu_custom_call.1} parent=111 // pred_fallthru
          _
        // Predicated region
        $region125: #{tpu_custom_call.1} parent=111 // pred_check
          %p909 = pneg %p176
        $region126: #{tpu_custom_call.1} parent=111 // pred_check_branch
          %911 = sbr.rel (%p909) target = $region128
        $region127: #{tpu_custom_call.1} parent=111 // pred_region
          %p912 = scmp.lt.s32.totalorder %s78, 1
          %s913 = scalar_select %p912, %s78, 1
          %s914 = smul.addr %s913, 3
          %s915 = smul.addr %s914, 4
          %s916 = scalar_lea.vmem %s7, %s915
        $region128: #{tpu_custom_call.1} parent=111 // pred_fallthru
          _
      $region112: #{tpu_custom_call.1} parent=5 // pred_fallthru
        _
      %p917 = scmp.le.s32.totalorder 1, %s78
      %p918 = scmp.lt.s32.totalorder %s78, 3
      %p919 = pnand %p917, %p918
      %p920 = pneg %p919
      // Predicated region
      $region129: #{tpu_custom_call.1} parent=5 // pred_check
        _
      $region130: #{tpu_custom_call.1} parent=5 // pred_check_branch
        %922 = sbr.rel (%p919) target = $region132
      $region131: #{tpu_custom_call.1} parent=5 // pred_region
        %s923 = ssub.s32 %s78, 1
        %s924 = sand.u32 %s117, 1
        %s925 = scalar_lea.sflag [#allocation3], %s924
        %s926 = sand.u32 %s117, 1
        %s927 = smul.addr %s926, 4
        %s928 = scalar_lea.vmem [#allocation2], %s927
        // Predicated region
        $region133: #{tpu_custom_call.1} parent=131 // pred_check
          %p929 = pneg %p130
        $region134: #{tpu_custom_call.1} parent=131 // pred_check_branch
          %931 = sbr.rel (%p929) target = $region136
        $region135: #{tpu_custom_call.1} parent=131 // pred_region
          %932 = dma.done %s925, 64
        $region136: #{tpu_custom_call.1} parent=131 // pred_fallthru
          _
        // Predicated region
        $region137: #{tpu_custom_call.1} parent=131 // pred_check
          %p933 = pneg %p224
        $region138: #{tpu_custom_call.1} parent=131 // pred_check_branch
          %935 = sbr.rel (%p933) target = $region140
        $region139: #{tpu_custom_call.1} parent=131 // pred_region
          %936 = dma.done [#allocation6], 16
        $region140: #{tpu_custom_call.1} parent=131 // pred_fallthru
          _
        // Predicated region
        $region141: #{tpu_custom_call.1} parent=131 // pred_check
          %p937 = pneg %p266
        $region142: #{tpu_custom_call.1} parent=131 // pred_check_branch
          %939 = sbr.rel (%p937) target = $region144
        $region143: #{tpu_custom_call.1} parent=131 // pred_region
          %940 = dma.done [#allocation6], 16
        $region144: #{tpu_custom_call.1} parent=131 // pred_fallthru
          _
        // Predicated region
        $region145: #{tpu_custom_call.1} parent=131 // pred_check
          %p941 = pneg %p308
        $region146: #{tpu_custom_call.1} parent=131 // pred_check_branch
          %943 = sbr.rel (%p941) target = $region148
        $region147: #{tpu_custom_call.1} parent=131 // pred_region
          %944 = dma.done [#allocation9], 16
        $region148: #{tpu_custom_call.1} parent=131 // pred_fallthru
          _
        // Predicated region
        $region149: #{tpu_custom_call.1} parent=131 // pred_check
          %p945 = pneg %p329
        $region150: #{tpu_custom_call.1} parent=131 // pred_check_branch
          %947 = sbr.rel (%p945) target = $region152
        $region151: #{tpu_custom_call.1} parent=131 // pred_region
          %948 = dma.done [#allocation9], 16
        $region152: #{tpu_custom_call.1} parent=131 // pred_fallthru
          _
        // Predicated region
        $region153: #{tpu_custom_call.1} parent=131 // pred_check
          %p949 = pneg %p350
        $region154: #{tpu_custom_call.1} parent=131 // pred_check_branch
          %951 = sbr.rel (%p949) target = $region156
        $region155: #{tpu_custom_call.1} parent=131 // pred_region
          %952 = dma.done [#allocation12], 16
        $region156: #{tpu_custom_call.1} parent=131 // pred_fallthru
          _
        // Predicated region
        $region157: #{tpu_custom_call.1} parent=131 // pred_check
          %p953 = pneg %p392
        $region158: #{tpu_custom_call.1} parent=131 // pred_check_branch
          %955 = sbr.rel (%p953) target = $region160
        $region159: #{tpu_custom_call.1} parent=131 // pred_region
          %956 = dma.done [#allocation12], 16
        $region160: #{tpu_custom_call.1} parent=131 // pred_fallthru
          _
        %p957 = scmp.lt.s32.totalorder %s83, 1
        %s958 = scalar_select %p957, %s83, 1
        %s959 = smul.addr %s958, 8
        %s960 = scalar_lea.vmem %s1, %s959
        %p961 = pneg %p104
        %p962 = pneg %p101
        %s963 = sand.u32 %s117, 1
        %s964 = scalar_lea.sflag [#allocation3], %s963
        %s965 = sand.u32 %s117, 1
        %s966 = smul.addr %s965, 4
        %s967 = scalar_lea.vmem [#allocation2], %s966
        %p968 = pneg %p130
        %p969 = pneg %p127
        %p970 = scmp.lt.s32.totalorder %s83, 1
        %s971 = scalar_select %p970, %s83, 1
        %s972 = smul.addr %s971, 8
        %s973 = scalar_lea.vmem %s5, %s972
        %p974 = pneg %p156
        %p975 = pneg %p153
        %p976 = scmp.lt.s32.totalorder %s83, 1
        %s977 = scalar_select %p976, %s83, 1
        %s978 = smul.addr %s977, 3
        %s979 = smul.addr %s978, 4
        %s980 = scalar_lea.vmem %s7, %s979
        %p981 = pneg %p182
        %p982 = pneg %p179
        %p983 = pneg %p203
        %p984 = pneg %p200
        %p985 = pneg %p224
        %p986 = pneg %p221
        %p987 = pneg %p245
        %p988 = pneg %p242
        %p989 = pneg %p266
        %p990 = pneg %p263
        %p991 = pneg %p287
        %p992 = pneg %p284
        %p993 = pneg %p308
        %p994 = pneg %p305
        %p995 = pneg %p329
        %p996 = pneg %p326
        %p997 = pneg %p350
        %p998 = pneg %p347
        %p999 = pneg %p371
        %p1000 = pneg %p368
        %p1001 = pneg %p392
        %p1002 = pneg %p389
        %p1003 = pneg %p413
        %p1004 = pneg %p410
        %p1005 = pneg %p434
        %p1006 = pneg %p431
        %p1007 = pneg %p455
        %p1008 = pneg %p452
        %p1009 = pneg %p476
        %p1010 = pneg %p473
        %p1011 = pneg %p497
        %p1012 = pneg %p494
        %p1013 = pneg %p518
        %p1014 = pneg %p515
        %p1015 = pneg %p539
        %p1016 = pneg %p536
        %p1017 = pneg %p560
        %p1018 = pneg %p557
        %p1019 = pneg %p581
        %p1020 = pneg %p578
        %p1021 = pneg %p602
        %p1022 = pneg %p599
        %p1023 = pneg %p623
        %p1024 = pneg %p620
        %p1025 = pneg %p644
        %p1026 = pneg %p641
        %p1027 = pneg %p665
        %p1028 = pneg %p662
        %p1029 = pneg %p686
        %p1030 = pneg %p683
        %p1031 = pneg %p712
        %p1032 = pneg %p709
        %s1033 = sand.u32 %s699, 1
        %s1034 = scalar_lea.sflag [#allocation4], %s1033
        %s1035 = sand.u32 %s699, 1
        %s1036 = smul.addr %s1035, 8
        %s1037 = scalar_lea.vmem [#allocation14], %s1036
        %p1038 = pneg %p738
        %p1039 = pneg %p735
        %s1040 = sand.u32 %s725, 1
        %s1041 = scalar_lea.sflag [#allocation16], %s1040
        %s1042 = sand.u32 %s725, 1
        %s1043 = smul.addr %s1042, 8
        %s1044 = scalar_lea.vmem [#allocation15], %s1043
        %p1045 = scmp.lt.s32.totalorder %s83, 1
        %s1046 = scalar_select %p1045, %s83, 1
        %s1047 = smul.addr %s1046, 8
        %s1048 = scalar_lea.vmem %s1, %s1047
        %p1049 = scmp.lt.s32.totalorder %s83, 1
        %s1050 = scalar_select %p1049, %s83, 1
        %s1051 = smul.addr %s1050, 8
        %s1052 = scalar_lea.vmem %s5, %s1051
        %p1053 = scmp.lt.s32.totalorder %s83, 1
        %s1054 = scalar_select %p1053, %s83, 1
        %s1055 = smul.addr %s1054, 3
        %s1056 = smul.addr %s1055, 4
        %s1057 = scalar_lea.vmem %s7, %s1056
        %v1059 = vld [vmem:[%s1048] sm:$0xff]
        %v1060 = vld [vmem:[%s928] sm:$0xf]
        %v1061 = vld [vmem:[%s1052] sm:$0xff]
        %v1062 = vld [vmem:[%s1057] sm:$0xf]
        %v1063 = vld [vmem:[%s1057 + $0x4] sm:$0xf]
        %v1064 = vld [vmem:[%s1057 + $0x8] sm:$0x3]
        %v1065 = vunpack.c.l.bf16 %v1060
        %v1066 = vadd.f32 %v1059, %v1065
        %v1067 = vld [vmem:[%s13] sm:$0xf]
        %v1068 = vld [vmem:[%s13 + $0x4] sm:$0xf]
        %v1069 = vld [vmem:[%s13 + $0x8] sm:$0xf]
        %v1070 = vld [vmem:[%s13 + $0xc] sm:$0xf]
        %v1071 = vpack.c.bf16 %v1066, %v1066
        %v1072 = vld [vmem:[#allocation7] sm:$0x1]
        %v1074 = vlaneseq
        %v1075 = vshrl.u32 %v1074, 7
        %v1076 = vsub.s32 0, %v1075
        %v1077 = vrot.slane %v1072, %v1076
        %v1083 = vunpack.c.l.b16 %v1067
        %v1084 = vunpack.c.l.b16 %v1068
        %v1085 = vunpack.c.l.b16 %v1069
        %v1086 = vunpack.c.l.b16 %v1070
        %v1087 = vpack.c.b16 %v1084, %v1083
        %v1088 = vpack.c.b16 %v1086, %v1085
        %vm1091 = vcmask 261120
        %v1093 = vsel %vm1091, %v1071, 0
        %1095 = vmatprep.subr.bf16.mxu0 0
        %1096 = vmatpush1.bf16.msra.mxu0 %v1087
        %1097 = vmatprep.subr.bf16.mxu0 0
        %1098 = vmatpush1.bf16.msra.mxu0 %v1088
        %1099 = vmatprep.subr.bf16.mxu0 0
        %1100 = vmatpush1.bf16.msra.mxu0 0
        %1101 = vmatprep.subr.bf16.mxu0 0
        %1102 = vmatpush1.bf16.msra.mxu0 0
        %1103 = vmatprep.subr.bf16.mxu0 0
        %1104 = vmatpush1.bf16.msra.mxu0 0
        %1105 = vmatprep.subr.bf16.mxu0 0
        %1106 = vmatpush1.bf16.msra.mxu0 0
        %1107 = vmatprep.subr.bf16.mxu0 0
        %1108 = vmatpush1.bf16.msra.mxu0 0
        %1109 = vmatprep.subr.bf16.mxu0 0
        %1110 = vmatpush1.bf16.msra.mxu0 0
        %1111 = vmatprep.subr.bf16.mxu0 0
        %1112 = vmatpush1.bf16.msra.mxu0 0
        %1113 = vmatprep.subr.bf16.mxu0 0
        %1114 = vmatpush1.bf16.msra.mxu0 0
        %1115 = vmatprep.subr.bf16.mxu0 0
        %1116 = vmatpush1.bf16.msra.mxu0 0
        %1117 = vmatprep.subr.bf16.mxu0 0
        %1118 = vmatpush1.bf16.msra.mxu0 0
        %1119 = vmatprep.subr.bf16.mxu0 0
        %1120 = vmatpush1.bf16.msra.mxu0 0
        %1121 = vmatprep.subr.bf16.mxu0 0
        %1122 = vmatpush1.bf16.msra.mxu0 0
        %1123 = vmatprep.subr.bf16.mxu0 0
        %1124 = vmatpush1.bf16.msra.mxu0 0
        %1125 = vmatprep.subr.bf16.mxu0 0
        %1126 = vmatpush1.bf16.msra.mxu0 0
        %1127 = vmatprep.mubr.bf16.mxu0 0
        %1128 = vmatmul.mubr.bf16.gmra.mrb[0].mxu0 %v1093
        %v1129 = vpop.f32.mrb[0].mxu0
        %v1130 = vadd.f32 %v1077, %v1129
        %v1131 = vpop.f32.mrb[0].mxu0
        %v1132 = vpop.f32.mrb[0].mxu0
        %v1133 = vpop.f32.mrb[0].mxu0
        %1134 = vdwg.mxu0
        %v1135 = vmul.f32 %v1130, 0.35355338
        %v1136 = vpack.c.bf16 %v1059, %v1059
        %1137 = vrot.lane.b32.xlu0 %v1087, 64
        %v1138 = vpop.permute.xlu0 %1137
        %1139 = vrot.lane.b32.xlu0 %v1088, 64
        %v1140 = vpop.permute.xlu0 %1139
        %1143 = vrot.lane.b32.xlu0 %v1077, 64
        %v1144 = vpop.permute.xlu0 %1143
        %v1147 = vsel %vm1091, %v1136, 0
        %1149 = vmatprep.subr.bf16.mxu0 0
        %1150 = vmatpush1.bf16.msra.mxu0 %v1138
        %1151 = vmatprep.subr.bf16.mxu0 0
        %1152 = vmatpush1.bf16.msra.mxu0 %v1140
        %1153 = vmatprep.subr.bf16.mxu0 0
        %1154 = vmatpush1.bf16.msra.mxu0 0
        %1155 = vmatprep.subr.bf16.mxu0 0
        %1156 = vmatpush1.bf16.msra.mxu0 0
        %1157 = vmatprep.subr.bf16.mxu0 0
        %1158 = vmatpush1.bf16.msra.mxu0 0
        %1159 = vmatprep.subr.bf16.mxu0 0
        %1160 = vmatpush1.bf16.msra.mxu0 0
        %1161 = vmatprep.subr.bf16.mxu0 0
        %1162 = vmatpush1.bf16.msra.mxu0 0
        %1163 = vmatprep.subr.bf16.mxu0 0
        %1164 = vmatpush1.bf16.msra.mxu0 0
        %1165 = vmatprep.subr.bf16.mxu0 0
        %1166 = vmatpush1.bf16.msra.mxu0 0
        %1167 = vmatprep.subr.bf16.mxu0 0
        %1168 = vmatpush1.bf16.msra.mxu0 0
        %1169 = vmatprep.subr.bf16.mxu0 0
        %1170 = vmatpush1.bf16.msra.mxu0 0
        %1171 = vmatprep.subr.bf16.mxu0 0
        %1172 = vmatpush1.bf16.msra.mxu0 0
        %1173 = vmatprep.subr.bf16.mxu0 0
        %1174 = vmatpush1.bf16.msra.mxu0 0
        %1175 = vmatprep.subr.bf16.mxu0 0
        %1176 = vmatpush1.bf16.msra.mxu0 0
        %1177 = vmatprep.subr.bf16.mxu0 0
        %1178 = vmatpush1.bf16.msra.mxu0 0
        %1179 = vmatprep.subr.bf16.mxu0 0
        %1180 = vmatpush1.bf16.msra.mxu0 0
        %1181 = vmatprep.mubr.bf16.mxu0 0
        %1182 = vmatmul.mubr.bf16.gmra.mrb[0].mxu0 %v1147
        %v1183 = vpop.f32.mrb[0].mxu0
        %v1184 = vadd.f32 %v1144, %v1183
        %v1185 = vpop.f32.mrb[0].mxu0
        %v1186 = vpop.f32.mrb[0].mxu0
        %v1187 = vpop.f32.mrb[0].mxu0
        %1188 = vdwg.mxu0
        %v1189 = vpack.c.bf16 %v1135, %v1135
        %v1190 = vpack.c.bf16 %v1130, %v1130
        %1192 = vrot.lane.b32.xlu0 %v1190, 96
        %v1193 = vpop.permute.xlu0 %1192
        %vm1194 = vcmask 64512
        %v1196 = vsel %vm1194, %v1189, 0
        %v1199 = vsel %vm1194, %v1193, 0
        %1201 = vmatprep.subr.bf16.mxu0 0
        %1202 = vmatpush1.bf16.xpose.msra.mxu0 %v1199
        %1203 = vmatprep.subr.bf16.mxu0 0
        %1204 = vmatpush1.bf16.xpose.msra.mxu0 0
        %1205 = vmatprep.subr.bf16.mxu0 0
        %1206 = vmatpush1.bf16.xpose.msra.mxu0 0
        %1207 = vmatprep.subr.bf16.mxu0 0
        %1208 = vmatpush1.bf16.xpose.msra.mxu0 0
        %1209 = vmatprep.subr.bf16.mxu0 0
        %1210 = vmatpush1.bf16.xpose.msra.mxu0 0
        %1211 = vmatprep.subr.bf16.mxu0 0
        %1212 = vmatpush1.bf16.xpose.msra.mxu0 0
        %1213 = vmatprep.subr.bf16.mxu0 0
        %1214 = vmatpush1.bf16.xpose.msra.mxu0 0
        %1215 = vmatprep.subr.bf16.mxu0 0
        %1216 = vmatpush1.bf16.xpose.msra.mxu0 0
        %1217 = vmatprep.subr.bf16.mxu0 0
        %1218 = vmatpush1.bf16.xpose.msra.mxu0 0
        %1219 = vmatprep.subr.bf16.mxu0 0
        %1220 = vmatpush1.bf16.xpose.msra.mxu0 0
        %1221 = vmatprep.subr.bf16.mxu0 0
        %1222 = vmatpush1.bf16.xpose.msra.mxu0 0
        %1223 = vmatprep.subr.bf16.mxu0 0
        %1224 = vmatpush1.bf16.xpose.msra.mxu0 0
        %1225 = vmatprep.subr.bf16.mxu0 0
        %1226 = vmatpush1.bf16.xpose.msra.mxu0 0
        %1227 = vmatprep.subr.bf16.mxu0 0
        %1228 = vmatpush1.bf16.xpose.msra.mxu0 0
        %1229 = vmatprep.subr.bf16.mxu0 0
        %1230 = vmatpush1.bf16.xpose.msra.mxu0 0
        %1231 = vmatprep.subr.bf16.mxu0 0
        %1232 = vmatpush1.bf16.xpose.msra.mxu0 0
        %1233 = vmatprep.mubr.bf16.mxu0 0
        %1234 = vmatmul.mubr.bf16.gmra.mrb[0].mxu0 %v1196
        %v1235 = vpop.f32.mrb[0].mxu0
        %v1236 = vadd.f32 0.0, %v1235
        %v1237 = vpop.f32.mrb[0].mxu0
        %v1238 = vpop.f32.mrb[0].mxu0
        %v1239 = vpop.f32.mrb[0].mxu0
        %1240 = vdwg.mxu0
        %v1241 = vsel %vm1194, %v1236, -inf
        %1242 = vmax.xlane.f32.xlu0 %v1241
        %v1243 = vpop.xlane.xlu0 %1242
        %v1244 = vsub.f32 %v1236, %v1243
        %v1245 = vmul.f32 %v1244, 1.442695
        %v1246 = vpow.pop %v1245
        %v1247 = vsel %vm1194, %v1246, 0.0
        %1248 = vadd.xlane.f32.xlu0 %v1247
        %v1249 = vpop.xlane.xlu0 %1248
        %v1250 = vrcp.pop %v1249
        %v1251 = vmul.f32 %v1246, %v1250
        %v1252 = vpack.c.bf16 %v1251, %v1251
        %v1253 = vpack.c.bf16 %v1184, %v1184
        %v1255 = vsel %vm1194, %v1252, 0
        %vm1257 = vcmask 1043456
        %v1259 = vsel %vm1257, %v1253, 0
        %1261 = vmatprep.subr.bf16.mxu0 0
        %1262 = vmatpush1.bf16.msra.mxu0 %v1259
        %1263 = vmatprep.subr.bf16.mxu0 0
        %1264 = vmatpush1.bf16.msra.mxu0 0
        %1265 = vmatprep.subr.bf16.mxu0 0
        %1266 = vmatpush1.bf16.msra.mxu0 0
        %1267 = vmatprep.subr.bf16.mxu0 0
        %1268 = vmatpush1.bf16.msra.mxu0 0
        %1269 = vmatprep.subr.bf16.mxu0 0
        %1270 = vmatpush1.bf16.msra.mxu0 0
        %1271 = vmatprep.subr.bf16.mxu0 0
        %1272 = vmatpush1.bf16.msra.mxu0 0
        %1273 = vmatprep.subr.bf16.mxu0 0
        %1274 = vmatpush1.bf16.msra.mxu0 0
        %1275 = vmatprep.subr.bf16.mxu0 0
        %1276 = vmatpush1.bf16.msra.mxu0 0
        %1277 = vmatprep.subr.bf16.mxu0 0
        %1278 = vmatpush1.bf16.msra.mxu0 0
        %1279 = vmatprep.subr.bf16.mxu0 0
        %1280 = vmatpush1.bf16.msra.mxu0 0
        %1281 = vmatprep.subr.bf16.mxu0 0
        %1282 = vmatpush1.bf16.msra.mxu0 0
        %1283 = vmatprep.subr.bf16.mxu0 0
        %1284 = vmatpush1.bf16.msra.mxu0 0
        %1285 = vmatprep.subr.bf16.mxu0 0
        %1286 = vmatpush1.bf16.msra.mxu0 0
        %1287 = vmatprep.subr.bf16.mxu0 0
        %1288 = vmatpush1.bf16.msra.mxu0 0
        %1289 = vmatprep.subr.bf16.mxu0 0
        %1290 = vmatpush1.bf16.msra.mxu0 0
        %1291 = vmatprep.subr.bf16.mxu0 0
        %1292 = vmatpush1.bf16.msra.mxu0 0
        %1293 = vmatprep.mubr.bf16.mxu0 0
        %1294 = vmatmul.mubr.bf16.gmra.mrb[0].mxu0 %v1255
        %v1295 = vpop.f32.mrb[0].mxu0
        %v1296 = vadd.f32 0.0, %v1295
        %v1297 = vpop.f32.mrb[0].mxu0
        %v1298 = vpop.f32.mrb[0].mxu0
        %v1299 = vpop.f32.mrb[0].mxu0
        %1300 = vdwg.mxu0
        %v1301 = vld [vmem:[%s17] sm:$0xf]
        %v1302 = vpack.c.bf16 %v1296, %v1296
        %1304 = vrot.lane.b32.xlu0 %v1189, 120
        %v1305 = vpop.permute.xlu0 %1304
        %1306 = vrot.lane.b32.xlu0 %v1190, 88
        %v1307 = vpop.permute.xlu0 %1306
        %v1309 = vsel %vm1194, %v1305, 0
        %v1312 = vsel %vm1194, %v1307, 0
        %1314 = vmatprep.subr.bf16.mxu0 0
        %1315 = vmatpush1.bf16.xpose.msra.mxu0 %v1312
        %1316 = vmatprep.subr.bf16.mxu0 0
        %1317 = vmatpush1.bf16.xpose.msra.mxu0 0
        %1318 = vmatprep.subr.bf16.mxu0 0
        %1319 = vmatpush1.bf16.xpose.msra.mxu0 0
        %1320 = vmatprep.subr.bf16.mxu0 0
        %1321 = vmatpush1.bf16.xpose.msra.mxu0 0
        %1322 = vmatprep.subr.bf16.mxu0 0
        %1323 = vmatpush1.bf16.xpose.msra.mxu0 0
        %1324 = vmatprep.subr.bf16.mxu0 0
        %1325 = vmatpush1.bf16.xpose.msra.mxu0 0
        %1326 = vmatprep.subr.bf16.mxu0 0
        %1327 = vmatpush1.bf16.xpose.msra.mxu0 0
        %1328 = vmatprep.subr.bf16.mxu0 0
        %1329 = vmatpush1.bf16.xpose.msra.mxu0 0
        %1330 = vmatprep.subr.bf16.mxu0 0
        %1331 = vmatpush1.bf16.xpose.msra.mxu0 0
        %1332 = vmatprep.subr.bf16.mxu0 0
        %1333 = vmatpush1.bf16.xpose.msra.mxu0 0
        %1334 = vmatprep.subr.bf16.mxu0 0
        %1335 = vmatpush1.bf16.xpose.msra.mxu0 0
        %1336 = vmatprep.subr.bf16.mxu0 0
        %1337 = vmatpush1.bf16.xpose.msra.mxu0 0
        %1338 = vmatprep.subr.bf16.mxu0 0
        %1339 = vmatpush1.bf16.xpose.msra.mxu0 0
        %1340 = vmatprep.subr.bf16.mxu0 0
        %1341 = vmatpush1.bf16.xpose.msra.mxu0 0
        %1342 = vmatprep.subr.bf16.mxu0 0
        %1343 = vmatpush1.bf16.xpose.msra.mxu0 0
        %1344 = vmatprep.subr.bf16.mxu0 0
        %1345 = vmatpush1.bf16.xpose.msra.mxu0 0
        %1346 = vmatprep.mubr.bf16.mxu0 0
        %1347 = vmatmul.mubr.bf16.gmra.mrb[0].mxu0 %v1309
        %v1348 = vpop.f32.mrb[0].mxu0
        %v1349 = vadd.f32 0.0, %v1348
        %v1350 = vpop.f32.mrb[0].mxu0
        %v1351 = vpop.f32.mrb[0].mxu0
        %v1352 = vpop.f32.mrb[0].mxu0
        %1353 = vdwg.mxu0
        %v1354 = vsel %vm1194, %v1349, -inf
        %1355 = vmax.xlane.f32.xlu0 %v1354
        %v1356 = vpop.xlane.xlu0 %1355
        %v1357 = vsub.f32 %v1349, %v1356
        %v1358 = vmul.f32 %v1357, 1.442695
        %v1359 = vpow.pop %v1358
        %v1360 = vsel %vm1194, %v1359, 0.0
        %1361 = vadd.xlane.f32.xlu0 %v1360
        %v1362 = vpop.xlane.xlu0 %1361
        %v1363 = vrcp.pop %v1362
        %v1364 = vmul.f32 %v1359, %v1363
        %v1365 = vpack.c.bf16 %v1364, %v1364
        %1367 = vrot.lane.b32.xlu0 %v1253, 120
        %v1368 = vpop.permute.xlu0 %1367
        %v1370 = vsel %vm1194, %v1365, 0
        %v1373 = vsel %vm1257, %v1368, 0
        %1375 = vmatprep.subr.bf16.mxu0 0
        %1376 = vmatpush1.bf16.msra.mxu0 %v1373
        %1377 = vmatprep.subr.bf16.mxu0 0
        %1378 = vmatpush1.bf16.msra.mxu0 0
        %1379 = vmatprep.subr.bf16.mxu0 0
        %1380 = vmatpush1.bf16.msra.mxu0 0
        %1381 = vmatprep.subr.bf16.mxu0 0
        %1382 = vmatpush1.bf16.msra.mxu0 0
        %1383 = vmatprep.subr.bf16.mxu0 0
        %1384 = vmatpush1.bf16.msra.mxu0 0
        %1385 = vmatprep.subr.bf16.mxu0 0
        %1386 = vmatpush1.bf16.msra.mxu0 0
        %1387 = vmatprep.subr.bf16.mxu0 0
        %1388 = vmatpush1.bf16.msra.mxu0 0
        %1389 = vmatprep.subr.bf16.mxu0 0
        %1390 = vmatpush1.bf16.msra.mxu0 0
        %1391 = vmatprep.subr.bf16.mxu0 0
        %1392 = vmatpush1.bf16.msra.mxu0 0
        %1393 = vmatprep.subr.bf16.mxu0 0
        %1394 = vmatpush1.bf16.msra.mxu0 0
        %1395 = vmatprep.subr.bf16.mxu0 0
        %1396 = vmatpush1.bf16.msra.mxu0 0
        %1397 = vmatprep.subr.bf16.mxu0 0
        %1398 = vmatpush1.bf16.msra.mxu0 0
        %1399 = vmatprep.subr.bf16.mxu0 0
        %1400 = vmatpush1.bf16.msra.mxu0 0
        %1401 = vmatprep.subr.bf16.mxu0 0
        %1402 = vmatpush1.bf16.msra.mxu0 0
        %1403 = vmatprep.subr.bf16.mxu0 0
        %1404 = vmatpush1.bf16.msra.mxu0 0
        %1405 = vmatprep.subr.bf16.mxu0 0
        %1406 = vmatpush1.bf16.msra.mxu0 0
        %1407 = vmatprep.mubr.bf16.mxu0 0
        %1408 = vmatmul.mubr.bf16.gmra.mrb[0].mxu0 %v1370
        %v1409 = vpop.f32.mrb[0].mxu0
        %v1410 = vadd.f32 0.0, %v1409
        %v1411 = vpop.f32.mrb[0].mxu0
        %v1412 = vpop.f32.mrb[0].mxu0
        %v1413 = vpop.f32.mrb[0].mxu0
        %1414 = vdwg.mxu0
        %v1415 = vld [vmem:[%s17 + $0x4] sm:$0xf]
        %v1416 = vpack.c.bf16 %v1410, %v1410
        %v1418 = vsel %vm1194, %v1416, 0
        %v1421 = vsel %vm1257, %v1415, 0
        %1423 = vmatprep.subr.bf16.mxu0 0
        %1424 = vmatpush1.bf16.msra.mxu0 %v1421
        %1425 = vmatprep.subr.bf16.mxu0 0
        %1426 = vmatpush1.bf16.msra.mxu0 0
        %1427 = vmatprep.subr.bf16.mxu0 0
        %1428 = vmatpush1.bf16.msra.mxu0 0
        %1429 = vmatprep.subr.bf16.mxu0 0
        %1430 = vmatpush1.bf16.msra.mxu0 0
        %1431 = vmatprep.subr.bf16.mxu0 0
        %1432 = vmatpush1.bf16.msra.mxu0 0
        %1433 = vmatprep.subr.bf16.mxu0 0
        %1434 = vmatpush1.bf16.msra.mxu0 0
        %1435 = vmatprep.subr.bf16.mxu0 0
        %1436 = vmatpush1.bf16.msra.mxu0 0
        %1437 = vmatprep.subr.bf16.mxu0 0
        %1438 = vmatpush1.bf16.msra.mxu0 0
        %1439 = vmatprep.subr.bf16.mxu0 0
        %1440 = vmatpush1.bf16.msra.mxu0 0
        %1441 = vmatprep.subr.bf16.mxu0 0
        %1442 = vmatpush1.bf16.msra.mxu0 0
        %1443 = vmatprep.subr.bf16.mxu0 0
        %1444 = vmatpush1.bf16.msra.mxu0 0
        %1445 = vmatprep.subr.bf16.mxu0 0
        %1446 = vmatpush1.bf16.msra.mxu0 0
        %1447 = vmatprep.subr.bf16.mxu0 0
        %1448 = vmatpush1.bf16.msra.mxu0 0
        %1449 = vmatprep.subr.bf16.mxu0 0
        %1450 = vmatpush1.bf16.msra.mxu0 0
        %1451 = vmatprep.subr.bf16.mxu0 0
        %1452 = vmatpush1.bf16.msra.mxu0 0
        %1453 = vmatprep.subr.bf16.mxu0 0
        %1454 = vmatpush1.bf16.msra.mxu0 0
        %1455 = vmatprep.mubr.bf16.mxu0 0
        %1456 = vmatmul.mubr.bf16.gmra.mrb[0].mxu0 %v1418
        %v1457 = vpop.f32.mrb[0].mxu0
        %v1458 = vadd.f32 0.0, %v1457
        %v1459 = vpop.f32.mrb[0].mxu0
        %v1460 = vpop.f32.mrb[0].mxu0
        %v1461 = vpop.f32.mrb[0].mxu0
        %1462 = vdwg.mxu0
        %v1464 = vsel %vm1194, %v1302, 0
        %v1467 = vsel %vm1257, %v1301, 0
        %1469 = vmatprep.subr.bf16.mxu0 0
        %1470 = vmatpush1.bf16.msra.mxu0 %v1467
        %1471 = vmatprep.subr.bf16.mxu0 0
        %1472 = vmatpush1.bf16.msra.mxu0 0
        %1473 = vmatprep.subr.bf16.mxu0 0
        %1474 = vmatpush1.bf16.msra.mxu0 0
        %1475 = vmatprep.subr.bf16.mxu0 0
        %1476 = vmatpush1.bf16.msra.mxu0 0
        %1477 = vmatprep.subr.bf16.mxu0 0
        %1478 = vmatpush1.bf16.msra.mxu0 0
        %1479 = vmatprep.subr.bf16.mxu0 0
        %1480 = vmatpush1.bf16.msra.mxu0 0
        %1481 = vmatprep.subr.bf16.mxu0 0
        %1482 = vmatpush1.bf16.msra.mxu0 0
        %1483 = vmatprep.subr.bf16.mxu0 0
        %1484 = vmatpush1.bf16.msra.mxu0 0
        %1485 = vmatprep.subr.bf16.mxu0 0
        %1486 = vmatpush1.bf16.msra.mxu0 0
        %1487 = vmatprep.subr.bf16.mxu0 0
        %1488 = vmatpush1.bf16.msra.mxu0 0
        %1489 = vmatprep.subr.bf16.mxu0 0
        %1490 = vmatpush1.bf16.msra.mxu0 0
        %1491 = vmatprep.subr.bf16.mxu0 0
        %1492 = vmatpush1.bf16.msra.mxu0 0
        %1493 = vmatprep.subr.bf16.mxu0 0
        %1494 = vmatpush1.bf16.msra.mxu0 0
        %1495 = vmatprep.subr.bf16.mxu0 0
        %1496 = vmatpush1.bf16.msra.mxu0 0
        %1497 = vmatprep.subr.bf16.mxu0 0
        %1498 = vmatpush1.bf16.msra.mxu0 0
        %1499 = vmatprep.subr.bf16.mxu0 0
        %1500 = vmatpush1.bf16.msra.mxu0 0
        %1501 = vmatprep.mubr.bf16.mxu0 0
        %1502 = vmatmul.mubr.bf16.gmra.mrb[0].mxu0 %v1464
        %v1503 = vpop.f32.mrb[0].mxu0
        %v1504 = vadd.f32 %v1458, %v1503
        %v1505 = vpop.f32.mrb[0].mxu0
        %v1506 = vpop.f32.mrb[0].mxu0
        %v1507 = vpop.f32.mrb[0].mxu0
        %1508 = vdwg.mxu0
        %1509 = vrot.lane.b32.xlu0 %v1189, 112
        %v1510 = vpop.permute.xlu0 %1509
        %1511 = vrot.lane.b32.xlu0 %v1190, 80
        %v1512 = vpop.permute.xlu0 %1511
        %v1514 = vsel %vm1194, %v1510, 0
        %v1517 = vsel %vm1194, %v1512, 0
        %1519 = vmatprep.subr.bf16.mxu0 0
        %1520 = vmatpush1.bf16.xpose.msra.mxu0 %v1517
        %1521 = vmatprep.subr.bf16.mxu0 0
        %1522 = vmatpush1.bf16.xpose.msra.mxu0 0
        %1523 = vmatprep.subr.bf16.mxu0 0
        %1524 = vmatpush1.bf16.xpose.msra.mxu0 0
        %1525 = vmatprep.subr.bf16.mxu0 0
        %1526 = vmatpush1.bf16.xpose.msra.mxu0 0
        %1527 = vmatprep.subr.bf16.mxu0 0
        %1528 = vmatpush1.bf16.xpose.msra.mxu0 0
        %1529 = vmatprep.subr.bf16.mxu0 0
        %1530 = vmatpush1.bf16.xpose.msra.mxu0 0
        %1531 = vmatprep.subr.bf16.mxu0 0
        %1532 = vmatpush1.bf16.xpose.msra.mxu0 0
        %1533 = vmatprep.subr.bf16.mxu0 0
        %1534 = vmatpush1.bf16.xpose.msra.mxu0 0
        %1535 = vmatprep.subr.bf16.mxu0 0
        %1536 = vmatpush1.bf16.xpose.msra.mxu0 0
        %1537 = vmatprep.subr.bf16.mxu0 0
        %1538 = vmatpush1.bf16.xpose.msra.mxu0 0
        %1539 = vmatprep.subr.bf16.mxu0 0
        %1540 = vmatpush1.bf16.xpose.msra.mxu0 0
        %1541 = vmatprep.subr.bf16.mxu0 0
        %1542 = vmatpush1.bf16.xpose.msra.mxu0 0
        %1543 = vmatprep.subr.bf16.mxu0 0
        %1544 = vmatpush1.bf16.xpose.msra.mxu0 0
        %1545 = vmatprep.subr.bf16.mxu0 0
        %1546 = vmatpush1.bf16.xpose.msra.mxu0 0
        %1547 = vmatprep.subr.bf16.mxu0 0
        %1548 = vmatpush1.bf16.xpose.msra.mxu0 0
        %1549 = vmatprep.subr.bf16.mxu0 0
        %1550 = vmatpush1.bf16.xpose.msra.mxu0 0
        %1551 = vmatprep.mubr.bf16.mxu0 0
        %1552 = vmatmul.mubr.bf16.gmra.mrb[0].mxu0 %v1514
        %v1553 = vpop.f32.mrb[0].mxu0
        %v1554 = vadd.f32 0.0, %v1553
        %v1555 = vpop.f32.mrb[0].mxu0
        %v1556 = vpop.f32.mrb[0].mxu0
        %v1557 = vpop.f32.mrb[0].mxu0
        %1558 = vdwg.mxu0
        %v1559 = vsel %vm1194, %v1554, -inf
        %1560 = vmax.xlane.f32.xlu0 %v1559
        %v1561 = vpop.xlane.xlu0 %1560
        %v1562 = vsub.f32 %v1554, %v1561
        %v1563 = vmul.f32 %v1562, 1.442695
        %v1564 = vpow.pop %v1563
        %v1565 = vsel %vm1194, %v1564, 0.0
        %1566 = vadd.xlane.f32.xlu0 %v1565
        %v1567 = vpop.xlane.xlu0 %1566
        %v1568 = vrcp.pop %v1567
        %v1569 = vmul.f32 %v1564, %v1568
        %v1570 = vpack.c.bf16 %v1569, %v1569
        %1571 = vrot.lane.b32.xlu0 %v1253, 112
        %v1572 = vpop.permute.xlu0 %1571
        %v1574 = vsel %vm1194, %v1570, 0
        %v1577 = vsel %vm1257, %v1572, 0
        %1579 = vmatprep.subr.bf16.mxu0 0
        %1580 = vmatpush1.bf16.msra.mxu0 %v1577
        %1581 = vmatprep.subr.bf16.mxu0 0
        %1582 = vmatpush1.bf16.msra.mxu0 0
        %1583 = vmatprep.subr.bf16.mxu0 0
        %1584 = vmatpush1.bf16.msra.mxu0 0
        %1585 = vmatprep.subr.bf16.mxu0 0
        %1586 = vmatpush1.bf16.msra.mxu0 0
        %1587 = vmatprep.subr.bf16.mxu0 0
        %1588 = vmatpush1.bf16.msra.mxu0 0
        %1589 = vmatprep.subr.bf16.mxu0 0
        %1590 = vmatpush1.bf16.msra.mxu0 0
        %1591 = vmatprep.subr.bf16.mxu0 0
        %1592 = vmatpush1.bf16.msra.mxu0 0
        %1593 = vmatprep.subr.bf16.mxu0 0
        %1594 = vmatpush1.bf16.msra.mxu0 0
        %1595 = vmatprep.subr.bf16.mxu0 0
        %1596 = vmatpush1.bf16.msra.mxu0 0
        %1597 = vmatprep.subr.bf16.mxu0 0
        %1598 = vmatpush1.bf16.msra.mxu0 0
        %1599 = vmatprep.subr.bf16.mxu0 0
        %1600 = vmatpush1.bf16.msra.mxu0 0
        %1601 = vmatprep.subr.bf16.mxu0 0
        %1602 = vmatpush1.bf16.msra.mxu0 0
        %1603 = vmatprep.subr.bf16.mxu0 0
        %1604 = vmatpush1.bf16.msra.mxu0 0
        %1605 = vmatprep.subr.bf16.mxu0 0
        %1606 = vmatpush1.bf16.msra.mxu0 0
        %1607 = vmatprep.subr.bf16.mxu0 0
        %1608 = vmatpush1.bf16.msra.mxu0 0
        %1609 = vmatprep.subr.bf16.mxu0 0
        %1610 = vmatpush1.bf16.msra.mxu0 0
        %1611 = vmatprep.mubr.bf16.mxu0 0
        %1612 = vmatmul.mubr.bf16.gmra.mrb[0].mxu0 %v1574
        %v1613 = vpop.f32.mrb[0].mxu0
        %v1614 = vadd.f32 0.0, %v1613
        %v1615 = vpop.f32.mrb[0].mxu0
        %v1616 = vpop.f32.mrb[0].mxu0
        %v1617 = vpop.f32.mrb[0].mxu0
        %1618 = vdwg.mxu0
        %v1619 = vld [vmem:[%s17 + $0x8] sm:$0xf]
        %v1620 = vpack.c.bf16 %v1614, %v1614
        %v1622 = vsel %vm1194, %v1620, 0
        %v1625 = vsel %vm1257, %v1619, 0
        %1627 = vmatprep.subr.bf16.mxu0 0
        %1628 = vmatpush1.bf16.msra.mxu0 %v1625
        %1629 = vmatprep.subr.bf16.mxu0 0
        %1630 = vmatpush1.bf16.msra.mxu0 0
        %1631 = vmatprep.subr.bf16.mxu0 0
        %1632 = vmatpush1.bf16.msra.mxu0 0
        %1633 = vmatprep.subr.bf16.mxu0 0
        %1634 = vmatpush1.bf16.msra.mxu0 0
        %1635 = vmatprep.subr.bf16.mxu0 0
        %1636 = vmatpush1.bf16.msra.mxu0 0
        %1637 = vmatprep.subr.bf16.mxu0 0
        %1638 = vmatpush1.bf16.msra.mxu0 0
        %1639 = vmatprep.subr.bf16.mxu0 0
        %1640 = vmatpush1.bf16.msra.mxu0 0
        %1641 = vmatprep.subr.bf16.mxu0 0
        %1642 = vmatpush1.bf16.msra.mxu0 0
        %1643 = vmatprep.subr.bf16.mxu0 0
        %1644 = vmatpush1.bf16.msra.mxu0 0
        %1645 = vmatprep.subr.bf16.mxu0 0
        %1646 = vmatpush1.bf16.msra.mxu0 0
        %1647 = vmatprep.subr.bf16.mxu0 0
        %1648 = vmatpush1.bf16.msra.mxu0 0
        %1649 = vmatprep.subr.bf16.mxu0 0
        %1650 = vmatpush1.bf16.msra.mxu0 0
        %1651 = vmatprep.subr.bf16.mxu0 0
        %1652 = vmatpush1.bf16.msra.mxu0 0
        %1653 = vmatprep.subr.bf16.mxu0 0
        %1654 = vmatpush1.bf16.msra.mxu0 0
        %1655 = vmatprep.subr.bf16.mxu0 0
        %1656 = vmatpush1.bf16.msra.mxu0 0
        %1657 = vmatprep.subr.bf16.mxu0 0
        %1658 = vmatpush1.bf16.msra.mxu0 0
        %1659 = vmatprep.mubr.bf16.mxu0 0
        %1660 = vmatmul.mubr.bf16.gmra.mrb[0].mxu0 %v1622
        %v1661 = vpop.f32.mrb[0].mxu0
        %v1662 = vadd.f32 0.0, %v1661
        %v1663 = vpop.f32.mrb[0].mxu0
        %v1664 = vpop.f32.mrb[0].mxu0
        %v1665 = vpop.f32.mrb[0].mxu0
        %1666 = vdwg.mxu0
        %v1667 = vadd.f32 %v1504, %v1662
        %1668 = vrot.lane.b32.xlu0 %v1189, 104
        %v1669 = vpop.permute.xlu0 %1668
        %1670 = vrot.lane.b32.xlu0 %v1190, 72
        %v1671 = vpop.permute.xlu0 %1670
        %v1673 = vsel %vm1194, %v1669, 0
        %v1676 = vsel %vm1194, %v1671, 0
        %1678 = vmatprep.subr.bf16.mxu0 0
        %1679 = vmatpush1.bf16.xpose.msra.mxu0 %v1676
        %1680 = vmatprep.subr.bf16.mxu0 0
        %1681 = vmatpush1.bf16.xpose.msra.mxu0 0
        %1682 = vmatprep.subr.bf16.mxu0 0
        %1683 = vmatpush1.bf16.xpose.msra.mxu0 0
        %1684 = vmatprep.subr.bf16.mxu0 0
        %1685 = vmatpush1.bf16.xpose.msra.mxu0 0
        %1686 = vmatprep.subr.bf16.mxu0 0
        %1687 = vmatpush1.bf16.xpose.msra.mxu0 0
        %1688 = vmatprep.subr.bf16.mxu0 0
        %1689 = vmatpush1.bf16.xpose.msra.mxu0 0
        %1690 = vmatprep.subr.bf16.mxu0 0
        %1691 = vmatpush1.bf16.xpose.msra.mxu0 0
        %1692 = vmatprep.subr.bf16.mxu0 0
        %1693 = vmatpush1.bf16.xpose.msra.mxu0 0
        %1694 = vmatprep.subr.bf16.mxu0 0
        %1695 = vmatpush1.bf16.xpose.msra.mxu0 0
        %1696 = vmatprep.subr.bf16.mxu0 0
        %1697 = vmatpush1.bf16.xpose.msra.mxu0 0
        %1698 = vmatprep.subr.bf16.mxu0 0
        %1699 = vmatpush1.bf16.xpose.msra.mxu0 0
        %1700 = vmatprep.subr.bf16.mxu0 0
        %1701 = vmatpush1.bf16.xpose.msra.mxu0 0
        %1702 = vmatprep.subr.bf16.mxu0 0
        %1703 = vmatpush1.bf16.xpose.msra.mxu0 0
        %1704 = vmatprep.subr.bf16.mxu0 0
        %1705 = vmatpush1.bf16.xpose.msra.mxu0 0
        %1706 = vmatprep.subr.bf16.mxu0 0
        %1707 = vmatpush1.bf16.xpose.msra.mxu0 0
        %1708 = vmatprep.subr.bf16.mxu0 0
        %1709 = vmatpush1.bf16.xpose.msra.mxu0 0
        %1710 = vmatprep.mubr.bf16.mxu0 0
        %1711 = vmatmul.mubr.bf16.gmra.mrb[0].mxu0 %v1673
        %v1712 = vpop.f32.mrb[0].mxu0
        %v1713 = vadd.f32 0.0, %v1712
        %v1714 = vpop.f32.mrb[0].mxu0
        %v1715 = vpop.f32.mrb[0].mxu0
        %v1716 = vpop.f32.mrb[0].mxu0
        %1717 = vdwg.mxu0
        %v1718 = vsel %vm1194, %v1713, -inf
        %1719 = vmax.xlane.f32.xlu0 %v1718
        %v1720 = vpop.xlane.xlu0 %1719
        %v1721 = vsub.f32 %v1713, %v1720
        %v1722 = vmul.f32 %v1721, 1.442695
        %v1723 = vpow.pop %v1722
        %v1724 = vsel %vm1194, %v1723, 0.0
        %1725 = vadd.xlane.f32.xlu0 %v1724
        %v1726 = vpop.xlane.xlu0 %1725
        %v1727 = vrcp.pop %v1726
        %v1728 = vmul.f32 %v1723, %v1727
        %v1729 = vpack.c.bf16 %v1728, %v1728
        %1730 = vrot.lane.b32.xlu0 %v1253, 104
        %v1731 = vpop.permute.xlu0 %1730
        %v1733 = vsel %vm1194, %v1729, 0
        %v1736 = vsel %vm1257, %v1731, 0
        %1738 = vmatprep.subr.bf16.mxu0 0
        %1739 = vmatpush1.bf16.msra.mxu0 %v1736
        %1740 = vmatprep.subr.bf16.mxu0 0
        %1741 = vmatpush1.bf16.msra.mxu0 0
        %1742 = vmatprep.subr.bf16.mxu0 0
        %1743 = vmatpush1.bf16.msra.mxu0 0
        %1744 = vmatprep.subr.bf16.mxu0 0
        %1745 = vmatpush1.bf16.msra.mxu0 0
        %1746 = vmatprep.subr.bf16.mxu0 0
        %1747 = vmatpush1.bf16.msra.mxu0 0
        %1748 = vmatprep.subr.bf16.mxu0 0
        %1749 = vmatpush1.bf16.msra.mxu0 0
        %1750 = vmatprep.subr.bf16.mxu0 0
        %1751 = vmatpush1.bf16.msra.mxu0 0
        %1752 = vmatprep.subr.bf16.mxu0 0
        %1753 = vmatpush1.bf16.msra.mxu0 0
        %1754 = vmatprep.subr.bf16.mxu0 0
        %1755 = vmatpush1.bf16.msra.mxu0 0
        %1756 = vmatprep.subr.bf16.mxu0 0
        %1757 = vmatpush1.bf16.msra.mxu0 0
        %1758 = vmatprep.subr.bf16.mxu0 0
        %1759 = vmatpush1.bf16.msra.mxu0 0
        %1760 = vmatprep.subr.bf16.mxu0 0
        %1761 = vmatpush1.bf16.msra.mxu0 0
        %1762 = vmatprep.subr.bf16.mxu0 0
        %1763 = vmatpush1.bf16.msra.mxu0 0
        %1764 = vmatprep.subr.bf16.mxu0 0
        %1765 = vmatpush1.bf16.msra.mxu0 0
        %1766 = vmatprep.subr.bf16.mxu0 0
        %1767 = vmatpush1.bf16.msra.mxu0 0
        %1768 = vmatprep.subr.bf16.mxu0 0
        %1769 = vmatpush1.bf16.msra.mxu0 0
        %1770 = vmatprep.mubr.bf16.mxu0 0
        %1771 = vmatmul.mubr.bf16.gmra.mrb[0].mxu0 %v1733
        %v1772 = vpop.f32.mrb[0].mxu0
        %v1773 = vadd.f32 0.0, %v1772
        %v1774 = vpop.f32.mrb[0].mxu0
        %v1775 = vpop.f32.mrb[0].mxu0
        %v1776 = vpop.f32.mrb[0].mxu0
        %1777 = vdwg.mxu0
        %v1778 = vld [vmem:[%s17 + $0xc] sm:$0xf]
        %v1779 = vpack.c.bf16 %v1773, %v1773
        %v1781 = vsel %vm1194, %v1779, 0
        %v1784 = vsel %vm1257, %v1778, 0
        %1786 = vmatprep.subr.bf16.mxu0 0
        %1787 = vmatpush1.bf16.msra.mxu0 %v1784
        %1788 = vmatprep.subr.bf16.mxu0 0
        %1789 = vmatpush1.bf16.msra.mxu0 0
        %1790 = vmatprep.subr.bf16.mxu0 0
        %1791 = vmatpush1.bf16.msra.mxu0 0
        %1792 = vmatprep.subr.bf16.mxu0 0
        %1793 = vmatpush1.bf16.msra.mxu0 0
        %1794 = vmatprep.subr.bf16.mxu0 0
        %1795 = vmatpush1.bf16.msra.mxu0 0
        %1796 = vmatprep.subr.bf16.mxu0 0
        %1797 = vmatpush1.bf16.msra.mxu0 0
        %1798 = vmatprep.subr.bf16.mxu0 0
        %1799 = vmatpush1.bf16.msra.mxu0 0
        %1800 = vmatprep.subr.bf16.mxu0 0
        %1801 = vmatpush1.bf16.msra.mxu0 0
        %1802 = vmatprep.subr.bf16.mxu0 0
        %1803 = vmatpush1.bf16.msra.mxu0 0
        %1804 = vmatprep.subr.bf16.mxu0 0
        %1805 = vmatpush1.bf16.msra.mxu0 0
        %1806 = vmatprep.subr.bf16.mxu0 0
        %1807 = vmatpush1.bf16.msra.mxu0 0
        %1808 = vmatprep.subr.bf16.mxu0 0
        %1809 = vmatpush1.bf16.msra.mxu0 0
        %1810 = vmatprep.subr.bf16.mxu0 0
        %1811 = vmatpush1.bf16.msra.mxu0 0
        %1812 = vmatprep.subr.bf16.mxu0 0
        %1813 = vmatpush1.bf16.msra.mxu0 0
        %1814 = vmatprep.subr.bf16.mxu0 0
        %1815 = vmatpush1.bf16.msra.mxu0 0
        %1816 = vmatprep.subr.bf16.mxu0 0
        %1817 = vmatpush1.bf16.msra.mxu0 0
        %1818 = vmatprep.mubr.bf16.mxu0 0
        %1819 = vmatmul.mubr.bf16.gmra.mrb[0].mxu0 %v1781
        %v1820 = vpop.f32.mrb[0].mxu0
        %v1821 = vadd.f32 0.0, %v1820
        %v1822 = vpop.f32.mrb[0].mxu0
        %v1823 = vpop.f32.mrb[0].mxu0
        %v1824 = vpop.f32.mrb[0].mxu0
        %1825 = vdwg.mxu0
        %v1826 = vadd.f32 %v1667, %v1821
        %v1827 = vld [vmem:[#allocation8] sm:$0x1]
        %v1829 = vlaneseq
        %v1830 = vshrl.u32 %v1829, 7
        %v1831 = vsub.s32 0, %v1830
        %v1832 = vrot.slane %v1827, %v1831
        %v1834 = vadd.f32 %v1826, %v1832
        %v1835 = vadd.f32 %v1059, %v1834
        %v1836 = vsel %vm1091, %v1835, 0.0
        %1837 = vadd.xlane.f32.xlu0 %v1836
        %v1838 = vpop.xlane.xlu0 %1837
        %v1839 = vrcp.pop 32.0
        %v1840 = vmul.f32 %v1838, %v1839
        %v1841 = vsub.f32 %v1835, %v1840
        %v1842 = vmul.f32 %v1841, %v1841
        %v1843 = vsel %vm1091, %v1842, 0.0
        %1844 = vadd.xlane.f32.xlu0 %v1843
        %v1845 = vpop.xlane.xlu0 %1844
        %v1846 = vmul.f32 %v1845, %v1839
        %v1847 = vadd.f32 %v1846, 1e-05
        %v1848 = vrsqrt.pop %v1847
        %v1849 = vmul.f32 %v1841, %v1848
        %v1850 = vld [vmem:[#allocation10] sm:$0x1]
        %v1852 = vlaneseq
        %v1853 = vshrl.u32 %v1852, 7
        %v1854 = vsub.s32 0, %v1853
        %v1855 = vrot.slane %v1850, %v1854
        %v1857 = vmul.f32 %v1849, %v1855
        %v1858 = vld [vmem:[#allocation11] sm:$0x1]
        %v1860 = vlaneseq
        %v1861 = vshrl.u32 %v1860, 7
        %v1862 = vsub.s32 0, %v1861
        %v1863 = vrot.slane %v1858, %v1862
        %v1865 = vadd.f32 %v1857, %v1863
        %v1866 = vadd.f32 %v1865, %v1065
        %v1867 = vld [vmem:[%s33] sm:$0xf]
        %v1868 = vld [vmem:[%s33 + $0x4] sm:$0xf]
        %v1869 = vld [vmem:[%s33 + $0x8] sm:$0xf]
        %v1870 = vld [vmem:[%s33 + $0xc] sm:$0xf]
        %v1871 = vld [vmem:[%s35] sm:$0x1]
        %v1873 = vlaneseq
        %v1874 = vshrl.u32 %v1873, 7
        %v1875 = vsub.s32 0, %v1874
        %v1876 = vrot.slane %v1871, %v1875
        %v1881 = vunpack.c.l.b16 %v1062
        %v1882 = vunpack.c.l.b16 %v1063
        %v1883 = vunpack.c.l.b16 %v1064
        %v1884 = vpack.c.b16 %v1882, %v1881
        %v1885 = vpack.c.b16 %v1883, %v1883
        %v1890 = vunpack.c.l.b16 %v1867
        %v1891 = vunpack.c.l.b16 %v1868
        %v1892 = vunpack.c.l.b16 %v1869
        %v1893 = vunpack.c.l.b16 %v1870
        %v1894 = vpack.c.b16 %v1891, %v1890
        %v1895 = vpack.c.b16 %v1893, %v1892
        %v1899 = vsel %vm1091, %v1884, 0
        %v1902 = vsel %vm1091, %v1885, 0
        %1904 = vmatprep.subr.bf16.mxu0 0
        %1905 = vmatpush1.bf16.msra.mxu0 %v1894
        %1906 = vmatprep.subr.bf16.mxu0 0
        %1907 = vmatpush1.bf16.msra.mxu0 %v1895
        %1908 = vmatprep.subr.bf16.mxu0 0
        %1909 = vmatpush1.bf16.msra.mxu0 0
        %1910 = vmatprep.subr.bf16.mxu0 0
        %1911 = vmatpush1.bf16.msra.mxu0 0
        %1912 = vmatprep.subr.bf16.mxu0 0
        %1913 = vmatpush1.bf16.msra.mxu0 0
        %1914 = vmatprep.subr.bf16.mxu0 0
        %1915 = vmatpush1.bf16.msra.mxu0 0
        %1916 = vmatprep.subr.bf16.mxu0 0
        %1917 = vmatpush1.bf16.msra.mxu0 0
        %1918 = vmatprep.subr.bf16.mxu0 0
        %1919 = vmatpush1.bf16.msra.mxu0 0
        %1920 = vmatprep.subr.bf16.mxu0 0
        %1921 = vmatpush1.bf16.msra.mxu0 0
        %1922 = vmatprep.subr.bf16.mxu0 0
        %1923 = vmatpush1.bf16.msra.mxu0 0
        %1924 = vmatprep.subr.bf16.mxu0 0
        %1925 = vmatpush1.bf16.msra.mxu0 0
        %1926 = vmatprep.subr.bf16.mxu0 0
        %1927 = vmatpush1.bf16.msra.mxu0 0
        %1928 = vmatprep.subr.bf16.mxu0 0
        %1929 = vmatpush1.bf16.msra.mxu0 0
        %1930 = vmatprep.subr.bf16.mxu0 0
        %1931 = vmatpush1.bf16.msra.mxu0 0
        %1932 = vmatprep.subr.bf16.mxu0 0
        %1933 = vmatpush1.bf16.msra.mxu0 0
        %1934 = vmatprep.subr.bf16.mxu0 0
        %1935 = vmatpush1.bf16.msra.mxu0 0
        %1936 = vmatprep.mubr.bf16.mxu0 0
        %1937 = vmatmul.mubr.bf16.gmra.mrb[0].mxu0 %v1899
        %v1938 = vpop.f32.mrb[0].mxu0
        %v1939 = vadd.f32 %v1876, %v1938
        %v1940 = vpop.f32.mrb[0].mxu0
        %v1941 = vpop.f32.mrb[0].mxu0
        %v1942 = vadd.f32 %v1876, %v1941
        %v1943 = vpop.f32.mrb[0].mxu0
        %1944 = vmatprep.mubr.bf16.mxu0 0
        %1945 = vmatmul.mubr.bf16.gmra.mrb[0].mxu0 %v1902
        %v1946 = vpop.f32.mrb[0].mxu0
        %v1947 = vadd.f32 %v1876, %v1946
        %v1948 = vpop.f32.mrb[0].mxu0
        %v1949 = vpop.f32.mrb[0].mxu0
        %v1950 = vpop.f32.mrb[0].mxu0
        %1951 = vdwg.mxu0
        %v1952 = vpack.c.bf16 %v1942, %v1939
        %v1953 = vpack.c.bf16 %v1947, %v1947
        %v1954 = vld [vmem:[%s25] sm:$0xf]
        %v1955 = vld [vmem:[%s25 + $0x4] sm:$0xf]
        %v1956 = vld [vmem:[%s25 + $0x8] sm:$0xf]
        %v1957 = vld [vmem:[%s25 + $0xc] sm:$0xf]
        %v1958 = vpack.c.bf16 %v1866, %v1866
        %v1959 = vld [vmem:[#allocation13] sm:$0x1]
        %v1961 = vlaneseq
        %v1962 = vshrl.u32 %v1961, 7
        %v1963 = vsub.s32 0, %v1962
        %v1964 = vrot.slane %v1959, %v1963
        %v1970 = vunpack.c.l.b16 %v1954
        %v1971 = vunpack.c.l.b16 %v1955
        %v1972 = vunpack.c.l.b16 %v1956
        %v1973 = vunpack.c.l.b16 %v1957
        %v1974 = vpack.c.b16 %v1971, %v1970
        %v1975 = vpack.c.b16 %v1973, %v1972
        %v1979 = vsel %vm1091, %v1958, 0
        %1981 = vmatprep.subr.bf16.mxu0 0
        %1982 = vmatpush1.bf16.msra.mxu0 %v1974
        %1983 = vmatprep.subr.bf16.mxu0 0
        %1984 = vmatpush1.bf16.msra.mxu0 %v1975
        %1985 = vmatprep.subr.bf16.mxu0 0
        %1986 = vmatpush1.bf16.msra.mxu0 0
        %1987 = vmatprep.subr.bf16.mxu0 0
        %1988 = vmatpush1.bf16.msra.mxu0 0
        %1989 = vmatprep.subr.bf16.mxu0 0
        %1990 = vmatpush1.bf16.msra.mxu0 0
        %1991 = vmatprep.subr.bf16.mxu0 0
        %1992 = vmatpush1.bf16.msra.mxu0 0
        %1993 = vmatprep.subr.bf16.mxu0 0
        %1994 = vmatpush1.bf16.msra.mxu0 0
        %1995 = vmatprep.subr.bf16.mxu0 0
        %1996 = vmatpush1.bf16.msra.mxu0 0
        %1997 = vmatprep.subr.bf16.mxu0 0
        %1998 = vmatpush1.bf16.msra.mxu0 0
        %1999 = vmatprep.subr.bf16.mxu0 0
        %2000 = vmatpush1.bf16.msra.mxu0 0
        %2001 = vmatprep.subr.bf16.mxu0 0
        %2002 = vmatpush1.bf16.msra.mxu0 0
        %2003 = vmatprep.subr.bf16.mxu0 0
        %2004 = vmatpush1.bf16.msra.mxu0 0
        %2005 = vmatprep.subr.bf16.mxu0 0
        %2006 = vmatpush1.bf16.msra.mxu0 0
        %2007 = vmatprep.subr.bf16.mxu0 0
        %2008 = vmatpush1.bf16.msra.mxu0 0
        %2009 = vmatprep.subr.bf16.mxu0 0
        %2010 = vmatpush1.bf16.msra.mxu0 0
        %2011 = vmatprep.subr.bf16.mxu0 0
        %2012 = vmatpush1.bf16.msra.mxu0 0
        %2013 = vmatprep.mubr.bf16.mxu0 0
        %2014 = vmatmul.mubr.bf16.gmra.mrb[0].mxu0 %v1979
        %v2015 = vpop.f32.mrb[0].mxu0
        %v2016 = vadd.f32 %v1964, %v2015
        %v2017 = vpop.f32.mrb[0].mxu0
        %v2018 = vpop.f32.mrb[0].mxu0
        %v2019 = vpop.f32.mrb[0].mxu0
        %2020 = vdwg.mxu0
        %v2021 = vld [vmem:[%s29] sm:$0xf]
        %v2022 = vld [vmem:[%s29 + $0x4] sm:$0xf]
        %v2023 = vld [vmem:[%s29 + $0x8] sm:$0xf]
        %v2024 = vld [vmem:[%s29 + $0xc] sm:$0xf]
        %v2025 = vld [vmem:[%s31] sm:$0x1]
        %v2027 = vlaneseq
        %v2028 = vshrl.u32 %v2027, 7
        %v2029 = vsub.s32 0, %v2028
        %v2030 = vrot.slane %v2025, %v2029
        %v2036 = vunpack.c.l.b16 %v2021
        %v2037 = vunpack.c.l.b16 %v2022
        %v2038 = vunpack.c.l.b16 %v2023
        %v2039 = vunpack.c.l.b16 %v2024
        %v2040 = vpack.c.b16 %v2037, %v2036
        %v2041 = vpack.c.b16 %v2039, %v2038
        %2044 = vmatprep.subr.bf16.mxu0 0
        %2045 = vmatpush1.bf16.msra.mxu0 %v2040
        %2046 = vmatprep.subr.bf16.mxu0 0
        %2047 = vmatpush1.bf16.msra.mxu0 %v2041
        %2048 = vmatprep.subr.bf16.mxu0 0
        %2049 = vmatpush1.bf16.msra.mxu0 0
        %2050 = vmatprep.subr.bf16.mxu0 0
        %2051 = vmatpush1.bf16.msra.mxu0 0
        %2052 = vmatprep.subr.bf16.mxu0 0
        %2053 = vmatpush1.bf16.msra.mxu0 0
        %2054 = vmatprep.subr.bf16.mxu0 0
        %2055 = vmatpush1.bf16.msra.mxu0 0
        %2056 = vmatprep.subr.bf16.mxu0 0
        %2057 = vmatpush1.bf16.msra.mxu0 0
        %2058 = vmatprep.subr.bf16.mxu0 0
        %2059 = vmatpush1.bf16.msra.mxu0 0
        %2060 = vmatprep.subr.bf16.mxu0 0
        %2061 = vmatpush1.bf16.msra.mxu0 0
        %2062 = vmatprep.subr.bf16.mxu0 0
        %2063 = vmatpush1.bf16.msra.mxu0 0
        %2064 = vmatprep.subr.bf16.mxu0 0
        %2065 = vmatpush1.bf16.msra.mxu0 0
        %2066 = vmatprep.subr.bf16.mxu0 0
        %2067 = vmatpush1.bf16.msra.mxu0 0
        %2068 = vmatprep.subr.bf16.mxu0 0
        %2069 = vmatpush1.bf16.msra.mxu0 0
        %2070 = vmatprep.subr.bf16.mxu0 0
        %2071 = vmatpush1.bf16.msra.mxu0 0
        %2072 = vmatprep.subr.bf16.mxu0 0
        %2073 = vmatpush1.bf16.msra.mxu0 0
        %2074 = vmatprep.subr.bf16.mxu0 0
        %2075 = vmatpush1.bf16.msra.mxu0 0
        %2076 = vmatprep.mubr.bf16.mxu0 0
        %2077 = vmatmul.mubr.bf16.gmra.mrb[0].mxu0 %v1979
        %v2078 = vpop.f32.mrb[0].mxu0
        %v2079 = vadd.f32 %v2030, %v2078
        %v2080 = vpop.f32.mrb[0].mxu0
        %v2081 = vpop.f32.mrb[0].mxu0
        %v2082 = vpop.f32.mrb[0].mxu0
        %2083 = vdwg.mxu0
        %v2084 = vld [vmem:[%s9] sm:$0x1]
        %v2086 = vlaneseq
        %v2087 = vshrl.u32 %v2086, 7
        %v2088 = vsub.s32 0, %v2087
        %v2089 = vrot.slane %v2084, %v2088
        %v2091 = vmul.f32 %v2016, %v2089
        %v2092 = vadd.f32 %v1061, %v2091
        %2093 = vst.msk [vmem:[%s1044] sm:$0xff] %vm1091, %v2092
        %v2094 = vld [vmem:[#allocation5] sm:$0x1]
        %v2096 = vlaneseq
        %v2097 = vshrl.u32 %v2096, 7
        %v2098 = vsub.s32 0, %v2097
        %v2099 = vrot.slane %v2094, %v2098
        %v2101 = vmul.f32 %v2092, %v2099
        %v2102 = vsub.f32 %v2101, 0.5
        %v2103 = vfloor.f32 %v2102
        %v2104 = vsub.f32 %v2102, %v2103
        %v2105 = vcvt.f32.s32.to.zero.pseudo %v2103
        %vm2106 = vcmask 130048
        %v2107 = vsel %vm2106, %v2079, -inf
        %2108 = vmax.xlane.f32.xlu0 %v2107
        %v2109 = vpop.xlane.xlu0 %2108
        %v2110 = vsub.f32 %v2079, %v2109
        %v2111 = vmul.f32 %v2110, 1.442695
        %v2112 = vpow.pop %v2111
        %vm2113 = vcmask 31744
        %v2114 = vsel %vm2113, %v2112, 0.0
        %2115 = vadd.xlane.f32.xlu0 %v2114
        %v2116 = vpop.xlane.xlu0 %2115
        %v2117 = vmax.f32 %v2116, 1e-20
        %v2118 = vrcp.pop %v2117
        %v2119 = vmul.f32 1.0, %v2118
        %2121 = vrot.lane.b32.xlu0 %v2112, 124
        %v2122 = vpop.permute.xlu0 %2121
        %v2124 = vsel %vm2113, %v2122, 0.0
        %2125 = vadd.xlane.f32.xlu0 %v2124
        %v2126 = vpop.xlane.xlu0 %2125
        %v2127 = vmax.f32 %v2126, 1e-20
        %v2128 = vrcp.pop %v2127
        %v2129 = vmul.f32 1.0, %v2128
        %2130 = vrot.lane.b32.xlu0 %v2112, 120
        %v2131 = vpop.permute.xlu0 %2130
        %v2133 = vsel %vm2113, %v2131, 0.0
        %2134 = vadd.xlane.f32.xlu0 %v2133
        %v2135 = vpop.xlane.xlu0 %2134
        %v2136 = vmax.f32 %v2135, 1e-20
        %v2137 = vrcp.pop %v2136
        %v2138 = vmul.f32 1.0, %v2137
        %2139 = vrot.lane.b32.xlu0 %v2112, 116
        %v2140 = vpop.permute.xlu0 %2139
        %v2142 = vsel %vm2113, %v2140, 0.0
        %2143 = vadd.xlane.f32.xlu0 %v2142
        %v2144 = vpop.xlane.xlu0 %2143
        %v2145 = vmax.f32 %v2144, 1e-20
        %v2146 = vrcp.pop %v2145
        %v2147 = vmul.f32 1.0, %v2146
        %v2148 = vlaneseq
        %v2149 = vand.u32 %v2148, 127
        %v2150 = vmul.f32 %v2112, %v2119
        %2151 = vset.pattern.permute.xlu0 0
        %2152 = vperm.xlu0 %2151, %v2105
        %v2153 = vpop.permute.xlu0 %2152
        %vm2154 = vcmp.eq.s32.totalorder %v2149, %v2153
        %v2155 = vsub.f32 1.0, %v2104
        %2157 = vset.pattern.permute.xlu0 0
        %2158 = vperm.xlu0 %2157, %v2155
        %v2159 = vpop.permute.xlu0 %2158
        %v2161 = vsel %vm2154, %v2159, 0.0
        %v2162 = vadd.s32 %v2105, 1
        %2163 = vset.pattern.permute.xlu0 0
        %2164 = vperm.xlu0 %2163, %v2162
        %v2165 = vpop.permute.xlu0 %2164
        %vm2166 = vcmp.eq.s32.totalorder %v2149, %v2165
        %2168 = vset.pattern.permute.xlu0 0
        %2169 = vperm.xlu0 %2168, %v2104
        %v2170 = vpop.permute.xlu0 %2169
        %v2172 = vsel %vm2166, %v2170, 0.0
        %v2173 = vadd.f32 %v2161, %v2172
        %2174 = vset.pattern.permute.xlu0 1
        %2175 = vperm.xlu0 %2174, %v2105
        %v2176 = vpop.permute.xlu0 %2175
        %vm2177 = vcmp.eq.s32.totalorder %v2149, %v2176
        %2178 = vset.pattern.permute.xlu0 1
        %2179 = vperm.xlu0 %2178, %v2155
        %v2180 = vpop.permute.xlu0 %2179
        %v2182 = vsel %vm2177, %v2180, 0.0
        %2183 = vset.pattern.permute.xlu0 1
        %2184 = vperm.xlu0 %2183, %v2162
        %v2185 = vpop.permute.xlu0 %2184
        %vm2186 = vcmp.eq.s32.totalorder %v2149, %v2185
        %2187 = vset.pattern.permute.xlu0 1
        %2188 = vperm.xlu0 %2187, %v2104
        %v2189 = vpop.permute.xlu0 %2188
        %v2191 = vsel %vm2186, %v2189, 0.0
        %v2192 = vadd.f32 %v2182, %v2191
        %2194 = vset.pattern.permute.xlu0 0
        %2195 = vperm.xlu0 %2194, %v2150
        %v2196 = vpop.permute.xlu0 %2195
        %v2198 = vmul.f32 %v2192, %v2196
        %v2199 = vlaneseq
        %v2200 = vshrl.u32 %v2199, 7
        %v2201 = vsub.s32 0, %v2200
        %v2202 = vrot.slane %v2198, %v2201
        %2204 = vbcast.lane.b32.xlu0 %v2202, 256
        %v2205 = vpop.permute.xlu0 %2204
        %v2206 = vlaneseq
        %v2207 = vshrl.u32 %v2206, 7
        %v2208 = vsub.s32 1, %v2207
        %v2209 = vrot.slane %v2198, %v2208
        %2211 = vbcast.lane.b32.xlu0 %v2209, 256
        %v2212 = vpop.permute.xlu0 %2211
        %v2213 = vlaneseq
        %v2214 = vshrl.u32 %v2213, 7
        %v2215 = vsub.s32 2, %v2214
        %v2216 = vrot.slane %v2198, %v2215
        %2218 = vbcast.lane.b32.xlu0 %v2216, 256
        %v2219 = vpop.permute.xlu0 %2218
        %v2220 = vlaneseq
        %v2221 = vshrl.u32 %v2220, 7
        %v2222 = vsub.s32 3, %v2221
        %v2223 = vrot.slane %v2198, %v2222
        %2225 = vbcast.lane.b32.xlu0 %v2223, 256
        %v2226 = vpop.permute.xlu0 %2225
        %v2227 = vlaneseq
        %v2228 = vshrl.u32 %v2227, 7
        %v2229 = vsub.s32 4, %v2228
        %v2230 = vrot.slane %v2198, %v2229
        %2232 = vbcast.lane.b32.xlu0 %v2230, 256
        %v2233 = vpop.permute.xlu0 %2232
        %v2234 = vlaneseq
        %v2235 = vshrl.u32 %v2234, 7
        %v2236 = vsub.s32 5, %v2235
        %v2237 = vrot.slane %v2198, %v2236
        %2239 = vbcast.lane.b32.xlu0 %v2237, 256
        %v2240 = vpop.permute.xlu0 %2239
        %v2241 = vlaneseq
        %v2242 = vshrl.u32 %v2241, 7
        %v2243 = vsub.s32 6, %v2242
        %v2244 = vrot.slane %v2198, %v2243
        %2246 = vbcast.lane.b32.xlu0 %v2244, 256
        %v2247 = vpop.permute.xlu0 %2246
        %v2248 = vlaneseq
        %v2249 = vshrl.u32 %v2248, 7
        %v2250 = vsub.s32 7, %v2249
        %v2251 = vrot.slane %v2198, %v2250
        %2253 = vbcast.lane.b32.xlu0 %v2251, 256
        %v2254 = vpop.permute.xlu0 %2253
        %v2256 = vcombine.high %v2173, %v2173
        %v2258 = vunpack.c.l.s4 1966171168
        %v2259 = vunpack.c.0.s8 %v2258
        %v2260 = vlaneseq
        %v2261 = vshrl.u32 %v2260, 7
        %v2262 = vsub.s32 %v2259, %v2261
        %v2263 = vrot.slane %v2173, %v2262
        %v2265 = vunpack.c.l.s4 1966171168
        %v2266 = vunpack.c.0.s8 %v2265
        %v2267 = vlaneseq
        %v2268 = vshrl.u32 %v2267, 7
        %v2269 = vsub.s32 %v2266, %v2268
        %v2270 = vrot.slane %v2256, %v2269
        %v2271 = vcombine.high %v2263, %v2263
        %v2272 = vcombine.high %v2270, %v2270
        %v2274 = vunpack.c.l.s4 1966171168
        %v2275 = vunpack.c.0.s8 %v2274
        %v2276 = vlaneseq
        %v2277 = vshrl.u32 %v2276, 7
        %v2278 = vsub.s32 %v2275, %v2277
        %v2279 = vrot.slane %v2263, %v2278
        %v2281 = vunpack.c.l.s4 1966171168
        %v2282 = vunpack.c.0.s8 %v2281
        %v2283 = vlaneseq
        %v2284 = vshrl.u32 %v2283, 7
        %v2285 = vsub.s32 %v2282, %v2284
        %v2286 = vrot.slane %v2270, %v2285
        %v2288 = vunpack.c.l.s4 1966171168
        %v2289 = vunpack.c.0.s8 %v2288
        %v2290 = vlaneseq
        %v2291 = vshrl.u32 %v2290, 7
        %v2292 = vsub.s32 %v2289, %v2291
        %v2293 = vrot.slane %v2271, %v2292
        %v2295 = vunpack.c.l.s4 1966171168
        %v2296 = vunpack.c.0.s8 %v2295
        %v2297 = vlaneseq
        %v2298 = vshrl.u32 %v2297, 7
        %v2299 = vsub.s32 %v2296, %v2298
        %v2300 = vrot.slane %v2272, %v2299
        %v2301 = vcombine.high %v2279, %v2279
        %v2302 = vcombine.high %v2286, %v2286
        %v2303 = vcombine.high %v2293, %v2293
        %v2304 = vcombine.high %v2300, %v2300
        %v2305 = vlaneseq
        %v2306 = vshrl.u32 %v2305, 7
        %v2307 = vsub.s32 0, %v2306
        %v2308 = vrot.slane %v2279, %v2307
        %v2309 = vlaneseq
        %v2310 = vshrl.u32 %v2309, 7
        %v2311 = vsub.s32 0, %v2310
        %v2312 = vrot.slane %v2293, %v2311
        %v2313 = vlaneseq
        %v2314 = vshrl.u32 %v2313, 7
        %v2315 = vsub.s32 0, %v2314
        %v2316 = vrot.slane %v2301, %v2315
        %v2317 = vlaneseq
        %v2318 = vshrl.u32 %v2317, 7
        %v2319 = vsub.s32 0, %v2318
        %v2320 = vrot.slane %v2303, %v2319
        %v2321 = vlaneseq
        %v2322 = vshrl.u32 %v2321, 7
        %v2323 = vsub.s32 0, %v2322
        %v2324 = vrot.slane %v2286, %v2323
        %v2325 = vlaneseq
        %v2326 = vshrl.u32 %v2325, 7
        %v2327 = vsub.s32 0, %v2326
        %v2328 = vrot.slane %v2300, %v2327
        %v2329 = vlaneseq
        %v2330 = vshrl.u32 %v2329, 7
        %v2331 = vsub.s32 0, %v2330
        %v2332 = vrot.slane %v2302, %v2331
        %v2333 = vlaneseq
        %v2334 = vshrl.u32 %v2333, 7
        %v2335 = vsub.s32 0, %v2334
        %v2336 = vrot.slane %v2304, %v2335
        %v2345 = vmul.f32 %v2205, %v2308
        %v2346 = vmul.f32 %v2212, %v2312
        %v2347 = vmul.f32 %v2219, %v2316
        %v2348 = vmul.f32 %v2226, %v2320
        %v2349 = vmul.f32 %v2233, %v2324
        %v2350 = vmul.f32 %v2240, %v2328
        %v2351 = vmul.f32 %v2247, %v2332
        %v2352 = vmul.f32 %v2254, %v2336
        %v2353 = vadd.f32 %v2345, 0.0
        %v2354 = vadd.f32 %v2346, 0.0
        %v2355 = vadd.f32 %v2347, 0.0
        %v2356 = vadd.f32 %v2348, 0.0
        %v2357 = vadd.f32 %v2349, 0.0
        %v2358 = vadd.f32 %v2350, 0.0
        %v2359 = vadd.f32 %v2351, 0.0
        %v2360 = vadd.f32 %v2352, 0.0
        %2361 = vset.pattern.permute.xlu0 2
        %2362 = vperm.xlu0 %2361, %v2105
        %v2363 = vpop.permute.xlu0 %2362
        %vm2364 = vcmp.eq.s32.totalorder %v2149, %v2363
        %2365 = vset.pattern.permute.xlu0 2
        %2366 = vperm.xlu0 %2365, %v2155
        %v2367 = vpop.permute.xlu0 %2366
        %v2369 = vsel %vm2364, %v2367, 0.0
        %2370 = vset.pattern.permute.xlu0 2
        %2371 = vperm.xlu0 %2370, %v2162
        %v2372 = vpop.permute.xlu0 %2371
        %vm2373 = vcmp.eq.s32.totalorder %v2149, %v2372
        %2374 = vset.pattern.permute.xlu0 2
        %2375 = vperm.xlu0 %2374, %v2104
        %v2376 = vpop.permute.xlu0 %2375
        %v2378 = vsel %vm2373, %v2376, 0.0
        %v2379 = vadd.f32 %v2369, %v2378
        %2380 = vset.pattern.permute.xlu0 3
        %2381 = vperm.xlu0 %2380, %v2105
        %v2382 = vpop.permute.xlu0 %2381
        %vm2383 = vcmp.eq.s32.totalorder %v2149, %v2382
        %2384 = vset.pattern.permute.xlu0 3
        %2385 = vperm.xlu0 %2384, %v2155
        %v2386 = vpop.permute.xlu0 %2385
        %v2388 = vsel %vm2383, %v2386, 0.0
        %2389 = vset.pattern.permute.xlu0 3
        %2390 = vperm.xlu0 %2389, %v2162
        %v2391 = vpop.permute.xlu0 %2390
        %vm2392 = vcmp.eq.s32.totalorder %v2149, %v2391
        %2393 = vset.pattern.permute.xlu0 3
        %2394 = vperm.xlu0 %2393, %v2104
        %v2395 = vpop.permute.xlu0 %2394
        %v2397 = vsel %vm2392, %v2395, 0.0
        %v2398 = vadd.f32 %v2388, %v2397
        %2399 = vset.pattern.permute.xlu0 1
        %2400 = vperm.xlu0 %2399, %v2150
        %v2401 = vpop.permute.xlu0 %2400
        %v2403 = vmul.f32 %v2398, %v2401
        %v2404 = vlaneseq
        %v2405 = vshrl.u32 %v2404, 7
        %v2406 = vsub.s32 0, %v2405
        %v2407 = vrot.slane %v2403, %v2406
        %2409 = vbcast.lane.b32.xlu0 %v2407, 256
        %v2410 = vpop.permute.xlu0 %2409
        %v2411 = vlaneseq
        %v2412 = vshrl.u32 %v2411, 7
        %v2413 = vsub.s32 1, %v2412
        %v2414 = vrot.slane %v2403, %v2413
        %2416 = vbcast.lane.b32.xlu0 %v2414, 256
        %v2417 = vpop.permute.xlu0 %2416
        %v2418 = vlaneseq
        %v2419 = vshrl.u32 %v2418, 7
        %v2420 = vsub.s32 2, %v2419
        %v2421 = vrot.slane %v2403, %v2420
        %2423 = vbcast.lane.b32.xlu0 %v2421, 256
        %v2424 = vpop.permute.xlu0 %2423
        %v2425 = vlaneseq
        %v2426 = vshrl.u32 %v2425, 7
        %v2427 = vsub.s32 3, %v2426
        %v2428 = vrot.slane %v2403, %v2427
        %2430 = vbcast.lane.b32.xlu0 %v2428, 256
        %v2431 = vpop.permute.xlu0 %2430
        %v2432 = vlaneseq
        %v2433 = vshrl.u32 %v2432, 7
        %v2434 = vsub.s32 4, %v2433
        %v2435 = vrot.slane %v2403, %v2434
        %2437 = vbcast.lane.b32.xlu0 %v2435, 256
        %v2438 = vpop.permute.xlu0 %2437
        %v2439 = vlaneseq
        %v2440 = vshrl.u32 %v2439, 7
        %v2441 = vsub.s32 5, %v2440
        %v2442 = vrot.slane %v2403, %v2441
        %2444 = vbcast.lane.b32.xlu0 %v2442, 256
        %v2445 = vpop.permute.xlu0 %2444
        %v2446 = vlaneseq
        %v2447 = vshrl.u32 %v2446, 7
        %v2448 = vsub.s32 6, %v2447
        %v2449 = vrot.slane %v2403, %v2448
        %2451 = vbcast.lane.b32.xlu0 %v2449, 256
        %v2452 = vpop.permute.xlu0 %2451
        %v2453 = vlaneseq
        %v2454 = vshrl.u32 %v2453, 7
        %v2455 = vsub.s32 7, %v2454
        %v2456 = vrot.slane %v2403, %v2455
        %2458 = vbcast.lane.b32.xlu0 %v2456, 256
        %v2459 = vpop.permute.xlu0 %2458
        %v2461 = vcombine.high %v2379, %v2379
        %v2463 = vunpack.c.l.s4 1966171168
        %v2464 = vunpack.c.0.s8 %v2463
        %v2465 = vlaneseq
        %v2466 = vshrl.u32 %v2465, 7
        %v2467 = vsub.s32 %v2464, %v2466
        %v2468 = vrot.slane %v2379, %v2467
        %v2470 = vunpack.c.l.s4 1966171168
        %v2471 = vunpack.c.0.s8 %v2470
        %v2472 = vlaneseq
        %v2473 = vshrl.u32 %v2472, 7
        %v2474 = vsub.s32 %v2471, %v2473
        %v2475 = vrot.slane %v2461, %v2474
        %v2476 = vcombine.high %v2468, %v2468
        %v2477 = vcombine.high %v2475, %v2475
        %v2479 = vunpack.c.l.s4 1966171168
        %v2480 = vunpack.c.0.s8 %v2479
        %v2481 = vlaneseq
        %v2482 = vshrl.u32 %v2481, 7
        %v2483 = vsub.s32 %v2480, %v2482
        %v2484 = vrot.slane %v2468, %v2483
        %v2486 = vunpack.c.l.s4 1966171168
        %v2487 = vunpack.c.0.s8 %v2486
        %v2488 = vlaneseq
        %v2489 = vshrl.u32 %v2488, 7
        %v2490 = vsub.s32 %v2487, %v2489
        %v2491 = vrot.slane %v2475, %v2490
        %v2493 = vunpack.c.l.s4 1966171168
        %v2494 = vunpack.c.0.s8 %v2493
        %v2495 = vlaneseq
        %v2496 = vshrl.u32 %v2495, 7
        %v2497 = vsub.s32 %v2494, %v2496
        %v2498 = vrot.slane %v2476, %v2497
        %v2500 = vunpack.c.l.s4 1966171168
        %v2501 = vunpack.c.0.s8 %v2500
        %v2502 = vlaneseq
        %v2503 = vshrl.u32 %v2502, 7
        %v2504 = vsub.s32 %v2501, %v2503
        %v2505 = vrot.slane %v2477, %v2504
        %v2506 = vcombine.high %v2484, %v2484
        %v2507 = vcombine.high %v2491, %v2491
        %v2508 = vcombine.high %v2498, %v2498
        %v2509 = vcombine.high %v2505, %v2505
        %v2510 = vlaneseq
        %v2511 = vshrl.u32 %v2510, 7
        %v2512 = vsub.s32 0, %v2511
        %v2513 = vrot.slane %v2484, %v2512
        %v2514 = vlaneseq
        %v2515 = vshrl.u32 %v2514, 7
        %v2516 = vsub.s32 0, %v2515
        %v2517 = vrot.slane %v2498, %v2516
        %v2518 = vlaneseq
        %v2519 = vshrl.u32 %v2518, 7
        %v2520 = vsub.s32 0, %v2519
        %v2521 = vrot.slane %v2506, %v2520
        %v2522 = vlaneseq
        %v2523 = vshrl.u32 %v2522, 7
        %v2524 = vsub.s32 0, %v2523
        %v2525 = vrot.slane %v2508, %v2524
        %v2526 = vlaneseq
        %v2527 = vshrl.u32 %v2526, 7
        %v2528 = vsub.s32 0, %v2527
        %v2529 = vrot.slane %v2491, %v2528
        %v2530 = vlaneseq
        %v2531 = vshrl.u32 %v2530, 7
        %v2532 = vsub.s32 0, %v2531
        %v2533 = vrot.slane %v2505, %v2532
        %v2534 = vlaneseq
        %v2535 = vshrl.u32 %v2534, 7
        %v2536 = vsub.s32 0, %v2535
        %v2537 = vrot.slane %v2507, %v2536
        %v2538 = vlaneseq
        %v2539 = vshrl.u32 %v2538, 7
        %v2540 = vsub.s32 0, %v2539
        %v2541 = vrot.slane %v2509, %v2540
        %v2550 = vmul.f32 %v2410, %v2513
        %v2551 = vmul.f32 %v2417, %v2517
        %v2552 = vmul.f32 %v2424, %v2521
        %v2553 = vmul.f32 %v2431, %v2525
        %v2554 = vmul.f32 %v2438, %v2529
        %v2555 = vmul.f32 %v2445, %v2533
        %v2556 = vmul.f32 %v2452, %v2537
        %v2557 = vmul.f32 %v2459, %v2541
        %v2558 = vadd.f32 %v2353, %v2550
        %v2559 = vadd.f32 %v2354, %v2551
        %v2560 = vadd.f32 %v2355, %v2552
        %v2561 = vadd.f32 %v2356, %v2553
        %v2562 = vadd.f32 %v2357, %v2554
        %v2563 = vadd.f32 %v2358, %v2555
        %v2564 = vadd.f32 %v2359, %v2556
        %v2565 = vadd.f32 %v2360, %v2557
        %v2566 = vcombine.low %v2558, %v2560
        %v2568 = vunpack.c.l.s4 1983009808
        %v2569 = vunpack.c.0.s8 %v2568
        %v2570 = vlaneseq
        %v2571 = vshrl.u32 %v2570, 7
        %v2572 = vsub.s32 %v2569, %v2571
        %v2573 = vrot.slane %v2566, %v2572
        %v2574 = vcombine.low %v2559, %v2561
        %v2576 = vunpack.c.l.s4 1983009808
        %v2577 = vunpack.c.0.s8 %v2576
        %v2578 = vlaneseq
        %v2579 = vshrl.u32 %v2578, 7
        %v2580 = vsub.s32 %v2577, %v2579
        %v2581 = vrot.slane %v2574, %v2580
        %v2582 = vcombine.low %v2562, %v2564
        %v2584 = vunpack.c.l.s4 1983009808
        %v2585 = vunpack.c.0.s8 %v2584
        %v2586 = vlaneseq
        %v2587 = vshrl.u32 %v2586, 7
        %v2588 = vsub.s32 %v2585, %v2587
        %v2589 = vrot.slane %v2582, %v2588
        %v2590 = vcombine.low %v2563, %v2565
        %v2592 = vunpack.c.l.s4 1983009808
        %v2593 = vunpack.c.0.s8 %v2592
        %v2594 = vlaneseq
        %v2595 = vshrl.u32 %v2594, 7
        %v2596 = vsub.s32 %v2593, %v2595
        %v2597 = vrot.slane %v2590, %v2596
        %v2598 = vcombine.low %v2573, %v2581
        %v2599 = vcombine.high %v2573, %v2581
        %v2601 = vunpack.c.l.s4 1934713408
        %v2602 = vunpack.c.0.s8 %v2601
        %v2603 = vlaneseq
        %v2604 = vshrl.u32 %v2603, 7
        %v2605 = vsub.s32 %v2602, %v2604
        %v2606 = vrot.slane %v2598, %v2605
        %v2608 = vunpack.c.l.s4 1934713408
        %v2609 = vunpack.c.0.s8 %v2608
        %v2610 = vlaneseq
        %v2611 = vshrl.u32 %v2610, 7
        %v2612 = vsub.s32 %v2609, %v2611
        %v2613 = vrot.slane %v2599, %v2612
        %v2614 = vcombine.low %v2589, %v2597
        %v2615 = vcombine.high %v2589, %v2597
        %v2617 = vunpack.c.l.s4 1934713408
        %v2618 = vunpack.c.0.s8 %v2617
        %v2619 = vlaneseq
        %v2620 = vshrl.u32 %v2619, 7
        %v2621 = vsub.s32 %v2618, %v2620
        %v2622 = vrot.slane %v2614, %v2621
        %v2624 = vunpack.c.l.s4 1934713408
        %v2625 = vunpack.c.0.s8 %v2624
        %v2626 = vlaneseq
        %v2627 = vshrl.u32 %v2626, 7
        %v2628 = vsub.s32 %v2625, %v2627
        %v2629 = vrot.slane %v2615, %v2628
        %v2630 = vcombine.low %v2606, %v2622
        %v2631 = vcombine.high %v2606, %v2622
        %v2632 = vcombine.low %v2613, %v2629
        %v2633 = vcombine.high %v2613, %v2629
        %2635 = vrot.lane.b32.xlu0 %v2631, 4
        %v2636 = vpop.permute.xlu0 %2635
        %2639 = vrot.lane.b32.xlu0 %v2632, 8
        %v2640 = vpop.permute.xlu0 %2639
        %2643 = vrot.lane.b32.xlu0 %v2633, 12
        %v2644 = vpop.permute.xlu0 %2643
        %v2646 = vsel %vm2113, %v2630, %v2636
        %v2647 = vsel %vm1194, %v2646, %v2640
        %vm2648 = vcmask 97280
        %v2649 = vsel %vm2648, %v2647, %v2644
        %v2650 = vpack.c.bf16 %v2649, %v2649
        %v2651 = vmul.f32 %v2112, %v2129
        %2652 = vset.pattern.permute.xlu0 8
        %2653 = vperm.xlu0 %2652, %v2105
        %v2654 = vpop.permute.xlu0 %2653
        %vm2655 = vcmp.eq.s32.totalorder %v2149, %v2654
        %2656 = vset.pattern.permute.xlu0 8
        %2657 = vperm.xlu0 %2656, %v2155
        %v2658 = vpop.permute.xlu0 %2657
        %v2660 = vsel %vm2655, %v2658, 0.0
        %2661 = vset.pattern.permute.xlu0 8
        %2662 = vperm.xlu0 %2661, %v2162
        %v2663 = vpop.permute.xlu0 %2662
        %vm2664 = vcmp.eq.s32.totalorder %v2149, %v2663
        %2665 = vset.pattern.permute.xlu0 8
        %2666 = vperm.xlu0 %2665, %v2104
        %v2667 = vpop.permute.xlu0 %2666
        %v2669 = vsel %vm2664, %v2667, 0.0
        %v2670 = vadd.f32 %v2660, %v2669
        %2671 = vset.pattern.permute.xlu0 9
        %2672 = vperm.xlu0 %2671, %v2105
        %v2673 = vpop.permute.xlu0 %2672
        %vm2674 = vcmp.eq.s32.totalorder %v2149, %v2673
        %2675 = vset.pattern.permute.xlu0 9
        %2676 = vperm.xlu0 %2675, %v2155
        %v2677 = vpop.permute.xlu0 %2676
        %v2679 = vsel %vm2674, %v2677, 0.0
        %2680 = vset.pattern.permute.xlu0 9
        %2681 = vperm.xlu0 %2680, %v2162
        %v2682 = vpop.permute.xlu0 %2681
        %vm2683 = vcmp.eq.s32.totalorder %v2149, %v2682
        %2684 = vset.pattern.permute.xlu0 9
        %2685 = vperm.xlu0 %2684, %v2104
        %v2686 = vpop.permute.xlu0 %2685
        %v2688 = vsel %vm2683, %v2686, 0.0
        %v2689 = vadd.f32 %v2679, %v2688
        %2691 = vset.pattern.permute.xlu0 4
        %2692 = vperm.xlu0 %2691, %v2651
        %v2693 = vpop.permute.xlu0 %2692
        %v2695 = vmul.f32 %v2689, %v2693
        %v2696 = vlaneseq
        %v2697 = vshrl.u32 %v2696, 7
        %v2698 = vsub.s32 0, %v2697
        %v2699 = vrot.slane %v2695, %v2698
        %2701 = vbcast.lane.b32.xlu0 %v2699, 256
        %v2702 = vpop.permute.xlu0 %2701
        %v2703 = vlaneseq
        %v2704 = vshrl.u32 %v2703, 7
        %v2705 = vsub.s32 1, %v2704
        %v2706 = vrot.slane %v2695, %v2705
        %2708 = vbcast.lane.b32.xlu0 %v2706, 256
        %v2709 = vpop.permute.xlu0 %2708
        %v2710 = vlaneseq
        %v2711 = vshrl.u32 %v2710, 7
        %v2712 = vsub.s32 2, %v2711
        %v2713 = vrot.slane %v2695, %v2712
        %2715 = vbcast.lane.b32.xlu0 %v2713, 256
        %v2716 = vpop.permute.xlu0 %2715
        %v2717 = vlaneseq
        %v2718 = vshrl.u32 %v2717, 7
        %v2719 = vsub.s32 3, %v2718
        %v2720 = vrot.slane %v2695, %v2719
        %2722 = vbcast.lane.b32.xlu0 %v2720, 256
        %v2723 = vpop.permute.xlu0 %2722
        %v2724 = vlaneseq
        %v2725 = vshrl.u32 %v2724, 7
        %v2726 = vsub.s32 4, %v2725
        %v2727 = vrot.slane %v2695, %v2726
        %2729 = vbcast.lane.b32.xlu0 %v2727, 256
        %v2730 = vpop.permute.xlu0 %2729
        %v2731 = vlaneseq
        %v2732 = vshrl.u32 %v2731, 7
        %v2733 = vsub.s32 5, %v2732
        %v2734 = vrot.slane %v2695, %v2733
        %2736 = vbcast.lane.b32.xlu0 %v2734, 256
        %v2737 = vpop.permute.xlu0 %2736
        %v2738 = vlaneseq
        %v2739 = vshrl.u32 %v2738, 7
        %v2740 = vsub.s32 6, %v2739
        %v2741 = vrot.slane %v2695, %v2740
        %2743 = vbcast.lane.b32.xlu0 %v2741, 256
        %v2744 = vpop.permute.xlu0 %2743
        %v2745 = vlaneseq
        %v2746 = vshrl.u32 %v2745, 7
        %v2747 = vsub.s32 7, %v2746
        %v2748 = vrot.slane %v2695, %v2747
        %2750 = vbcast.lane.b32.xlu0 %v2748, 256
        %v2751 = vpop.permute.xlu0 %2750
        %v2753 = vcombine.high %v2670, %v2670
        %v2755 = vunpack.c.l.s4 1966171168
        %v2756 = vunpack.c.0.s8 %v2755
        %v2757 = vlaneseq
        %v2758 = vshrl.u32 %v2757, 7
        %v2759 = vsub.s32 %v2756, %v2758
        %v2760 = vrot.slane %v2670, %v2759
        %v2762 = vunpack.c.l.s4 1966171168
        %v2763 = vunpack.c.0.s8 %v2762
        %v2764 = vlaneseq
        %v2765 = vshrl.u32 %v2764, 7
        %v2766 = vsub.s32 %v2763, %v2765
        %v2767 = vrot.slane %v2753, %v2766
        %v2768 = vcombine.high %v2760, %v2760
        %v2769 = vcombine.high %v2767, %v2767
        %v2771 = vunpack.c.l.s4 1966171168
        %v2772 = vunpack.c.0.s8 %v2771
        %v2773 = vlaneseq
        %v2774 = vshrl.u32 %v2773, 7
        %v2775 = vsub.s32 %v2772, %v2774
        %v2776 = vrot.slane %v2760, %v2775
        %v2778 = vunpack.c.l.s4 1966171168
        %v2779 = vunpack.c.0.s8 %v2778
        %v2780 = vlaneseq
        %v2781 = vshrl.u32 %v2780, 7
        %v2782 = vsub.s32 %v2779, %v2781
        %v2783 = vrot.slane %v2767, %v2782
        %v2785 = vunpack.c.l.s4 1966171168
        %v2786 = vunpack.c.0.s8 %v2785
        %v2787 = vlaneseq
        %v2788 = vshrl.u32 %v2787, 7
        %v2789 = vsub.s32 %v2786, %v2788
        %v2790 = vrot.slane %v2768, %v2789
        %v2792 = vunpack.c.l.s4 1966171168
        %v2793 = vunpack.c.0.s8 %v2792
        %v2794 = vlaneseq
        %v2795 = vshrl.u32 %v2794, 7
        %v2796 = vsub.s32 %v2793, %v2795
        %v2797 = vrot.slane %v2769, %v2796
        %v2798 = vcombine.high %v2776, %v2776
        %v2799 = vcombine.high %v2783, %v2783
        %v2800 = vcombine.high %v2790, %v2790
        %v2801 = vcombine.high %v2797, %v2797
        %v2802 = vlaneseq
        %v2803 = vshrl.u32 %v2802, 7
        %v2804 = vsub.s32 0, %v2803
        %v2805 = vrot.slane %v2776, %v2804
        %v2806 = vlaneseq
        %v2807 = vshrl.u32 %v2806, 7
        %v2808 = vsub.s32 0, %v2807
        %v2809 = vrot.slane %v2790, %v2808
        %v2810 = vlaneseq
        %v2811 = vshrl.u32 %v2810, 7
        %v2812 = vsub.s32 0, %v2811
        %v2813 = vrot.slane %v2798, %v2812
        %v2814 = vlaneseq
        %v2815 = vshrl.u32 %v2814, 7
        %v2816 = vsub.s32 0, %v2815
        %v2817 = vrot.slane %v2800, %v2816
        %v2818 = vlaneseq
        %v2819 = vshrl.u32 %v2818, 7
        %v2820 = vsub.s32 0, %v2819
        %v2821 = vrot.slane %v2783, %v2820
        %v2822 = vlaneseq
        %v2823 = vshrl.u32 %v2822, 7
        %v2824 = vsub.s32 0, %v2823
        %v2825 = vrot.slane %v2797, %v2824
        %v2826 = vlaneseq
        %v2827 = vshrl.u32 %v2826, 7
        %v2828 = vsub.s32 0, %v2827
        %v2829 = vrot.slane %v2799, %v2828
        %v2830 = vlaneseq
        %v2831 = vshrl.u32 %v2830, 7
        %v2832 = vsub.s32 0, %v2831
        %v2833 = vrot.slane %v2801, %v2832
        %v2842 = vmul.f32 %v2702, %v2805
        %v2843 = vmul.f32 %v2709, %v2809
        %v2844 = vmul.f32 %v2716, %v2813
        %v2845 = vmul.f32 %v2723, %v2817
        %v2846 = vmul.f32 %v2730, %v2821
        %v2847 = vmul.f32 %v2737, %v2825
        %v2848 = vmul.f32 %v2744, %v2829
        %v2849 = vmul.f32 %v2751, %v2833
        %v2850 = vadd.f32 %v2842, 0.0
        %v2851 = vadd.f32 %v2843, 0.0
        %v2852 = vadd.f32 %v2844, 0.0
        %v2853 = vadd.f32 %v2845, 0.0
        %v2854 = vadd.f32 %v2846, 0.0
        %v2855 = vadd.f32 %v2847, 0.0
        %v2856 = vadd.f32 %v2848, 0.0
        %v2857 = vadd.f32 %v2849, 0.0
        %2858 = vset.pattern.permute.xlu0 10
        %2859 = vperm.xlu0 %2858, %v2105
        %v2860 = vpop.permute.xlu0 %2859
        %vm2861 = vcmp.eq.s32.totalorder %v2149, %v2860
        %2862 = vset.pattern.permute.xlu0 10
        %2863 = vperm.xlu0 %2862, %v2155
        %v2864 = vpop.permute.xlu0 %2863
        %v2866 = vsel %vm2861, %v2864, 0.0
        %2867 = vset.pattern.permute.xlu0 10
        %2868 = vperm.xlu0 %2867, %v2162
        %v2869 = vpop.permute.xlu0 %2868
        %vm2870 = vcmp.eq.s32.totalorder %v2149, %v2869
        %2871 = vset.pattern.permute.xlu0 10
        %2872 = vperm.xlu0 %2871, %v2104
        %v2873 = vpop.permute.xlu0 %2872
        %v2875 = vsel %vm2870, %v2873, 0.0
        %v2876 = vadd.f32 %v2866, %v2875
        %2877 = vset.pattern.permute.xlu0 11
        %2878 = vperm.xlu0 %2877, %v2105
        %v2879 = vpop.permute.xlu0 %2878
        %vm2880 = vcmp.eq.s32.totalorder %v2149, %v2879
        %2881 = vset.pattern.permute.xlu0 11
        %2882 = vperm.xlu0 %2881, %v2155
        %v2883 = vpop.permute.xlu0 %2882
        %v2885 = vsel %vm2880, %v2883, 0.0
        %2886 = vset.pattern.permute.xlu0 11
        %2887 = vperm.xlu0 %2886, %v2162
        %v2888 = vpop.permute.xlu0 %2887
        %vm2889 = vcmp.eq.s32.totalorder %v2149, %v2888
        %2890 = vset.pattern.permute.xlu0 11
        %2891 = vperm.xlu0 %2890, %v2104
        %v2892 = vpop.permute.xlu0 %2891
        %v2894 = vsel %vm2889, %v2892, 0.0
        %v2895 = vadd.f32 %v2885, %v2894
        %2896 = vset.pattern.permute.xlu0 5
        %2897 = vperm.xlu0 %2896, %v2651
        %v2898 = vpop.permute.xlu0 %2897
        %v2900 = vmul.f32 %v2895, %v2898
        %v2901 = vlaneseq
        %v2902 = vshrl.u32 %v2901, 7
        %v2903 = vsub.s32 0, %v2902
        %v2904 = vrot.slane %v2900, %v2903
        %2906 = vbcast.lane.b32.xlu0 %v2904, 256
        %v2907 = vpop.permute.xlu0 %2906
        %v2908 = vlaneseq
        %v2909 = vshrl.u32 %v2908, 7
        %v2910 = vsub.s32 1, %v2909
        %v2911 = vrot.slane %v2900, %v2910
        %2913 = vbcast.lane.b32.xlu0 %v2911, 256
        %v2914 = vpop.permute.xlu0 %2913
        %v2915 = vlaneseq
        %v2916 = vshrl.u32 %v2915, 7
        %v2917 = vsub.s32 2, %v2916
        %v2918 = vrot.slane %v2900, %v2917
        %2920 = vbcast.lane.b32.xlu0 %v2918, 256
        %v2921 = vpop.permute.xlu0 %2920
        %v2922 = vlaneseq
        %v2923 = vshrl.u32 %v2922, 7
        %v2924 = vsub.s32 3, %v2923
        %v2925 = vrot.slane %v2900, %v2924
        %2927 = vbcast.lane.b32.xlu0 %v2925, 256
        %v2928 = vpop.permute.xlu0 %2927
        %v2929 = vlaneseq
        %v2930 = vshrl.u32 %v2929, 7
        %v2931 = vsub.s32 4, %v2930
        %v2932 = vrot.slane %v2900, %v2931
        %2934 = vbcast.lane.b32.xlu0 %v2932, 256
        %v2935 = vpop.permute.xlu0 %2934
        %v2936 = vlaneseq
        %v2937 = vshrl.u32 %v2936, 7
        %v2938 = vsub.s32 5, %v2937
        %v2939 = vrot.slane %v2900, %v2938
        %2941 = vbcast.lane.b32.xlu0 %v2939, 256
        %v2942 = vpop.permute.xlu0 %2941
        %v2943 = vlaneseq
        %v2944 = vshrl.u32 %v2943, 7
        %v2945 = vsub.s32 6, %v2944
        %v2946 = vrot.slane %v2900, %v2945
        %2948 = vbcast.lane.b32.xlu0 %v2946, 256
        %v2949 = vpop.permute.xlu0 %2948
        %v2950 = vlaneseq
        %v2951 = vshrl.u32 %v2950, 7
        %v2952 = vsub.s32 7, %v2951
        %v2953 = vrot.slane %v2900, %v2952
        %2955 = vbcast.lane.b32.xlu0 %v2953, 256
        %v2956 = vpop.permute.xlu0 %2955
        %v2958 = vcombine.high %v2876, %v2876
        %v2960 = vunpack.c.l.s4 1966171168
        %v2961 = vunpack.c.0.s8 %v2960
        %v2962 = vlaneseq
        %v2963 = vshrl.u32 %v2962, 7
        %v2964 = vsub.s32 %v2961, %v2963
        %v2965 = vrot.slane %v2876, %v2964
        %v2967 = vunpack.c.l.s4 1966171168
        %v2968 = vunpack.c.0.s8 %v2967
        %v2969 = vlaneseq
        %v2970 = vshrl.u32 %v2969, 7
        %v2971 = vsub.s32 %v2968, %v2970
        %v2972 = vrot.slane %v2958, %v2971
        %v2973 = vcombine.high %v2965, %v2965
        %v2974 = vcombine.high %v2972, %v2972
        %v2976 = vunpack.c.l.s4 1966171168
        %v2977 = vunpack.c.0.s8 %v2976
        %v2978 = vlaneseq
        %v2979 = vshrl.u32 %v2978, 7
        %v2980 = vsub.s32 %v2977, %v2979
        %v2981 = vrot.slane %v2965, %v2980
        %v2983 = vunpack.c.l.s4 1966171168
        %v2984 = vunpack.c.0.s8 %v2983
        %v2985 = vlaneseq
        %v2986 = vshrl.u32 %v2985, 7
        %v2987 = vsub.s32 %v2984, %v2986
        %v2988 = vrot.slane %v2972, %v2987
        %v2990 = vunpack.c.l.s4 1966171168
        %v2991 = vunpack.c.0.s8 %v2990
        %v2992 = vlaneseq
        %v2993 = vshrl.u32 %v2992, 7
        %v2994 = vsub.s32 %v2991, %v2993
        %v2995 = vrot.slane %v2973, %v2994
        %v2997 = vunpack.c.l.s4 1966171168
        %v2998 = vunpack.c.0.s8 %v2997
        %v2999 = vlaneseq
        %v3000 = vshrl.u32 %v2999, 7
        %v3001 = vsub.s32 %v2998, %v3000
        %v3002 = vrot.slane %v2974, %v3001
        %v3003 = vcombine.high %v2981, %v2981
        %v3004 = vcombine.high %v2988, %v2988
        %v3005 = vcombine.high %v2995, %v2995
        %v3006 = vcombine.high %v3002, %v3002
        %v3007 = vlaneseq
        %v3008 = vshrl.u32 %v3007, 7
        %v3009 = vsub.s32 0, %v3008
        %v3010 = vrot.slane %v2981, %v3009
        %v3011 = vlaneseq
        %v3012 = vshrl.u32 %v3011, 7
        %v3013 = vsub.s32 0, %v3012
        %v3014 = vrot.slane %v2995, %v3013
        %v3015 = vlaneseq
        %v3016 = vshrl.u32 %v3015, 7
        %v3017 = vsub.s32 0, %v3016
        %v3018 = vrot.slane %v3003, %v3017
        %v3019 = vlaneseq
        %v3020 = vshrl.u32 %v3019, 7
        %v3021 = vsub.s32 0, %v3020
        %v3022 = vrot.slane %v3005, %v3021
        %v3023 = vlaneseq
        %v3024 = vshrl.u32 %v3023, 7
        %v3025 = vsub.s32 0, %v3024
        %v3026 = vrot.slane %v2988, %v3025
        %v3027 = vlaneseq
        %v3028 = vshrl.u32 %v3027, 7
        %v3029 = vsub.s32 0, %v3028
        %v3030 = vrot.slane %v3002, %v3029
        %v3031 = vlaneseq
        %v3032 = vshrl.u32 %v3031, 7
        %v3033 = vsub.s32 0, %v3032
        %v3034 = vrot.slane %v3004, %v3033
        %v3035 = vlaneseq
        %v3036 = vshrl.u32 %v3035, 7
        %v3037 = vsub.s32 0, %v3036
        %v3038 = vrot.slane %v3006, %v3037
        %v3047 = vmul.f32 %v2907, %v3010
        %v3048 = vmul.f32 %v2914, %v3014
        %v3049 = vmul.f32 %v2921, %v3018
        %v3050 = vmul.f32 %v2928, %v3022
        %v3051 = vmul.f32 %v2935, %v3026
        %v3052 = vmul.f32 %v2942, %v3030
        %v3053 = vmul.f32 %v2949, %v3034
        %v3054 = vmul.f32 %v2956, %v3038
        %v3055 = vadd.f32 %v2850, %v3047
        %v3056 = vadd.f32 %v2851, %v3048
        %v3057 = vadd.f32 %v2852, %v3049
        %v3058 = vadd.f32 %v2853, %v3050
        %v3059 = vadd.f32 %v2854, %v3051
        %v3060 = vadd.f32 %v2855, %v3052
        %v3061 = vadd.f32 %v2856, %v3053
        %v3062 = vadd.f32 %v2857, %v3054
        %v3063 = vcombine.low %v3055, %v3057
        %v3065 = vunpack.c.l.s4 1983009808
        %v3066 = vunpack.c.0.s8 %v3065
        %v3067 = vlaneseq
        %v3068 = vshrl.u32 %v3067, 7
        %v3069 = vsub.s32 %v3066, %v3068
        %v3070 = vrot.slane %v3063, %v3069
        %v3071 = vcombine.low %v3056, %v3058
        %v3073 = vunpack.c.l.s4 1983009808
        %v3074 = vunpack.c.0.s8 %v3073
        %v3075 = vlaneseq
        %v3076 = vshrl.u32 %v3075, 7
        %v3077 = vsub.s32 %v3074, %v3076
        %v3078 = vrot.slane %v3071, %v3077
        %v3079 = vcombine.low %v3059, %v3061
        %v3081 = vunpack.c.l.s4 1983009808
        %v3082 = vunpack.c.0.s8 %v3081
        %v3083 = vlaneseq
        %v3084 = vshrl.u32 %v3083, 7
        %v3085 = vsub.s32 %v3082, %v3084
        %v3086 = vrot.slane %v3079, %v3085
        %v3087 = vcombine.low %v3060, %v3062
        %v3089 = vunpack.c.l.s4 1983009808
        %v3090 = vunpack.c.0.s8 %v3089
        %v3091 = vlaneseq
        %v3092 = vshrl.u32 %v3091, 7
        %v3093 = vsub.s32 %v3090, %v3092
        %v3094 = vrot.slane %v3087, %v3093
        %v3095 = vcombine.low %v3070, %v3078
        %v3096 = vcombine.high %v3070, %v3078
        %v3098 = vunpack.c.l.s4 1934713408
        %v3099 = vunpack.c.0.s8 %v3098
        %v3100 = vlaneseq
        %v3101 = vshrl.u32 %v3100, 7
        %v3102 = vsub.s32 %v3099, %v3101
        %v3103 = vrot.slane %v3095, %v3102
        %v3105 = vunpack.c.l.s4 1934713408
        %v3106 = vunpack.c.0.s8 %v3105
        %v3107 = vlaneseq
        %v3108 = vshrl.u32 %v3107, 7
        %v3109 = vsub.s32 %v3106, %v3108
        %v3110 = vrot.slane %v3096, %v3109
        %v3111 = vcombine.low %v3086, %v3094
        %v3112 = vcombine.high %v3086, %v3094
        %v3114 = vunpack.c.l.s4 1934713408
        %v3115 = vunpack.c.0.s8 %v3114
        %v3116 = vlaneseq
        %v3117 = vshrl.u32 %v3116, 7
        %v3118 = vsub.s32 %v3115, %v3117
        %v3119 = vrot.slane %v3111, %v3118
        %v3121 = vunpack.c.l.s4 1934713408
        %v3122 = vunpack.c.0.s8 %v3121
        %v3123 = vlaneseq
        %v3124 = vshrl.u32 %v3123, 7
        %v3125 = vsub.s32 %v3122, %v3124
        %v3126 = vrot.slane %v3112, %v3125
        %v3127 = vcombine.low %v3103, %v3119
        %v3128 = vcombine.high %v3103, %v3119
        %v3129 = vcombine.low %v3110, %v3126
        %v3130 = vcombine.high %v3110, %v3126
        %3132 = vrot.lane.b32.xlu0 %v3128, 4
        %v3133 = vpop.permute.xlu0 %3132
        %3136 = vrot.lane.b32.xlu0 %v3129, 8
        %v3137 = vpop.permute.xlu0 %3136
        %3140 = vrot.lane.b32.xlu0 %v3130, 12
        %v3141 = vpop.permute.xlu0 %3140
        %v3143 = vsel %vm2113, %v3127, %v3133
        %v3144 = vsel %vm1194, %v3143, %v3137
        %v3145 = vsel %vm2648, %v3144, %v3141
        %v3146 = vpack.c.bf16 %v3145, %v3145
        %v3147 = vmul.f32 %v2112, %v2138
        %3148 = vset.pattern.permute.xlu0 16
        %3149 = vperm.xlu0 %3148, %v2105
        %v3150 = vpop.permute.xlu0 %3149
        %vm3151 = vcmp.eq.s32.totalorder %v2149, %v3150
        %3152 = vset.pattern.permute.xlu0 16
        %3153 = vperm.xlu0 %3152, %v2155
        %v3154 = vpop.permute.xlu0 %3153
        %v3156 = vsel %vm3151, %v3154, 0.0
        %3157 = vset.pattern.permute.xlu0 16
        %3158 = vperm.xlu0 %3157, %v2162
        %v3159 = vpop.permute.xlu0 %3158
        %vm3160 = vcmp.eq.s32.totalorder %v2149, %v3159
        %3161 = vset.pattern.permute.xlu0 16
        %3162 = vperm.xlu0 %3161, %v2104
        %v3163 = vpop.permute.xlu0 %3162
        %v3165 = vsel %vm3160, %v3163, 0.0
        %v3166 = vadd.f32 %v3156, %v3165
        %3167 = vset.pattern.permute.xlu0 17
        %3168 = vperm.xlu0 %3167, %v2105
        %v3169 = vpop.permute.xlu0 %3168
        %vm3170 = vcmp.eq.s32.totalorder %v2149, %v3169
        %3171 = vset.pattern.permute.xlu0 17
        %3172 = vperm.xlu0 %3171, %v2155
        %v3173 = vpop.permute.xlu0 %3172
        %v3175 = vsel %vm3170, %v3173, 0.0
        %3176 = vset.pattern.permute.xlu0 17
        %3177 = vperm.xlu0 %3176, %v2162
        %v3178 = vpop.permute.xlu0 %3177
        %vm3179 = vcmp.eq.s32.totalorder %v2149, %v3178
        %3180 = vset.pattern.permute.xlu0 17
        %3181 = vperm.xlu0 %3180, %v2104
        %v3182 = vpop.permute.xlu0 %3181
        %v3184 = vsel %vm3179, %v3182, 0.0
        %v3185 = vadd.f32 %v3175, %v3184
        %3187 = vset.pattern.permute.xlu0 8
        %3188 = vperm.xlu0 %3187, %v3147
        %v3189 = vpop.permute.xlu0 %3188
        %v3191 = vmul.f32 %v3185, %v3189
        %v3192 = vlaneseq
        %v3193 = vshrl.u32 %v3192, 7
        %v3194 = vsub.s32 0, %v3193
        %v3195 = vrot.slane %v3191, %v3194
        %3197 = vbcast.lane.b32.xlu0 %v3195, 256
        %v3198 = vpop.permute.xlu0 %3197
        %v3199 = vlaneseq
        %v3200 = vshrl.u32 %v3199, 7
        %v3201 = vsub.s32 1, %v3200
        %v3202 = vrot.slane %v3191, %v3201
        %3204 = vbcast.lane.b32.xlu0 %v3202, 256
        %v3205 = vpop.permute.xlu0 %3204
        %v3206 = vlaneseq
        %v3207 = vshrl.u32 %v3206, 7
        %v3208 = vsub.s32 2, %v3207
        %v3209 = vrot.slane %v3191, %v3208
        %3211 = vbcast.lane.b32.xlu0 %v3209, 256
        %v3212 = vpop.permute.xlu0 %3211
        %v3213 = vlaneseq
        %v3214 = vshrl.u32 %v3213, 7
        %v3215 = vsub.s32 3, %v3214
        %v3216 = vrot.slane %v3191, %v3215
        %3218 = vbcast.lane.b32.xlu0 %v3216, 256
        %v3219 = vpop.permute.xlu0 %3218
        %v3220 = vlaneseq
        %v3221 = vshrl.u32 %v3220, 7
        %v3222 = vsub.s32 4, %v3221
        %v3223 = vrot.slane %v3191, %v3222
        %3225 = vbcast.lane.b32.xlu0 %v3223, 256
        %v3226 = vpop.permute.xlu0 %3225
        %v3227 = vlaneseq
        %v3228 = vshrl.u32 %v3227, 7
        %v3229 = vsub.s32 5, %v3228
        %v3230 = vrot.slane %v3191, %v3229
        %3232 = vbcast.lane.b32.xlu0 %v3230, 256
        %v3233 = vpop.permute.xlu0 %3232
        %v3234 = vlaneseq
        %v3235 = vshrl.u32 %v3234, 7
        %v3236 = vsub.s32 6, %v3235
        %v3237 = vrot.slane %v3191, %v3236
        %3239 = vbcast.lane.b32.xlu0 %v3237, 256
        %v3240 = vpop.permute.xlu0 %3239
        %v3241 = vlaneseq
        %v3242 = vshrl.u32 %v3241, 7
        %v3243 = vsub.s32 7, %v3242
        %v3244 = vrot.slane %v3191, %v3243
        %3246 = vbcast.lane.b32.xlu0 %v3244, 256
        %v3247 = vpop.permute.xlu0 %3246
        %v3249 = vcombine.high %v3166, %v3166
        %v3251 = vunpack.c.l.s4 1966171168
        %v3252 = vunpack.c.0.s8 %v3251
        %v3253 = vlaneseq
        %v3254 = vshrl.u32 %v3253, 7
        %v3255 = vsub.s32 %v3252, %v3254
        %v3256 = vrot.slane %v3166, %v3255
        %v3258 = vunpack.c.l.s4 1966171168
        %v3259 = vunpack.c.0.s8 %v3258
        %v3260 = vlaneseq
        %v3261 = vshrl.u32 %v3260, 7
        %v3262 = vsub.s32 %v3259, %v3261
        %v3263 = vrot.slane %v3249, %v3262
        %v3264 = vcombine.high %v3256, %v3256
        %v3265 = vcombine.high %v3263, %v3263
        %v3267 = vunpack.c.l.s4 1966171168
        %v3268 = vunpack.c.0.s8 %v3267
        %v3269 = vlaneseq
        %v3270 = vshrl.u32 %v3269, 7
        %v3271 = vsub.s32 %v3268, %v3270
        %v3272 = vrot.slane %v3256, %v3271
        %v3274 = vunpack.c.l.s4 1966171168
        %v3275 = vunpack.c.0.s8 %v3274
        %v3276 = vlaneseq
        %v3277 = vshrl.u32 %v3276, 7
        %v3278 = vsub.s32 %v3275, %v3277
        %v3279 = vrot.slane %v3263, %v3278
        %v3281 = vunpack.c.l.s4 1966171168
        %v3282 = vunpack.c.0.s8 %v3281
        %v3283 = vlaneseq
        %v3284 = vshrl.u32 %v3283, 7
        %v3285 = vsub.s32 %v3282, %v3284
        %v3286 = vrot.slane %v3264, %v3285
        %v3288 = vunpack.c.l.s4 1966171168
        %v3289 = vunpack.c.0.s8 %v3288
        %v3290 = vlaneseq
        %v3291 = vshrl.u32 %v3290, 7
        %v3292 = vsub.s32 %v3289, %v3291
        %v3293 = vrot.slane %v3265, %v3292
        %v3294 = vcombine.high %v3272, %v3272
        %v3295 = vcombine.high %v3279, %v3279
        %v3296 = vcombine.high %v3286, %v3286
        %v3297 = vcombine.high %v3293, %v3293
        %v3298 = vlaneseq
        %v3299 = vshrl.u32 %v3298, 7
        %v3300 = vsub.s32 0, %v3299
        %v3301 = vrot.slane %v3272, %v3300
        %v3302 = vlaneseq
        %v3303 = vshrl.u32 %v3302, 7
        %v3304 = vsub.s32 0, %v3303
        %v3305 = vrot.slane %v3286, %v3304
        %v3306 = vlaneseq
        %v3307 = vshrl.u32 %v3306, 7
        %v3308 = vsub.s32 0, %v3307
        %v3309 = vrot.slane %v3294, %v3308
        %v3310 = vlaneseq
        %v3311 = vshrl.u32 %v3310, 7
        %v3312 = vsub.s32 0, %v3311
        %v3313 = vrot.slane %v3296, %v3312
        %v3314 = vlaneseq
        %v3315 = vshrl.u32 %v3314, 7
        %v3316 = vsub.s32 0, %v3315
        %v3317 = vrot.slane %v3279, %v3316
        %v3318 = vlaneseq
        %v3319 = vshrl.u32 %v3318, 7
        %v3320 = vsub.s32 0, %v3319
        %v3321 = vrot.slane %v3293, %v3320
        %v3322 = vlaneseq
        %v3323 = vshrl.u32 %v3322, 7
        %v3324 = vsub.s32 0, %v3323
        %v3325 = vrot.slane %v3295, %v3324
        %v3326 = vlaneseq
        %v3327 = vshrl.u32 %v3326, 7
        %v3328 = vsub.s32 0, %v3327
        %v3329 = vrot.slane %v3297, %v3328
        %v3338 = vmul.f32 %v3198, %v3301
        %v3339 = vmul.f32 %v3205, %v3305
        %v3340 = vmul.f32 %v3212, %v3309
        %v3341 = vmul.f32 %v3219, %v3313
        %v3342 = vmul.f32 %v3226, %v3317
        %v3343 = vmul.f32 %v3233, %v3321
        %v3344 = vmul.f32 %v3240, %v3325
        %v3345 = vmul.f32 %v3247, %v3329
        %v3346 = vadd.f32 %v3338, 0.0
        %v3347 = vadd.f32 %v3339, 0.0
        %v3348 = vadd.f32 %v3340, 0.0
        %v3349 = vadd.f32 %v3341, 0.0
        %v3350 = vadd.f32 %v3342, 0.0
        %v3351 = vadd.f32 %v3343, 0.0
        %v3352 = vadd.f32 %v3344, 0.0
        %v3353 = vadd.f32 %v3345, 0.0
        %3354 = vset.pattern.permute.xlu0 18
        %3355 = vperm.xlu0 %3354, %v2105
        %v3356 = vpop.permute.xlu0 %3355
        %vm3357 = vcmp.eq.s32.totalorder %v2149, %v3356
        %3358 = vset.pattern.permute.xlu0 18
        %3359 = vperm.xlu0 %3358, %v2155
        %v3360 = vpop.permute.xlu0 %3359
        %v3362 = vsel %vm3357, %v3360, 0.0
        %3363 = vset.pattern.permute.xlu0 18
        %3364 = vperm.xlu0 %3363, %v2162
        %v3365 = vpop.permute.xlu0 %3364
        %vm3366 = vcmp.eq.s32.totalorder %v2149, %v3365
        %3367 = vset.pattern.permute.xlu0 18
        %3368 = vperm.xlu0 %3367, %v2104
        %v3369 = vpop.permute.xlu0 %3368
        %v3371 = vsel %vm3366, %v3369, 0.0
        %v3372 = vadd.f32 %v3362, %v3371
        %3373 = vset.pattern.permute.xlu0 19
        %3374 = vperm.xlu0 %3373, %v2105
        %v3375 = vpop.permute.xlu0 %3374
        %vm3376 = vcmp.eq.s32.totalorder %v2149, %v3375
        %3377 = vset.pattern.permute.xlu0 19
        %3378 = vperm.xlu0 %3377, %v2155
        %v3379 = vpop.permute.xlu0 %3378
        %v3381 = vsel %vm3376, %v3379, 0.0
        %3382 = vset.pattern.permute.xlu0 19
        %3383 = vperm.xlu0 %3382, %v2162
        %v3384 = vpop.permute.xlu0 %3383
        %vm3385 = vcmp.eq.s32.totalorder %v2149, %v3384
        %3386 = vset.pattern.permute.xlu0 19
        %3387 = vperm.xlu0 %3386, %v2104
        %v3388 = vpop.permute.xlu0 %3387
        %v3390 = vsel %vm3385, %v3388, 0.0
        %v3391 = vadd.f32 %v3381, %v3390
        %3392 = vset.pattern.permute.xlu0 9
        %3393 = vperm.xlu0 %3392, %v3147
        %v3394 = vpop.permute.xlu0 %3393
        %v3396 = vmul.f32 %v3391, %v3394
        %v3397 = vlaneseq
        %v3398 = vshrl.u32 %v3397, 7
        %v3399 = vsub.s32 0, %v3398
        %v3400 = vrot.slane %v3396, %v3399
        %3402 = vbcast.lane.b32.xlu0 %v3400, 256
        %v3403 = vpop.permute.xlu0 %3402
        %v3404 = vlaneseq
        %v3405 = vshrl.u32 %v3404, 7
        %v3406 = vsub.s32 1, %v3405
        %v3407 = vrot.slane %v3396, %v3406
        %3409 = vbcast.lane.b32.xlu0 %v3407, 256
        %v3410 = vpop.permute.xlu0 %3409
        %v3411 = vlaneseq
        %v3412 = vshrl.u32 %v3411, 7
        %v3413 = vsub.s32 2, %v3412
        %v3414 = vrot.slane %v3396, %v3413
        %3416 = vbcast.lane.b32.xlu0 %v3414, 256
        %v3417 = vpop.permute.xlu0 %3416
        %v3418 = vlaneseq
        %v3419 = vshrl.u32 %v3418, 7
        %v3420 = vsub.s32 3, %v3419
        %v3421 = vrot.slane %v3396, %v3420
        %3423 = vbcast.lane.b32.xlu0 %v3421, 256
        %v3424 = vpop.permute.xlu0 %3423
        %v3425 = vlaneseq
        %v3426 = vshrl.u32 %v3425, 7
        %v3427 = vsub.s32 4, %v3426
        %v3428 = vrot.slane %v3396, %v3427
        %3430 = vbcast.lane.b32.xlu0 %v3428, 256
        %v3431 = vpop.permute.xlu0 %3430
        %v3432 = vlaneseq
        %v3433 = vshrl.u32 %v3432, 7
        %v3434 = vsub.s32 5, %v3433
        %v3435 = vrot.slane %v3396, %v3434
        %3437 = vbcast.lane.b32.xlu0 %v3435, 256
        %v3438 = vpop.permute.xlu0 %3437
        %v3439 = vlaneseq
        %v3440 = vshrl.u32 %v3439, 7
        %v3441 = vsub.s32 6, %v3440
        %v3442 = vrot.slane %v3396, %v3441
        %3444 = vbcast.lane.b32.xlu0 %v3442, 256
        %v3445 = vpop.permute.xlu0 %3444
        %v3446 = vlaneseq
        %v3447 = vshrl.u32 %v3446, 7
        %v3448 = vsub.s32 7, %v3447
        %v3449 = vrot.slane %v3396, %v3448
        %3451 = vbcast.lane.b32.xlu0 %v3449, 256
        %v3452 = vpop.permute.xlu0 %3451
        %v3454 = vcombine.high %v3372, %v3372
        %v3456 = vunpack.c.l.s4 1966171168
        %v3457 = vunpack.c.0.s8 %v3456
        %v3458 = vlaneseq
        %v3459 = vshrl.u32 %v3458, 7
        %v3460 = vsub.s32 %v3457, %v3459
        %v3461 = vrot.slane %v3372, %v3460
        %v3463 = vunpack.c.l.s4 1966171168
        %v3464 = vunpack.c.0.s8 %v3463
        %v3465 = vlaneseq
        %v3466 = vshrl.u32 %v3465, 7
        %v3467 = vsub.s32 %v3464, %v3466
        %v3468 = vrot.slane %v3454, %v3467
        %v3469 = vcombine.high %v3461, %v3461
        %v3470 = vcombine.high %v3468, %v3468
        %v3472 = vunpack.c.l.s4 1966171168
        %v3473 = vunpack.c.0.s8 %v3472
        %v3474 = vlaneseq
        %v3475 = vshrl.u32 %v3474, 7
        %v3476 = vsub.s32 %v3473, %v3475
        %v3477 = vrot.slane %v3461, %v3476
        %v3479 = vunpack.c.l.s4 1966171168
        %v3480 = vunpack.c.0.s8 %v3479
        %v3481 = vlaneseq
        %v3482 = vshrl.u32 %v3481, 7
        %v3483 = vsub.s32 %v3480, %v3482
        %v3484 = vrot.slane %v3468, %v3483
        %v3486 = vunpack.c.l.s4 1966171168
        %v3487 = vunpack.c.0.s8 %v3486
        %v3488 = vlaneseq
        %v3489 = vshrl.u32 %v3488, 7
        %v3490 = vsub.s32 %v3487, %v3489
        %v3491 = vrot.slane %v3469, %v3490
        %v3493 = vunpack.c.l.s4 1966171168
        %v3494 = vunpack.c.0.s8 %v3493
        %v3495 = vlaneseq
        %v3496 = vshrl.u32 %v3495, 7
        %v3497 = vsub.s32 %v3494, %v3496
        %v3498 = vrot.slane %v3470, %v3497
        %v3499 = vcombine.high %v3477, %v3477
        %v3500 = vcombine.high %v3484, %v3484
        %v3501 = vcombine.high %v3491, %v3491
        %v3502 = vcombine.high %v3498, %v3498
        %v3503 = vlaneseq
        %v3504 = vshrl.u32 %v3503, 7
        %v3505 = vsub.s32 0, %v3504
        %v3506 = vrot.slane %v3477, %v3505
        %v3507 = vlaneseq
        %v3508 = vshrl.u32 %v3507, 7
        %v3509 = vsub.s32 0, %v3508
        %v3510 = vrot.slane %v3491, %v3509
        %v3511 = vlaneseq
        %v3512 = vshrl.u32 %v3511, 7
        %v3513 = vsub.s32 0, %v3512
        %v3514 = vrot.slane %v3499, %v3513
        %v3515 = vlaneseq
        %v3516 = vshrl.u32 %v3515, 7
        %v3517 = vsub.s32 0, %v3516
        %v3518 = vrot.slane %v3501, %v3517
        %v3519 = vlaneseq
        %v3520 = vshrl.u32 %v3519, 7
        %v3521 = vsub.s32 0, %v3520
        %v3522 = vrot.slane %v3484, %v3521
        %v3523 = vlaneseq
        %v3524 = vshrl.u32 %v3523, 7
        %v3525 = vsub.s32 0, %v3524
        %v3526 = vrot.slane %v3498, %v3525
        %v3527 = vlaneseq
        %v3528 = vshrl.u32 %v3527, 7
        %v3529 = vsub.s32 0, %v3528
        %v3530 = vrot.slane %v3500, %v3529
        %v3531 = vlaneseq
        %v3532 = vshrl.u32 %v3531, 7
        %v3533 = vsub.s32 0, %v3532
        %v3534 = vrot.slane %v3502, %v3533
        %v3543 = vmul.f32 %v3403, %v3506
        %v3544 = vmul.f32 %v3410, %v3510
        %v3545 = vmul.f32 %v3417, %v3514
        %v3546 = vmul.f32 %v3424, %v3518
        %v3547 = vmul.f32 %v3431, %v3522
        %v3548 = vmul.f32 %v3438, %v3526
        %v3549 = vmul.f32 %v3445, %v3530
        %v3550 = vmul.f32 %v3452, %v3534
        %v3551 = vadd.f32 %v3346, %v3543
        %v3552 = vadd.f32 %v3347, %v3544
        %v3553 = vadd.f32 %v3348, %v3545
        %v3554 = vadd.f32 %v3349, %v3546
        %v3555 = vadd.f32 %v3350, %v3547
        %v3556 = vadd.f32 %v3351, %v3548
        %v3557 = vadd.f32 %v3352, %v3549
        %v3558 = vadd.f32 %v3353, %v3550
        %v3559 = vcombine.low %v3551, %v3553
        %v3561 = vunpack.c.l.s4 1983009808
        %v3562 = vunpack.c.0.s8 %v3561
        %v3563 = vlaneseq
        %v3564 = vshrl.u32 %v3563, 7
        %v3565 = vsub.s32 %v3562, %v3564
        %v3566 = vrot.slane %v3559, %v3565
        %v3567 = vcombine.low %v3552, %v3554
        %v3569 = vunpack.c.l.s4 1983009808
        %v3570 = vunpack.c.0.s8 %v3569
        %v3571 = vlaneseq
        %v3572 = vshrl.u32 %v3571, 7
        %v3573 = vsub.s32 %v3570, %v3572
        %v3574 = vrot.slane %v3567, %v3573
        %v3575 = vcombine.low %v3555, %v3557
        %v3577 = vunpack.c.l.s4 1983009808
        %v3578 = vunpack.c.0.s8 %v3577
        %v3579 = vlaneseq
        %v3580 = vshrl.u32 %v3579, 7
        %v3581 = vsub.s32 %v3578, %v3580
        %v3582 = vrot.slane %v3575, %v3581
        %v3583 = vcombine.low %v3556, %v3558
        %v3585 = vunpack.c.l.s4 1983009808
        %v3586 = vunpack.c.0.s8 %v3585
        %v3587 = vlaneseq
        %v3588 = vshrl.u32 %v3587, 7
        %v3589 = vsub.s32 %v3586, %v3588
        %v3590 = vrot.slane %v3583, %v3589
        %v3591 = vcombine.low %v3566, %v3574
        %v3592 = vcombine.high %v3566, %v3574
        %v3594 = vunpack.c.l.s4 1934713408
        %v3595 = vunpack.c.0.s8 %v3594
        %v3596 = vlaneseq
        %v3597 = vshrl.u32 %v3596, 7
        %v3598 = vsub.s32 %v3595, %v3597
        %v3599 = vrot.slane %v3591, %v3598
        %v3601 = vunpack.c.l.s4 1934713408
        %v3602 = vunpack.c.0.s8 %v3601
        %v3603 = vlaneseq
        %v3604 = vshrl.u32 %v3603, 7
        %v3605 = vsub.s32 %v3602, %v3604
        %v3606 = vrot.slane %v3592, %v3605
        %v3607 = vcombine.low %v3582, %v3590
        %v3608 = vcombine.high %v3582, %v3590
        %v3610 = vunpack.c.l.s4 1934713408
        %v3611 = vunpack.c.0.s8 %v3610
        %v3612 = vlaneseq
        %v3613 = vshrl.u32 %v3612, 7
        %v3614 = vsub.s32 %v3611, %v3613
        %v3615 = vrot.slane %v3607, %v3614
        %v3617 = vunpack.c.l.s4 1934713408
        %v3618 = vunpack.c.0.s8 %v3617
        %v3619 = vlaneseq
        %v3620 = vshrl.u32 %v3619, 7
        %v3621 = vsub.s32 %v3618, %v3620
        %v3622 = vrot.slane %v3608, %v3621
        %v3623 = vcombine.low %v3599, %v3615
        %v3624 = vcombine.high %v3599, %v3615
        %v3625 = vcombine.low %v3606, %v3622
        %v3626 = vcombine.high %v3606, %v3622
        %3628 = vrot.lane.b32.xlu0 %v3624, 4
        %v3629 = vpop.permute.xlu0 %3628
        %3632 = vrot.lane.b32.xlu0 %v3625, 8
        %v3633 = vpop.permute.xlu0 %3632
        %3636 = vrot.lane.b32.xlu0 %v3626, 12
        %v3637 = vpop.permute.xlu0 %3636
        %v3639 = vsel %vm2113, %v3623, %v3629
        %v3640 = vsel %vm1194, %v3639, %v3633
        %v3641 = vsel %vm2648, %v3640, %v3637
        %v3642 = vpack.c.bf16 %v3641, %v3641
        %v3643 = vmul.f32 %v2112, %v2147
        %3644 = vset.pattern.permute.xlu0 24
        %3645 = vperm.xlu0 %3644, %v2105
        %v3646 = vpop.permute.xlu0 %3645
        %vm3647 = vcmp.eq.s32.totalorder %v2149, %v3646
        %3648 = vset.pattern.permute.xlu0 24
        %3649 = vperm.xlu0 %3648, %v2155
        %v3650 = vpop.permute.xlu0 %3649
        %v3652 = vsel %vm3647, %v3650, 0.0
        %3653 = vset.pattern.permute.xlu0 24
        %3654 = vperm.xlu0 %3653, %v2162
        %v3655 = vpop.permute.xlu0 %3654
        %vm3656 = vcmp.eq.s32.totalorder %v2149, %v3655
        %3657 = vset.pattern.permute.xlu0 24
        %3658 = vperm.xlu0 %3657, %v2104
        %v3659 = vpop.permute.xlu0 %3658
        %v3661 = vsel %vm3656, %v3659, 0.0
        %v3662 = vadd.f32 %v3652, %v3661
        %3663 = vset.pattern.permute.xlu0 25
        %3664 = vperm.xlu0 %3663, %v2105
        %v3665 = vpop.permute.xlu0 %3664
        %vm3666 = vcmp.eq.s32.totalorder %v2149, %v3665
        %3667 = vset.pattern.permute.xlu0 25
        %3668 = vperm.xlu0 %3667, %v2155
        %v3669 = vpop.permute.xlu0 %3668
        %v3671 = vsel %vm3666, %v3669, 0.0
        %3672 = vset.pattern.permute.xlu0 25
        %3673 = vperm.xlu0 %3672, %v2162
        %v3674 = vpop.permute.xlu0 %3673
        %vm3675 = vcmp.eq.s32.totalorder %v2149, %v3674
        %3676 = vset.pattern.permute.xlu0 25
        %3677 = vperm.xlu0 %3676, %v2104
        %v3678 = vpop.permute.xlu0 %3677
        %v3680 = vsel %vm3675, %v3678, 0.0
        %v3681 = vadd.f32 %v3671, %v3680
        %3683 = vset.pattern.permute.xlu0 12
        %3684 = vperm.xlu0 %3683, %v3643
        %v3685 = vpop.permute.xlu0 %3684
        %v3687 = vmul.f32 %v3681, %v3685
        %v3688 = vlaneseq
        %v3689 = vshrl.u32 %v3688, 7
        %v3690 = vsub.s32 0, %v3689
        %v3691 = vrot.slane %v3687, %v3690
        %3693 = vbcast.lane.b32.xlu0 %v3691, 256
        %v3694 = vpop.permute.xlu0 %3693
        %v3695 = vlaneseq
        %v3696 = vshrl.u32 %v3695, 7
        %v3697 = vsub.s32 1, %v3696
        %v3698 = vrot.slane %v3687, %v3697
        %3700 = vbcast.lane.b32.xlu0 %v3698, 256
        %v3701 = vpop.permute.xlu0 %3700
        %v3702 = vlaneseq
        %v3703 = vshrl.u32 %v3702, 7
        %v3704 = vsub.s32 2, %v3703
        %v3705 = vrot.slane %v3687, %v3704
        %3707 = vbcast.lane.b32.xlu0 %v3705, 256
        %v3708 = vpop.permute.xlu0 %3707
        %v3709 = vlaneseq
        %v3710 = vshrl.u32 %v3709, 7
        %v3711 = vsub.s32 3, %v3710
        %v3712 = vrot.slane %v3687, %v3711
        %3714 = vbcast.lane.b32.xlu0 %v3712, 256
        %v3715 = vpop.permute.xlu0 %3714
        %v3716 = vlaneseq
        %v3717 = vshrl.u32 %v3716, 7
        %v3718 = vsub.s32 4, %v3717
        %v3719 = vrot.slane %v3687, %v3718
        %3721 = vbcast.lane.b32.xlu0 %v3719, 256
        %v3722 = vpop.permute.xlu0 %3721
        %v3723 = vlaneseq
        %v3724 = vshrl.u32 %v3723, 7
        %v3725 = vsub.s32 5, %v3724
        %v3726 = vrot.slane %v3687, %v3725
        %3728 = vbcast.lane.b32.xlu0 %v3726, 256
        %v3729 = vpop.permute.xlu0 %3728
        %v3730 = vlaneseq
        %v3731 = vshrl.u32 %v3730, 7
        %v3732 = vsub.s32 6, %v3731
        %v3733 = vrot.slane %v3687, %v3732
        %3735 = vbcast.lane.b32.xlu0 %v3733, 256
        %v3736 = vpop.permute.xlu0 %3735
        %v3737 = vlaneseq
        %v3738 = vshrl.u32 %v3737, 7
        %v3739 = vsub.s32 7, %v3738
        %v3740 = vrot.slane %v3687, %v3739
        %3742 = vbcast.lane.b32.xlu0 %v3740, 256
        %v3743 = vpop.permute.xlu0 %3742
        %v3745 = vcombine.high %v3662, %v3662
        %v3747 = vunpack.c.l.s4 1966171168
        %v3748 = vunpack.c.0.s8 %v3747
        %v3749 = vlaneseq
        %v3750 = vshrl.u32 %v3749, 7
        %v3751 = vsub.s32 %v3748, %v3750
        %v3752 = vrot.slane %v3662, %v3751
        %v3754 = vunpack.c.l.s4 1966171168
        %v3755 = vunpack.c.0.s8 %v3754
        %v3756 = vlaneseq
        %v3757 = vshrl.u32 %v3756, 7
        %v3758 = vsub.s32 %v3755, %v3757
        %v3759 = vrot.slane %v3745, %v3758
        %v3760 = vcombine.high %v3752, %v3752
        %v3761 = vcombine.high %v3759, %v3759
        %v3763 = vunpack.c.l.s4 1966171168
        %v3764 = vunpack.c.0.s8 %v3763
        %v3765 = vlaneseq
        %v3766 = vshrl.u32 %v3765, 7
        %v3767 = vsub.s32 %v3764, %v3766
        %v3768 = vrot.slane %v3752, %v3767
        %v3770 = vunpack.c.l.s4 1966171168
        %v3771 = vunpack.c.0.s8 %v3770
        %v3772 = vlaneseq
        %v3773 = vshrl.u32 %v3772, 7
        %v3774 = vsub.s32 %v3771, %v3773
        %v3775 = vrot.slane %v3759, %v3774
        %v3777 = vunpack.c.l.s4 1966171168
        %v3778 = vunpack.c.0.s8 %v3777
        %v3779 = vlaneseq
        %v3780 = vshrl.u32 %v3779, 7
        %v3781 = vsub.s32 %v3778, %v3780
        %v3782 = vrot.slane %v3760, %v3781
        %v3784 = vunpack.c.l.s4 1966171168
        %v3785 = vunpack.c.0.s8 %v3784
        %v3786 = vlaneseq
        %v3787 = vshrl.u32 %v3786, 7
        %v3788 = vsub.s32 %v3785, %v3787
        %v3789 = vrot.slane %v3761, %v3788
        %v3790 = vcombine.high %v3768, %v3768
        %v3791 = vcombine.high %v3775, %v3775
        %v3792 = vcombine.high %v3782, %v3782
        %v3793 = vcombine.high %v3789, %v3789
        %v3794 = vlaneseq
        %v3795 = vshrl.u32 %v3794, 7
        %v3796 = vsub.s32 0, %v3795
        %v3797 = vrot.slane %v3768, %v3796
        %v3798 = vlaneseq
        %v3799 = vshrl.u32 %v3798, 7
        %v3800 = vsub.s32 0, %v3799
        %v3801 = vrot.slane %v3782, %v3800
        %v3802 = vlaneseq
        %v3803 = vshrl.u32 %v3802, 7
        %v3804 = vsub.s32 0, %v3803
        %v3805 = vrot.slane %v3790, %v3804
        %v3806 = vlaneseq
        %v3807 = vshrl.u32 %v3806, 7
        %v3808 = vsub.s32 0, %v3807
        %v3809 = vrot.slane %v3792, %v3808
        %v3810 = vlaneseq
        %v3811 = vshrl.u32 %v3810, 7
        %v3812 = vsub.s32 0, %v3811
        %v3813 = vrot.slane %v3775, %v3812
        %v3814 = vlaneseq
        %v3815 = vshrl.u32 %v3814, 7
        %v3816 = vsub.s32 0, %v3815
        %v3817 = vrot.slane %v3789, %v3816
        %v3818 = vlaneseq
        %v3819 = vshrl.u32 %v3818, 7
        %v3820 = vsub.s32 0, %v3819
        %v3821 = vrot.slane %v3791, %v3820
        %v3822 = vlaneseq
        %v3823 = vshrl.u32 %v3822, 7
        %v3824 = vsub.s32 0, %v3823
        %v3825 = vrot.slane %v3793, %v3824
        %v3834 = vmul.f32 %v3694, %v3797
        %v3835 = vmul.f32 %v3701, %v3801
        %v3836 = vmul.f32 %v3708, %v3805
        %v3837 = vmul.f32 %v3715, %v3809
        %v3838 = vmul.f32 %v3722, %v3813
        %v3839 = vmul.f32 %v3729, %v3817
        %v3840 = vmul.f32 %v3736, %v3821
        %v3841 = vmul.f32 %v3743, %v3825
        %v3842 = vadd.f32 %v3834, 0.0
        %v3843 = vadd.f32 %v3835, 0.0
        %v3844 = vadd.f32 %v3836, 0.0
        %v3845 = vadd.f32 %v3837, 0.0
        %v3846 = vadd.f32 %v3838, 0.0
        %v3847 = vadd.f32 %v3839, 0.0
        %v3848 = vadd.f32 %v3840, 0.0
        %v3849 = vadd.f32 %v3841, 0.0
        %3850 = vset.pattern.permute.xlu0 26
        %3851 = vperm.xlu0 %3850, %v2105
        %v3852 = vpop.permute.xlu0 %3851
        %vm3853 = vcmp.eq.s32.totalorder %v2149, %v3852
        %3854 = vset.pattern.permute.xlu0 26
        %3855 = vperm.xlu0 %3854, %v2155
        %v3856 = vpop.permute.xlu0 %3855
        %v3858 = vsel %vm3853, %v3856, 0.0
        %3859 = vset.pattern.permute.xlu0 26
        %3860 = vperm.xlu0 %3859, %v2162
        %v3861 = vpop.permute.xlu0 %3860
        %vm3862 = vcmp.eq.s32.totalorder %v2149, %v3861
        %3863 = vset.pattern.permute.xlu0 26
        %3864 = vperm.xlu0 %3863, %v2104
        %v3865 = vpop.permute.xlu0 %3864
        %v3867 = vsel %vm3862, %v3865, 0.0
        %v3868 = vadd.f32 %v3858, %v3867
        %3869 = vset.pattern.permute.xlu0 27
        %3870 = vperm.xlu0 %3869, %v2105
        %v3871 = vpop.permute.xlu0 %3870
        %vm3872 = vcmp.eq.s32.totalorder %v2149, %v3871
        %3873 = vset.pattern.permute.xlu0 27
        %3874 = vperm.xlu0 %3873, %v2155
        %v3875 = vpop.permute.xlu0 %3874
        %v3877 = vsel %vm3872, %v3875, 0.0
        %3878 = vset.pattern.permute.xlu0 27
        %3879 = vperm.xlu0 %3878, %v2162
        %v3880 = vpop.permute.xlu0 %3879
        %vm3881 = vcmp.eq.s32.totalorder %v2149, %v3880
        %3882 = vset.pattern.permute.xlu0 27
        %3883 = vperm.xlu0 %3882, %v2104
        %v3884 = vpop.permute.xlu0 %3883
        %v3886 = vsel %vm3881, %v3884, 0.0
        %v3887 = vadd.f32 %v3877, %v3886
        %3888 = vset.pattern.permute.xlu0 13
        %3889 = vperm.xlu0 %3888, %v3643
        %v3890 = vpop.permute.xlu0 %3889
        %v3892 = vmul.f32 %v3887, %v3890
        %v3893 = vlaneseq
        %v3894 = vshrl.u32 %v3893, 7
        %v3895 = vsub.s32 0, %v3894
        %v3896 = vrot.slane %v3892, %v3895
        %3898 = vbcast.lane.b32.xlu0 %v3896, 256
        %v3899 = vpop.permute.xlu0 %3898
        %v3900 = vlaneseq
        %v3901 = vshrl.u32 %v3900, 7
        %v3902 = vsub.s32 1, %v3901
        %v3903 = vrot.slane %v3892, %v3902
        %3905 = vbcast.lane.b32.xlu0 %v3903, 256
        %v3906 = vpop.permute.xlu0 %3905
        %v3907 = vlaneseq
        %v3908 = vshrl.u32 %v3907, 7
        %v3909 = vsub.s32 2, %v3908
        %v3910 = vrot.slane %v3892, %v3909
        %3912 = vbcast.lane.b32.xlu0 %v3910, 256
        %v3913 = vpop.permute.xlu0 %3912
        %v3914 = vlaneseq
        %v3915 = vshrl.u32 %v3914, 7
        %v3916 = vsub.s32 3, %v3915
        %v3917 = vrot.slane %v3892, %v3916
        %3919 = vbcast.lane.b32.xlu0 %v3917, 256
        %v3920 = vpop.permute.xlu0 %3919
        %v3921 = vlaneseq
        %v3922 = vshrl.u32 %v3921, 7
        %v3923 = vsub.s32 4, %v3922
        %v3924 = vrot.slane %v3892, %v3923
        %3926 = vbcast.lane.b32.xlu0 %v3924, 256
        %v3927 = vpop.permute.xlu0 %3926
        %v3928 = vlaneseq
        %v3929 = vshrl.u32 %v3928, 7
        %v3930 = vsub.s32 5, %v3929
        %v3931 = vrot.slane %v3892, %v3930
        %3933 = vbcast.lane.b32.xlu0 %v3931, 256
        %v3934 = vpop.permute.xlu0 %3933
        %v3935 = vlaneseq
        %v3936 = vshrl.u32 %v3935, 7
        %v3937 = vsub.s32 6, %v3936
        %v3938 = vrot.slane %v3892, %v3937
        %3940 = vbcast.lane.b32.xlu0 %v3938, 256
        %v3941 = vpop.permute.xlu0 %3940
        %v3942 = vlaneseq
        %v3943 = vshrl.u32 %v3942, 7
        %v3944 = vsub.s32 7, %v3943
        %v3945 = vrot.slane %v3892, %v3944
        %3947 = vbcast.lane.b32.xlu0 %v3945, 256
        %v3948 = vpop.permute.xlu0 %3947
        %v3950 = vcombine.high %v3868, %v3868
        %v3952 = vunpack.c.l.s4 1966171168
        %v3953 = vunpack.c.0.s8 %v3952
        %v3954 = vlaneseq
        %v3955 = vshrl.u32 %v3954, 7
        %v3956 = vsub.s32 %v3953, %v3955
        %v3957 = vrot.slane %v3868, %v3956
        %v3959 = vunpack.c.l.s4 1966171168
        %v3960 = vunpack.c.0.s8 %v3959
        %v3961 = vlaneseq
        %v3962 = vshrl.u32 %v3961, 7
        %v3963 = vsub.s32 %v3960, %v3962
        %v3964 = vrot.slane %v3950, %v3963
        %v3965 = vcombine.high %v3957, %v3957
        %v3966 = vcombine.high %v3964, %v3964
        %v3968 = vunpack.c.l.s4 1966171168
        %v3969 = vunpack.c.0.s8 %v3968
        %v3970 = vlaneseq
        %v3971 = vshrl.u32 %v3970, 7
        %v3972 = vsub.s32 %v3969, %v3971
        %v3973 = vrot.slane %v3957, %v3972
        %v3975 = vunpack.c.l.s4 1966171168
        %v3976 = vunpack.c.0.s8 %v3975
        %v3977 = vlaneseq
        %v3978 = vshrl.u32 %v3977, 7
        %v3979 = vsub.s32 %v3976, %v3978
        %v3980 = vrot.slane %v3964, %v3979
        %v3982 = vunpack.c.l.s4 1966171168
        %v3983 = vunpack.c.0.s8 %v3982
        %v3984 = vlaneseq
        %v3985 = vshrl.u32 %v3984, 7
        %v3986 = vsub.s32 %v3983, %v3985
        %v3987 = vrot.slane %v3965, %v3986
        %v3989 = vunpack.c.l.s4 1966171168
        %v3990 = vunpack.c.0.s8 %v3989
        %v3991 = vlaneseq
        %v3992 = vshrl.u32 %v3991, 7
        %v3993 = vsub.s32 %v3990, %v3992
        %v3994 = vrot.slane %v3966, %v3993
        %v3995 = vcombine.high %v3973, %v3973
        %v3996 = vcombine.high %v3980, %v3980
        %v3997 = vcombine.high %v3987, %v3987
        %v3998 = vcombine.high %v3994, %v3994
        %v3999 = vlaneseq
        %v4000 = vshrl.u32 %v3999, 7
        %v4001 = vsub.s32 0, %v4000
        %v4002 = vrot.slane %v3973, %v4001
        %v4003 = vlaneseq
        %v4004 = vshrl.u32 %v4003, 7
        %v4005 = vsub.s32 0, %v4004
        %v4006 = vrot.slane %v3987, %v4005
        %v4007 = vlaneseq
        %v4008 = vshrl.u32 %v4007, 7
        %v4009 = vsub.s32 0, %v4008
        %v4010 = vrot.slane %v3995, %v4009
        %v4011 = vlaneseq
        %v4012 = vshrl.u32 %v4011, 7
        %v4013 = vsub.s32 0, %v4012
        %v4014 = vrot.slane %v3997, %v4013
        %v4015 = vlaneseq
        %v4016 = vshrl.u32 %v4015, 7
        %v4017 = vsub.s32 0, %v4016
        %v4018 = vrot.slane %v3980, %v4017
        %v4019 = vlaneseq
        %v4020 = vshrl.u32 %v4019, 7
        %v4021 = vsub.s32 0, %v4020
        %v4022 = vrot.slane %v3994, %v4021
        %v4023 = vlaneseq
        %v4024 = vshrl.u32 %v4023, 7
        %v4025 = vsub.s32 0, %v4024
        %v4026 = vrot.slane %v3996, %v4025
        %v4027 = vlaneseq
        %v4028 = vshrl.u32 %v4027, 7
        %v4029 = vsub.s32 0, %v4028
        %v4030 = vrot.slane %v3998, %v4029
        %v4039 = vmul.f32 %v3899, %v4002
        %v4040 = vmul.f32 %v3906, %v4006
        %v4041 = vmul.f32 %v3913, %v4010
        %v4042 = vmul.f32 %v3920, %v4014
        %v4043 = vmul.f32 %v3927, %v4018
        %v4044 = vmul.f32 %v3934, %v4022
        %v4045 = vmul.f32 %v3941, %v4026
        %v4046 = vmul.f32 %v3948, %v4030
        %v4047 = vadd.f32 %v3842, %v4039
        %v4048 = vadd.f32 %v3843, %v4040
        %v4049 = vadd.f32 %v3844, %v4041
        %v4050 = vadd.f32 %v3845, %v4042
        %v4051 = vadd.f32 %v3846, %v4043
        %v4052 = vadd.f32 %v3847, %v4044
        %v4053 = vadd.f32 %v3848, %v4045
        %v4054 = vadd.f32 %v3849, %v4046
        %v4055 = vcombine.low %v4047, %v4049
        %v4057 = vunpack.c.l.s4 1983009808
        %v4058 = vunpack.c.0.s8 %v4057
        %v4059 = vlaneseq
        %v4060 = vshrl.u32 %v4059, 7
        %v4061 = vsub.s32 %v4058, %v4060
        %v4062 = vrot.slane %v4055, %v4061
        %v4063 = vcombine.low %v4048, %v4050
        %v4065 = vunpack.c.l.s4 1983009808
        %v4066 = vunpack.c.0.s8 %v4065
        %v4067 = vlaneseq
        %v4068 = vshrl.u32 %v4067, 7
        %v4069 = vsub.s32 %v4066, %v4068
        %v4070 = vrot.slane %v4063, %v4069
        %v4071 = vcombine.low %v4051, %v4053
        %v4073 = vunpack.c.l.s4 1983009808
        %v4074 = vunpack.c.0.s8 %v4073
        %v4075 = vlaneseq
        %v4076 = vshrl.u32 %v4075, 7
        %v4077 = vsub.s32 %v4074, %v4076
        %v4078 = vrot.slane %v4071, %v4077
        %v4079 = vcombine.low %v4052, %v4054
        %v4081 = vunpack.c.l.s4 1983009808
        %v4082 = vunpack.c.0.s8 %v4081
        %v4083 = vlaneseq
        %v4084 = vshrl.u32 %v4083, 7
        %v4085 = vsub.s32 %v4082, %v4084
        %v4086 = vrot.slane %v4079, %v4085
        %v4087 = vcombine.low %v4062, %v4070
        %v4088 = vcombine.high %v4062, %v4070
        %v4090 = vunpack.c.l.s4 1934713408
        %v4091 = vunpack.c.0.s8 %v4090
        %v4092 = vlaneseq
        %v4093 = vshrl.u32 %v4092, 7
        %v4094 = vsub.s32 %v4091, %v4093
        %v4095 = vrot.slane %v4087, %v4094
        %v4097 = vunpack.c.l.s4 1934713408
        %v4098 = vunpack.c.0.s8 %v4097
        %v4099 = vlaneseq
        %v4100 = vshrl.u32 %v4099, 7
        %v4101 = vsub.s32 %v4098, %v4100
        %v4102 = vrot.slane %v4088, %v4101
        %v4103 = vcombine.low %v4078, %v4086
        %v4104 = vcombine.high %v4078, %v4086
        %v4106 = vunpack.c.l.s4 1934713408
        %v4107 = vunpack.c.0.s8 %v4106
        %v4108 = vlaneseq
        %v4109 = vshrl.u32 %v4108, 7
        %v4110 = vsub.s32 %v4107, %v4109
        %v4111 = vrot.slane %v4103, %v4110
        %v4113 = vunpack.c.l.s4 1934713408
        %v4114 = vunpack.c.0.s8 %v4113
        %v4115 = vlaneseq
        %v4116 = vshrl.u32 %v4115, 7
        %v4117 = vsub.s32 %v4114, %v4116
        %v4118 = vrot.slane %v4104, %v4117
        %v4119 = vcombine.low %v4095, %v4111
        %v4120 = vcombine.high %v4095, %v4111
        %v4121 = vcombine.low %v4102, %v4118
        %v4122 = vcombine.high %v4102, %v4118
        %4124 = vrot.lane.b32.xlu0 %v4120, 4
        %v4125 = vpop.permute.xlu0 %4124
        %4128 = vrot.lane.b32.xlu0 %v4121, 8
        %v4129 = vpop.permute.xlu0 %4128
        %4132 = vrot.lane.b32.xlu0 %v4122, 12
        %v4133 = vpop.permute.xlu0 %4132
        %v4135 = vsel %vm2113, %v4119, %v4125
        %v4136 = vsel %vm1194, %v4135, %v4129
        %v4137 = vsel %vm2648, %v4136, %v4133
        %v4138 = vpack.c.bf16 %v4137, %v4137
        %4139 = vset.pattern.permute.xlu0 4
        %4140 = vperm.xlu0 %4139, %v2105
        %v4141 = vpop.permute.xlu0 %4140
        %vm4142 = vcmp.eq.s32.totalorder %v2149, %v4141
        %4143 = vset.pattern.permute.xlu0 4
        %4144 = vperm.xlu0 %4143, %v2155
        %v4145 = vpop.permute.xlu0 %4144
        %v4147 = vsel %vm4142, %v4145, 0.0
        %4148 = vset.pattern.permute.xlu0 4
        %4149 = vperm.xlu0 %4148, %v2162
        %v4150 = vpop.permute.xlu0 %4149
        %vm4151 = vcmp.eq.s32.totalorder %v2149, %v4150
        %4152 = vset.pattern.permute.xlu0 4
        %4153 = vperm.xlu0 %4152, %v2104
        %v4154 = vpop.permute.xlu0 %4153
        %v4156 = vsel %vm4151, %v4154, 0.0
        %v4157 = vadd.f32 %v4147, %v4156
        %4158 = vset.pattern.permute.xlu0 5
        %4159 = vperm.xlu0 %4158, %v2105
        %v4160 = vpop.permute.xlu0 %4159
        %vm4161 = vcmp.eq.s32.totalorder %v2149, %v4160
        %4162 = vset.pattern.permute.xlu0 5
        %4163 = vperm.xlu0 %4162, %v2155
        %v4164 = vpop.permute.xlu0 %4163
        %v4166 = vsel %vm4161, %v4164, 0.0
        %4167 = vset.pattern.permute.xlu0 5
        %4168 = vperm.xlu0 %4167, %v2162
        %v4169 = vpop.permute.xlu0 %4168
        %vm4170 = vcmp.eq.s32.totalorder %v2149, %v4169
        %4171 = vset.pattern.permute.xlu0 5
        %4172 = vperm.xlu0 %4171, %v2104
        %v4173 = vpop.permute.xlu0 %4172
        %v4175 = vsel %vm4170, %v4173, 0.0
        %v4176 = vadd.f32 %v4166, %v4175
        %4177 = vset.pattern.permute.xlu0 2
        %4178 = vperm.xlu0 %4177, %v2150
        %v4179 = vpop.permute.xlu0 %4178
        %v4181 = vmul.f32 %v4176, %v4179
        %v4182 = vlaneseq
        %v4183 = vshrl.u32 %v4182, 7
        %v4184 = vsub.s32 0, %v4183
        %v4185 = vrot.slane %v4181, %v4184
        %4187 = vbcast.lane.b32.xlu0 %v4185, 256
        %v4188 = vpop.permute.xlu0 %4187
        %v4189 = vlaneseq
        %v4190 = vshrl.u32 %v4189, 7
        %v4191 = vsub.s32 1, %v4190
        %v4192 = vrot.slane %v4181, %v4191
        %4194 = vbcast.lane.b32.xlu0 %v4192, 256
        %v4195 = vpop.permute.xlu0 %4194
        %v4196 = vlaneseq
        %v4197 = vshrl.u32 %v4196, 7
        %v4198 = vsub.s32 2, %v4197
        %v4199 = vrot.slane %v4181, %v4198
        %4201 = vbcast.lane.b32.xlu0 %v4199, 256
        %v4202 = vpop.permute.xlu0 %4201
        %v4203 = vlaneseq
        %v4204 = vshrl.u32 %v4203, 7
        %v4205 = vsub.s32 3, %v4204
        %v4206 = vrot.slane %v4181, %v4205
        %4208 = vbcast.lane.b32.xlu0 %v4206, 256
        %v4209 = vpop.permute.xlu0 %4208
        %v4210 = vlaneseq
        %v4211 = vshrl.u32 %v4210, 7
        %v4212 = vsub.s32 4, %v4211
        %v4213 = vrot.slane %v4181, %v4212
        %4215 = vbcast.lane.b32.xlu0 %v4213, 256
        %v4216 = vpop.permute.xlu0 %4215
        %v4217 = vlaneseq
        %v4218 = vshrl.u32 %v4217, 7
        %v4219 = vsub.s32 5, %v4218
        %v4220 = vrot.slane %v4181, %v4219
        %4222 = vbcast.lane.b32.xlu0 %v4220, 256
        %v4223 = vpop.permute.xlu0 %4222
        %v4224 = vlaneseq
        %v4225 = vshrl.u32 %v4224, 7
        %v4226 = vsub.s32 6, %v4225
        %v4227 = vrot.slane %v4181, %v4226
        %4229 = vbcast.lane.b32.xlu0 %v4227, 256
        %v4230 = vpop.permute.xlu0 %4229
        %v4231 = vlaneseq
        %v4232 = vshrl.u32 %v4231, 7
        %v4233 = vsub.s32 7, %v4232
        %v4234 = vrot.slane %v4181, %v4233
        %4236 = vbcast.lane.b32.xlu0 %v4234, 256
        %v4237 = vpop.permute.xlu0 %4236
        %v4239 = vcombine.high %v4157, %v4157
        %v4241 = vunpack.c.l.s4 1966171168
        %v4242 = vunpack.c.0.s8 %v4241
        %v4243 = vlaneseq
        %v4244 = vshrl.u32 %v4243, 7
        %v4245 = vsub.s32 %v4242, %v4244
        %v4246 = vrot.slane %v4157, %v4245
        %v4248 = vunpack.c.l.s4 1966171168
        %v4249 = vunpack.c.0.s8 %v4248
        %v4250 = vlaneseq
        %v4251 = vshrl.u32 %v4250, 7
        %v4252 = vsub.s32 %v4249, %v4251
        %v4253 = vrot.slane %v4239, %v4252
        %v4254 = vcombine.high %v4246, %v4246
        %v4255 = vcombine.high %v4253, %v4253
        %v4257 = vunpack.c.l.s4 1966171168
        %v4258 = vunpack.c.0.s8 %v4257
        %v4259 = vlaneseq
        %v4260 = vshrl.u32 %v4259, 7
        %v4261 = vsub.s32 %v4258, %v4260
        %v4262 = vrot.slane %v4246, %v4261
        %v4264 = vunpack.c.l.s4 1966171168
        %v4265 = vunpack.c.0.s8 %v4264
        %v4266 = vlaneseq
        %v4267 = vshrl.u32 %v4266, 7
        %v4268 = vsub.s32 %v4265, %v4267
        %v4269 = vrot.slane %v4253, %v4268
        %v4271 = vunpack.c.l.s4 1966171168
        %v4272 = vunpack.c.0.s8 %v4271
        %v4273 = vlaneseq
        %v4274 = vshrl.u32 %v4273, 7
        %v4275 = vsub.s32 %v4272, %v4274
        %v4276 = vrot.slane %v4254, %v4275
        %v4278 = vunpack.c.l.s4 1966171168
        %v4279 = vunpack.c.0.s8 %v4278
        %v4280 = vlaneseq
        %v4281 = vshrl.u32 %v4280, 7
        %v4282 = vsub.s32 %v4279, %v4281
        %v4283 = vrot.slane %v4255, %v4282
        %v4284 = vcombine.high %v4262, %v4262
        %v4285 = vcombine.high %v4269, %v4269
        %v4286 = vcombine.high %v4276, %v4276
        %v4287 = vcombine.high %v4283, %v4283
        %v4288 = vlaneseq
        %v4289 = vshrl.u32 %v4288, 7
        %v4290 = vsub.s32 0, %v4289
        %v4291 = vrot.slane %v4262, %v4290
        %v4292 = vlaneseq
        %v4293 = vshrl.u32 %v4292, 7
        %v4294 = vsub.s32 0, %v4293
        %v4295 = vrot.slane %v4276, %v4294
        %v4296 = vlaneseq
        %v4297 = vshrl.u32 %v4296, 7
        %v4298 = vsub.s32 0, %v4297
        %v4299 = vrot.slane %v4284, %v4298
        %v4300 = vlaneseq
        %v4301 = vshrl.u32 %v4300, 7
        %v4302 = vsub.s32 0, %v4301
        %v4303 = vrot.slane %v4286, %v4302
        %v4304 = vlaneseq
        %v4305 = vshrl.u32 %v4304, 7
        %v4306 = vsub.s32 0, %v4305
        %v4307 = vrot.slane %v4269, %v4306
        %v4308 = vlaneseq
        %v4309 = vshrl.u32 %v4308, 7
        %v4310 = vsub.s32 0, %v4309
        %v4311 = vrot.slane %v4283, %v4310
        %v4312 = vlaneseq
        %v4313 = vshrl.u32 %v4312, 7
        %v4314 = vsub.s32 0, %v4313
        %v4315 = vrot.slane %v4285, %v4314
        %v4316 = vlaneseq
        %v4317 = vshrl.u32 %v4316, 7
        %v4318 = vsub.s32 0, %v4317
        %v4319 = vrot.slane %v4287, %v4318
        %v4328 = vmul.f32 %v4188, %v4291
        %v4329 = vmul.f32 %v4195, %v4295
        %v4330 = vmul.f32 %v4202, %v4299
        %v4331 = vmul.f32 %v4209, %v4303
        %v4332 = vmul.f32 %v4216, %v4307
        %v4333 = vmul.f32 %v4223, %v4311
        %v4334 = vmul.f32 %v4230, %v4315
        %v4335 = vmul.f32 %v4237, %v4319
        %v4336 = vadd.f32 %v4328, 0.0
        %v4337 = vadd.f32 %v4329, 0.0
        %v4338 = vadd.f32 %v4330, 0.0
        %v4339 = vadd.f32 %v4331, 0.0
        %v4340 = vadd.f32 %v4332, 0.0
        %v4341 = vadd.f32 %v4333, 0.0
        %v4342 = vadd.f32 %v4334, 0.0
        %v4343 = vadd.f32 %v4335, 0.0
        %4344 = vset.pattern.permute.xlu0 6
        %4345 = vperm.xlu0 %4344, %v2105
        %v4346 = vpop.permute.xlu0 %4345
        %vm4347 = vcmp.eq.s32.totalorder %v2149, %v4346
        %4348 = vset.pattern.permute.xlu0 6
        %4349 = vperm.xlu0 %4348, %v2155
        %v4350 = vpop.permute.xlu0 %4349
        %v4352 = vsel %vm4347, %v4350, 0.0
        %4353 = vset.pattern.permute.xlu0 6
        %4354 = vperm.xlu0 %4353, %v2162
        %v4355 = vpop.permute.xlu0 %4354
        %vm4356 = vcmp.eq.s32.totalorder %v2149, %v4355
        %4357 = vset.pattern.permute.xlu0 6
        %4358 = vperm.xlu0 %4357, %v2104
        %v4359 = vpop.permute.xlu0 %4358
        %v4361 = vsel %vm4356, %v4359, 0.0
        %v4362 = vadd.f32 %v4352, %v4361
        %4363 = vset.pattern.permute.xlu0 7
        %4364 = vperm.xlu0 %4363, %v2105
        %v4365 = vpop.permute.xlu0 %4364
        %vm4366 = vcmp.eq.s32.totalorder %v2149, %v4365
        %4367 = vset.pattern.permute.xlu0 7
        %4368 = vperm.xlu0 %4367, %v2155
        %v4369 = vpop.permute.xlu0 %4368
        %v4371 = vsel %vm4366, %v4369, 0.0
        %4372 = vset.pattern.permute.xlu0 7
        %4373 = vperm.xlu0 %4372, %v2162
        %v4374 = vpop.permute.xlu0 %4373
        %vm4375 = vcmp.eq.s32.totalorder %v2149, %v4374
        %4376 = vset.pattern.permute.xlu0 7
        %4377 = vperm.xlu0 %4376, %v2104
        %v4378 = vpop.permute.xlu0 %4377
        %v4380 = vsel %vm4375, %v4378, 0.0
        %v4381 = vadd.f32 %v4371, %v4380
        %4382 = vset.pattern.permute.xlu0 3
        %4383 = vperm.xlu0 %4382, %v2150
        %v4384 = vpop.permute.xlu0 %4383
        %v4386 = vmul.f32 %v4381, %v4384
        %v4387 = vlaneseq
        %v4388 = vshrl.u32 %v4387, 7
        %v4389 = vsub.s32 0, %v4388
        %v4390 = vrot.slane %v4386, %v4389
        %4392 = vbcast.lane.b32.xlu0 %v4390, 256
        %v4393 = vpop.permute.xlu0 %4392
        %v4394 = vlaneseq
        %v4395 = vshrl.u32 %v4394, 7
        %v4396 = vsub.s32 1, %v4395
        %v4397 = vrot.slane %v4386, %v4396
        %4399 = vbcast.lane.b32.xlu0 %v4397, 256
        %v4400 = vpop.permute.xlu0 %4399
        %v4401 = vlaneseq
        %v4402 = vshrl.u32 %v4401, 7
        %v4403 = vsub.s32 2, %v4402
        %v4404 = vrot.slane %v4386, %v4403
        %4406 = vbcast.lane.b32.xlu0 %v4404, 256
        %v4407 = vpop.permute.xlu0 %4406
        %v4408 = vlaneseq
        %v4409 = vshrl.u32 %v4408, 7
        %v4410 = vsub.s32 3, %v4409
        %v4411 = vrot.slane %v4386, %v4410
        %4413 = vbcast.lane.b32.xlu0 %v4411, 256
        %v4414 = vpop.permute.xlu0 %4413
        %v4415 = vlaneseq
        %v4416 = vshrl.u32 %v4415, 7
        %v4417 = vsub.s32 4, %v4416
        %v4418 = vrot.slane %v4386, %v4417
        %4420 = vbcast.lane.b32.xlu0 %v4418, 256
        %v4421 = vpop.permute.xlu0 %4420
        %v4422 = vlaneseq
        %v4423 = vshrl.u32 %v4422, 7
        %v4424 = vsub.s32 5, %v4423
        %v4425 = vrot.slane %v4386, %v4424
        %4427 = vbcast.lane.b32.xlu0 %v4425, 256
        %v4428 = vpop.permute.xlu0 %4427
        %v4429 = vlaneseq
        %v4430 = vshrl.u32 %v4429, 7
        %v4431 = vsub.s32 6, %v4430
        %v4432 = vrot.slane %v4386, %v4431
        %4434 = vbcast.lane.b32.xlu0 %v4432, 256
        %v4435 = vpop.permute.xlu0 %4434
        %v4436 = vlaneseq
        %v4437 = vshrl.u32 %v4436, 7
        %v4438 = vsub.s32 7, %v4437
        %v4439 = vrot.slane %v4386, %v4438
        %4441 = vbcast.lane.b32.xlu0 %v4439, 256
        %v4442 = vpop.permute.xlu0 %4441
        %v4444 = vcombine.high %v4362, %v4362
        %v4446 = vunpack.c.l.s4 1966171168
        %v4447 = vunpack.c.0.s8 %v4446
        %v4448 = vlaneseq
        %v4449 = vshrl.u32 %v4448, 7
        %v4450 = vsub.s32 %v4447, %v4449
        %v4451 = vrot.slane %v4362, %v4450
        %v4453 = vunpack.c.l.s4 1966171168
        %v4454 = vunpack.c.0.s8 %v4453
        %v4455 = vlaneseq
        %v4456 = vshrl.u32 %v4455, 7
        %v4457 = vsub.s32 %v4454, %v4456
        %v4458 = vrot.slane %v4444, %v4457
        %v4459 = vcombine.high %v4451, %v4451
        %v4460 = vcombine.high %v4458, %v4458
        %v4462 = vunpack.c.l.s4 1966171168
        %v4463 = vunpack.c.0.s8 %v4462
        %v4464 = vlaneseq
        %v4465 = vshrl.u32 %v4464, 7
        %v4466 = vsub.s32 %v4463, %v4465
        %v4467 = vrot.slane %v4451, %v4466
        %v4469 = vunpack.c.l.s4 1966171168
        %v4470 = vunpack.c.0.s8 %v4469
        %v4471 = vlaneseq
        %v4472 = vshrl.u32 %v4471, 7
        %v4473 = vsub.s32 %v4470, %v4472
        %v4474 = vrot.slane %v4458, %v4473
        %v4476 = vunpack.c.l.s4 1966171168
        %v4477 = vunpack.c.0.s8 %v4476
        %v4478 = vlaneseq
        %v4479 = vshrl.u32 %v4478, 7
        %v4480 = vsub.s32 %v4477, %v4479
        %v4481 = vrot.slane %v4459, %v4480
        %v4483 = vunpack.c.l.s4 1966171168
        %v4484 = vunpack.c.0.s8 %v4483
        %v4485 = vlaneseq
        %v4486 = vshrl.u32 %v4485, 7
        %v4487 = vsub.s32 %v4484, %v4486
        %v4488 = vrot.slane %v4460, %v4487
        %v4489 = vcombine.high %v4467, %v4467
        %v4490 = vcombine.high %v4474, %v4474
        %v4491 = vcombine.high %v4481, %v4481
        %v4492 = vcombine.high %v4488, %v4488
        %v4493 = vlaneseq
        %v4494 = vshrl.u32 %v4493, 7
        %v4495 = vsub.s32 0, %v4494
        %v4496 = vrot.slane %v4467, %v4495
        %v4497 = vlaneseq
        %v4498 = vshrl.u32 %v4497, 7
        %v4499 = vsub.s32 0, %v4498
        %v4500 = vrot.slane %v4481, %v4499
        %v4501 = vlaneseq
        %v4502 = vshrl.u32 %v4501, 7
        %v4503 = vsub.s32 0, %v4502
        %v4504 = vrot.slane %v4489, %v4503
        %v4505 = vlaneseq
        %v4506 = vshrl.u32 %v4505, 7
        %v4507 = vsub.s32 0, %v4506
        %v4508 = vrot.slane %v4491, %v4507
        %v4509 = vlaneseq
        %v4510 = vshrl.u32 %v4509, 7
        %v4511 = vsub.s32 0, %v4510
        %v4512 = vrot.slane %v4474, %v4511
        %v4513 = vlaneseq
        %v4514 = vshrl.u32 %v4513, 7
        %v4515 = vsub.s32 0, %v4514
        %v4516 = vrot.slane %v4488, %v4515
        %v4517 = vlaneseq
        %v4518 = vshrl.u32 %v4517, 7
        %v4519 = vsub.s32 0, %v4518
        %v4520 = vrot.slane %v4490, %v4519
        %v4521 = vlaneseq
        %v4522 = vshrl.u32 %v4521, 7
        %v4523 = vsub.s32 0, %v4522
        %v4524 = vrot.slane %v4492, %v4523
        %v4533 = vmul.f32 %v4393, %v4496
        %v4534 = vmul.f32 %v4400, %v4500
        %v4535 = vmul.f32 %v4407, %v4504
        %v4536 = vmul.f32 %v4414, %v4508
        %v4537 = vmul.f32 %v4421, %v4512
        %v4538 = vmul.f32 %v4428, %v4516
        %v4539 = vmul.f32 %v4435, %v4520
        %v4540 = vmul.f32 %v4442, %v4524
        %v4541 = vadd.f32 %v4336, %v4533
        %v4542 = vadd.f32 %v4337, %v4534
        %v4543 = vadd.f32 %v4338, %v4535
        %v4544 = vadd.f32 %v4339, %v4536
        %v4545 = vadd.f32 %v4340, %v4537
        %v4546 = vadd.f32 %v4341, %v4538
        %v4547 = vadd.f32 %v4342, %v4539
        %v4548 = vadd.f32 %v4343, %v4540
        %v4549 = vcombine.low %v4541, %v4543
        %v4551 = vunpack.c.l.s4 1983009808
        %v4552 = vunpack.c.0.s8 %v4551
        %v4553 = vlaneseq
        %v4554 = vshrl.u32 %v4553, 7
        %v4555 = vsub.s32 %v4552, %v4554
        %v4556 = vrot.slane %v4549, %v4555
        %v4557 = vcombine.low %v4542, %v4544
        %v4559 = vunpack.c.l.s4 1983009808
        %v4560 = vunpack.c.0.s8 %v4559
        %v4561 = vlaneseq
        %v4562 = vshrl.u32 %v4561, 7
        %v4563 = vsub.s32 %v4560, %v4562
        %v4564 = vrot.slane %v4557, %v4563
        %v4565 = vcombine.low %v4545, %v4547
        %v4567 = vunpack.c.l.s4 1983009808
        %v4568 = vunpack.c.0.s8 %v4567
        %v4569 = vlaneseq
        %v4570 = vshrl.u32 %v4569, 7
        %v4571 = vsub.s32 %v4568, %v4570
        %v4572 = vrot.slane %v4565, %v4571
        %v4573 = vcombine.low %v4546, %v4548
        %v4575 = vunpack.c.l.s4 1983009808
        %v4576 = vunpack.c.0.s8 %v4575
        %v4577 = vlaneseq
        %v4578 = vshrl.u32 %v4577, 7
        %v4579 = vsub.s32 %v4576, %v4578
        %v4580 = vrot.slane %v4573, %v4579
        %v4581 = vcombine.low %v4556, %v4564
        %v4583 = vunpack.c.l.s4 1934713408
        %v4584 = vunpack.c.0.s8 %v4583
        %v4585 = vlaneseq
        %v4586 = vshrl.u32 %v4585, 7
        %v4587 = vsub.s32 %v4584, %v4586
        %v4588 = vrot.slane %v4581, %v4587
        %v4589 = vcombine.low %v4572, %v4580
        %v4591 = vunpack.c.l.s4 1934713408
        %v4592 = vunpack.c.0.s8 %v4591
        %v4593 = vlaneseq
        %v4594 = vshrl.u32 %v4593, 7
        %v4595 = vsub.s32 %v4592, %v4594
        %v4596 = vrot.slane %v4589, %v4595
        %v4597 = vcombine.low %v4588, %v4596
        %v4598 = vcombine.high %v4588, %v4596
        %4600 = vrot.lane.b32.xlu0 %v4598, 2
        %v4601 = vpop.permute.xlu0 %4600
        %vm4603 = vcmask 15360
        %v4604 = vsel %vm4603, %v4597, %v4601
        %v4605 = vpack.c.bf16 %v4604, %v4604
        %v4607 = vsel %vm2113, %v4605, 0
        %vm4609 = vcmask 1041408
        %v4611 = vsel %vm4609, %v1953, 0
        %4613 = vmatprep.subr.bf16.mxu0 0
        %4614 = vmatpush1.bf16.msra.mxu0 %v4611
        %4615 = vmatprep.subr.bf16.mxu0 0
        %4616 = vmatpush1.bf16.msra.mxu0 0
        %4617 = vmatprep.subr.bf16.mxu0 0
        %4618 = vmatpush1.bf16.msra.mxu0 0
        %4619 = vmatprep.subr.bf16.mxu0 0
        %4620 = vmatpush1.bf16.msra.mxu0 0
        %4621 = vmatprep.subr.bf16.mxu0 0
        %4622 = vmatpush1.bf16.msra.mxu0 0
        %4623 = vmatprep.subr.bf16.mxu0 0
        %4624 = vmatpush1.bf16.msra.mxu0 0
        %4625 = vmatprep.subr.bf16.mxu0 0
        %4626 = vmatpush1.bf16.msra.mxu0 0
        %4627 = vmatprep.subr.bf16.mxu0 0
        %4628 = vmatpush1.bf16.msra.mxu0 0
        %4629 = vmatprep.subr.bf16.mxu0 0
        %4630 = vmatpush1.bf16.msra.mxu0 0
        %4631 = vmatprep.subr.bf16.mxu0 0
        %4632 = vmatpush1.bf16.msra.mxu0 0
        %4633 = vmatprep.subr.bf16.mxu0 0
        %4634 = vmatpush1.bf16.msra.mxu0 0
        %4635 = vmatprep.subr.bf16.mxu0 0
        %4636 = vmatpush1.bf16.msra.mxu0 0
        %4637 = vmatprep.subr.bf16.mxu0 0
        %4638 = vmatpush1.bf16.msra.mxu0 0
        %4639 = vmatprep.subr.bf16.mxu0 0
        %4640 = vmatpush1.bf16.msra.mxu0 0
        %4641 = vmatprep.subr.bf16.mxu0 0
        %4642 = vmatpush1.bf16.msra.mxu0 0
        %4643 = vmatprep.subr.bf16.mxu0 0
        %4644 = vmatpush1.bf16.msra.mxu0 0
        %4645 = vmatprep.mubr.bf16.mxu0 0
        %4646 = vmatmul.mubr.bf16.gmra.mrb[0].mxu0 %v4607
        %v4647 = vpop.f32.mrb[0].mxu0
        %v4648 = vadd.f32 0.0, %v4647
        %v4649 = vpop.f32.mrb[0].mxu0
        %v4650 = vpop.f32.mrb[0].mxu0
        %v4651 = vpop.f32.mrb[0].mxu0
        %4652 = vdwg.mxu0
        %v4654 = vsel %vm2106, %v2650, 0
        %4656 = vmatprep.subr.bf16.mxu0 0
        %4657 = vmatpush1.bf16.msra.mxu0 %v1952
        %4658 = vmatprep.subr.bf16.mxu0 0
        %4659 = vmatpush1.bf16.msra.mxu0 0
        %4660 = vmatprep.subr.bf16.mxu0 0
        %4661 = vmatpush1.bf16.msra.mxu0 0
        %4662 = vmatprep.subr.bf16.mxu0 0
        %4663 = vmatpush1.bf16.msra.mxu0 0
        %4664 = vmatprep.subr.bf16.mxu0 0
        %4665 = vmatpush1.bf16.msra.mxu0 0
        %4666 = vmatprep.subr.bf16.mxu0 0
        %4667 = vmatpush1.bf16.msra.mxu0 0
        %4668 = vmatprep.subr.bf16.mxu0 0
        %4669 = vmatpush1.bf16.msra.mxu0 0
        %4670 = vmatprep.subr.bf16.mxu0 0
        %4671 = vmatpush1.bf16.msra.mxu0 0
        %4672 = vmatprep.subr.bf16.mxu0 0
        %4673 = vmatpush1.bf16.msra.mxu0 0
        %4674 = vmatprep.subr.bf16.mxu0 0
        %4675 = vmatpush1.bf16.msra.mxu0 0
        %4676 = vmatprep.subr.bf16.mxu0 0
        %4677 = vmatpush1.bf16.msra.mxu0 0
        %4678 = vmatprep.subr.bf16.mxu0 0
        %4679 = vmatpush1.bf16.msra.mxu0 0
        %4680 = vmatprep.subr.bf16.mxu0 0
        %4681 = vmatpush1.bf16.msra.mxu0 0
        %4682 = vmatprep.subr.bf16.mxu0 0
        %4683 = vmatpush1.bf16.msra.mxu0 0
        %4684 = vmatprep.subr.bf16.mxu0 0
        %4685 = vmatpush1.bf16.msra.mxu0 0
        %4686 = vmatprep.subr.bf16.mxu0 0
        %4687 = vmatpush1.bf16.msra.mxu0 0
        %4688 = vmatprep.mubr.bf16.mxu0 0
        %4689 = vmatmul.mubr.bf16.gmra.mrb[0].mxu0 %v4654
        %v4690 = vpop.f32.mrb[0].mxu0
        %v4691 = vadd.f32 %v4648, %v4690
        %v4692 = vpop.f32.mrb[0].mxu0
        %v4693 = vpop.f32.mrb[0].mxu0
        %v4694 = vpop.f32.mrb[0].mxu0
        %4695 = vdwg.mxu0
        %4696 = vset.pattern.permute.xlu0 12
        %4697 = vperm.xlu0 %4696, %v2105
        %v4698 = vpop.permute.xlu0 %4697
        %vm4699 = vcmp.eq.s32.totalorder %v2149, %v4698
        %4700 = vset.pattern.permute.xlu0 12
        %4701 = vperm.xlu0 %4700, %v2155
        %v4702 = vpop.permute.xlu0 %4701
        %v4704 = vsel %vm4699, %v4702, 0.0
        %4705 = vset.pattern.permute.xlu0 12
        %4706 = vperm.xlu0 %4705, %v2162
        %v4707 = vpop.permute.xlu0 %4706
        %vm4708 = vcmp.eq.s32.totalorder %v2149, %v4707
        %4709 = vset.pattern.permute.xlu0 12
        %4710 = vperm.xlu0 %4709, %v2104
        %v4711 = vpop.permute.xlu0 %4710
        %v4713 = vsel %vm4708, %v4711, 0.0
        %v4714 = vadd.f32 %v4704, %v4713
        %4715 = vset.pattern.permute.xlu0 13
        %4716 = vperm.xlu0 %4715, %v2105
        %v4717 = vpop.permute.xlu0 %4716
        %vm4718 = vcmp.eq.s32.totalorder %v2149, %v4717
        %4719 = vset.pattern.permute.xlu0 13
        %4720 = vperm.xlu0 %4719, %v2155
        %v4721 = vpop.permute.xlu0 %4720
        %v4723 = vsel %vm4718, %v4721, 0.0
        %4724 = vset.pattern.permute.xlu0 13
        %4725 = vperm.xlu0 %4724, %v2162
        %v4726 = vpop.permute.xlu0 %4725
        %vm4727 = vcmp.eq.s32.totalorder %v2149, %v4726
        %4728 = vset.pattern.permute.xlu0 13
        %4729 = vperm.xlu0 %4728, %v2104
        %v4730 = vpop.permute.xlu0 %4729
        %v4732 = vsel %vm4727, %v4730, 0.0
        %v4733 = vadd.f32 %v4723, %v4732
        %4734 = vset.pattern.permute.xlu0 6
        %4735 = vperm.xlu0 %4734, %v2651
        %v4736 = vpop.permute.xlu0 %4735
        %v4738 = vmul.f32 %v4733, %v4736
        %v4739 = vlaneseq
        %v4740 = vshrl.u32 %v4739, 7
        %v4741 = vsub.s32 0, %v4740
        %v4742 = vrot.slane %v4738, %v4741
        %4744 = vbcast.lane.b32.xlu0 %v4742, 256
        %v4745 = vpop.permute.xlu0 %4744
        %v4746 = vlaneseq
        %v4747 = vshrl.u32 %v4746, 7
        %v4748 = vsub.s32 1, %v4747
        %v4749 = vrot.slane %v4738, %v4748
        %4751 = vbcast.lane.b32.xlu0 %v4749, 256
        %v4752 = vpop.permute.xlu0 %4751
        %v4753 = vlaneseq
        %v4754 = vshrl.u32 %v4753, 7
        %v4755 = vsub.s32 2, %v4754
        %v4756 = vrot.slane %v4738, %v4755
        %4758 = vbcast.lane.b32.xlu0 %v4756, 256
        %v4759 = vpop.permute.xlu0 %4758
        %v4760 = vlaneseq
        %v4761 = vshrl.u32 %v4760, 7
        %v4762 = vsub.s32 3, %v4761
        %v4763 = vrot.slane %v4738, %v4762
        %4765 = vbcast.lane.b32.xlu0 %v4763, 256
        %v4766 = vpop.permute.xlu0 %4765
        %v4767 = vlaneseq
        %v4768 = vshrl.u32 %v4767, 7
        %v4769 = vsub.s32 4, %v4768
        %v4770 = vrot.slane %v4738, %v4769
        %4772 = vbcast.lane.b32.xlu0 %v4770, 256
        %v4773 = vpop.permute.xlu0 %4772
        %v4774 = vlaneseq
        %v4775 = vshrl.u32 %v4774, 7
        %v4776 = vsub.s32 5, %v4775
        %v4777 = vrot.slane %v4738, %v4776
        %4779 = vbcast.lane.b32.xlu0 %v4777, 256
        %v4780 = vpop.permute.xlu0 %4779
        %v4781 = vlaneseq
        %v4782 = vshrl.u32 %v4781, 7
        %v4783 = vsub.s32 6, %v4782
        %v4784 = vrot.slane %v4738, %v4783
        %4786 = vbcast.lane.b32.xlu0 %v4784, 256
        %v4787 = vpop.permute.xlu0 %4786
        %v4788 = vlaneseq
        %v4789 = vshrl.u32 %v4788, 7
        %v4790 = vsub.s32 7, %v4789
        %v4791 = vrot.slane %v4738, %v4790
        %4793 = vbcast.lane.b32.xlu0 %v4791, 256
        %v4794 = vpop.permute.xlu0 %4793
        %v4796 = vcombine.high %v4714, %v4714
        %v4798 = vunpack.c.l.s4 1966171168
        %v4799 = vunpack.c.0.s8 %v4798
        %v4800 = vlaneseq
        %v4801 = vshrl.u32 %v4800, 7
        %v4802 = vsub.s32 %v4799, %v4801
        %v4803 = vrot.slane %v4714, %v4802
        %v4805 = vunpack.c.l.s4 1966171168
        %v4806 = vunpack.c.0.s8 %v4805
        %v4807 = vlaneseq
        %v4808 = vshrl.u32 %v4807, 7
        %v4809 = vsub.s32 %v4806, %v4808
        %v4810 = vrot.slane %v4796, %v4809
        %v4811 = vcombine.high %v4803, %v4803
        %v4812 = vcombine.high %v4810, %v4810
        %v4814 = vunpack.c.l.s4 1966171168
        %v4815 = vunpack.c.0.s8 %v4814
        %v4816 = vlaneseq
        %v4817 = vshrl.u32 %v4816, 7
        %v4818 = vsub.s32 %v4815, %v4817
        %v4819 = vrot.slane %v4803, %v4818
        %v4821 = vunpack.c.l.s4 1966171168
        %v4822 = vunpack.c.0.s8 %v4821
        %v4823 = vlaneseq
        %v4824 = vshrl.u32 %v4823, 7
        %v4825 = vsub.s32 %v4822, %v4824
        %v4826 = vrot.slane %v4810, %v4825
        %v4828 = vunpack.c.l.s4 1966171168
        %v4829 = vunpack.c.0.s8 %v4828
        %v4830 = vlaneseq
        %v4831 = vshrl.u32 %v4830, 7
        %v4832 = vsub.s32 %v4829, %v4831
        %v4833 = vrot.slane %v4811, %v4832
        %v4835 = vunpack.c.l.s4 1966171168
        %v4836 = vunpack.c.0.s8 %v4835
        %v4837 = vlaneseq
        %v4838 = vshrl.u32 %v4837, 7
        %v4839 = vsub.s32 %v4836, %v4838
        %v4840 = vrot.slane %v4812, %v4839
        %v4841 = vcombine.high %v4819, %v4819
        %v4842 = vcombine.high %v4826, %v4826
        %v4843 = vcombine.high %v4833, %v4833
        %v4844 = vcombine.high %v4840, %v4840
        %v4845 = vlaneseq
        %v4846 = vshrl.u32 %v4845, 7
        %v4847 = vsub.s32 0, %v4846
        %v4848 = vrot.slane %v4819, %v4847
        %v4849 = vlaneseq
        %v4850 = vshrl.u32 %v4849, 7
        %v4851 = vsub.s32 0, %v4850
        %v4852 = vrot.slane %v4833, %v4851
        %v4853 = vlaneseq
        %v4854 = vshrl.u32 %v4853, 7
        %v4855 = vsub.s32 0, %v4854
        %v4856 = vrot.slane %v4841, %v4855
        %v4857 = vlaneseq
        %v4858 = vshrl.u32 %v4857, 7
        %v4859 = vsub.s32 0, %v4858
        %v4860 = vrot.slane %v4843, %v4859
        %v4861 = vlaneseq
        %v4862 = vshrl.u32 %v4861, 7
        %v4863 = vsub.s32 0, %v4862
        %v4864 = vrot.slane %v4826, %v4863
        %v4865 = vlaneseq
        %v4866 = vshrl.u32 %v4865, 7
        %v4867 = vsub.s32 0, %v4866
        %v4868 = vrot.slane %v4840, %v4867
        %v4869 = vlaneseq
        %v4870 = vshrl.u32 %v4869, 7
        %v4871 = vsub.s32 0, %v4870
        %v4872 = vrot.slane %v4842, %v4871
        %v4873 = vlaneseq
        %v4874 = vshrl.u32 %v4873, 7
        %v4875 = vsub.s32 0, %v4874
        %v4876 = vrot.slane %v4844, %v4875
        %v4885 = vmul.f32 %v4745, %v4848
        %v4886 = vmul.f32 %v4752, %v4852
        %v4887 = vmul.f32 %v4759, %v4856
        %v4888 = vmul.f32 %v4766, %v4860
        %v4889 = vmul.f32 %v4773, %v4864
        %v4890 = vmul.f32 %v4780, %v4868
        %v4891 = vmul.f32 %v4787, %v4872
        %v4892 = vmul.f32 %v4794, %v4876
        %v4893 = vadd.f32 %v4885, 0.0
        %v4894 = vadd.f32 %v4886, 0.0
        %v4895 = vadd.f32 %v4887, 0.0
        %v4896 = vadd.f32 %v4888, 0.0
        %v4897 = vadd.f32 %v4889, 0.0
        %v4898 = vadd.f32 %v4890, 0.0
        %v4899 = vadd.f32 %v4891, 0.0
        %v4900 = vadd.f32 %v4892, 0.0
        %4901 = vset.pattern.permute.xlu0 14
        %4902 = vperm.xlu0 %4901, %v2105
        %v4903 = vpop.permute.xlu0 %4902
        %vm4904 = vcmp.eq.s32.totalorder %v2149, %v4903
        %4905 = vset.pattern.permute.xlu0 14
        %4906 = vperm.xlu0 %4905, %v2155
        %v4907 = vpop.permute.xlu0 %4906
        %v4909 = vsel %vm4904, %v4907, 0.0
        %4910 = vset.pattern.permute.xlu0 14
        %4911 = vperm.xlu0 %4910, %v2162
        %v4912 = vpop.permute.xlu0 %4911
        %vm4913 = vcmp.eq.s32.totalorder %v2149, %v4912
        %4914 = vset.pattern.permute.xlu0 14
        %4915 = vperm.xlu0 %4914, %v2104
        %v4916 = vpop.permute.xlu0 %4915
        %v4918 = vsel %vm4913, %v4916, 0.0
        %v4919 = vadd.f32 %v4909, %v4918
        %4920 = vset.pattern.permute.xlu0 15
        %4921 = vperm.xlu0 %4920, %v2105
        %v4922 = vpop.permute.xlu0 %4921
        %vm4923 = vcmp.eq.s32.totalorder %v2149, %v4922
        %4924 = vset.pattern.permute.xlu0 15
        %4925 = vperm.xlu0 %4924, %v2155
        %v4926 = vpop.permute.xlu0 %4925
        %v4928 = vsel %vm4923, %v4926, 0.0
        %4929 = vset.pattern.permute.xlu0 15
        %4930 = vperm.xlu0 %4929, %v2162
        %v4931 = vpop.permute.xlu0 %4930
        %vm4932 = vcmp.eq.s32.totalorder %v2149, %v4931
        %4933 = vset.pattern.permute.xlu0 15
        %4934 = vperm.xlu0 %4933, %v2104
        %v4935 = vpop.permute.xlu0 %4934
        %v4937 = vsel %vm4932, %v4935, 0.0
        %v4938 = vadd.f32 %v4928, %v4937
        %4939 = vset.pattern.permute.xlu0 7
        %4940 = vperm.xlu0 %4939, %v2651
        %v4941 = vpop.permute.xlu0 %4940
        %v4943 = vmul.f32 %v4938, %v4941
        %v4944 = vlaneseq
        %v4945 = vshrl.u32 %v4944, 7
        %v4946 = vsub.s32 0, %v4945
        %v4947 = vrot.slane %v4943, %v4946
        %4949 = vbcast.lane.b32.xlu0 %v4947, 256
        %v4950 = vpop.permute.xlu0 %4949
        %v4951 = vlaneseq
        %v4952 = vshrl.u32 %v4951, 7
        %v4953 = vsub.s32 1, %v4952
        %v4954 = vrot.slane %v4943, %v4953
        %4956 = vbcast.lane.b32.xlu0 %v4954, 256
        %v4957 = vpop.permute.xlu0 %4956
        %v4958 = vlaneseq
        %v4959 = vshrl.u32 %v4958, 7
        %v4960 = vsub.s32 2, %v4959
        %v4961 = vrot.slane %v4943, %v4960
        %4963 = vbcast.lane.b32.xlu0 %v4961, 256
        %v4964 = vpop.permute.xlu0 %4963
        %v4965 = vlaneseq
        %v4966 = vshrl.u32 %v4965, 7
        %v4967 = vsub.s32 3, %v4966
        %v4968 = vrot.slane %v4943, %v4967
        %4970 = vbcast.lane.b32.xlu0 %v4968, 256
        %v4971 = vpop.permute.xlu0 %4970
        %v4972 = vlaneseq
        %v4973 = vshrl.u32 %v4972, 7
        %v4974 = vsub.s32 4, %v4973
        %v4975 = vrot.slane %v4943, %v4974
        %4977 = vbcast.lane.b32.xlu0 %v4975, 256
        %v4978 = vpop.permute.xlu0 %4977
        %v4979 = vlaneseq
        %v4980 = vshrl.u32 %v4979, 7
        %v4981 = vsub.s32 5, %v4980
        %v4982 = vrot.slane %v4943, %v4981
        %4984 = vbcast.lane.b32.xlu0 %v4982, 256
        %v4985 = vpop.permute.xlu0 %4984
        %v4986 = vlaneseq
        %v4987 = vshrl.u32 %v4986, 7
        %v4988 = vsub.s32 6, %v4987
        %v4989 = vrot.slane %v4943, %v4988
        %4991 = vbcast.lane.b32.xlu0 %v4989, 256
        %v4992 = vpop.permute.xlu0 %4991
        %v4993 = vlaneseq
        %v4994 = vshrl.u32 %v4993, 7
        %v4995 = vsub.s32 7, %v4994
        %v4996 = vrot.slane %v4943, %v4995
        %4998 = vbcast.lane.b32.xlu0 %v4996, 256
        %v4999 = vpop.permute.xlu0 %4998
        %v5001 = vcombine.high %v4919, %v4919
        %v5003 = vunpack.c.l.s4 1966171168
        %v5004 = vunpack.c.0.s8 %v5003
        %v5005 = vlaneseq
        %v5006 = vshrl.u32 %v5005, 7
        %v5007 = vsub.s32 %v5004, %v5006
        %v5008 = vrot.slane %v4919, %v5007
        %v5010 = vunpack.c.l.s4 1966171168
        %v5011 = vunpack.c.0.s8 %v5010
        %v5012 = vlaneseq
        %v5013 = vshrl.u32 %v5012, 7
        %v5014 = vsub.s32 %v5011, %v5013
        %v5015 = vrot.slane %v5001, %v5014
        %v5016 = vcombine.high %v5008, %v5008
        %v5017 = vcombine.high %v5015, %v5015
        %v5019 = vunpack.c.l.s4 1966171168
        %v5020 = vunpack.c.0.s8 %v5019
        %v5021 = vlaneseq
        %v5022 = vshrl.u32 %v5021, 7
        %v5023 = vsub.s32 %v5020, %v5022
        %v5024 = vrot.slane %v5008, %v5023
        %v5026 = vunpack.c.l.s4 1966171168
        %v5027 = vunpack.c.0.s8 %v5026
        %v5028 = vlaneseq
        %v5029 = vshrl.u32 %v5028, 7
        %v5030 = vsub.s32 %v5027, %v5029
        %v5031 = vrot.slane %v5015, %v5030
        %v5033 = vunpack.c.l.s4 1966171168
        %v5034 = vunpack.c.0.s8 %v5033
        %v5035 = vlaneseq
        %v5036 = vshrl.u32 %v5035, 7
        %v5037 = vsub.s32 %v5034, %v5036
        %v5038 = vrot.slane %v5016, %v5037
        %v5040 = vunpack.c.l.s4 1966171168
        %v5041 = vunpack.c.0.s8 %v5040
        %v5042 = vlaneseq
        %v5043 = vshrl.u32 %v5042, 7
        %v5044 = vsub.s32 %v5041, %v5043
        %v5045 = vrot.slane %v5017, %v5044
        %v5046 = vcombine.high %v5024, %v5024
        %v5047 = vcombine.high %v5031, %v5031
        %v5048 = vcombine.high %v5038, %v5038
        %v5049 = vcombine.high %v5045, %v5045
        %v5050 = vlaneseq
        %v5051 = vshrl.u32 %v5050, 7
        %v5052 = vsub.s32 0, %v5051
        %v5053 = vrot.slane %v5024, %v5052
        %v5054 = vlaneseq
        %v5055 = vshrl.u32 %v5054, 7
        %v5056 = vsub.s32 0, %v5055
        %v5057 = vrot.slane %v5038, %v5056
        %v5058 = vlaneseq
        %v5059 = vshrl.u32 %v5058, 7
        %v5060 = vsub.s32 0, %v5059
        %v5061 = vrot.slane %v5046, %v5060
        %v5062 = vlaneseq
        %v5063 = vshrl.u32 %v5062, 7
        %v5064 = vsub.s32 0, %v5063
        %v5065 = vrot.slane %v5048, %v5064
        %v5066 = vlaneseq
        %v5067 = vshrl.u32 %v5066, 7
        %v5068 = vsub.s32 0, %v5067
        %v5069 = vrot.slane %v5031, %v5068
        %v5070 = vlaneseq
        %v5071 = vshrl.u32 %v5070, 7
        %v5072 = vsub.s32 0, %v5071
        %v5073 = vrot.slane %v5045, %v5072
        %v5074 = vlaneseq
        %v5075 = vshrl.u32 %v5074, 7
        %v5076 = vsub.s32 0, %v5075
        %v5077 = vrot.slane %v5047, %v5076
        %v5078 = vlaneseq
        %v5079 = vshrl.u32 %v5078, 7
        %v5080 = vsub.s32 0, %v5079
        %v5081 = vrot.slane %v5049, %v5080
        %v5090 = vmul.f32 %v4950, %v5053
        %v5091 = vmul.f32 %v4957, %v5057
        %v5092 = vmul.f32 %v4964, %v5061
        %v5093 = vmul.f32 %v4971, %v5065
        %v5094 = vmul.f32 %v4978, %v5069
        %v5095 = vmul.f32 %v4985, %v5073
        %v5096 = vmul.f32 %v4992, %v5077
        %v5097 = vmul.f32 %v4999, %v5081
        %v5098 = vadd.f32 %v4893, %v5090
        %v5099 = vadd.f32 %v4894, %v5091
        %v5100 = vadd.f32 %v4895, %v5092
        %v5101 = vadd.f32 %v4896, %v5093
        %v5102 = vadd.f32 %v4897, %v5094
        %v5103 = vadd.f32 %v4898, %v5095
        %v5104 = vadd.f32 %v4899, %v5096
        %v5105 = vadd.f32 %v4900, %v5097
        %v5106 = vcombine.low %v5098, %v5100
        %v5108 = vunpack.c.l.s4 1983009808
        %v5109 = vunpack.c.0.s8 %v5108
        %v5110 = vlaneseq
        %v5111 = vshrl.u32 %v5110, 7
        %v5112 = vsub.s32 %v5109, %v5111
        %v5113 = vrot.slane %v5106, %v5112
        %v5114 = vcombine.low %v5099, %v5101
        %v5116 = vunpack.c.l.s4 1983009808
        %v5117 = vunpack.c.0.s8 %v5116
        %v5118 = vlaneseq
        %v5119 = vshrl.u32 %v5118, 7
        %v5120 = vsub.s32 %v5117, %v5119
        %v5121 = vrot.slane %v5114, %v5120
        %v5122 = vcombine.low %v5102, %v5104
        %v5124 = vunpack.c.l.s4 1983009808
        %v5125 = vunpack.c.0.s8 %v5124
        %v5126 = vlaneseq
        %v5127 = vshrl.u32 %v5126, 7
        %v5128 = vsub.s32 %v5125, %v5127
        %v5129 = vrot.slane %v5122, %v5128
        %v5130 = vcombine.low %v5103, %v5105
        %v5132 = vunpack.c.l.s4 1983009808
        %v5133 = vunpack.c.0.s8 %v5132
        %v5134 = vlaneseq
        %v5135 = vshrl.u32 %v5134, 7
        %v5136 = vsub.s32 %v5133, %v5135
        %v5137 = vrot.slane %v5130, %v5136
        %v5138 = vcombine.low %v5113, %v5121
        %v5140 = vunpack.c.l.s4 1934713408
        %v5141 = vunpack.c.0.s8 %v5140
        %v5142 = vlaneseq
        %v5143 = vshrl.u32 %v5142, 7
        %v5144 = vsub.s32 %v5141, %v5143
        %v5145 = vrot.slane %v5138, %v5144
        %v5146 = vcombine.low %v5129, %v5137
        %v5148 = vunpack.c.l.s4 1934713408
        %v5149 = vunpack.c.0.s8 %v5148
        %v5150 = vlaneseq
        %v5151 = vshrl.u32 %v5150, 7
        %v5152 = vsub.s32 %v5149, %v5151
        %v5153 = vrot.slane %v5146, %v5152
        %v5154 = vcombine.low %v5145, %v5153
        %v5155 = vcombine.high %v5145, %v5153
        %5157 = vrot.lane.b32.xlu0 %v5155, 2
        %v5158 = vpop.permute.xlu0 %5157
        %v5160 = vsel %vm4603, %v5154, %v5158
        %v5161 = vpack.c.bf16 %v5160, %v5160
        %5163 = vrot.lane.b32.xlu0 %v1953, 120
        %v5164 = vpop.permute.xlu0 %5163
        %v5166 = vsel %vm2113, %v5161, 0
        %v5169 = vsel %vm4609, %v5164, 0
        %5171 = vmatprep.subr.bf16.mxu0 0
        %5172 = vmatpush1.bf16.msra.mxu0 %v5169
        %5173 = vmatprep.subr.bf16.mxu0 0
        %5174 = vmatpush1.bf16.msra.mxu0 0
        %5175 = vmatprep.subr.bf16.mxu0 0
        %5176 = vmatpush1.bf16.msra.mxu0 0
        %5177 = vmatprep.subr.bf16.mxu0 0
        %5178 = vmatpush1.bf16.msra.mxu0 0
        %5179 = vmatprep.subr.bf16.mxu0 0
        %5180 = vmatpush1.bf16.msra.mxu0 0
        %5181 = vmatprep.subr.bf16.mxu0 0
        %5182 = vmatpush1.bf16.msra.mxu0 0
        %5183 = vmatprep.subr.bf16.mxu0 0
        %5184 = vmatpush1.bf16.msra.mxu0 0
        %5185 = vmatprep.subr.bf16.mxu0 0
        %5186 = vmatpush1.bf16.msra.mxu0 0
        %5187 = vmatprep.subr.bf16.mxu0 0
        %5188 = vmatpush1.bf16.msra.mxu0 0
        %5189 = vmatprep.subr.bf16.mxu0 0
        %5190 = vmatpush1.bf16.msra.mxu0 0
        %5191 = vmatprep.subr.bf16.mxu0 0
        %5192 = vmatpush1.bf16.msra.mxu0 0
        %5193 = vmatprep.subr.bf16.mxu0 0
        %5194 = vmatpush1.bf16.msra.mxu0 0
        %5195 = vmatprep.subr.bf16.mxu0 0
        %5196 = vmatpush1.bf16.msra.mxu0 0
        %5197 = vmatprep.subr.bf16.mxu0 0
        %5198 = vmatpush1.bf16.msra.mxu0 0
        %5199 = vmatprep.subr.bf16.mxu0 0
        %5200 = vmatpush1.bf16.msra.mxu0 0
        %5201 = vmatprep.subr.bf16.mxu0 0
        %5202 = vmatpush1.bf16.msra.mxu0 0
        %5203 = vmatprep.mubr.bf16.mxu0 0
        %5204 = vmatmul.mubr.bf16.gmra.mrb[0].mxu0 %v5166
        %v5205 = vpop.f32.mrb[0].mxu0
        %v5206 = vadd.f32 0.0, %v5205
        %v5207 = vpop.f32.mrb[0].mxu0
        %v5208 = vpop.f32.mrb[0].mxu0
        %v5209 = vpop.f32.mrb[0].mxu0
        %5210 = vdwg.mxu0
        %5212 = vrot.lane.b32.xlu0 %v1952, 120
        %v5213 = vpop.permute.xlu0 %5212
        %v5216 = vsel %vm2106, %v3146, 0
        %5218 = vmatprep.subr.bf16.mxu0 0
        %5219 = vmatpush1.bf16.msra.mxu0 %v5213
        %5220 = vmatprep.subr.bf16.mxu0 0
        %5221 = vmatpush1.bf16.msra.mxu0 0
        %5222 = vmatprep.subr.bf16.mxu0 0
        %5223 = vmatpush1.bf16.msra.mxu0 0
        %5224 = vmatprep.subr.bf16.mxu0 0
        %5225 = vmatpush1.bf16.msra.mxu0 0
        %5226 = vmatprep.subr.bf16.mxu0 0
        %5227 = vmatpush1.bf16.msra.mxu0 0
        %5228 = vmatprep.subr.bf16.mxu0 0
        %5229 = vmatpush1.bf16.msra.mxu0 0
        %5230 = vmatprep.subr.bf16.mxu0 0
        %5231 = vmatpush1.bf16.msra.mxu0 0
        %5232 = vmatprep.subr.bf16.mxu0 0
        %5233 = vmatpush1.bf16.msra.mxu0 0
        %5234 = vmatprep.subr.bf16.mxu0 0
        %5235 = vmatpush1.bf16.msra.mxu0 0
        %5236 = vmatprep.subr.bf16.mxu0 0
        %5237 = vmatpush1.bf16.msra.mxu0 0
        %5238 = vmatprep.subr.bf16.mxu0 0
        %5239 = vmatpush1.bf16.msra.mxu0 0
        %5240 = vmatprep.subr.bf16.mxu0 0
        %5241 = vmatpush1.bf16.msra.mxu0 0
        %5242 = vmatprep.subr.bf16.mxu0 0
        %5243 = vmatpush1.bf16.msra.mxu0 0
        %5244 = vmatprep.subr.bf16.mxu0 0
        %5245 = vmatpush1.bf16.msra.mxu0 0
        %5246 = vmatprep.subr.bf16.mxu0 0
        %5247 = vmatpush1.bf16.msra.mxu0 0
        %5248 = vmatprep.subr.bf16.mxu0 0
        %5249 = vmatpush1.bf16.msra.mxu0 0
        %5250 = vmatprep.mubr.bf16.mxu0 0
        %5251 = vmatmul.mubr.bf16.gmra.mrb[0].mxu0 %v5216
        %v5252 = vpop.f32.mrb[0].mxu0
        %v5253 = vadd.f32 %v5206, %v5252
        %v5254 = vpop.f32.mrb[0].mxu0
        %v5255 = vpop.f32.mrb[0].mxu0
        %v5256 = vpop.f32.mrb[0].mxu0
        %5257 = vdwg.mxu0
        %5258 = vset.pattern.permute.xlu0 20
        %5259 = vperm.xlu0 %5258, %v2105
        %v5260 = vpop.permute.xlu0 %5259
        %vm5261 = vcmp.eq.s32.totalorder %v2149, %v5260
        %5262 = vset.pattern.permute.xlu0 20
        %5263 = vperm.xlu0 %5262, %v2155
        %v5264 = vpop.permute.xlu0 %5263
        %v5266 = vsel %vm5261, %v5264, 0.0
        %5267 = vset.pattern.permute.xlu0 20
        %5268 = vperm.xlu0 %5267, %v2162
        %v5269 = vpop.permute.xlu0 %5268
        %vm5270 = vcmp.eq.s32.totalorder %v2149, %v5269
        %5271 = vset.pattern.permute.xlu0 20
        %5272 = vperm.xlu0 %5271, %v2104
        %v5273 = vpop.permute.xlu0 %5272
        %v5275 = vsel %vm5270, %v5273, 0.0
        %v5276 = vadd.f32 %v5266, %v5275
        %5277 = vset.pattern.permute.xlu0 21
        %5278 = vperm.xlu0 %5277, %v2105
        %v5279 = vpop.permute.xlu0 %5278
        %vm5280 = vcmp.eq.s32.totalorder %v2149, %v5279
        %5281 = vset.pattern.permute.xlu0 21
        %5282 = vperm.xlu0 %5281, %v2155
        %v5283 = vpop.permute.xlu0 %5282
        %v5285 = vsel %vm5280, %v5283, 0.0
        %5286 = vset.pattern.permute.xlu0 21
        %5287 = vperm.xlu0 %5286, %v2162
        %v5288 = vpop.permute.xlu0 %5287
        %vm5289 = vcmp.eq.s32.totalorder %v2149, %v5288
        %5290 = vset.pattern.permute.xlu0 21
        %5291 = vperm.xlu0 %5290, %v2104
        %v5292 = vpop.permute.xlu0 %5291
        %v5294 = vsel %vm5289, %v5292, 0.0
        %v5295 = vadd.f32 %v5285, %v5294
        %5296 = vset.pattern.permute.xlu0 10
        %5297 = vperm.xlu0 %5296, %v3147
        %v5298 = vpop.permute.xlu0 %5297
        %v5300 = vmul.f32 %v5295, %v5298
        %v5301 = vlaneseq
        %v5302 = vshrl.u32 %v5301, 7
        %v5303 = vsub.s32 0, %v5302
        %v5304 = vrot.slane %v5300, %v5303
        %5306 = vbcast.lane.b32.xlu0 %v5304, 256
        %v5307 = vpop.permute.xlu0 %5306
        %v5308 = vlaneseq
        %v5309 = vshrl.u32 %v5308, 7
        %v5310 = vsub.s32 1, %v5309
        %v5311 = vrot.slane %v5300, %v5310
        %5313 = vbcast.lane.b32.xlu0 %v5311, 256
        %v5314 = vpop.permute.xlu0 %5313
        %v5315 = vlaneseq
        %v5316 = vshrl.u32 %v5315, 7
        %v5317 = vsub.s32 2, %v5316
        %v5318 = vrot.slane %v5300, %v5317
        %5320 = vbcast.lane.b32.xlu0 %v5318, 256
        %v5321 = vpop.permute.xlu0 %5320
        %v5322 = vlaneseq
        %v5323 = vshrl.u32 %v5322, 7
        %v5324 = vsub.s32 3, %v5323
        %v5325 = vrot.slane %v5300, %v5324
        %5327 = vbcast.lane.b32.xlu0 %v5325, 256
        %v5328 = vpop.permute.xlu0 %5327
        %v5329 = vlaneseq
        %v5330 = vshrl.u32 %v5329, 7
        %v5331 = vsub.s32 4, %v5330
        %v5332 = vrot.slane %v5300, %v5331
        %5334 = vbcast.lane.b32.xlu0 %v5332, 256
        %v5335 = vpop.permute.xlu0 %5334
        %v5336 = vlaneseq
        %v5337 = vshrl.u32 %v5336, 7
        %v5338 = vsub.s32 5, %v5337
        %v5339 = vrot.slane %v5300, %v5338
        %5341 = vbcast.lane.b32.xlu0 %v5339, 256
        %v5342 = vpop.permute.xlu0 %5341
        %v5343 = vlaneseq
        %v5344 = vshrl.u32 %v5343, 7
        %v5345 = vsub.s32 6, %v5344
        %v5346 = vrot.slane %v5300, %v5345
        %5348 = vbcast.lane.b32.xlu0 %v5346, 256
        %v5349 = vpop.permute.xlu0 %5348
        %v5350 = vlaneseq
        %v5351 = vshrl.u32 %v5350, 7
        %v5352 = vsub.s32 7, %v5351
        %v5353 = vrot.slane %v5300, %v5352
        %5355 = vbcast.lane.b32.xlu0 %v5353, 256
        %v5356 = vpop.permute.xlu0 %5355
        %v5358 = vcombine.high %v5276, %v5276
        %v5360 = vunpack.c.l.s4 1966171168
        %v5361 = vunpack.c.0.s8 %v5360
        %v5362 = vlaneseq
        %v5363 = vshrl.u32 %v5362, 7
        %v5364 = vsub.s32 %v5361, %v5363
        %v5365 = vrot.slane %v5276, %v5364
        %v5367 = vunpack.c.l.s4 1966171168
        %v5368 = vunpack.c.0.s8 %v5367
        %v5369 = vlaneseq
        %v5370 = vshrl.u32 %v5369, 7
        %v5371 = vsub.s32 %v5368, %v5370
        %v5372 = vrot.slane %v5358, %v5371
        %v5373 = vcombine.high %v5365, %v5365
        %v5374 = vcombine.high %v5372, %v5372
        %v5376 = vunpack.c.l.s4 1966171168
        %v5377 = vunpack.c.0.s8 %v5376
        %v5378 = vlaneseq
        %v5379 = vshrl.u32 %v5378, 7
        %v5380 = vsub.s32 %v5377, %v5379
        %v5381 = vrot.slane %v5365, %v5380
        %v5383 = vunpack.c.l.s4 1966171168
        %v5384 = vunpack.c.0.s8 %v5383
        %v5385 = vlaneseq
        %v5386 = vshrl.u32 %v5385, 7
        %v5387 = vsub.s32 %v5384, %v5386
        %v5388 = vrot.slane %v5372, %v5387
        %v5390 = vunpack.c.l.s4 1966171168
        %v5391 = vunpack.c.0.s8 %v5390
        %v5392 = vlaneseq
        %v5393 = vshrl.u32 %v5392, 7
        %v5394 = vsub.s32 %v5391, %v5393
        %v5395 = vrot.slane %v5373, %v5394
        %v5397 = vunpack.c.l.s4 1966171168
        %v5398 = vunpack.c.0.s8 %v5397
        %v5399 = vlaneseq
        %v5400 = vshrl.u32 %v5399, 7
        %v5401 = vsub.s32 %v5398, %v5400
        %v5402 = vrot.slane %v5374, %v5401
        %v5403 = vcombine.high %v5381, %v5381
        %v5404 = vcombine.high %v5388, %v5388
        %v5405 = vcombine.high %v5395, %v5395
        %v5406 = vcombine.high %v5402, %v5402
        %v5407 = vlaneseq
        %v5408 = vshrl.u32 %v5407, 7
        %v5409 = vsub.s32 0, %v5408
        %v5410 = vrot.slane %v5381, %v5409
        %v5411 = vlaneseq
        %v5412 = vshrl.u32 %v5411, 7
        %v5413 = vsub.s32 0, %v5412
        %v5414 = vrot.slane %v5395, %v5413
        %v5415 = vlaneseq
        %v5416 = vshrl.u32 %v5415, 7
        %v5417 = vsub.s32 0, %v5416
        %v5418 = vrot.slane %v5403, %v5417
        %v5419 = vlaneseq
        %v5420 = vshrl.u32 %v5419, 7
        %v5421 = vsub.s32 0, %v5420
        %v5422 = vrot.slane %v5405, %v5421
        %v5423 = vlaneseq
        %v5424 = vshrl.u32 %v5423, 7
        %v5425 = vsub.s32 0, %v5424
        %v5426 = vrot.slane %v5388, %v5425
        %v5427 = vlaneseq
        %v5428 = vshrl.u32 %v5427, 7
        %v5429 = vsub.s32 0, %v5428
        %v5430 = vrot.slane %v5402, %v5429
        %v5431 = vlaneseq
        %v5432 = vshrl.u32 %v5431, 7
        %v5433 = vsub.s32 0, %v5432
        %v5434 = vrot.slane %v5404, %v5433
        %v5435 = vlaneseq
        %v5436 = vshrl.u32 %v5435, 7
        %v5437 = vsub.s32 0, %v5436
        %v5438 = vrot.slane %v5406, %v5437
        %v5447 = vmul.f32 %v5307, %v5410
        %v5448 = vmul.f32 %v5314, %v5414
        %v5449 = vmul.f32 %v5321, %v5418
        %v5450 = vmul.f32 %v5328, %v5422
        %v5451 = vmul.f32 %v5335, %v5426
        %v5452 = vmul.f32 %v5342, %v5430
        %v5453 = vmul.f32 %v5349, %v5434
        %v5454 = vmul.f32 %v5356, %v5438
        %v5455 = vadd.f32 %v5447, 0.0
        %v5456 = vadd.f32 %v5448, 0.0
        %v5457 = vadd.f32 %v5449, 0.0
        %v5458 = vadd.f32 %v5450, 0.0
        %v5459 = vadd.f32 %v5451, 0.0
        %v5460 = vadd.f32 %v5452, 0.0
        %v5461 = vadd.f32 %v5453, 0.0
        %v5462 = vadd.f32 %v5454, 0.0
        %5463 = vset.pattern.permute.xlu0 22
        %5464 = vperm.xlu0 %5463, %v2105
        %v5465 = vpop.permute.xlu0 %5464
        %vm5466 = vcmp.eq.s32.totalorder %v2149, %v5465
        %5467 = vset.pattern.permute.xlu0 22
        %5468 = vperm.xlu0 %5467, %v2155
        %v5469 = vpop.permute.xlu0 %5468
        %v5471 = vsel %vm5466, %v5469, 0.0
        %5472 = vset.pattern.permute.xlu0 22
        %5473 = vperm.xlu0 %5472, %v2162
        %v5474 = vpop.permute.xlu0 %5473
        %vm5475 = vcmp.eq.s32.totalorder %v2149, %v5474
        %5476 = vset.pattern.permute.xlu0 22
        %5477 = vperm.xlu0 %5476, %v2104
        %v5478 = vpop.permute.xlu0 %5477
        %v5480 = vsel %vm5475, %v5478, 0.0
        %v5481 = vadd.f32 %v5471, %v5480
        %5482 = vset.pattern.permute.xlu0 23
        %5483 = vperm.xlu0 %5482, %v2105
        %v5484 = vpop.permute.xlu0 %5483
        %vm5485 = vcmp.eq.s32.totalorder %v2149, %v5484
        %5486 = vset.pattern.permute.xlu0 23
        %5487 = vperm.xlu0 %5486, %v2155
        %v5488 = vpop.permute.xlu0 %5487
        %v5490 = vsel %vm5485, %v5488, 0.0
        %5491 = vset.pattern.permute.xlu0 23
        %5492 = vperm.xlu0 %5491, %v2162
        %v5493 = vpop.permute.xlu0 %5492
        %vm5494 = vcmp.eq.s32.totalorder %v2149, %v5493
        %5495 = vset.pattern.permute.xlu0 23
        %5496 = vperm.xlu0 %5495, %v2104
        %v5497 = vpop.permute.xlu0 %5496
        %v5499 = vsel %vm5494, %v5497, 0.0
        %v5500 = vadd.f32 %v5490, %v5499
        %5501 = vset.pattern.permute.xlu0 11
        %5502 = vperm.xlu0 %5501, %v3147
        %v5503 = vpop.permute.xlu0 %5502
        %v5505 = vmul.f32 %v5500, %v5503
        %v5506 = vlaneseq
        %v5507 = vshrl.u32 %v5506, 7
        %v5508 = vsub.s32 0, %v5507
        %v5509 = vrot.slane %v5505, %v5508
        %5511 = vbcast.lane.b32.xlu0 %v5509, 256
        %v5512 = vpop.permute.xlu0 %5511
        %v5513 = vlaneseq
        %v5514 = vshrl.u32 %v5513, 7
        %v5515 = vsub.s32 1, %v5514
        %v5516 = vrot.slane %v5505, %v5515
        %5518 = vbcast.lane.b32.xlu0 %v5516, 256
        %v5519 = vpop.permute.xlu0 %5518
        %v5520 = vlaneseq
        %v5521 = vshrl.u32 %v5520, 7
        %v5522 = vsub.s32 2, %v5521
        %v5523 = vrot.slane %v5505, %v5522
        %5525 = vbcast.lane.b32.xlu0 %v5523, 256
        %v5526 = vpop.permute.xlu0 %5525
        %v5527 = vlaneseq
        %v5528 = vshrl.u32 %v5527, 7
        %v5529 = vsub.s32 3, %v5528
        %v5530 = vrot.slane %v5505, %v5529
        %5532 = vbcast.lane.b32.xlu0 %v5530, 256
        %v5533 = vpop.permute.xlu0 %5532
        %v5534 = vlaneseq
        %v5535 = vshrl.u32 %v5534, 7
        %v5536 = vsub.s32 4, %v5535
        %v5537 = vrot.slane %v5505, %v5536
        %5539 = vbcast.lane.b32.xlu0 %v5537, 256
        %v5540 = vpop.permute.xlu0 %5539
        %v5541 = vlaneseq
        %v5542 = vshrl.u32 %v5541, 7
        %v5543 = vsub.s32 5, %v5542
        %v5544 = vrot.slane %v5505, %v5543
        %5546 = vbcast.lane.b32.xlu0 %v5544, 256
        %v5547 = vpop.permute.xlu0 %5546
        %v5548 = vlaneseq
        %v5549 = vshrl.u32 %v5548, 7
        %v5550 = vsub.s32 6, %v5549
        %v5551 = vrot.slane %v5505, %v5550
        %5553 = vbcast.lane.b32.xlu0 %v5551, 256
        %v5554 = vpop.permute.xlu0 %5553
        %v5555 = vlaneseq
        %v5556 = vshrl.u32 %v5555, 7
        %v5557 = vsub.s32 7, %v5556
        %v5558 = vrot.slane %v5505, %v5557
        %5560 = vbcast.lane.b32.xlu0 %v5558, 256
        %v5561 = vpop.permute.xlu0 %5560
        %v5563 = vcombine.high %v5481, %v5481
        %v5565 = vunpack.c.l.s4 1966171168
        %v5566 = vunpack.c.0.s8 %v5565
        %v5567 = vlaneseq
        %v5568 = vshrl.u32 %v5567, 7
        %v5569 = vsub.s32 %v5566, %v5568
        %v5570 = vrot.slane %v5481, %v5569
        %v5572 = vunpack.c.l.s4 1966171168
        %v5573 = vunpack.c.0.s8 %v5572
        %v5574 = vlaneseq
        %v5575 = vshrl.u32 %v5574, 7
        %v5576 = vsub.s32 %v5573, %v5575
        %v5577 = vrot.slane %v5563, %v5576
        %v5578 = vcombine.high %v5570, %v5570
        %v5579 = vcombine.high %v5577, %v5577
        %v5581 = vunpack.c.l.s4 1966171168
        %v5582 = vunpack.c.0.s8 %v5581
        %v5583 = vlaneseq
        %v5584 = vshrl.u32 %v5583, 7
        %v5585 = vsub.s32 %v5582, %v5584
        %v5586 = vrot.slane %v5570, %v5585
        %v5588 = vunpack.c.l.s4 1966171168
        %v5589 = vunpack.c.0.s8 %v5588
        %v5590 = vlaneseq
        %v5591 = vshrl.u32 %v5590, 7
        %v5592 = vsub.s32 %v5589, %v5591
        %v5593 = vrot.slane %v5577, %v5592
        %v5595 = vunpack.c.l.s4 1966171168
        %v5596 = vunpack.c.0.s8 %v5595
        %v5597 = vlaneseq
        %v5598 = vshrl.u32 %v5597, 7
        %v5599 = vsub.s32 %v5596, %v5598
        %v5600 = vrot.slane %v5578, %v5599
        %v5602 = vunpack.c.l.s4 1966171168
        %v5603 = vunpack.c.0.s8 %v5602
        %v5604 = vlaneseq
        %v5605 = vshrl.u32 %v5604, 7
        %v5606 = vsub.s32 %v5603, %v5605
        %v5607 = vrot.slane %v5579, %v5606
        %v5608 = vcombine.high %v5586, %v5586
        %v5609 = vcombine.high %v5593, %v5593
        %v5610 = vcombine.high %v5600, %v5600
        %v5611 = vcombine.high %v5607, %v5607
        %v5612 = vlaneseq
        %v5613 = vshrl.u32 %v5612, 7
        %v5614 = vsub.s32 0, %v5613
        %v5615 = vrot.slane %v5586, %v5614
        %v5616 = vlaneseq
        %v5617 = vshrl.u32 %v5616, 7
        %v5618 = vsub.s32 0, %v5617
        %v5619 = vrot.slane %v5600, %v5618
        %v5620 = vlaneseq
        %v5621 = vshrl.u32 %v5620, 7
        %v5622 = vsub.s32 0, %v5621
        %v5623 = vrot.slane %v5608, %v5622
        %v5624 = vlaneseq
        %v5625 = vshrl.u32 %v5624, 7
        %v5626 = vsub.s32 0, %v5625
        %v5627 = vrot.slane %v5610, %v5626
        %v5628 = vlaneseq
        %v5629 = vshrl.u32 %v5628, 7
        %v5630 = vsub.s32 0, %v5629
        %v5631 = vrot.slane %v5593, %v5630
        %v5632 = vlaneseq
        %v5633 = vshrl.u32 %v5632, 7
        %v5634 = vsub.s32 0, %v5633
        %v5635 = vrot.slane %v5607, %v5634
        %v5636 = vlaneseq
        %v5637 = vshrl.u32 %v5636, 7
        %v5638 = vsub.s32 0, %v5637
        %v5639 = vrot.slane %v5609, %v5638
        %v5640 = vlaneseq
        %v5641 = vshrl.u32 %v5640, 7
        %v5642 = vsub.s32 0, %v5641
        %v5643 = vrot.slane %v5611, %v5642
        %v5652 = vmul.f32 %v5512, %v5615
        %v5653 = vmul.f32 %v5519, %v5619
        %v5654 = vmul.f32 %v5526, %v5623
        %v5655 = vmul.f32 %v5533, %v5627
        %v5656 = vmul.f32 %v5540, %v5631
        %v5657 = vmul.f32 %v5547, %v5635
        %v5658 = vmul.f32 %v5554, %v5639
        %v5659 = vmul.f32 %v5561, %v5643
        %v5660 = vadd.f32 %v5455, %v5652
        %v5661 = vadd.f32 %v5456, %v5653
        %v5662 = vadd.f32 %v5457, %v5654
        %v5663 = vadd.f32 %v5458, %v5655
        %v5664 = vadd.f32 %v5459, %v5656
        %v5665 = vadd.f32 %v5460, %v5657
        %v5666 = vadd.f32 %v5461, %v5658
        %v5667 = vadd.f32 %v5462, %v5659
        %v5668 = vcombine.low %v5660, %v5662
        %v5670 = vunpack.c.l.s4 1983009808
        %v5671 = vunpack.c.0.s8 %v5670
        %v5672 = vlaneseq
        %v5673 = vshrl.u32 %v5672, 7
        %v5674 = vsub.s32 %v5671, %v5673
        %v5675 = vrot.slane %v5668, %v5674
        %v5676 = vcombine.low %v5661, %v5663
        %v5678 = vunpack.c.l.s4 1983009808
        %v5679 = vunpack.c.0.s8 %v5678
        %v5680 = vlaneseq
        %v5681 = vshrl.u32 %v5680, 7
        %v5682 = vsub.s32 %v5679, %v5681
        %v5683 = vrot.slane %v5676, %v5682
        %v5684 = vcombine.low %v5664, %v5666
        %v5686 = vunpack.c.l.s4 1983009808
        %v5687 = vunpack.c.0.s8 %v5686
        %v5688 = vlaneseq
        %v5689 = vshrl.u32 %v5688, 7
        %v5690 = vsub.s32 %v5687, %v5689
        %v5691 = vrot.slane %v5684, %v5690
        %v5692 = vcombine.low %v5665, %v5667
        %v5694 = vunpack.c.l.s4 1983009808
        %v5695 = vunpack.c.0.s8 %v5694
        %v5696 = vlaneseq
        %v5697 = vshrl.u32 %v5696, 7
        %v5698 = vsub.s32 %v5695, %v5697
        %v5699 = vrot.slane %v5692, %v5698
        %v5700 = vcombine.low %v5675, %v5683
        %v5702 = vunpack.c.l.s4 1934713408
        %v5703 = vunpack.c.0.s8 %v5702
        %v5704 = vlaneseq
        %v5705 = vshrl.u32 %v5704, 7
        %v5706 = vsub.s32 %v5703, %v5705
        %v5707 = vrot.slane %v5700, %v5706
        %v5708 = vcombine.low %v5691, %v5699
        %v5710 = vunpack.c.l.s4 1934713408
        %v5711 = vunpack.c.0.s8 %v5710
        %v5712 = vlaneseq
        %v5713 = vshrl.u32 %v5712, 7
        %v5714 = vsub.s32 %v5711, %v5713
        %v5715 = vrot.slane %v5708, %v5714
        %v5716 = vcombine.low %v5707, %v5715
        %v5717 = vcombine.high %v5707, %v5715
        %5719 = vrot.lane.b32.xlu0 %v5717, 2
        %v5720 = vpop.permute.xlu0 %5719
        %v5722 = vsel %vm4603, %v5716, %v5720
        %v5723 = vpack.c.bf16 %v5722, %v5722
        %5724 = vrot.lane.b32.xlu0 %v1953, 112
        %v5725 = vpop.permute.xlu0 %5724
        %v5727 = vsel %vm2113, %v5723, 0
        %v5730 = vsel %vm4609, %v5725, 0
        %5732 = vmatprep.subr.bf16.mxu0 0
        %5733 = vmatpush1.bf16.msra.mxu0 %v5730
        %5734 = vmatprep.subr.bf16.mxu0 0
        %5735 = vmatpush1.bf16.msra.mxu0 0
        %5736 = vmatprep.subr.bf16.mxu0 0
        %5737 = vmatpush1.bf16.msra.mxu0 0
        %5738 = vmatprep.subr.bf16.mxu0 0
        %5739 = vmatpush1.bf16.msra.mxu0 0
        %5740 = vmatprep.subr.bf16.mxu0 0
        %5741 = vmatpush1.bf16.msra.mxu0 0
        %5742 = vmatprep.subr.bf16.mxu0 0
        %5743 = vmatpush1.bf16.msra.mxu0 0
        %5744 = vmatprep.subr.bf16.mxu0 0
        %5745 = vmatpush1.bf16.msra.mxu0 0
        %5746 = vmatprep.subr.bf16.mxu0 0
        %5747 = vmatpush1.bf16.msra.mxu0 0
        %5748 = vmatprep.subr.bf16.mxu0 0
        %5749 = vmatpush1.bf16.msra.mxu0 0
        %5750 = vmatprep.subr.bf16.mxu0 0
        %5751 = vmatpush1.bf16.msra.mxu0 0
        %5752 = vmatprep.subr.bf16.mxu0 0
        %5753 = vmatpush1.bf16.msra.mxu0 0
        %5754 = vmatprep.subr.bf16.mxu0 0
        %5755 = vmatpush1.bf16.msra.mxu0 0
        %5756 = vmatprep.subr.bf16.mxu0 0
        %5757 = vmatpush1.bf16.msra.mxu0 0
        %5758 = vmatprep.subr.bf16.mxu0 0
        %5759 = vmatpush1.bf16.msra.mxu0 0
        %5760 = vmatprep.subr.bf16.mxu0 0
        %5761 = vmatpush1.bf16.msra.mxu0 0
        %5762 = vmatprep.subr.bf16.mxu0 0
        %5763 = vmatpush1.bf16.msra.mxu0 0
        %5764 = vmatprep.mubr.bf16.mxu0 0
        %5765 = vmatmul.mubr.bf16.gmra.mrb[0].mxu0 %v5727
        %v5766 = vpop.f32.mrb[0].mxu0
        %v5767 = vadd.f32 0.0, %v5766
        %v5768 = vpop.f32.mrb[0].mxu0
        %v5769 = vpop.f32.mrb[0].mxu0
        %v5770 = vpop.f32.mrb[0].mxu0
        %5771 = vdwg.mxu0
        %5772 = vrot.lane.b32.xlu0 %v1952, 112
        %v5773 = vpop.permute.xlu0 %5772
        %v5776 = vsel %vm2106, %v3642, 0
        %5778 = vmatprep.subr.bf16.mxu0 0
        %5779 = vmatpush1.bf16.msra.mxu0 %v5773
        %5780 = vmatprep.subr.bf16.mxu0 0
        %5781 = vmatpush1.bf16.msra.mxu0 0
        %5782 = vmatprep.subr.bf16.mxu0 0
        %5783 = vmatpush1.bf16.msra.mxu0 0
        %5784 = vmatprep.subr.bf16.mxu0 0
        %5785 = vmatpush1.bf16.msra.mxu0 0
        %5786 = vmatprep.subr.bf16.mxu0 0
        %5787 = vmatpush1.bf16.msra.mxu0 0
        %5788 = vmatprep.subr.bf16.mxu0 0
        %5789 = vmatpush1.bf16.msra.mxu0 0
        %5790 = vmatprep.subr.bf16.mxu0 0
        %5791 = vmatpush1.bf16.msra.mxu0 0
        %5792 = vmatprep.subr.bf16.mxu0 0
        %5793 = vmatpush1.bf16.msra.mxu0 0
        %5794 = vmatprep.subr.bf16.mxu0 0
        %5795 = vmatpush1.bf16.msra.mxu0 0
        %5796 = vmatprep.subr.bf16.mxu0 0
        %5797 = vmatpush1.bf16.msra.mxu0 0
        %5798 = vmatprep.subr.bf16.mxu0 0
        %5799 = vmatpush1.bf16.msra.mxu0 0
        %5800 = vmatprep.subr.bf16.mxu0 0
        %5801 = vmatpush1.bf16.msra.mxu0 0
        %5802 = vmatprep.subr.bf16.mxu0 0
        %5803 = vmatpush1.bf16.msra.mxu0 0
        %5804 = vmatprep.subr.bf16.mxu0 0
        %5805 = vmatpush1.bf16.msra.mxu0 0
        %5806 = vmatprep.subr.bf16.mxu0 0
        %5807 = vmatpush1.bf16.msra.mxu0 0
        %5808 = vmatprep.subr.bf16.mxu0 0
        %5809 = vmatpush1.bf16.msra.mxu0 0
        %5810 = vmatprep.mubr.bf16.mxu0 0
        %5811 = vmatmul.mubr.bf16.gmra.mrb[0].mxu0 %v5776
        %v5812 = vpop.f32.mrb[0].mxu0
        %v5813 = vadd.f32 %v5767, %v5812
        %v5814 = vpop.f32.mrb[0].mxu0
        %v5815 = vpop.f32.mrb[0].mxu0
        %v5816 = vpop.f32.mrb[0].mxu0
        %5817 = vdwg.mxu0
        %5818 = vset.pattern.permute.xlu0 28
        %5819 = vperm.xlu0 %5818, %v2105
        %v5820 = vpop.permute.xlu0 %5819
        %vm5821 = vcmp.eq.s32.totalorder %v2149, %v5820
        %5822 = vset.pattern.permute.xlu0 28
        %5823 = vperm.xlu0 %5822, %v2155
        %v5824 = vpop.permute.xlu0 %5823
        %v5826 = vsel %vm5821, %v5824, 0.0
        %5827 = vset.pattern.permute.xlu0 28
        %5828 = vperm.xlu0 %5827, %v2162
        %v5829 = vpop.permute.xlu0 %5828
        %vm5830 = vcmp.eq.s32.totalorder %v2149, %v5829
        %5831 = vset.pattern.permute.xlu0 28
        %5832 = vperm.xlu0 %5831, %v2104
        %v5833 = vpop.permute.xlu0 %5832
        %v5835 = vsel %vm5830, %v5833, 0.0
        %v5836 = vadd.f32 %v5826, %v5835
        %5837 = vset.pattern.permute.xlu0 29
        %5838 = vperm.xlu0 %5837, %v2105
        %v5839 = vpop.permute.xlu0 %5838
        %vm5840 = vcmp.eq.s32.totalorder %v2149, %v5839
        %5841 = vset.pattern.permute.xlu0 29
        %5842 = vperm.xlu0 %5841, %v2155
        %v5843 = vpop.permute.xlu0 %5842
        %v5845 = vsel %vm5840, %v5843, 0.0
        %5846 = vset.pattern.permute.xlu0 29
        %5847 = vperm.xlu0 %5846, %v2162
        %v5848 = vpop.permute.xlu0 %5847
        %vm5849 = vcmp.eq.s32.totalorder %v2149, %v5848
        %5850 = vset.pattern.permute.xlu0 29
        %5851 = vperm.xlu0 %5850, %v2104
        %v5852 = vpop.permute.xlu0 %5851
        %v5854 = vsel %vm5849, %v5852, 0.0
        %v5855 = vadd.f32 %v5845, %v5854
        %5856 = vset.pattern.permute.xlu0 14
        %5857 = vperm.xlu0 %5856, %v3643
        %v5858 = vpop.permute.xlu0 %5857
        %v5860 = vmul.f32 %v5855, %v5858
        %v5861 = vlaneseq
        %v5862 = vshrl.u32 %v5861, 7
        %v5863 = vsub.s32 0, %v5862
        %v5864 = vrot.slane %v5860, %v5863
        %5866 = vbcast.lane.b32.xlu0 %v5864, 256
        %v5867 = vpop.permute.xlu0 %5866
        %v5868 = vlaneseq
        %v5869 = vshrl.u32 %v5868, 7
        %v5870 = vsub.s32 1, %v5869
        %v5871 = vrot.slane %v5860, %v5870
        %5873 = vbcast.lane.b32.xlu0 %v5871, 256
        %v5874 = vpop.permute.xlu0 %5873
        %v5875 = vlaneseq
        %v5876 = vshrl.u32 %v5875, 7
        %v5877 = vsub.s32 2, %v5876
        %v5878 = vrot.slane %v5860, %v5877
        %5880 = vbcast.lane.b32.xlu0 %v5878, 256
        %v5881 = vpop.permute.xlu0 %5880
        %v5882 = vlaneseq
        %v5883 = vshrl.u32 %v5882, 7
        %v5884 = vsub.s32 3, %v5883
        %v5885 = vrot.slane %v5860, %v5884
        %5887 = vbcast.lane.b32.xlu0 %v5885, 256
        %v5888 = vpop.permute.xlu0 %5887
        %v5889 = vlaneseq
        %v5890 = vshrl.u32 %v5889, 7
        %v5891 = vsub.s32 4, %v5890
        %v5892 = vrot.slane %v5860, %v5891
        %5894 = vbcast.lane.b32.xlu0 %v5892, 256
        %v5895 = vpop.permute.xlu0 %5894
        %v5896 = vlaneseq
        %v5897 = vshrl.u32 %v5896, 7
        %v5898 = vsub.s32 5, %v5897
        %v5899 = vrot.slane %v5860, %v5898
        %5901 = vbcast.lane.b32.xlu0 %v5899, 256
        %v5902 = vpop.permute.xlu0 %5901
        %v5903 = vlaneseq
        %v5904 = vshrl.u32 %v5903, 7
        %v5905 = vsub.s32 6, %v5904
        %v5906 = vrot.slane %v5860, %v5905
        %5908 = vbcast.lane.b32.xlu0 %v5906, 256
        %v5909 = vpop.permute.xlu0 %5908
        %v5910 = vlaneseq
        %v5911 = vshrl.u32 %v5910, 7
        %v5912 = vsub.s32 7, %v5911
        %v5913 = vrot.slane %v5860, %v5912
        %5915 = vbcast.lane.b32.xlu0 %v5913, 256
        %v5916 = vpop.permute.xlu0 %5915
        %v5918 = vcombine.high %v5836, %v5836
        %v5920 = vunpack.c.l.s4 1966171168
        %v5921 = vunpack.c.0.s8 %v5920
        %v5922 = vlaneseq
        %v5923 = vshrl.u32 %v5922, 7
        %v5924 = vsub.s32 %v5921, %v5923
        %v5925 = vrot.slane %v5836, %v5924
        %v5927 = vunpack.c.l.s4 1966171168
        %v5928 = vunpack.c.0.s8 %v5927
        %v5929 = vlaneseq
        %v5930 = vshrl.u32 %v5929, 7
        %v5931 = vsub.s32 %v5928, %v5930
        %v5932 = vrot.slane %v5918, %v5931
        %v5933 = vcombine.high %v5925, %v5925
        %v5934 = vcombine.high %v5932, %v5932
        %v5936 = vunpack.c.l.s4 1966171168
        %v5937 = vunpack.c.0.s8 %v5936
        %v5938 = vlaneseq
        %v5939 = vshrl.u32 %v5938, 7
        %v5940 = vsub.s32 %v5937, %v5939
        %v5941 = vrot.slane %v5925, %v5940
        %v5943 = vunpack.c.l.s4 1966171168
        %v5944 = vunpack.c.0.s8 %v5943
        %v5945 = vlaneseq
        %v5946 = vshrl.u32 %v5945, 7
        %v5947 = vsub.s32 %v5944, %v5946
        %v5948 = vrot.slane %v5932, %v5947
        %v5950 = vunpack.c.l.s4 1966171168
        %v5951 = vunpack.c.0.s8 %v5950
        %v5952 = vlaneseq
        %v5953 = vshrl.u32 %v5952, 7
        %v5954 = vsub.s32 %v5951, %v5953
        %v5955 = vrot.slane %v5933, %v5954
        %v5957 = vunpack.c.l.s4 1966171168
        %v5958 = vunpack.c.0.s8 %v5957
        %v5959 = vlaneseq
        %v5960 = vshrl.u32 %v5959, 7
        %v5961 = vsub.s32 %v5958, %v5960
        %v5962 = vrot.slane %v5934, %v5961
        %v5963 = vcombine.high %v5941, %v5941
        %v5964 = vcombine.high %v5948, %v5948
        %v5965 = vcombine.high %v5955, %v5955
        %v5966 = vcombine.high %v5962, %v5962
        %v5967 = vlaneseq
        %v5968 = vshrl.u32 %v5967, 7
        %v5969 = vsub.s32 0, %v5968
        %v5970 = vrot.slane %v5941, %v5969
        %v5971 = vlaneseq
        %v5972 = vshrl.u32 %v5971, 7
        %v5973 = vsub.s32 0, %v5972
        %v5974 = vrot.slane %v5955, %v5973
        %v5975 = vlaneseq
        %v5976 = vshrl.u32 %v5975, 7
        %v5977 = vsub.s32 0, %v5976
        %v5978 = vrot.slane %v5963, %v5977
        %v5979 = vlaneseq
        %v5980 = vshrl.u32 %v5979, 7
        %v5981 = vsub.s32 0, %v5980
        %v5982 = vrot.slane %v5965, %v5981
        %v5983 = vlaneseq
        %v5984 = vshrl.u32 %v5983, 7
        %v5985 = vsub.s32 0, %v5984
        %v5986 = vrot.slane %v5948, %v5985
        %v5987 = vlaneseq
        %v5988 = vshrl.u32 %v5987, 7
        %v5989 = vsub.s32 0, %v5988
        %v5990 = vrot.slane %v5962, %v5989
        %v5991 = vlaneseq
        %v5992 = vshrl.u32 %v5991, 7
        %v5993 = vsub.s32 0, %v5992
        %v5994 = vrot.slane %v5964, %v5993
        %v5995 = vlaneseq
        %v5996 = vshrl.u32 %v5995, 7
        %v5997 = vsub.s32 0, %v5996
        %v5998 = vrot.slane %v5966, %v5997
        %v6007 = vmul.f32 %v5867, %v5970
        %v6008 = vmul.f32 %v5874, %v5974
        %v6009 = vmul.f32 %v5881, %v5978
        %v6010 = vmul.f32 %v5888, %v5982
        %v6011 = vmul.f32 %v5895, %v5986
        %v6012 = vmul.f32 %v5902, %v5990
        %v6013 = vmul.f32 %v5909, %v5994
        %v6014 = vmul.f32 %v5916, %v5998
        %v6015 = vadd.f32 %v6007, 0.0
        %v6016 = vadd.f32 %v6008, 0.0
        %v6017 = vadd.f32 %v6009, 0.0
        %v6018 = vadd.f32 %v6010, 0.0
        %v6019 = vadd.f32 %v6011, 0.0
        %v6020 = vadd.f32 %v6012, 0.0
        %v6021 = vadd.f32 %v6013, 0.0
        %v6022 = vadd.f32 %v6014, 0.0
        %6023 = vset.pattern.permute.xlu0 30
        %6024 = vperm.xlu0 %6023, %v2105
        %v6025 = vpop.permute.xlu0 %6024
        %vm6026 = vcmp.eq.s32.totalorder %v2149, %v6025
        %6027 = vset.pattern.permute.xlu0 30
        %6028 = vperm.xlu0 %6027, %v2155
        %v6029 = vpop.permute.xlu0 %6028
        %v6031 = vsel %vm6026, %v6029, 0.0
        %6032 = vset.pattern.permute.xlu0 30
        %6033 = vperm.xlu0 %6032, %v2162
        %v6034 = vpop.permute.xlu0 %6033
        %vm6035 = vcmp.eq.s32.totalorder %v2149, %v6034
        %6036 = vset.pattern.permute.xlu0 30
        %6037 = vperm.xlu0 %6036, %v2104
        %v6038 = vpop.permute.xlu0 %6037
        %v6040 = vsel %vm6035, %v6038, 0.0
        %v6041 = vadd.f32 %v6031, %v6040
        %6042 = vset.pattern.permute.xlu0 31
        %6043 = vperm.xlu0 %6042, %v2105
        %v6044 = vpop.permute.xlu0 %6043
        %vm6045 = vcmp.eq.s32.totalorder %v2149, %v6044
        %6046 = vset.pattern.permute.xlu0 31
        %6047 = vperm.xlu0 %6046, %v2155
        %v6048 = vpop.permute.xlu0 %6047
        %v6050 = vsel %vm6045, %v6048, 0.0
        %6051 = vset.pattern.permute.xlu0 31
        %6052 = vperm.xlu0 %6051, %v2162
        %v6053 = vpop.permute.xlu0 %6052
        %vm6054 = vcmp.eq.s32.totalorder %v2149, %v6053
        %6055 = vset.pattern.permute.xlu0 31
        %6056 = vperm.xlu0 %6055, %v2104
        %v6057 = vpop.permute.xlu0 %6056
        %v6059 = vsel %vm6054, %v6057, 0.0
        %v6060 = vadd.f32 %v6050, %v6059
        %6061 = vset.pattern.permute.xlu0 15
        %6062 = vperm.xlu0 %6061, %v3643
        %v6063 = vpop.permute.xlu0 %6062
        %v6065 = vmul.f32 %v6060, %v6063
        %v6066 = vlaneseq
        %v6067 = vshrl.u32 %v6066, 7
        %v6068 = vsub.s32 0, %v6067
        %v6069 = vrot.slane %v6065, %v6068
        %6071 = vbcast.lane.b32.xlu0 %v6069, 256
        %v6072 = vpop.permute.xlu0 %6071
        %v6073 = vlaneseq
        %v6074 = vshrl.u32 %v6073, 7
        %v6075 = vsub.s32 1, %v6074
        %v6076 = vrot.slane %v6065, %v6075
        %6078 = vbcast.lane.b32.xlu0 %v6076, 256
        %v6079 = vpop.permute.xlu0 %6078
        %v6080 = vlaneseq
        %v6081 = vshrl.u32 %v6080, 7
        %v6082 = vsub.s32 2, %v6081
        %v6083 = vrot.slane %v6065, %v6082
        %6085 = vbcast.lane.b32.xlu0 %v6083, 256
        %v6086 = vpop.permute.xlu0 %6085
        %v6087 = vlaneseq
        %v6088 = vshrl.u32 %v6087, 7
        %v6089 = vsub.s32 3, %v6088
        %v6090 = vrot.slane %v6065, %v6089
        %6092 = vbcast.lane.b32.xlu0 %v6090, 256
        %v6093 = vpop.permute.xlu0 %6092
        %v6094 = vlaneseq
        %v6095 = vshrl.u32 %v6094, 7
        %v6096 = vsub.s32 4, %v6095
        %v6097 = vrot.slane %v6065, %v6096
        %6099 = vbcast.lane.b32.xlu0 %v6097, 256
        %v6100 = vpop.permute.xlu0 %6099
        %v6101 = vlaneseq
        %v6102 = vshrl.u32 %v6101, 7
        %v6103 = vsub.s32 5, %v6102
        %v6104 = vrot.slane %v6065, %v6103
        %6106 = vbcast.lane.b32.xlu0 %v6104, 256
        %v6107 = vpop.permute.xlu0 %6106
        %v6108 = vlaneseq
        %v6109 = vshrl.u32 %v6108, 7
        %v6110 = vsub.s32 6, %v6109
        %v6111 = vrot.slane %v6065, %v6110
        %6113 = vbcast.lane.b32.xlu0 %v6111, 256
        %v6114 = vpop.permute.xlu0 %6113
        %v6115 = vlaneseq
        %v6116 = vshrl.u32 %v6115, 7
        %v6117 = vsub.s32 7, %v6116
        %v6118 = vrot.slane %v6065, %v6117
        %6120 = vbcast.lane.b32.xlu0 %v6118, 256
        %v6121 = vpop.permute.xlu0 %6120
        %v6123 = vcombine.high %v6041, %v6041
        %v6125 = vunpack.c.l.s4 1966171168
        %v6126 = vunpack.c.0.s8 %v6125
        %v6127 = vlaneseq
        %v6128 = vshrl.u32 %v6127, 7
        %v6129 = vsub.s32 %v6126, %v6128
        %v6130 = vrot.slane %v6041, %v6129
        %v6132 = vunpack.c.l.s4 1966171168
        %v6133 = vunpack.c.0.s8 %v6132
        %v6134 = vlaneseq
        %v6135 = vshrl.u32 %v6134, 7
        %v6136 = vsub.s32 %v6133, %v6135
        %v6137 = vrot.slane %v6123, %v6136
        %v6138 = vcombine.high %v6130, %v6130
        %v6139 = vcombine.high %v6137, %v6137
        %v6141 = vunpack.c.l.s4 1966171168
        %v6142 = vunpack.c.0.s8 %v6141
        %v6143 = vlaneseq
        %v6144 = vshrl.u32 %v6143, 7
        %v6145 = vsub.s32 %v6142, %v6144
        %v6146 = vrot.slane %v6130, %v6145
        %v6148 = vunpack.c.l.s4 1966171168
        %v6149 = vunpack.c.0.s8 %v6148
        %v6150 = vlaneseq
        %v6151 = vshrl.u32 %v6150, 7
        %v6152 = vsub.s32 %v6149, %v6151
        %v6153 = vrot.slane %v6137, %v6152
        %v6155 = vunpack.c.l.s4 1966171168
        %v6156 = vunpack.c.0.s8 %v6155
        %v6157 = vlaneseq
        %v6158 = vshrl.u32 %v6157, 7
        %v6159 = vsub.s32 %v6156, %v6158
        %v6160 = vrot.slane %v6138, %v6159
        %v6162 = vunpack.c.l.s4 1966171168
        %v6163 = vunpack.c.0.s8 %v6162
        %v6164 = vlaneseq
        %v6165 = vshrl.u32 %v6164, 7
        %v6166 = vsub.s32 %v6163, %v6165
        %v6167 = vrot.slane %v6139, %v6166
        %v6168 = vcombine.high %v6146, %v6146
        %v6169 = vcombine.high %v6153, %v6153
        %v6170 = vcombine.high %v6160, %v6160
        %v6171 = vcombine.high %v6167, %v6167
        %v6172 = vlaneseq
        %v6173 = vshrl.u32 %v6172, 7
        %v6174 = vsub.s32 0, %v6173
        %v6175 = vrot.slane %v6146, %v6174
        %v6176 = vlaneseq
        %v6177 = vshrl.u32 %v6176, 7
        %v6178 = vsub.s32 0, %v6177
        %v6179 = vrot.slane %v6160, %v6178
        %v6180 = vlaneseq
        %v6181 = vshrl.u32 %v6180, 7
        %v6182 = vsub.s32 0, %v6181
        %v6183 = vrot.slane %v6168, %v6182
        %v6184 = vlaneseq
        %v6185 = vshrl.u32 %v6184, 7
        %v6186 = vsub.s32 0, %v6185
        %v6187 = vrot.slane %v6170, %v6186
        %v6188 = vlaneseq
        %v6189 = vshrl.u32 %v6188, 7
        %v6190 = vsub.s32 0, %v6189
        %v6191 = vrot.slane %v6153, %v6190
        %v6192 = vlaneseq
        %v6193 = vshrl.u32 %v6192, 7
        %v6194 = vsub.s32 0, %v6193
        %v6195 = vrot.slane %v6167, %v6194
        %v6196 = vlaneseq
        %v6197 = vshrl.u32 %v6196, 7
        %v6198 = vsub.s32 0, %v6197
        %v6199 = vrot.slane %v6169, %v6198
        %v6200 = vlaneseq
        %v6201 = vshrl.u32 %v6200, 7
        %v6202 = vsub.s32 0, %v6201
        %v6203 = vrot.slane %v6171, %v6202
        %v6212 = vmul.f32 %v6072, %v6175
        %v6213 = vmul.f32 %v6079, %v6179
        %v6214 = vmul.f32 %v6086, %v6183
        %v6215 = vmul.f32 %v6093, %v6187
        %v6216 = vmul.f32 %v6100, %v6191
        %v6217 = vmul.f32 %v6107, %v6195
        %v6218 = vmul.f32 %v6114, %v6199
        %v6219 = vmul.f32 %v6121, %v6203
        %v6220 = vadd.f32 %v6015, %v6212
        %v6221 = vadd.f32 %v6016, %v6213
        %v6222 = vadd.f32 %v6017, %v6214
        %v6223 = vadd.f32 %v6018, %v6215
        %v6224 = vadd.f32 %v6019, %v6216
        %v6225 = vadd.f32 %v6020, %v6217
        %v6226 = vadd.f32 %v6021, %v6218
        %v6227 = vadd.f32 %v6022, %v6219
        %v6228 = vcombine.low %v6220, %v6222
        %v6230 = vunpack.c.l.s4 1983009808
        %v6231 = vunpack.c.0.s8 %v6230
        %v6232 = vlaneseq
        %v6233 = vshrl.u32 %v6232, 7
        %v6234 = vsub.s32 %v6231, %v6233
        %v6235 = vrot.slane %v6228, %v6234
        %v6236 = vcombine.low %v6221, %v6223
        %v6238 = vunpack.c.l.s4 1983009808
        %v6239 = vunpack.c.0.s8 %v6238
        %v6240 = vlaneseq
        %v6241 = vshrl.u32 %v6240, 7
        %v6242 = vsub.s32 %v6239, %v6241
        %v6243 = vrot.slane %v6236, %v6242
        %v6244 = vcombine.low %v6224, %v6226
        %v6246 = vunpack.c.l.s4 1983009808
        %v6247 = vunpack.c.0.s8 %v6246
        %v6248 = vlaneseq
        %v6249 = vshrl.u32 %v6248, 7
        %v6250 = vsub.s32 %v6247, %v6249
        %v6251 = vrot.slane %v6244, %v6250
        %v6252 = vcombine.low %v6225, %v6227
        %v6254 = vunpack.c.l.s4 1983009808
        %v6255 = vunpack.c.0.s8 %v6254
        %v6256 = vlaneseq
        %v6257 = vshrl.u32 %v6256, 7
        %v6258 = vsub.s32 %v6255, %v6257
        %v6259 = vrot.slane %v6252, %v6258
        %v6260 = vcombine.low %v6235, %v6243
        %v6262 = vunpack.c.l.s4 1934713408
        %v6263 = vunpack.c.0.s8 %v6262
        %v6264 = vlaneseq
        %v6265 = vshrl.u32 %v6264, 7
        %v6266 = vsub.s32 %v6263, %v6265
        %v6267 = vrot.slane %v6260, %v6266
        %v6268 = vcombine.low %v6251, %v6259
        %v6270 = vunpack.c.l.s4 1934713408
        %v6271 = vunpack.c.0.s8 %v6270
        %v6272 = vlaneseq
        %v6273 = vshrl.u32 %v6272, 7
        %v6274 = vsub.s32 %v6271, %v6273
        %v6275 = vrot.slane %v6268, %v6274
        %v6276 = vcombine.low %v6267, %v6275
        %v6277 = vcombine.high %v6267, %v6275
        %6279 = vrot.lane.b32.xlu0 %v6277, 2
        %v6280 = vpop.permute.xlu0 %6279
        %v6282 = vsel %vm4603, %v6276, %v6280
        %v6283 = vpack.c.bf16 %v6282, %v6282
        %6284 = vrot.lane.b32.xlu0 %v1953, 104
        %v6285 = vpop.permute.xlu0 %6284
        %v6287 = vsel %vm2113, %v6283, 0
        %v6290 = vsel %vm4609, %v6285, 0
        %6292 = vmatprep.subr.bf16.mxu0 0
        %6293 = vmatpush1.bf16.msra.mxu0 %v6290
        %6294 = vmatprep.subr.bf16.mxu0 0
        %6295 = vmatpush1.bf16.msra.mxu0 0
        %6296 = vmatprep.subr.bf16.mxu0 0
        %6297 = vmatpush1.bf16.msra.mxu0 0
        %6298 = vmatprep.subr.bf16.mxu0 0
        %6299 = vmatpush1.bf16.msra.mxu0 0
        %6300 = vmatprep.subr.bf16.mxu0 0
        %6301 = vmatpush1.bf16.msra.mxu0 0
        %6302 = vmatprep.subr.bf16.mxu0 0
        %6303 = vmatpush1.bf16.msra.mxu0 0
        %6304 = vmatprep.subr.bf16.mxu0 0
        %6305 = vmatpush1.bf16.msra.mxu0 0
        %6306 = vmatprep.subr.bf16.mxu0 0
        %6307 = vmatpush1.bf16.msra.mxu0 0
        %6308 = vmatprep.subr.bf16.mxu0 0
        %6309 = vmatpush1.bf16.msra.mxu0 0
        %6310 = vmatprep.subr.bf16.mxu0 0
        %6311 = vmatpush1.bf16.msra.mxu0 0
        %6312 = vmatprep.subr.bf16.mxu0 0
        %6313 = vmatpush1.bf16.msra.mxu0 0
        %6314 = vmatprep.subr.bf16.mxu0 0
        %6315 = vmatpush1.bf16.msra.mxu0 0
        %6316 = vmatprep.subr.bf16.mxu0 0
        %6317 = vmatpush1.bf16.msra.mxu0 0
        %6318 = vmatprep.subr.bf16.mxu0 0
        %6319 = vmatpush1.bf16.msra.mxu0 0
        %6320 = vmatprep.subr.bf16.mxu0 0
        %6321 = vmatpush1.bf16.msra.mxu0 0
        %6322 = vmatprep.subr.bf16.mxu0 0
        %6323 = vmatpush1.bf16.msra.mxu0 0
        %6324 = vmatprep.mubr.bf16.mxu0 0
        %6325 = vmatmul.mubr.bf16.gmra.mrb[0].mxu0 %v6287
        %v6326 = vpop.f32.mrb[0].mxu0
        %v6327 = vadd.f32 0.0, %v6326
        %v6328 = vpop.f32.mrb[0].mxu0
        %v6329 = vpop.f32.mrb[0].mxu0
        %v6330 = vpop.f32.mrb[0].mxu0
        %6331 = vdwg.mxu0
        %6332 = vrot.lane.b32.xlu0 %v1952, 104
        %v6333 = vpop.permute.xlu0 %6332
        %v6336 = vsel %vm2106, %v4138, 0
        %6338 = vmatprep.subr.bf16.mxu0 0
        %6339 = vmatpush1.bf16.msra.mxu0 %v6333
        %6340 = vmatprep.subr.bf16.mxu0 0
        %6341 = vmatpush1.bf16.msra.mxu0 0
        %6342 = vmatprep.subr.bf16.mxu0 0
        %6343 = vmatpush1.bf16.msra.mxu0 0
        %6344 = vmatprep.subr.bf16.mxu0 0
        %6345 = vmatpush1.bf16.msra.mxu0 0
        %6346 = vmatprep.subr.bf16.mxu0 0
        %6347 = vmatpush1.bf16.msra.mxu0 0
        %6348 = vmatprep.subr.bf16.mxu0 0
        %6349 = vmatpush1.bf16.msra.mxu0 0
        %6350 = vmatprep.subr.bf16.mxu0 0
        %6351 = vmatpush1.bf16.msra.mxu0 0
        %6352 = vmatprep.subr.bf16.mxu0 0
        %6353 = vmatpush1.bf16.msra.mxu0 0
        %6354 = vmatprep.subr.bf16.mxu0 0
        %6355 = vmatpush1.bf16.msra.mxu0 0
        %6356 = vmatprep.subr.bf16.mxu0 0
        %6357 = vmatpush1.bf16.msra.mxu0 0
        %6358 = vmatprep.subr.bf16.mxu0 0
        %6359 = vmatpush1.bf16.msra.mxu0 0
        %6360 = vmatprep.subr.bf16.mxu0 0
        %6361 = vmatpush1.bf16.msra.mxu0 0
        %6362 = vmatprep.subr.bf16.mxu0 0
        %6363 = vmatpush1.bf16.msra.mxu0 0
        %6364 = vmatprep.subr.bf16.mxu0 0
        %6365 = vmatpush1.bf16.msra.mxu0 0
        %6366 = vmatprep.subr.bf16.mxu0 0
        %6367 = vmatpush1.bf16.msra.mxu0 0
        %6368 = vmatprep.subr.bf16.mxu0 0
        %6369 = vmatpush1.bf16.msra.mxu0 0
        %6370 = vmatprep.mubr.bf16.mxu0 0
        %6371 = vmatmul.mubr.bf16.gmra.mrb[0].mxu0 %v6336
        %v6372 = vpop.f32.mrb[0].mxu0
        %v6373 = vadd.f32 %v6327, %v6372
        %v6374 = vpop.f32.mrb[0].mxu0
        %v6375 = vpop.f32.mrb[0].mxu0
        %v6376 = vpop.f32.mrb[0].mxu0
        %6377 = vdwg.mxu0
        %v6378 = vld [vmem:[%s37] sm:$0xf]
        %v6379 = vpack.c.bf16 %v4691, %v4691
        %v6380 = vld [vmem:[%s37 + $0x4] sm:$0xf]
        %v6381 = vpack.c.bf16 %v5253, %v5253
        %v6383 = vsel %vm1194, %v6381, 0
        %v6386 = vsel %vm1257, %v6380, 0
        %6388 = vmatprep.subr.bf16.mxu0 0
        %6389 = vmatpush1.bf16.msra.mxu0 %v6386
        %6390 = vmatprep.subr.bf16.mxu0 0
        %6391 = vmatpush1.bf16.msra.mxu0 0
        %6392 = vmatprep.subr.bf16.mxu0 0
        %6393 = vmatpush1.bf16.msra.mxu0 0
        %6394 = vmatprep.subr.bf16.mxu0 0
        %6395 = vmatpush1.bf16.msra.mxu0 0
        %6396 = vmatprep.subr.bf16.mxu0 0
        %6397 = vmatpush1.bf16.msra.mxu0 0
        %6398 = vmatprep.subr.bf16.mxu0 0
        %6399 = vmatpush1.bf16.msra.mxu0 0
        %6400 = vmatprep.subr.bf16.mxu0 0
        %6401 = vmatpush1.bf16.msra.mxu0 0
        %6402 = vmatprep.subr.bf16.mxu0 0
        %6403 = vmatpush1.bf16.msra.mxu0 0
        %6404 = vmatprep.subr.bf16.mxu0 0
        %6405 = vmatpush1.bf16.msra.mxu0 0
        %6406 = vmatprep.subr.bf16.mxu0 0
        %6407 = vmatpush1.bf16.msra.mxu0 0
        %6408 = vmatprep.subr.bf16.mxu0 0
        %6409 = vmatpush1.bf16.msra.mxu0 0
        %6410 = vmatprep.subr.bf16.mxu0 0
        %6411 = vmatpush1.bf16.msra.mxu0 0
        %6412 = vmatprep.subr.bf16.mxu0 0
        %6413 = vmatpush1.bf16.msra.mxu0 0
        %6414 = vmatprep.subr.bf16.mxu0 0
        %6415 = vmatpush1.bf16.msra.mxu0 0
        %6416 = vmatprep.subr.bf16.mxu0 0
        %6417 = vmatpush1.bf16.msra.mxu0 0
        %6418 = vmatprep.subr.bf16.mxu0 0
        %6419 = vmatpush1.bf16.msra.mxu0 0
        %6420 = vmatprep.mubr.bf16.mxu0 0
        %6421 = vmatmul.mubr.bf16.gmra.mrb[0].mxu0 %v6383
        %v6422 = vpop.f32.mrb[0].mxu0
        %v6423 = vadd.f32 0.0, %v6422
        %v6424 = vpop.f32.mrb[0].mxu0
        %v6425 = vpop.f32.mrb[0].mxu0
        %v6426 = vpop.f32.mrb[0].mxu0
        %6427 = vdwg.mxu0
        %v6429 = vsel %vm1194, %v6379, 0
        %v6432 = vsel %vm1257, %v6378, 0
        %6434 = vmatprep.subr.bf16.mxu0 0
        %6435 = vmatpush1.bf16.msra.mxu0 %v6432
        %6436 = vmatprep.subr.bf16.mxu0 0
        %6437 = vmatpush1.bf16.msra.mxu0 0
        %6438 = vmatprep.subr.bf16.mxu0 0
        %6439 = vmatpush1.bf16.msra.mxu0 0
        %6440 = vmatprep.subr.bf16.mxu0 0
        %6441 = vmatpush1.bf16.msra.mxu0 0
        %6442 = vmatprep.subr.bf16.mxu0 0
        %6443 = vmatpush1.bf16.msra.mxu0 0
        %6444 = vmatprep.subr.bf16.mxu0 0
        %6445 = vmatpush1.bf16.msra.mxu0 0
        %6446 = vmatprep.subr.bf16.mxu0 0
        %6447 = vmatpush1.bf16.msra.mxu0 0
        %6448 = vmatprep.subr.bf16.mxu0 0
        %6449 = vmatpush1.bf16.msra.mxu0 0
        %6450 = vmatprep.subr.bf16.mxu0 0
        %6451 = vmatpush1.bf16.msra.mxu0 0
        %6452 = vmatprep.subr.bf16.mxu0 0
        %6453 = vmatpush1.bf16.msra.mxu0 0
        %6454 = vmatprep.subr.bf16.mxu0 0
        %6455 = vmatpush1.bf16.msra.mxu0 0
        %6456 = vmatprep.subr.bf16.mxu0 0
        %6457 = vmatpush1.bf16.msra.mxu0 0
        %6458 = vmatprep.subr.bf16.mxu0 0
        %6459 = vmatpush1.bf16.msra.mxu0 0
        %6460 = vmatprep.subr.bf16.mxu0 0
        %6461 = vmatpush1.bf16.msra.mxu0 0
        %6462 = vmatprep.subr.bf16.mxu0 0
        %6463 = vmatpush1.bf16.msra.mxu0 0
        %6464 = vmatprep.subr.bf16.mxu0 0
        %6465 = vmatpush1.bf16.msra.mxu0 0
        %6466 = vmatprep.mubr.bf16.mxu0 0
        %6467 = vmatmul.mubr.bf16.gmra.mrb[0].mxu0 %v6429
        %v6468 = vpop.f32.mrb[0].mxu0
        %v6469 = vadd.f32 %v6423, %v6468
        %v6470 = vpop.f32.mrb[0].mxu0
        %v6471 = vpop.f32.mrb[0].mxu0
        %v6472 = vpop.f32.mrb[0].mxu0
        %6473 = vdwg.mxu0
        %v6474 = vld [vmem:[%s37 + $0x8] sm:$0xf]
        %v6475 = vpack.c.bf16 %v5813, %v5813
        %v6477 = vsel %vm1194, %v6475, 0
        %v6480 = vsel %vm1257, %v6474, 0
        %6482 = vmatprep.subr.bf16.mxu0 0
        %6483 = vmatpush1.bf16.msra.mxu0 %v6480
        %6484 = vmatprep.subr.bf16.mxu0 0
        %6485 = vmatpush1.bf16.msra.mxu0 0
        %6486 = vmatprep.subr.bf16.mxu0 0
        %6487 = vmatpush1.bf16.msra.mxu0 0
        %6488 = vmatprep.subr.bf16.mxu0 0
        %6489 = vmatpush1.bf16.msra.mxu0 0
        %6490 = vmatprep.subr.bf16.mxu0 0
        %6491 = vmatpush1.bf16.msra.mxu0 0
        %6492 = vmatprep.subr.bf16.mxu0 0
        %6493 = vmatpush1.bf16.msra.mxu0 0
        %6494 = vmatprep.subr.bf16.mxu0 0
        %6495 = vmatpush1.bf16.msra.mxu0 0
        %6496 = vmatprep.subr.bf16.mxu0 0
        %6497 = vmatpush1.bf16.msra.mxu0 0
        %6498 = vmatprep.subr.bf16.mxu0 0
        %6499 = vmatpush1.bf16.msra.mxu0 0
        %6500 = vmatprep.subr.bf16.mxu0 0
        %6501 = vmatpush1.bf16.msra.mxu0 0
        %6502 = vmatprep.subr.bf16.mxu0 0
        %6503 = vmatpush1.bf16.msra.mxu0 0
        %6504 = vmatprep.subr.bf16.mxu0 0
        %6505 = vmatpush1.bf16.msra.mxu0 0
        %6506 = vmatprep.subr.bf16.mxu0 0
        %6507 = vmatpush1.bf16.msra.mxu0 0
        %6508 = vmatprep.subr.bf16.mxu0 0
        %6509 = vmatpush1.bf16.msra.mxu0 0
        %6510 = vmatprep.subr.bf16.mxu0 0
        %6511 = vmatpush1.bf16.msra.mxu0 0
        %6512 = vmatprep.subr.bf16.mxu0 0
        %6513 = vmatpush1.bf16.msra.mxu0 0
        %6514 = vmatprep.mubr.bf16.mxu0 0
        %6515 = vmatmul.mubr.bf16.gmra.mrb[0].mxu0 %v6477
        %v6516 = vpop.f32.mrb[0].mxu0
        %v6517 = vadd.f32 0.0, %v6516
        %v6518 = vpop.f32.mrb[0].mxu0
        %v6519 = vpop.f32.mrb[0].mxu0
        %v6520 = vpop.f32.mrb[0].mxu0
        %6521 = vdwg.mxu0
        %v6522 = vadd.f32 %v6469, %v6517
        %v6523 = vld [vmem:[%s37 + $0xc] sm:$0xf]
        %v6524 = vpack.c.bf16 %v6373, %v6373
        %v6526 = vsel %vm1194, %v6524, 0
        %v6529 = vsel %vm1257, %v6523, 0
        %6531 = vmatprep.subr.bf16.mxu0 0
        %6532 = vmatpush1.bf16.msra.mxu0 %v6529
        %6533 = vmatprep.subr.bf16.mxu0 0
        %6534 = vmatpush1.bf16.msra.mxu0 0
        %6535 = vmatprep.subr.bf16.mxu0 0
        %6536 = vmatpush1.bf16.msra.mxu0 0
        %6537 = vmatprep.subr.bf16.mxu0 0
        %6538 = vmatpush1.bf16.msra.mxu0 0
        %6539 = vmatprep.subr.bf16.mxu0 0
        %6540 = vmatpush1.bf16.msra.mxu0 0
        %6541 = vmatprep.subr.bf16.mxu0 0
        %6542 = vmatpush1.bf16.msra.mxu0 0
        %6543 = vmatprep.subr.bf16.mxu0 0
        %6544 = vmatpush1.bf16.msra.mxu0 0
        %6545 = vmatprep.subr.bf16.mxu0 0
        %6546 = vmatpush1.bf16.msra.mxu0 0
        %6547 = vmatprep.subr.bf16.mxu0 0
        %6548 = vmatpush1.bf16.msra.mxu0 0
        %6549 = vmatprep.subr.bf16.mxu0 0
        %6550 = vmatpush1.bf16.msra.mxu0 0
        %6551 = vmatprep.subr.bf16.mxu0 0
        %6552 = vmatpush1.bf16.msra.mxu0 0
        %6553 = vmatprep.subr.bf16.mxu0 0
        %6554 = vmatpush1.bf16.msra.mxu0 0
        %6555 = vmatprep.subr.bf16.mxu0 0
        %6556 = vmatpush1.bf16.msra.mxu0 0
        %6557 = vmatprep.subr.bf16.mxu0 0
        %6558 = vmatpush1.bf16.msra.mxu0 0
        %6559 = vmatprep.subr.bf16.mxu0 0
        %6560 = vmatpush1.bf16.msra.mxu0 0
        %6561 = vmatprep.subr.bf16.mxu0 0
        %6562 = vmatpush1.bf16.msra.mxu0 0
        %6563 = vmatprep.mubr.bf16.mxu0 0
        %6564 = vmatmul.mubr.bf16.gmra.mrb[0].mxu0 %v6526
        %v6565 = vpop.f32.mrb[0].mxu0
        %v6566 = vadd.f32 0.0, %v6565
        %v6567 = vpop.f32.mrb[0].mxu0
        %v6568 = vpop.f32.mrb[0].mxu0
        %v6569 = vpop.f32.mrb[0].mxu0
        %6570 = vdwg.mxu0
        %v6571 = vadd.f32 %v6522, %v6566
        %v6572 = vld [vmem:[%s39] sm:$0x1]
        %v6574 = vlaneseq
        %v6575 = vshrl.u32 %v6574, 7
        %v6576 = vsub.s32 0, %v6575
        %v6577 = vrot.slane %v6572, %v6576
        %v6579 = vadd.f32 %v6571, %v6577
        %v6580 = vadd.f32 %v1865, %v6579
        %v6581 = vsel %vm1091, %v6580, 0.0
        %6582 = vadd.xlane.f32.xlu0 %v6581
        %v6583 = vpop.xlane.xlu0 %6582
        %v6584 = vmul.f32 %v6583, %v1839
        %v6585 = vsub.f32 %v6580, %v6584
        %v6586 = vmul.f32 %v6585, %v6585
        %v6587 = vsel %vm1091, %v6586, 0.0
        %6588 = vadd.xlane.f32.xlu0 %v6587
        %v6589 = vpop.xlane.xlu0 %6588
        %v6590 = vmul.f32 %v6589, %v1839
        %v6591 = vadd.f32 %v6590, 1e-05
        %v6592 = vrsqrt.pop %v6591
        %v6593 = vmul.f32 %v6585, %v6592
        %v6594 = vld [vmem:[%s41] sm:$0x1]
        %v6596 = vlaneseq
        %v6597 = vshrl.u32 %v6596, 7
        %v6598 = vsub.s32 0, %v6597
        %v6599 = vrot.slane %v6594, %v6598
        %v6601 = vmul.f32 %v6593, %v6599
        %v6602 = vld [vmem:[%s43] sm:$0x1]
        %v6604 = vlaneseq
        %v6605 = vshrl.u32 %v6604, 7
        %v6606 = vsub.s32 0, %v6605
        %v6607 = vrot.slane %v6602, %v6606
        %v6609 = vadd.f32 %v6601, %v6607
        %v6610 = vld [vmem:[%s45] sm:$0xf]
        %v6611 = vld [vmem:[%s45 + $0x4] sm:$0xf]
        %v6612 = vld [vmem:[%s45 + $0x8] sm:$0xf]
        %v6613 = vld [vmem:[%s45 + $0xc] sm:$0xf]
        %v6614 = vpack.c.bf16 %v6609, %v6609
        %v6615 = vld [vmem:[%s47] sm:$0x1]
        %v6617 = vlaneseq
        %v6618 = vshrl.u32 %v6617, 7
        %v6619 = vsub.s32 0, %v6618
        %v6620 = vrot.slane %v6615, %v6619
        %v6626 = vunpack.c.l.b16 %v6610
        %v6627 = vunpack.c.l.b16 %v6611
        %v6628 = vunpack.c.l.b16 %v6612
        %v6629 = vunpack.c.l.b16 %v6613
        %v6630 = vpack.c.b16 %v6627, %v6626
        %v6631 = vpack.c.b16 %v6629, %v6628
        %v6635 = vsel %vm1091, %v6614, 0
        %6637 = vmatprep.subr.bf16.mxu0 0
        %6638 = vmatpush1.bf16.msra.mxu0 %v6630
        %6639 = vmatprep.subr.bf16.mxu0 0
        %6640 = vmatpush1.bf16.msra.mxu0 %v6631
        %6641 = vmatprep.subr.bf16.mxu0 0
        %6642 = vmatpush1.bf16.msra.mxu0 0
        %6643 = vmatprep.subr.bf16.mxu0 0
        %6644 = vmatpush1.bf16.msra.mxu0 0
        %6645 = vmatprep.subr.bf16.mxu0 0
        %6646 = vmatpush1.bf16.msra.mxu0 0
        %6647 = vmatprep.subr.bf16.mxu0 0
        %6648 = vmatpush1.bf16.msra.mxu0 0
        %6649 = vmatprep.subr.bf16.mxu0 0
        %6650 = vmatpush1.bf16.msra.mxu0 0
        %6651 = vmatprep.subr.bf16.mxu0 0
        %6652 = vmatpush1.bf16.msra.mxu0 0
        %6653 = vmatprep.subr.bf16.mxu0 0
        %6654 = vmatpush1.bf16.msra.mxu0 0
        %6655 = vmatprep.subr.bf16.mxu0 0
        %6656 = vmatpush1.bf16.msra.mxu0 0
        %6657 = vmatprep.subr.bf16.mxu0 0
        %6658 = vmatpush1.bf16.msra.mxu0 0
        %6659 = vmatprep.subr.bf16.mxu0 0
        %6660 = vmatpush1.bf16.msra.mxu0 0
        %6661 = vmatprep.subr.bf16.mxu0 0
        %6662 = vmatpush1.bf16.msra.mxu0 0
        %6663 = vmatprep.subr.bf16.mxu0 0
        %6664 = vmatpush1.bf16.msra.mxu0 0
        %6665 = vmatprep.subr.bf16.mxu0 0
        %6666 = vmatpush1.bf16.msra.mxu0 0
        %6667 = vmatprep.subr.bf16.mxu0 0
        %6668 = vmatpush1.bf16.msra.mxu0 0
        %6669 = vmatprep.mubr.bf16.mxu0 0
        %6670 = vmatmul.mubr.bf16.gmra.mrb[0].mxu0 %v6635
        %v6671 = vpop.f32.mrb[0].mxu0
        %v6672 = vadd.f32 %v6620, %v6671
        %v6673 = vpop.f32.mrb[0].mxu0
        %v6674 = vpop.f32.mrb[0].mxu0
        %v6675 = vpop.f32.mrb[0].mxu0
        %6676 = vdwg.mxu0
        %v6677 = vmax.f32 %v6672, 0.0
        %v6678 = vld [vmem:[%s49] sm:$0xf]
        %v6679 = vld [vmem:[%s49 + $0x4] sm:$0xf]
        %v6680 = vld [vmem:[%s49 + $0x8] sm:$0xf]
        %v6681 = vld [vmem:[%s49 + $0xc] sm:$0xf]
        %v6682 = vld [vmem:[%s49 + $0x10] sm:$0xf]
        %v6683 = vld [vmem:[%s49 + $0x14] sm:$0xf]
        %v6684 = vld [vmem:[%s49 + $0x18] sm:$0xf]
        %v6685 = vld [vmem:[%s49 + $0x1c] sm:$0xf]
        %v6686 = vpack.c.bf16 %v6677, %v6677
        %v6687 = vld [vmem:[%s51] sm:$0x1]
        %v6689 = vlaneseq
        %v6690 = vshrl.u32 %v6689, 7
        %v6691 = vsub.s32 0, %v6690
        %v6692 = vrot.slane %v6687, %v6691
        %v6702 = vunpack.c.l.b16 %v6678
        %v6703 = vunpack.c.l.b16 %v6679
        %v6704 = vunpack.c.l.b16 %v6680
        %v6705 = vunpack.c.l.b16 %v6681
        %v6706 = vunpack.c.l.b16 %v6682
        %v6707 = vunpack.c.l.b16 %v6683
        %v6708 = vunpack.c.l.b16 %v6684
        %v6709 = vunpack.c.l.b16 %v6685
        %v6710 = vpack.c.b16 %v6703, %v6702
        %v6711 = vpack.c.b16 %v6705, %v6704
        %v6712 = vpack.c.b16 %v6707, %v6706
        %v6713 = vpack.c.b16 %v6709, %v6708
        %vm6718 = vcmask 523264
        %v6720 = vsel %vm6718, %v6686, 0
        %6722 = vmatprep.subr.bf16.mxu0 0
        %6723 = vmatpush1.bf16.msra.mxu0 %v6710
        %6724 = vmatprep.subr.bf16.mxu0 0
        %6725 = vmatpush1.bf16.msra.mxu0 %v6711
        %6726 = vmatprep.subr.bf16.mxu0 0
        %6727 = vmatpush1.bf16.msra.mxu0 %v6712
        %6728 = vmatprep.subr.bf16.mxu0 0
        %6729 = vmatpush1.bf16.msra.mxu0 %v6713
        %6730 = vmatprep.subr.bf16.mxu0 0
        %6731 = vmatpush1.bf16.msra.mxu0 0
        %6732 = vmatprep.subr.bf16.mxu0 0
        %6733 = vmatpush1.bf16.msra.mxu0 0
        %6734 = vmatprep.subr.bf16.mxu0 0
        %6735 = vmatpush1.bf16.msra.mxu0 0
        %6736 = vmatprep.subr.bf16.mxu0 0
        %6737 = vmatpush1.bf16.msra.mxu0 0
        %6738 = vmatprep.subr.bf16.mxu0 0
        %6739 = vmatpush1.bf16.msra.mxu0 0
        %6740 = vmatprep.subr.bf16.mxu0 0
        %6741 = vmatpush1.bf16.msra.mxu0 0
        %6742 = vmatprep.subr.bf16.mxu0 0
        %6743 = vmatpush1.bf16.msra.mxu0 0
        %6744 = vmatprep.subr.bf16.mxu0 0
        %6745 = vmatpush1.bf16.msra.mxu0 0
        %6746 = vmatprep.subr.bf16.mxu0 0
        %6747 = vmatpush1.bf16.msra.mxu0 0
        %6748 = vmatprep.subr.bf16.mxu0 0
        %6749 = vmatpush1.bf16.msra.mxu0 0
        %6750 = vmatprep.subr.bf16.mxu0 0
        %6751 = vmatpush1.bf16.msra.mxu0 0
        %6752 = vmatprep.subr.bf16.mxu0 0
        %6753 = vmatpush1.bf16.msra.mxu0 0
        %6754 = vmatprep.mubr.bf16.mxu0 0
        %6755 = vmatmul.mubr.bf16.gmra.mrb[0].mxu0 %v6720
        %v6756 = vpop.f32.mrb[0].mxu0
        %v6757 = vadd.f32 %v6692, %v6756
        %v6758 = vpop.f32.mrb[0].mxu0
        %v6759 = vpop.f32.mrb[0].mxu0
        %v6760 = vpop.f32.mrb[0].mxu0
        %6761 = vdwg.mxu0
        %v6762 = vadd.f32 %v6609, %v6757
        %v6763 = vsel %vm1091, %v6762, 0.0
        %6764 = vadd.xlane.f32.xlu0 %v6763
        %v6765 = vpop.xlane.xlu0 %6764
        %v6766 = vmul.f32 %v6765, %v1839
        %v6767 = vsub.f32 %v6762, %v6766
        %v6768 = vmul.f32 %v6767, %v6767
        %v6769 = vsel %vm1091, %v6768, 0.0
        %6770 = vadd.xlane.f32.xlu0 %v6769
        %v6771 = vpop.xlane.xlu0 %6770
        %v6772 = vmul.f32 %v6771, %v1839
        %v6773 = vadd.f32 %v6772, 1e-05
        %v6774 = vrsqrt.pop %v6773
        %v6775 = vmul.f32 %v6767, %v6774
        %v6776 = vld [vmem:[%s53] sm:$0x1]
        %v6778 = vlaneseq
        %v6779 = vshrl.u32 %v6778, 7
        %v6780 = vsub.s32 0, %v6779
        %v6781 = vrot.slane %v6776, %v6780
        %v6783 = vmul.f32 %v6775, %v6781
        %v6784 = vld [vmem:[%s55] sm:$0x1]
        %v6786 = vlaneseq
        %v6787 = vshrl.u32 %v6786, 7
        %v6788 = vsub.s32 0, %v6787
        %v6789 = vrot.slane %v6784, %v6788
        %v6791 = vadd.f32 %v6783, %v6789
        %6792 = vst.msk [vmem:[%s1037] sm:$0xff] %vm1091, %v6791
        %s6793 = sand.u32 %s699, 1
        %s6794 = scalar_lea.sflag [#allocation4], %s6793
        %s6795 = sand.u32 %s699, 1
        %s6796 = smul.addr %s6795, 8
        %s6797 = scalar_lea.vmem [#allocation14], %s6796
        %s6798 = sand.u32 %s725, 1
        %s6799 = scalar_lea.sflag [#allocation16], %s6798
        %s6800 = sand.u32 %s725, 1
        %s6801 = smul.addr %s6800, 8
        %s6802 = scalar_lea.vmem [#allocation15], %s6801
        // Predicated region
        $region161: #{tpu_custom_call.1} parent=131 // pred_check
          %p6803 = pneg %p709
        $region162: #{tpu_custom_call.1} parent=131 // pred_check_branch
          %6805 = sbr.rel (%p6803) target = $region164
        $region163: #{tpu_custom_call.1} parent=131 // pred_region
          %s6807 = ssub.s32 128, 128
          %6808 = vsyncadd %s6794, %s6807
          %s6809 = smul.addr %s83, 128
          %s6810 = scalar_lea.hbm %s57, %s6809
          %s6812 = sshll.u32 %s6797, 4
          %s6813 = int_to_ptr.vmem [resolvable:$true] %s6812
          %6815 = dma.vmem_to_hbm [thread:$0]  %s6813, 128, %s6810, %s6794
        $region164: #{tpu_custom_call.1} parent=131 // pred_fallthru
          _
        // Predicated region
        $region165: #{tpu_custom_call.1} parent=131 // pred_check
          %p6816 = pneg %p735
        $region166: #{tpu_custom_call.1} parent=131 // pred_check_branch
          %6818 = sbr.rel (%p6816) target = $region168
        $region167: #{tpu_custom_call.1} parent=131 // pred_region
          %s6820 = ssub.s32 128, 128
          %6821 = vsyncadd %s6799, %s6820
          %s6822 = smul.addr %s83, 128
          %s6823 = scalar_lea.hbm %s59, %s6822
          %s6825 = sshll.u32 %s6802, 4
          %s6826 = int_to_ptr.vmem [resolvable:$true] %s6825
          %6828 = dma.vmem_to_hbm [thread:$0]  %s6826, 128, %s6823, %s6799
        $region168: #{tpu_custom_call.1} parent=131 // pred_fallthru
          _
      $region132: #{tpu_custom_call.1} parent=5 // pred_fallthru
        _
      %p6829 = scmp.le.s32.totalorder 2, %s78
      // Predicated region
      $region169: #{tpu_custom_call.1} parent=5 // pred_check
        %p6830 = pneg %p6829
      $region170: #{tpu_custom_call.1} parent=5 // pred_check_branch
        %6832 = sbr.rel (%p6830) target = $region172
      $region171: #{tpu_custom_call.1} parent=5 // pred_region
        %s6833 = ssub.s32 %s78, 2
        // Predicated region
        $region173: #{tpu_custom_call.1} parent=171 // pred_check
          %p6834 = pneg %p715
        $region174: #{tpu_custom_call.1} parent=171 // pred_check_branch
          %6836 = sbr.rel (%p6834) target = $region176
        $region175: #{tpu_custom_call.1} parent=171 // pred_region
          %s6837 = sand.u32 %s700, 1
          %s6838 = scalar_lea.sflag [#allocation4], %s6837
          %s6839 = sand.u32 %s700, 1
          %s6840 = smul.addr %s6839, 8
          %s6841 = scalar_lea.vmem [#allocation14], %s6840
          %6842 = dma.done %s6838, 128
        $region176: #{tpu_custom_call.1} parent=171 // pred_fallthru
          _
        // Predicated region
        $region177: #{tpu_custom_call.1} parent=171 // pred_check
          %p6843 = pneg %p741
        $region178: #{tpu_custom_call.1} parent=171 // pred_check_branch
          %6845 = sbr.rel (%p6843) target = $region180
        $region179: #{tpu_custom_call.1} parent=171 // pred_region
          %s6846 = sand.u32 %s726, 1
          %s6847 = scalar_lea.sflag [#allocation16], %s6846
          %s6848 = sand.u32 %s726, 1
          %s6849 = smul.addr %s6848, 8
          %s6850 = scalar_lea.vmem [#allocation15], %s6849
          %6851 = dma.done %s6847, 128
        $region180: #{tpu_custom_call.1} parent=171 // pred_fallthru
          _
      $region172: #{tpu_custom_call.1} parent=5 // pred_fallthru
        _
    $region6: #{tpu_custom_call.1} parent=1 // loop_footer
      %s82 = sadd.s32 1, %s78
    $region7: #{tpu_custom_call.1} parent=1 // loop_footer_branch
      %77 = sbr.rel target = $region3
    $region8: #{tpu_custom_call.1} parent=1 // loop_exit
      _
    %6852 = vsyncpa [#allocation3], 1
    %s6853 = scalar_lea.sflag [#allocation3], 1
    %6854 = vsyncpa %s6853, 1
    %6855 = vsyncpa [#allocation6], 1
    %6856 = vsyncpa [#allocation9], 1
    %6857 = vsyncpa [#allocation12], 1
    %6858 = vsyncpa [#allocation4], 1
    %s6859 = scalar_lea.sflag [#allocation4], 1
    %6860 = vsyncpa %s6859, 1
    %6861 = vsyncpa [#allocation16], 1
    %s6862 = scalar_lea.sflag [#allocation16], 1
    %6863 = vsyncpa %s6862, 1

</llo_original>
